<compile_context>
chip_gen: v6e
topology: v6e:2x2x1
jax: 0.10.0
libtpu: 0.0.40
codegen_flags: <defaults>
</compile_context>

<pallas_src>
import jax
import jax.numpy as jnp
from jax.experimental import pallas as pl
from jax.experimental.pallas import tpu as pltpu

EPS = 1e-5


def _largest_divisor_leq(n, cap):
    cap = max(1, min(n, cap))
    for d in range(cap, 0, -1):
        if n % d == 0:
            return d
    return 1


# --------------------------------------------------------------------------
# Kernel A: fused ConvTranspose2d(2,2,s=2) + Conv2d 1x1 + BN1 partial stats
#   y[row, dj*Cout+d] for di in {0,1} = x[row, :] @ Wc[di] + bc
# Output HBM layout (N*H, 2, W, 2*Cout) row-major == (N, 2H, 2W, Cout) NHWC.
# --------------------------------------------------------------------------
def _upconv_1x1_kernel(x_ref, w_ref, b_ref, y_ref, ps_ref, pq_ref):
    # x_ref : (th*W, Cin)         rows of the base-resolution image (NHWC-flat)
    # w_ref : (2, Cin, 2*Cout)    folded ConvT+1x1 weights, columns [dj=0 | dj=1]
    # b_ref : (1, 2*Cout)
    # y_ref : (th, 2, W, 2*Cout)
    # ps/pq : (1, 8, 2*Cout)      per-step partial sum / sum-of-squares (BN1)
    th, _, w_dim, c2 = y_ref.shape
    x = x_ref[...]
    b = b_ref[...]
    psum = jnp.zeros((8, c2), jnp.float32)
    pssq = jnp.zeros((8, c2), jnp.float32)
    for di in range(2):
        y = jnp.dot(x, w_ref[di], preferred_element_type=jnp.float32) + b
        y_ref[:, di, :, :] = y.reshape(th, w_dim, c2)
        yg = y.reshape(-1, 8, c2)
        psum = psum + jnp.sum(yg, axis=0)
        pssq = pssq + jnp.sum(yg * yg, axis=0)
    ps_ref[0] = psum
    pq_ref[0] = pssq


# --------------------------------------------------------------------------
# Kernel B: BN1 affine (on the input) + in-VMEM zero halo + 3x3 conv as one
# im2col matmul (K = 9*Cout) + BN2 partial stats.
# --------------------------------------------------------------------------
def _conv3x3_bn_kernel(x_ref, sc_ref, sh_ref, w_ref, o_ref, ps_ref, pq_ref,
                       xpad_ref):
    # x_ref  : (1, H2, W2, C)   upsampled activation (pre-BN1)
    # sc/sh  : (1, C)           BN1 scale / shift
    # w_ref  : (9*C, C)         3x3 weights in im2col order (kh, kw, c) x d
    # o_ref  : (1, H2, W2, C)   conv output (pre-BN2)
    # ps/pq  : (1, 8, C)        per-step partial stats (BN2)
    # xpad   : (H2+2, W2+2, C)  VMEM scratch: BN1-affined input with zero halo
    hp, wp, c = xpad_ref.shape
    h2, w2 = hp - 2, wp - 2

    # Affine BEFORE padding so the zero border stays zero (matches zero-pad
    # semantics of the reference; do NOT fold the shift into the conv bias).
    xpad_ref[...] = jnp.zeros((hp, wp, c), jnp.float32)
    xpad_ref[pl.ds(1, h2), pl.ds(1, w2), :] = (
        x_ref[0] * sc_ref[...] + sh_ref[...])

    # im2col: 9 shifted windows concatenated along channels -> one MXU matmul.
    cols = jnp.concatenate(
        [xpad_ref[pl.ds(kh, h2), pl.ds(kw, w2), :].reshape(h2 * w2, c)
         for kh in range(3) for kw in range(3)],
        axis=-1)                                           # (H2*W2, 9*C)
    y = jnp.dot(cols, w_ref[...], preferred_element_type=jnp.float32)

    o_ref[0] = y.reshape(h2, w2, c)
    yg = y.reshape(-1, 8, c)
    ps_ref[0] = jnp.sum(yg, axis=0)
    pq_ref[0] = jnp.sum(yg * yg, axis=0)


# --------------------------------------------------------------------------
# Kernel C: fused BatchNorm2 affine + ReLU epilogue (big row tiles)
# --------------------------------------------------------------------------
def _bn_relu_kernel(x_ref, sc_ref, sh_ref, o_ref):
    o_ref[...] = jnp.maximum(x_ref[...] * sc_ref[...] + sh_ref[...], 0.0)


# --------------------------------------------------------------------------
# Wrapper
# --------------------------------------------------------------------------
def _bn_scale_shift(s, ssq, count, gamma, beta):
    # training-mode BatchNorm: batch mean and *biased* variance
    # TODO(synk): E[x^2]-E[x]^2 can cancel for large-mean activations; OK at
    # this scale, consider a Welford/two-pass reduction for production use.
    mean = s / count
    var = ssq / count - mean * mean
    scale = gamma * jax.lax.rsqrt(var + EPS)
    shift = beta - mean * scale
    return scale, shift


def upsample_forward(x_nchw, kparams):
    wcat, bcat, g1, b1, w_col, g2, b2 = kparams
    n, cin, h, w = x_nchw.shape
    c2 = wcat.shape[-1]
    cout = c2 // 2
    h2, w2 = 2 * h, 2 * w
    m = n * h2 * w2
    assert w % 8 == 0, "base width must be a multiple of 8 for this kernel"

    x_nhwc = jnp.transpose(x_nchw, (0, 2, 3, 1)).astype(jnp.float32)
    x2d = x_nhwc.reshape(n * h * w, cin)

    parallel = pltpu.CompilerParams(dimension_semantics=("parallel",))

    # ---- kernel A: fused ConvT(2,2,s2) + 1x1 conv + BN1 partial stats -------
    th = _largest_divisor_leq(n * h, max(1, 8192 // w))      # big row tiles
    g_a = (n * h) // th
    y2p, ps1, pq1 = pl.pallas_call(
        _upconv_1x1_kernel,
        out_shape=(
            jax.ShapeDtypeStruct((n * h, 2, w, c2), jnp.float32),
            jax.ShapeDtypeStruct((g_a, 8, c2), jnp.float32),
            jax.ShapeDtypeStruct((g_a, 8, c2), jnp.float32),
        ),
        grid=(g_a,),
        in_specs=[
            pl.BlockSpec((th * w, cin), lambda i: (i, 0)),
            pl.BlockSpec((2, cin, c2), lambda i: (0, 0, 0)),
            pl.BlockSpec((1, c2), lambda i: (0, 0)),
        ],
        out_specs=(
            pl.BlockSpec((th, 2, w, c2), lambda i: (i, 0, 0, 0)),
            pl.BlockSpec((1, 8, c2), lambda i: (i, 0, 0)),
            pl.BlockSpec((1, 8, c2), lambda i: (i, 0, 0)),
        ),
        compiler_params=parallel,
    )(x2d, wcat, bcat)

    # row-major view of (N*H, 2, W, 2*Cout) IS the upsampled NHWC image (free).
    y2 = y2p.reshape(n, h2, w2, cout)

    s1 = jnp.sum(ps1, axis=(0, 1)).reshape(2, cout).sum(axis=0)
    q1 = jnp.sum(pq1, axis=(0, 1)).reshape(2, cout).sum(axis=0)
    scale1, shift1 = _bn_scale_shift(s1, q1, m, g1, b1)

    # ---- kernel B: BN1 affine + zero halo (VMEM) + 3x3 conv (im2col) --------
    # TODO(synk): for production-sized images / v7x's 64 MiB VMEM, tile H2 into
    # row strips with a 2-row halo instead of one whole image per grid step.
    y3, ps2, pq2 = pl.pallas_call(
        _conv3x3_bn_kernel,
        out_shape=(
            jax.ShapeDtypeStruct((n, h2, w2, cout), jnp.float32),
            jax.ShapeDtypeStruct((n, 8, cout), jnp.float32),
            jax.ShapeDtypeStruct((n, 8, cout), jnp.float32),
        ),
        grid=(n,),
        in_specs=[
            pl.BlockSpec((1, h2, w2, cout), lambda i: (i, 0, 0, 0)),
            pl.BlockSpec((1, cout), lambda i: (0, 0)),
            pl.BlockSpec((1, cout), lambda i: (0, 0)),
            pl.BlockSpec((9 * cout, cout), lambda i: (0, 0)),
        ],
        out_specs=(
            pl.BlockSpec((1, h2, w2, cout), lambda i: (i, 0, 0, 0)),
            pl.BlockSpec((1, 8, cout), lambda i: (i, 0, 0)),
            pl.BlockSpec((1, 8, cout), lambda i: (i, 0, 0)),
        ),
        scratch_shapes=[pltpu.VMEM((h2 + 2, w2 + 2, cout), jnp.float32)],
        compiler_params=parallel,
    )(y2, scale1.reshape(1, cout), shift1.reshape(1, cout), w_col)

    s2 = jnp.sum(ps2, axis=(0, 1))
    q2 = jnp.sum(pq2, axis=(0, 1))
    scale2, shift2 = _bn_scale_shift(s2, q2, m, g2, b2)

    # ---- kernel C: fused BN2 affine + ReLU epilogue --------------------------
    tm = _largest_divisor_leq(m, 4096)
    out_flat = pl.pallas_call(
        _bn_relu_kernel,
        out_shape=jax.ShapeDtypeStruct((m, cout), jnp.float32),
        grid=(m // tm,),
        in_specs=[
            pl.BlockSpec((tm, cout), lambda i: (i, 0)),
            pl.BlockSpec((1, cout), lambda i: (0, 0)),
            pl.BlockSpec((1, cout), lambda i: (0, 0)),
        ],
        out_specs=pl.BlockSpec((tm, cout), lambda i: (i, 0)),
        compiler_params=parallel,
    )(y3.reshape(m, cout), scale2.reshape(1, cout), shift2.reshape(1, cout))

    out = out_flat.reshape(n, h2, w2, cout)
    # TODO(synk): final NHWC->NCHW permute is left to XLA; BatchNorm
    # running_mean/running_var buffer updates (training side effect) are not
    # modeled — only the forward output is produced.
    return jnp.transpose(out, (0, 3, 1, 2))


# --------------------------------------------------------------------------
# Deterministic parameter init (PyTorch weight layouts), kernel-layout
# preparation, and a pure-JAX reference
# --------------------------------------------------------------------------
def init_params(key, cin, cout):
    ks = jax.random.split(key, 8)
    wt = 0.1 * jax.random.normal(ks[0], (cin, cin, 2, 2), jnp.float32)   # ConvT (Cin, Cout=Cin, kH, kW)
    bt = 0.1 * jax.random.normal(ks[1], (cin,), jnp.float32)
    w1 = 0.1 * jax.random.normal(ks[2], (cout, cin, 1, 1), jnp.float32)  # Conv1x1 (Cout, Cin, 1, 1)
    g1 = 1.0 + 0.1 * jax.random.normal(ks[3], (cout,), jnp.float32)
    b1 = 0.1 * jax.random.normal(ks[4], (cout,), jnp.float32)
    w3 = 0.1 * jax.random.normal(ks[5], (cout, cout, 3, 3), jnp.float32)  # Conv3x3 (Cout, Cin=Cout, 3, 3)
    g2 = 1.0 + 0.1 * jax.random.normal(ks[6], (cout,), jnp.float32)
    b2 = 0.1 * jax.random.normal(ks[7], (cout,), jnp.float32)
    return wt, bt, w1, g1, b1, w3, g2, b2


def prepare_kernel_params(torch_params):
    wt, bt, w1, g1, b1, w3, g2, b2 = torch_params
    cout = w1.shape[0]
    w1k = jnp.transpose(w1[:, :, 0, 0], (1, 0))                  # (Cin, Cout)
    # fold ConvTranspose into the 1x1 conv: Wc[di,dj] = Wt[:,:,di,dj] @ W1k
    wc = jnp.einsum('pqij,qd->ijpd', wt, w1k)                    # (2, 2, Cin, Cout)
    wcat = jnp.concatenate([wc[:, 0], wc[:, 1]], axis=-1)        # (2, Cin, 2*Cout)
    bc = bt @ w1k                                                # (Cout,)
    bcat = jnp.concatenate([bc, bc]).reshape(1, 2 * cout)        # (1, 2*Cout)
    # 3x3 weights in im2col order: rows = (kh, kw, cin), cols = cout
    w_col = jnp.transpose(w3, (2, 3, 1, 0)).reshape(9 * cout, cout)
    return wcat, bcat, g1, b1, w_col, g2, b2


def reference_forward(x_nchw, params):
    wt, bt, w1, g1, b1, w3, g2, b2 = params
    x = jnp.transpose(x_nchw, (0, 2, 3, 1)).astype(jnp.float32)
    n, h, w, cin = x.shape
    cout = w1.shape[0]
    h2, w2 = 2 * h, 2 * w
    y1 = jnp.einsum('nijc,cdpq->nipjqd', x, wt).reshape(n, h2, w2, cin) + bt
    y2 = jnp.einsum('nhwc,dc->nhwd', y1, w1[:, :, 0, 0])
    m1 = jnp.mean(y2, axis=(0, 1, 2))
    v1 = jnp.mean((y2 - m1) ** 2, axis=(0, 1, 2))
    y2n = (y2 - m1) / jnp.sqrt(v1 + EPS) * g1 + b1
    xp = jnp.pad(y2n, ((0, 0), (1, 1), (1, 1), (0, 0)))
    y3 = jnp.zeros((n, h2, w2, cout), jnp.float32)
    for kh in range(3):
        for kw in range(3):
            y3 = y3 + jnp.einsum('nhwc,dc->nhwd',
                                 xp[:, kh:kh + h2, kw:kw + w2, :],
                                 w3[:, :, kh, kw])
    m2 = jnp.mean(y3, axis=(0, 1, 2))
    v2 = jnp.mean((y3 - m2) ** 2, axis=(0, 1, 2))
    out = jnp.maximum((y3 - m2) / jnp.sqrt(v2 + EPS) * g2 + b2, 0.0)
    return jnp.transpose(out, (0, 3, 1, 2))


if __name__ == "__main__":
    key = jax.random.PRNGKey(0)
    k_x, k_p = jax.random.split(key)
    N, CIN, COUT, H, W = 2, 8, 16, 16, 16

    x = jax.random.normal(k_x, (N, CIN, H, W), jnp.float32)   # NCHW like PyTorch
    torch_params = init_params(k_p, CIN, COUT)
    kernel_params = prepare_kernel_params(torch_params)

    out = jax.jit(upsample_forward)(x, kernel_params)
    out = jax.block_until_ready(out)
    assert out.shape == (N, COUT, 2 * H, 2 * W)

    ref = reference_forward(x, torch_params)
    if not bool(jnp.allclose(out, ref, atol=2e-3, rtol=2e-3)):
        raise AssertionError(
            f"mismatch, max abs err = {float(jnp.max(jnp.abs(out - ref)))}")

    print("KERNEL_OK")
</pallas_src>

<mosaic_0001>
module attributes {stable_mosaic.version = 11 : i64} {
  func.func @_upconv_1x1_kernel(%arg0: i32, %arg1: memref<512x8xf32, #tpu.memory_space<vmem>>, %arg2: memref<2x8x32xf32, #tpu.memory_space<vmem>>, %arg3: memref<1x32xf32, #tpu.memory_space<vmem>>, %arg4: memref<32x2x16x32xf32, #tpu.memory_space<vmem>>, %arg5: memref<1x8x32xf32, #tpu.memory_space<vmem>>, %arg6: memref<1x8x32xf32, #tpu.memory_space<vmem>>) attributes {dimension_semantics = [#tpu.dimension_semantics<parallel>], iteration_bounds = array<i64: 1>, scalar_prefetch = 0 : i64, scratch_operands = 0 : i64, tpu.core_type = #tpu.core_type<tc>, window_params = [{transform_indices = @transform_0, window_bounds = array<i64: 512, 8>}, {pipeline_mode = #tpu.pipeline_mode<synchronous>, transform_indices = @transform_1, window_bounds = array<i64: 2, 8, 32>}, {pipeline_mode = #tpu.pipeline_mode<synchronous>, transform_indices = @transform_2, window_bounds = array<i64: 1, 32>}, {transform_indices = @transform_3, window_bounds = array<i64: 32, 2, 16, 32>}, {transform_indices = @transform_4, window_bounds = array<i64: 1, 8, 32>}, {transform_indices = @transform_5, window_bounds = array<i64: 1, 8, 32>}]} {
    %c0 = arith.constant 0 : index
    %c0_0 = arith.constant 0 : index
    %0 = vector.load %arg1[%c0, %c0_0] : memref<512x8xf32, #tpu.memory_space<vmem>>, vector<512x8xf32>
    %c0_1 = arith.constant 0 : index
    %c0_2 = arith.constant 0 : index
    %1 = vector.load %arg3[%c0_1, %c0_2] : memref<1x32xf32, #tpu.memory_space<vmem>>, vector<1x32xf32>
    %cst = arith.constant 0.000000e+00 : f32
    %2 = vector.broadcast %cst : f32 to vector<8x32xf32>
    %cst_3 = arith.constant 0.000000e+00 : f32
    %3 = vector.broadcast %cst_3 : f32 to vector<8x32xf32>
    %c0_4 = arith.constant 0 : index
    %c0_5 = arith.constant 0 : index
    %c0_6 = arith.constant 0 : index
    %4 = vector.load %arg2[%c0_4, %c0_5, %c0_6] : memref<2x8x32xf32, #tpu.memory_space<vmem>>, vector<1x8x32xf32>
    %5 = vector.shape_cast %4 : vector<1x8x32xf32> to vector<8x32xf32>
    %cst_7 = arith.constant dense<0.000000e+00> : vector<512x32xf32>
    %6 = tpu.matmul %0, %5, %cst_7 {dimension_numbers = #tpu.dot_dimension_numbers<[1], [0], [0], [1], [0, 0, 1, 1], [], []>} : vector<512x8xf32>, vector<8x32xf32>, vector<512x32xf32> -> vector<512x32xf32>
    %7 = vector.broadcast %1 : vector<1x32xf32> to vector<512x32xf32>
    %8 = arith.addf %6, %7 : vector<512x32xf32>
    %9 = vector.shape_cast %8 : vector<512x32xf32> to vector<32x16x32xf32>
    %c0_8 = arith.constant 0 : index
    %c0_9 = arith.constant 0 : index
    %c0_10 = arith.constant 0 : index
    %c0_11 = arith.constant 0 : index
    %10 = vector.load %arg4[%c0_8, %c0_9, %c0_10, %c0_11] : memref<32x2x16x32xf32, #tpu.memory_space<vmem>>, vector<32x1x16x32xf32>
    %11 = vector.shape_cast %10 : vector<32x1x16x32xf32> to vector<32x16x32xf32>
    %12 = vector.shape_cast %9 : vector<32x16x32xf32> to vector<32x1x16x32xf32>
    tpu.vector_store %arg4[%c0_8, %c0_9, %c0_10, %c0_11], %12 {strides = array<i32>} : memref<32x2x16x32xf32, #tpu.memory_space<vmem>>, vector<32x1x16x32xf32>,
    %13 = vector.shape_cast %8 : vector<512x32xf32> to vector<64x8x32xf32>
    %cst_12 = arith.constant dense<0.000000e+00> : vector<8x32xf32>
    %14 = vector.multi_reduction <add>, %13, %cst_12 [0] : vector<64x8x32xf32> to vector<8x32xf32>
    %15 = arith.addf %2, %14 : vector<8x32xf32>
    %16 = arith.mulf %13, %13 : vector<64x8x32xf32>
    %cst_13 = arith.constant dense<0.000000e+00> : vector<8x32xf32>
    %17 = vector.multi_reduction <add>, %16, %cst_13 [0] : vector<64x8x32xf32> to vector<8x32xf32>
    %18 = arith.addf %3, %17 : vector<8x32xf32>
    %c1 = arith.constant 1 : index
    %c0_14 = arith.constant 0 : index
    %c0_15 = arith.constant 0 : index
    %19 = vector.load %arg2[%c1, %c0_14, %c0_15] : memref<2x8x32xf32, #tpu.memory_space<vmem>>, vector<1x8x32xf32>
    %20 = vector.shape_cast %19 : vector<1x8x32xf32> to vector<8x32xf32>
    %cst_16 = arith.constant dense<0.000000e+00> : vector<512x32xf32>
    %21 = tpu.matmul %0, %20, %cst_16 {dimension_numbers = #tpu.dot_dimension_numbers<[1], [0], [0], [1], [0, 0, 1, 1], [], []>} : vector<512x8xf32>, vector<8x32xf32>, vector<512x32xf32> -> vector<512x32xf32>
    %22 = vector.broadcast %1 : vector<1x32xf32> to vector<512x32xf32>
    %23 = arith.addf %21, %22 : vector<512x32xf32>
    %24 = vector.shape_cast %23 : vector<512x32xf32> to vector<32x16x32xf32>
    %c0_17 = arith.constant 0 : index
    %c1_18 = arith.constant 1 : index
    %c0_19 = arith.constant 0 : index
    %c0_20 = arith.constant 0 : index
    %25 = vector.load %arg4[%c0_17, %c1_18, %c0_19, %c0_20] : memref<32x2x16x32xf32, #tpu.memory_space<vmem>>, vector<32x1x16x32xf32>
    %26 = vector.shape_cast %25 : vector<32x1x16x32xf32> to vector<32x16x32xf32>
    %27 = vector.shape_cast %24 : vector<32x16x32xf32> to vector<32x1x16x32xf32>
    tpu.vector_store %arg4[%c0_17, %c1_18, %c0_19, %c0_20], %27 {strides = array<i32>} : memref<32x2x16x32xf32, #tpu.memory_space<vmem>>, vector<32x1x16x32xf32>,
    %28 = vector.shape_cast %23 : vector<512x32xf32> to vector<64x8x32xf32>
    %cst_21 = arith.constant dense<0.000000e+00> : vector<8x32xf32>
    %29 = vector.multi_reduction <add>, %28, %cst_21 [0] : vector<64x8x32xf32> to vector<8x32xf32>
    %30 = arith.addf %15, %29 : vector<8x32xf32>
    %31 = arith.mulf %28, %28 : vector<64x8x32xf32>
    %cst_22 = arith.constant dense<0.000000e+00> : vector<8x32xf32>
    %32 = vector.multi_reduction <add>, %31, %cst_22 [0] : vector<64x8x32xf32> to vector<8x32xf32>
    %33 = arith.addf %18, %32 : vector<8x32xf32>
    %c0_23 = arith.constant 0 : index
    %c0_24 = arith.constant 0 : index
    %c0_25 = arith.constant 0 : index
    %34 = vector.load %arg5[%c0_23, %c0_24, %c0_25] : memref<1x8x32xf32, #tpu.memory_space<vmem>>, vector<1x8x32xf32>
    %35 = vector.shape_cast %34 : vector<1x8x32xf32> to vector<8x32xf32>
    %36 = vector.shape_cast %30 : vector<8x32xf32> to vector<1x8x32xf32>
    tpu.vector_store %arg5[%c0_23, %c0_24, %c0_25], %36 {strides = array<i32>} : memref<1x8x32xf32, #tpu.memory_space<vmem>>, vector<1x8x32xf32>,
    %c0_26 = arith.constant 0 : index
    %c0_27 = arith.constant 0 : index
    %c0_28 = arith.constant 0 : index
    %37 = vector.load %arg6[%c0_26, %c0_27, %c0_28] : memref<1x8x32xf32, #tpu.memory_space<vmem>>, vector<1x8x32xf32>
    %38 = vector.shape_cast %37 : vector<1x8x32xf32> to vector<8x32xf32>
    %39 = vector.shape_cast %33 : vector<8x32xf32> to vector<1x8x32xf32>
    tpu.vector_store %arg6[%c0_26, %c0_27, %c0_28], %39 {strides = array<i32>} : memref<1x8x32xf32, #tpu.memory_space<vmem>>, vector<1x8x32xf32>,
    return
  }
  func.func @transform_0(%arg0: i32) -> (i32, i32) {
    %c0_i32 = arith.constant 0 : i32
    %c0_i32_0 = arith.constant 0 : i32
    return %arg0, %c0_i32 : i32, i32
  }
  func.func @transform_1(%arg0: i32) -> (i32, i32, i32) {
    %c0_i32 = arith.constant 0 : i32
    %c0_i32_0 = arith.constant 0 : i32
    %c0_i32_1 = arith.constant 0 : i32
    %c0_i32_2 = arith.constant 0 : i32
    return %c0_i32, %c0_i32_0, %c0_i32_1 : i32, i32, i32
  }
  func.func @transform_2(%arg0: i32) -> (i32, i32) {
    %c0_i32 = arith.constant 0 : i32
    %c0_i32_0 = arith.constant 0 : i32
    %c0_i32_1 = arith.constant 0 : i32
    return %c0_i32, %c0_i32_0 : i32, i32
  }
  func.func @transform_3(%arg0: i32) -> (i32, i32, i32, i32) {
    %c0_i32 = arith.constant 0 : i32
    %c0_i32_0 = arith.constant 0 : i32
    %c0_i32_1 = arith.constant 0 : i32
    %c0_i32_2 = arith.constant 0 : i32
    return %arg0, %c0_i32, %c0_i32_0, %c0_i32_1 : i32, i32, i32, i32
  }
  func.func @transform_4(%arg0: i32) -> (i32, i32, i32) {
    %c0_i32 = arith.constant 0 : i32
    %c0_i32_0 = arith.constant 0 : i32
    %c0_i32_1 = arith.constant 0 : i32
    return %arg0, %c0_i32, %c0_i32_0 : i32, i32, i32
  }
  func.func @transform_5(%arg0: i32) -> (i32, i32, i32) {
    %c0_i32 = arith.constant 0 : i32
    %c0_i32_0 = arith.constant 0 : i32
    %c0_i32_1 = arith.constant 0 : i32
    return %arg0, %c0_i32, %c0_i32_0 : i32, i32, i32
  }
}

module attributes {stable_mosaic.version = 11 : i64} {
  func.func @_bn_relu_kernel(%arg0: i32, %arg1: memref<2048x16xf32, #tpu.memory_space<vmem>>, %arg2: memref<1x16xf32, #tpu.memory_space<vmem>>, %arg3: memref<1x16xf32, #tpu.memory_space<vmem>>, %arg4: memref<2048x16xf32, #tpu.memory_space<vmem>>) attributes {dimension_semantics = [#tpu.dimension_semantics<parallel>], iteration_bounds = array<i64: 1>, scalar_prefetch = 0 : i64, scratch_operands = 0 : i64, tpu.core_type = #tpu.core_type<tc>, window_params = [{transform_indices = @transform_0, window_bounds = array<i64: 2048, 16>}, {pipeline_mode = #tpu.pipeline_mode<synchronous>, transform_indices = @transform_1, window_bounds = array<i64: 1, 16>}, {pipeline_mode = #tpu.pipeline_mode<synchronous>, transform_indices = @transform_2, window_bounds = array<i64: 1, 16>}, {transform_indices = @transform_3, window_bounds = array<i64: 2048, 16>}]} {
    %c0 = arith.constant 0 : index
    %c0_0 = arith.constant 0 : index
    %0 = vector.load %arg1[%c0, %c0_0] : memref<2048x16xf32, #tpu.memory_space<vmem>>, vector<2048x16xf32>
    %c0_1 = arith.constant 0 : index
    %c0_2 = arith.constant 0 : index
    %1 = vector.load %arg2[%c0_1, %c0_2] : memref<1x16xf32, #tpu.memory_space<vmem>>, vector<1x16xf32>
    %2 = vector.broadcast %1 : vector<1x16xf32> to vector<2048x16xf32>
    %3 = arith.mulf %0, %2 : vector<2048x16xf32>
    %c0_3 = arith.constant 0 : index
    %c0_4 = arith.constant 0 : index
    %4 = vector.load %arg3[%c0_3, %c0_4] : memref<1x16xf32, #tpu.memory_space<vmem>>, vector<1x16xf32>
    %5 = vector.broadcast %4 : vector<1x16xf32> to vector<2048x16xf32>
    %6 = arith.addf %3, %5 : vector<2048x16xf32>
    %cst = arith.constant 0.000000e+00 : f32
    %7 = vector.broadcast %cst : f32 to vector<2048x16xf32>
    %8 = arith.maximumf %6, %7 : vector<2048x16xf32>
    %c0_5 = arith.constant 0 : index
    %c0_6 = arith.constant 0 : index
    %9 = vector.load %arg4[%c0_5, %c0_6] : memref<2048x16xf32, #tpu.memory_space<vmem>>, vector<2048x16xf32>
    tpu.vector_store %arg4[%c0_5, %c0_6], %8 {strides = array<i32>} : memref<2048x16xf32, #tpu.memory_space<vmem>>, vector<2048x16xf32>,
    return
  }
  func.func @transform_0(%arg0: i32) -> (i32, i32) {
    %c0_i32 = arith.constant 0 : i32
    %c0_i32_0 = arith.constant 0 : i32
    return %arg0, %c0_i32 : i32, i32
  }
  func.func @transform_1(%arg0: i32) -> (i32, i32) {
    %c0_i32 = arith.constant 0 : i32
    %c0_i32_0 = arith.constant 0 : i32
    %c0_i32_1 = arith.constant 0 : i32
    return %c0_i32, %c0_i32_0 : i32, i32
  }
  func.func @transform_2(%arg0: i32) -> (i32, i32) {
    %c0_i32 = arith.constant 0 : i32
    %c0_i32_0 = arith.constant 0 : i32
    %c0_i32_1 = arith.constant 0 : i32
    return %c0_i32, %c0_i32_0 : i32, i32
  }
  func.func @transform_3(%arg0: i32) -> (i32, i32) {
    %c0_i32 = arith.constant 0 : i32
    %c0_i32_0 = arith.constant 0 : i32
    return %arg0, %c0_i32 : i32, i32
  }
}

module attributes {stable_mosaic.version = 11 : i64} {
  func.func @_conv3x3_bn_kernel(%arg0: i32, %arg1: memref<1x32x32x16xf32, #tpu.memory_space<vmem>>, %arg2: memref<1x16xf32, #tpu.memory_space<vmem>>, %arg3: memref<1x16xf32, #tpu.memory_space<vmem>>, %arg4: memref<144x16xf32, #tpu.memory_space<vmem>>, %arg5: memref<1x32x32x16xf32, #tpu.memory_space<vmem>>, %arg6: memref<1x8x16xf32, #tpu.memory_space<vmem>>, %arg7: memref<1x8x16xf32, #tpu.memory_space<vmem>>, %arg8: memref<34x34x16xf32, #tpu.memory_space<vmem>>) attributes {dimension_semantics = [#tpu.dimension_semantics<parallel>], iteration_bounds = array<i64: 2>, scalar_prefetch = 0 : i64, scratch_operands = 1 : i64, tpu.core_type = #tpu.core_type<tc>, window_params = [{transform_indices = @transform_0, window_bounds = array<i64: 1, 32, 32, 16>}, {pipeline_mode = #tpu.pipeline_mode<synchronous>, transform_indices = @transform_1, window_bounds = array<i64: 1, 16>}, {pipeline_mode = #tpu.pipeline_mode<synchronous>, transform_indices = @transform_2, window_bounds = array<i64: 1, 16>}, {pipeline_mode = #tpu.pipeline_mode<synchronous>, transform_indices = @transform_3, window_bounds = array<i64: 144, 16>}, {transform_indices = @transform_4, window_bounds = array<i64: 1, 32, 32, 16>}, {transform_indices = @transform_5, window_bounds = array<i64: 1, 8, 16>}, {transform_indices = @transform_6, window_bounds = array<i64: 1, 8, 16>}]} {
    %cst = arith.constant 0.000000e+00 : f32
    %0 = vector.broadcast %cst : f32 to vector<34x34x16xf32>
    %c0 = arith.constant 0 : index
    %c0_0 = arith.constant 0 : index
    %c0_1 = arith.constant 0 : index
    %1 = vector.load %arg8[%c0, %c0_0, %c0_1] : memref<34x34x16xf32, #tpu.memory_space<vmem>>, vector<34x34x16xf32>
    tpu.vector_store %arg8[%c0, %c0_0, %c0_1], %0 {strides = array<i32>} : memref<34x34x16xf32, #tpu.memory_space<vmem>>, vector<34x34x16xf32>,
    %c0_2 = arith.constant 0 : index
    %c0_3 = arith.constant 0 : index
    %c0_4 = arith.constant 0 : index
    %c0_5 = arith.constant 0 : index
    %2 = vector.load %arg1[%c0_2, %c0_3, %c0_4, %c0_5] : memref<1x32x32x16xf32, #tpu.memory_space<vmem>>, vector<1x32x32x16xf32>
    %3 = vector.shape_cast %2 : vector<1x32x32x16xf32> to vector<32x32x16xf32>
    %c0_6 = arith.constant 0 : index
    %c0_7 = arith.constant 0 : index
    %4 = vector.load %arg2[%c0_6, %c0_7] : memref<1x16xf32, #tpu.memory_space<vmem>>, vector<1x16xf32>
    %5 = vector.shape_cast %4 : vector<1x16xf32> to vector<1x1x16xf32>
    %6 = vector.broadcast %5 : vector<1x1x16xf32> to vector<32x32x16xf32>
    %7 = arith.mulf %3, %6 : vector<32x32x16xf32>
    %c0_8 = arith.constant 0 : index
    %c0_9 = arith.constant 0 : index
    %8 = vector.load %arg3[%c0_8, %c0_9] : memref<1x16xf32, #tpu.memory_space<vmem>>, vector<1x16xf32>
    %9 = vector.shape_cast %8 : vector<1x16xf32> to vector<1x1x16xf32>
    %10 = vector.broadcast %9 : vector<1x1x16xf32> to vector<32x32x16xf32>
    %11 = arith.addf %7, %10 : vector<32x32x16xf32>
    %c1 = arith.constant 1 : index
    %c1_10 = arith.constant 1 : index
    %c0_11 = arith.constant 0 : index
    %12 = vector.load %arg8[%c1, %c1_10, %c0_11] : memref<34x34x16xf32, #tpu.memory_space<vmem>>, vector<32x32x16xf32>
    tpu.vector_store %arg8[%c1, %c1_10, %c0_11], %11 {strides = array<i32>} : memref<34x34x16xf32, #tpu.memory_space<vmem>>, vector<32x32x16xf32>,
    %c0_12 = arith.constant 0 : index
    %c0_13 = arith.constant 0 : index
    %c0_14 = arith.constant 0 : index
    %13 = vector.load %arg8[%c0_12, %c0_13, %c0_14] : memref<34x34x16xf32, #tpu.memory_space<vmem>>, vector<32x32x16xf32>
    %14 = vector.shape_cast %13 : vector<32x32x16xf32> to vector<1024x16xf32>
    %c0_15 = arith.constant 0 : index
    %c1_16 = arith.constant 1 : index
    %c0_17 = arith.constant 0 : index
    %15 = vector.load %arg8[%c0_15, %c1_16, %c0_17] : memref<34x34x16xf32, #tpu.memory_space<vmem>>, vector<32x32x16xf32>
    %16 = vector.shape_cast %15 : vector<32x32x16xf32> to vector<1024x16xf32>
    %c0_18 = arith.constant 0 : index
    %c2 = arith.constant 2 : index
    %c0_19 = arith.constant 0 : index
    %17 = vector.load %arg8[%c0_18, %c2, %c0_19] : memref<34x34x16xf32, #tpu.memory_space<vmem>>, vector<32x32x16xf32>
    %18 = vector.shape_cast %17 : vector<32x32x16xf32> to vector<1024x16xf32>
    %c1_20 = arith.constant 1 : index
    %c0_21 = arith.constant 0 : index
    %c0_22 = arith.constant 0 : index
    %19 = vector.load %arg8[%c1_20, %c0_21, %c0_22] : memref<34x34x16xf32, #tpu.memory_space<vmem>>, vector<32x32x16xf32>
    %20 = vector.shape_cast %19 : vector<32x32x16xf32> to vector<1024x16xf32>
    %c1_23 = arith.constant 1 : index
    %c1_24 = arith.constant 1 : index
    %c0_25 = arith.constant 0 : index
    %21 = vector.load %arg8[%c1_23, %c1_24, %c0_25] : memref<34x34x16xf32, #tpu.memory_space<vmem>>, vector<32x32x16xf32>
    %22 = vector.shape_cast %21 : vector<32x32x16xf32> to vector<1024x16xf32>
    %c1_26 = arith.constant 1 : index
    %c2_27 = arith.constant 2 : index
    %c0_28 = arith.constant 0 : index
    %23 = vector.load %arg8[%c1_26, %c2_27, %c0_28] : memref<34x34x16xf32, #tpu.memory_space<vmem>>, vector<32x32x16xf32>
    %24 = vector.shape_cast %23 : vector<32x32x16xf32> to vector<1024x16xf32>
    %c2_29 = arith.constant 2 : index
    %c0_30 = arith.constant 0 : index
    %c0_31 = arith.constant 0 : index
    %25 = vector.load %arg8[%c2_29, %c0_30, %c0_31] : memref<34x34x16xf32, #tpu.memory_space<vmem>>, vector<32x32x16xf32>
    %26 = vector.shape_cast %25 : vector<32x32x16xf32> to vector<1024x16xf32>
    %c2_32 = arith.constant 2 : index
    %c1_33 = arith.constant 1 : index
    %c0_34 = arith.constant 0 : index
    %27 = vector.load %arg8[%c2_32, %c1_33, %c0_34] : memref<34x34x16xf32, #tpu.memory_space<vmem>>, vector<32x32x16xf32>
    %28 = vector.shape_cast %27 : vector<32x32x16xf32> to vector<1024x16xf32>
    %c2_35 = arith.constant 2 : index
    %c2_36 = arith.constant 2 : index
    %c0_37 = arith.constant 0 : index
    %29 = vector.load %arg8[%c2_35, %c2_36, %c0_37] : memref<34x34x16xf32, #tpu.memory_space<vmem>>, vector<32x32x16xf32>
    %30 = vector.shape_cast %29 : vector<32x32x16xf32> to vector<1024x16xf32>
    %31 = tpu.concatenate %14, %16, %18, %20, %22, %24, %26, %28, %30 in 1 : vector<1024x16xf32>, vector<1024x16xf32>, vector<1024x16xf32>, vector<1024x16xf32>, vector<1024x16xf32>, vector<1024x16xf32>, vector<1024x16xf32>, vector<1024x16xf32>, vector<1024x16xf32> -> vector<1024x144xf32>
    %c0_38 = arith.constant 0 : index
    %c0_39 = arith.constant 0 : index
    %32 = vector.load %arg4[%c0_38, %c0_39] : memref<144x16xf32, #tpu.memory_space<vmem>>, vector<144x16xf32>
    %cst_40 = arith.constant dense<0.000000e+00> : vector<1024x16xf32>
    %33 = tpu.matmul %31, %32, %cst_40 {dimension_numbers = #tpu.dot_dimension_numbers<[1], [0], [0], [1], [0, 0, 1, 1], [], []>} : vector<1024x144xf32>, vector<144x16xf32>, vector<1024x16xf32> -> vector<1024x16xf32>
    %34 = vector.shape_cast %33 : vector<1024x16xf32> to vector<32x32x16xf32>
    %c0_41 = arith.constant 0 : index
    %c0_42 = arith.constant 0 : index
    %c0_43 = arith.constant 0 : index
    %c0_44 = arith.constant 0 : index
    %35 = vector.load %arg5[%c0_41, %c0_42, %c0_43, %c0_44] : memref<1x32x32x16xf32, #tpu.memory_space<vmem>>, vector<1x32x32x16xf32>
    %36 = vector.shape_cast %35 : vector<1x32x32x16xf32> to vector<32x32x16xf32>
    %37 = vector.shape_cast %34 : vector<32x32x16xf32> to vector<1x32x32x16xf32>
    tpu.vector_store %arg5[%c0_41, %c0_42, %c0_43, %c0_44], %37 {strides = array<i32>} : memref<1x32x32x16xf32, #tpu.memory_space<vmem>>, vector<1x32x32x16xf32>,
    %38 = vector.shape_cast %33 : vector<1024x16xf32> to vector<128x8x16xf32>
    %cst_45 = arith.constant dense<0.000000e+00> : vector<8x16xf32>
    %39 = vector.multi_reduction <add>, %38, %cst_45 [0] : vector<128x8x16xf32> to vector<8x16xf32>
    %c0_46 = arith.constant 0 : index
    %c0_47 = arith.constant 0 : index
    %c0_48 = arith.constant 0 : index
    %40 = vector.load %arg6[%c0_46, %c0_47, %c0_48] : memref<1x8x16xf32, #tpu.memory_space<vmem>>, vector<1x8x16xf32>
    %41 = vector.shape_cast %40 : vector<1x8x16xf32> to vector<8x16xf32>
    %42 = vector.shape_cast %39 : vector<8x16xf32> to vector<1x8x16xf32>
    tpu.vector_store %arg6[%c0_46, %c0_47, %c0_48], %42 {strides = array<i32>} : memref<1x8x16xf32, #tpu.memory_space<vmem>>, vector<1x8x16xf32>,
    %43 = arith.mulf %38, %38 : vector<128x8x16xf32>
    %cst_49 = arith.constant dense<0.000000e+00> : vector<8x16xf32>
    %44 = vector.multi_reduction <add>, %43, %cst_49 [0] : vector<128x8x16xf32> to vector<8x16xf32>
    %c0_50 = arith.constant 0 : index
    %c0_51 = arith.constant 0 : index
    %c0_52 = arith.constant 0 : index
    %45 = vector.load %arg7[%c0_50, %c0_51, %c0_52] : memref<1x8x16xf32, #tpu.memory_space<vmem>>, vector<1x8x16xf32>
    %46 = vector.shape_cast %45 : vector<1x8x16xf32> to vector<8x16xf32>
    %47 = vector.shape_cast %44 : vector<8x16xf32> to vector<1x8x16xf32>
    tpu.vector_store %arg7[%c0_50, %c0_51, %c0_52], %47 {strides = array<i32>} : memref<1x8x16xf32, #tpu.memory_space<vmem>>, vector<1x8x16xf32>,
    return
  }
  func.func @transform_0(%arg0: i32) -> (i32, i32, i32, i32) {
    %c0_i32 = arith.constant 0 : i32
    %c0_i32_0 = arith.constant 0 : i32
    %c0_i32_1 = arith.constant 0 : i32
    %c0_i32_2 = arith.constant 0 : i32
    return %arg0, %c0_i32, %c0_i32_0, %c0_i32_1 : i32, i32, i32, i32
  }
  func.func @transform_1(%arg0: i32) -> (i32, i32) {
    %c0_i32 = arith.constant 0 : i32
    %c0_i32_0 = arith.constant 0 : i32
    %c0_i32_1 = arith.constant 0 : i32
    return %c0_i32, %c0_i32_0 : i32, i32
  }
  func.func @transform_2(%arg0: i32) -> (i32, i32) {
    %c0_i32 = arith.constant 0 : i32
    %c0_i32_0 = arith.constant 0 : i32
    %c0_i32_1 = arith.constant 0 : i32
    return %c0_i32, %c0_i32_0 : i32, i32
  }
  func.func @transform_3(%arg0: i32) -> (i32, i32) {
    %c0_i32 = arith.constant 0 : i32
    %c0_i32_0 = arith.constant 0 : i32
    %c0_i32_1 = arith.constant 0 : i32
    return %c0_i32, %c0_i32_0 : i32, i32
  }
  func.func @transform_4(%arg0: i32) -> (i32, i32, i32, i32) {
    %c0_i32 = arith.constant 0 : i32
    %c0_i32_0 = arith.constant 0 : i32
    %c0_i32_1 = arith.constant 0 : i32
    %c0_i32_2 = arith.constant 0 : i32
    return %arg0, %c0_i32, %c0_i32_0, %c0_i32_1 : i32, i32, i32, i32
  }
  func.func @transform_5(%arg0: i32) -> (i32, i32, i32) {
    %c0_i32 = arith.constant 0 : i32
    %c0_i32_0 = arith.constant 0 : i32
    %c0_i32_1 = arith.constant 0 : i32
    return %arg0, %c0_i32, %c0_i32_0 : i32, i32, i32
  }
  func.func @transform_6(%arg0: i32) -> (i32, i32, i32) {
    %c0_i32 = arith.constant 0 : i32
    %c0_i32_0 = arith.constant 0 : i32
    %c0_i32_1 = arith.constant 0 : i32
    return %arg0, %c0_i32, %c0_i32_0 : i32, i32, i32
  }
}

</mosaic_0001>

<llo_original>
// kernel: upsample_forward.5
$region0: #{upsample_forward.5}
  #allocation0 [shape = 'u32[]', space=smem, size = 0x4, offset = 0x4, fixed_abs, tag = 'smem constant byte address 0x4 - core index']
  #allocation1 [shape = 'u32[144,128]{1,0:T(1,128)}', space=vmem, size = 0x12000, scoped, tag = 'internal scratch']
  %s0 = inlined_call_operand.vmem [shape: f32[2048,16], index: 0, kind: input, shape index: {}]
  %s1 = inlined_call_operand.vmem [shape: f32[1,16], index: 1, kind: input, shape index: {}]
  %s2 = inlined_call_operand.vmem [shape: f32[1,16], index: 2, kind: input, shape index: {}]
  %s3 = inlined_call_operand.vmem [shape: f32[2048,16], index: 3, kind: output, shape index: {}]
  %s4 = sld [smem:[#allocation0]]
  $region22: #{upsample_forward.5} parent=0
    _
  %s6 = ssub.s32 1, %s4
  %s7 = scalar_select 0, %s6, %s4
  // Predicated region
  $region2: #{upsample_forward.5} parent=0 // pred_check
    _
  $region3: #{upsample_forward.5} parent=0 // pred_check_branch
    %9 = sbr.rel (0) target = $region5
  $region4: #{upsample_forward.5} parent=0 // pred_region
    _
  $region5: #{upsample_forward.5} parent=0 // pred_fallthru
    _
  // Predicated region
  $region6: #{upsample_forward.5} parent=0 // pred_check
    _
  $region7: #{upsample_forward.5} parent=0 // pred_check_branch
    %11 = sbr.rel (0) target = $region9
  $region8: #{upsample_forward.5} parent=0 // pred_region
    _
  $region9: #{upsample_forward.5} parent=0 // pred_fallthru
    _
  // Predicated region
  $region10: #{upsample_forward.5} parent=0 // pred_check
    _
  $region11: #{upsample_forward.5} parent=0 // pred_check_branch
    %13 = sbr.rel (0) target = $region13
  $region12: #{upsample_forward.5} parent=0 // pred_region
    _
  $region13: #{upsample_forward.5} parent=0 // pred_fallthru
    _
  %v14 = vld [vmem:[%s0] sm:$0xff]
  %v15 = vld [vmem:[%s0 + $0x8] sm:$0xff]
  %v16 = vld [vmem:[%s0 + $0x10] sm:$0xff]
  %v17 = vld [vmem:[%s0 + $0x18] sm:$0xff]
  %v18 = vld [vmem:[%s0 + $0x20] sm:$0xff]
  %v19 = vld [vmem:[%s0 + $0x28] sm:$0xff]
  %v20 = vld [vmem:[%s0 + $0x30] sm:$0xff]
  %v21 = vld [vmem:[%s0 + $0x38] sm:$0xff]
  %v22 = vld [vmem:[%s0 + $0x40] sm:$0xff]
  %v23 = vld [vmem:[%s0 + $0x48] sm:$0xff]
  %v24 = vld [vmem:[%s0 + $0x50] sm:$0xff]
  %v25 = vld [vmem:[%s0 + $0x58] sm:$0xff]
  %v26 = vld [vmem:[%s0 + $0x60] sm:$0xff]
  %v27 = vld [vmem:[%s0 + $0x68] sm:$0xff]
  %v28 = vld [vmem:[%s0 + $0x70] sm:$0xff]
  %v29 = vld [vmem:[%s0 + $0x78] sm:$0xff]
  %v30 = vld [vmem:[%s0 + $0x80] sm:$0xff]
  %v31 = vld [vmem:[%s0 + $0x88] sm:$0xff]
  %v32 = vld [vmem:[%s0 + $0x90] sm:$0xff]
  %v33 = vld [vmem:[%s0 + $0x98] sm:$0xff]
  %v34 = vld [vmem:[%s0 + $0xa0] sm:$0xff]
  %v35 = vld [vmem:[%s0 + $0xa8] sm:$0xff]
  %v36 = vld [vmem:[%s0 + $0xb0] sm:$0xff]
  %v37 = vld [vmem:[%s0 + $0xb8] sm:$0xff]
  %v38 = vld [vmem:[%s0 + $0xc0] sm:$0xff]
  %v39 = vld [vmem:[%s0 + $0xc8] sm:$0xff]
  %v40 = vld [vmem:[%s0 + $0xd0] sm:$0xff]
  %v41 = vld [vmem:[%s0 + $0xd8] sm:$0xff]
  %v42 = vld [vmem:[%s0 + $0xe0] sm:$0xff]
  %v43 = vld [vmem:[%s0 + $0xe8] sm:$0xff]
  %v44 = vld [vmem:[%s0 + $0xf0] sm:$0xff]
  %v45 = vld [vmem:[%s0 + $0xf8] sm:$0xff]
  %v46 = vld [vmem:[%s0 + $0x100] sm:$0xff]
  %v47 = vld [vmem:[%s0 + $0x108] sm:$0xff]
  %v48 = vld [vmem:[%s0 + $0x110] sm:$0xff]
  %v49 = vld [vmem:[%s0 + $0x118] sm:$0xff]
  %v50 = vld [vmem:[%s0 + $0x120] sm:$0xff]
  %v51 = vld [vmem:[%s0 + $0x128] sm:$0xff]
  %v52 = vld [vmem:[%s0 + $0x130] sm:$0xff]
  %v53 = vld [vmem:[%s0 + $0x138] sm:$0xff]
  %v54 = vld [vmem:[%s0 + $0x140] sm:$0xff]
  %v55 = vld [vmem:[%s0 + $0x148] sm:$0xff]
  %v56 = vld [vmem:[%s0 + $0x150] sm:$0xff]
  %v57 = vld [vmem:[%s0 + $0x158] sm:$0xff]
  %v58 = vld [vmem:[%s0 + $0x160] sm:$0xff]
  %v59 = vld [vmem:[%s0 + $0x168] sm:$0xff]
  %v60 = vld [vmem:[%s0 + $0x170] sm:$0xff]
  %v61 = vld [vmem:[%s0 + $0x178] sm:$0xff]
  %v62 = vld [vmem:[%s0 + $0x180] sm:$0xff]
  %v63 = vld [vmem:[%s0 + $0x188] sm:$0xff]
  %v64 = vld [vmem:[%s0 + $0x190] sm:$0xff]
  %v65 = vld [vmem:[%s0 + $0x198] sm:$0xff]
  %v66 = vld [vmem:[%s0 + $0x1a0] sm:$0xff]
  %v67 = vld [vmem:[%s0 + $0x1a8] sm:$0xff]
  %v68 = vld [vmem:[%s0 + $0x1b0] sm:$0xff]
  %v69 = vld [vmem:[%s0 + $0x1b8] sm:$0xff]
  %v70 = vld [vmem:[%s0 + $0x1c0] sm:$0xff]
  %v71 = vld [vmem:[%s0 + $0x1c8] sm:$0xff]
  %v72 = vld [vmem:[%s0 + $0x1d0] sm:$0xff]
  %v73 = vld [vmem:[%s0 + $0x1d8] sm:$0xff]
  %v74 = vld [vmem:[%s0 + $0x1e0] sm:$0xff]
  %v75 = vld [vmem:[%s0 + $0x1e8] sm:$0xff]
  %v76 = vld [vmem:[%s0 + $0x1f0] sm:$0xff]
  %v77 = vld [vmem:[%s0 + $0x1f8] sm:$0xff]
  %v78 = vld [vmem:[%s0 + $0x200] sm:$0xff]
  %v79 = vld [vmem:[%s0 + $0x208] sm:$0xff]
  %v80 = vld [vmem:[%s0 + $0x210] sm:$0xff]
  %v81 = vld [vmem:[%s0 + $0x218] sm:$0xff]
  %v82 = vld [vmem:[%s0 + $0x220] sm:$0xff]
  %v83 = vld [vmem:[%s0 + $0x228] sm:$0xff]
  %v84 = vld [vmem:[%s0 + $0x230] sm:$0xff]
  %v85 = vld [vmem:[%s0 + $0x238] sm:$0xff]
  %v86 = vld [vmem:[%s0 + $0x240] sm:$0xff]
  %v87 = vld [vmem:[%s0 + $0x248] sm:$0xff]
  %v88 = vld [vmem:[%s0 + $0x250] sm:$0xff]
  %v89 = vld [vmem:[%s0 + $0x258] sm:$0xff]
  %v90 = vld [vmem:[%s0 + $0x260] sm:$0xff]
  %v91 = vld [vmem:[%s0 + $0x268] sm:$0xff]
  %v92 = vld [vmem:[%s0 + $0x270] sm:$0xff]
  %v93 = vld [vmem:[%s0 + $0x278] sm:$0xff]
  %v94 = vld [vmem:[%s0 + $0x280] sm:$0xff]
  %v95 = vld [vmem:[%s0 + $0x288] sm:$0xff]
  %v96 = vld [vmem:[%s0 + $0x290] sm:$0xff]
  %v97 = vld [vmem:[%s0 + $0x298] sm:$0xff]
  %v98 = vld [vmem:[%s0 + $0x2a0] sm:$0xff]
  %v99 = vld [vmem:[%s0 + $0x2a8] sm:$0xff]
  %v100 = vld [vmem:[%s0 + $0x2b0] sm:$0xff]
  %v101 = vld [vmem:[%s0 + $0x2b8] sm:$0xff]
  %v102 = vld [vmem:[%s0 + $0x2c0] sm:$0xff]
  %v103 = vld [vmem:[%s0 + $0x2c8] sm:$0xff]
  %v104 = vld [vmem:[%s0 + $0x2d0] sm:$0xff]
  %v105 = vld [vmem:[%s0 + $0x2d8] sm:$0xff]
  %v106 = vld [vmem:[%s0 + $0x2e0] sm:$0xff]
  %v107 = vld [vmem:[%s0 + $0x2e8] sm:$0xff]
  %v108 = vld [vmem:[%s0 + $0x2f0] sm:$0xff]
  %v109 = vld [vmem:[%s0 + $0x2f8] sm:$0xff]
  %v110 = vld [vmem:[%s0 + $0x300] sm:$0xff]
  %v111 = vld [vmem:[%s0 + $0x308] sm:$0xff]
  %v112 = vld [vmem:[%s0 + $0x310] sm:$0xff]
  %v113 = vld [vmem:[%s0 + $0x318] sm:$0xff]
  %v114 = vld [vmem:[%s0 + $0x320] sm:$0xff]
  %v115 = vld [vmem:[%s0 + $0x328] sm:$0xff]
  %v116 = vld [vmem:[%s0 + $0x330] sm:$0xff]
  %v117 = vld [vmem:[%s0 + $0x338] sm:$0xff]
  %v118 = vld [vmem:[%s0 + $0x340] sm:$0xff]
  %v119 = vld [vmem:[%s0 + $0x348] sm:$0xff]
  %v120 = vld [vmem:[%s0 + $0x350] sm:$0xff]
  %v121 = vld [vmem:[%s0 + $0x358] sm:$0xff]
  %v122 = vld [vmem:[%s0 + $0x360] sm:$0xff]
  %v123 = vld [vmem:[%s0 + $0x368] sm:$0xff]
  %v124 = vld [vmem:[%s0 + $0x370] sm:$0xff]
  %v125 = vld [vmem:[%s0 + $0x378] sm:$0xff]
  %v126 = vld [vmem:[%s0 + $0x380] sm:$0xff]
  %v127 = vld [vmem:[%s0 + $0x388] sm:$0xff]
  %v128 = vld [vmem:[%s0 + $0x390] sm:$0xff]
  %v129 = vld [vmem:[%s0 + $0x398] sm:$0xff]
  %v130 = vld [vmem:[%s0 + $0x3a0] sm:$0xff]
  %v131 = vld [vmem:[%s0 + $0x3a8] sm:$0xff]
  %v132 = vld [vmem:[%s0 + $0x3b0] sm:$0xff]
  %v133 = vld [vmem:[%s0 + $0x3b8] sm:$0xff]
  %v134 = vld [vmem:[%s0 + $0x3c0] sm:$0xff]
  %v135 = vld [vmem:[%s0 + $0x3c8] sm:$0xff]
  %v136 = vld [vmem:[%s0 + $0x3d0] sm:$0xff]
  %v137 = vld [vmem:[%s0 + $0x3d8] sm:$0xff]
  %v138 = vld [vmem:[%s0 + $0x3e0] sm:$0xff]
  %v139 = vld [vmem:[%s0 + $0x3e8] sm:$0xff]
  %v140 = vld [vmem:[%s0 + $0x3f0] sm:$0xff]
  %v141 = vld [vmem:[%s0 + $0x3f8] sm:$0xff]
  %v142 = vld [vmem:[%s0 + $0x400] sm:$0xff]
  %v143 = vld [vmem:[%s0 + $0x408] sm:$0xff]
  %v144 = vld [vmem:[%s0 + $0x410] sm:$0xff]
  %v145 = vld [vmem:[%s0 + $0x418] sm:$0xff]
  %v146 = vld [vmem:[%s0 + $0x420] sm:$0xff]
  %v147 = vld [vmem:[%s0 + $0x428] sm:$0xff]
  %v148 = vld [vmem:[%s0 + $0x430] sm:$0xff]
  %v149 = vld [vmem:[%s0 + $0x438] sm:$0xff]
  %v150 = vld [vmem:[%s0 + $0x440] sm:$0xff]
  %v151 = vld [vmem:[%s0 + $0x448] sm:$0xff]
  %v152 = vld [vmem:[%s0 + $0x450] sm:$0xff]
  %v153 = vld [vmem:[%s0 + $0x458] sm:$0xff]
  %v154 = vld [vmem:[%s0 + $0x460] sm:$0xff]
  %v155 = vld [vmem:[%s0 + $0x468] sm:$0xff]
  %v156 = vld [vmem:[%s0 + $0x470] sm:$0xff]
  %v157 = vld [vmem:[%s0 + $0x478] sm:$0xff]
  %v158 = vld [vmem:[%s0 + $0x480] sm:$0xff]
  %v159 = vld [vmem:[%s0 + $0x488] sm:$0xff]
  %v160 = vld [vmem:[%s0 + $0x490] sm:$0xff]
  %v161 = vld [vmem:[%s0 + $0x498] sm:$0xff]
  %v162 = vld [vmem:[%s0 + $0x4a0] sm:$0xff]
  %v163 = vld [vmem:[%s0 + $0x4a8] sm:$0xff]
  %v164 = vld [vmem:[%s0 + $0x4b0] sm:$0xff]
  %v165 = vld [vmem:[%s0 + $0x4b8] sm:$0xff]
  %v166 = vld [vmem:[%s0 + $0x4c0] sm:$0xff]
  %v167 = vld [vmem:[%s0 + $0x4c8] sm:$0xff]
  %v168 = vld [vmem:[%s0 + $0x4d0] sm:$0xff]
  %v169 = vld [vmem:[%s0 + $0x4d8] sm:$0xff]
  %v170 = vld [vmem:[%s0 + $0x4e0] sm:$0xff]
  %v171 = vld [vmem:[%s0 + $0x4e8] sm:$0xff]
  %v172 = vld [vmem:[%s0 + $0x4f0] sm:$0xff]
  %v173 = vld [vmem:[%s0 + $0x4f8] sm:$0xff]
  %v174 = vld [vmem:[%s0 + $0x500] sm:$0xff]
  %v175 = vld [vmem:[%s0 + $0x508] sm:$0xff]
  %v176 = vld [vmem:[%s0 + $0x510] sm:$0xff]
  %v177 = vld [vmem:[%s0 + $0x518] sm:$0xff]
  %v178 = vld [vmem:[%s0 + $0x520] sm:$0xff]
  %v179 = vld [vmem:[%s0 + $0x528] sm:$0xff]
  %v180 = vld [vmem:[%s0 + $0x530] sm:$0xff]
  %v181 = vld [vmem:[%s0 + $0x538] sm:$0xff]
  %v182 = vld [vmem:[%s0 + $0x540] sm:$0xff]
  %v183 = vld [vmem:[%s0 + $0x548] sm:$0xff]
  %v184 = vld [vmem:[%s0 + $0x550] sm:$0xff]
  %v185 = vld [vmem:[%s0 + $0x558] sm:$0xff]
  %v186 = vld [vmem:[%s0 + $0x560] sm:$0xff]
  %v187 = vld [vmem:[%s0 + $0x568] sm:$0xff]
  %v188 = vld [vmem:[%s0 + $0x570] sm:$0xff]
  %v189 = vld [vmem:[%s0 + $0x578] sm:$0xff]
  %v190 = vld [vmem:[%s0 + $0x580] sm:$0xff]
  %v191 = vld [vmem:[%s0 + $0x588] sm:$0xff]
  %v192 = vld [vmem:[%s0 + $0x590] sm:$0xff]
  %v193 = vld [vmem:[%s0 + $0x598] sm:$0xff]
  %v194 = vld [vmem:[%s0 + $0x5a0] sm:$0xff]
  %v195 = vld [vmem:[%s0 + $0x5a8] sm:$0xff]
  %v196 = vld [vmem:[%s0 + $0x5b0] sm:$0xff]
  %v197 = vld [vmem:[%s0 + $0x5b8] sm:$0xff]
  %v198 = vld [vmem:[%s0 + $0x5c0] sm:$0xff]
  %v199 = vld [vmem:[%s0 + $0x5c8] sm:$0xff]
  %v200 = vld [vmem:[%s0 + $0x5d0] sm:$0xff]
  %v201 = vld [vmem:[%s0 + $0x5d8] sm:$0xff]
  %v202 = vld [vmem:[%s0 + $0x5e0] sm:$0xff]
  %v203 = vld [vmem:[%s0 + $0x5e8] sm:$0xff]
  %v204 = vld [vmem:[%s0 + $0x5f0] sm:$0xff]
  %v205 = vld [vmem:[%s0 + $0x5f8] sm:$0xff]
  %v206 = vld [vmem:[%s0 + $0x600] sm:$0xff]
  %v207 = vld [vmem:[%s0 + $0x608] sm:$0xff]
  %v208 = vld [vmem:[%s0 + $0x610] sm:$0xff]
  %v209 = vld [vmem:[%s0 + $0x618] sm:$0xff]
  %v210 = vld [vmem:[%s0 + $0x620] sm:$0xff]
  %v211 = vld [vmem:[%s0 + $0x628] sm:$0xff]
  %v212 = vld [vmem:[%s0 + $0x630] sm:$0xff]
  %v213 = vld [vmem:[%s0 + $0x638] sm:$0xff]
  %v214 = vld [vmem:[%s0 + $0x640] sm:$0xff]
  %v215 = vld [vmem:[%s0 + $0x648] sm:$0xff]
  %v216 = vld [vmem:[%s0 + $0x650] sm:$0xff]
  %v217 = vld [vmem:[%s0 + $0x658] sm:$0xff]
  %v218 = vld [vmem:[%s0 + $0x660] sm:$0xff]
  %v219 = vld [vmem:[%s0 + $0x668] sm:$0xff]
  %v220 = vld [vmem:[%s0 + $0x670] sm:$0xff]
  %v221 = vld [vmem:[%s0 + $0x678] sm:$0xff]
  %v222 = vld [vmem:[%s0 + $0x680] sm:$0xff]
  %v223 = vld [vmem:[%s0 + $0x688] sm:$0xff]
  %v224 = vld [vmem:[%s0 + $0x690] sm:$0xff]
  %v225 = vld [vmem:[%s0 + $0x698] sm:$0xff]
  %v226 = vld [vmem:[%s0 + $0x6a0] sm:$0xff]
  %v227 = vld [vmem:[%s0 + $0x6a8] sm:$0xff]
  %v228 = vld [vmem:[%s0 + $0x6b0] sm:$0xff]
  %v229 = vld [vmem:[%s0 + $0x6b8] sm:$0xff]
  %v230 = vld [vmem:[%s0 + $0x6c0] sm:$0xff]
  %v231 = vld [vmem:[%s0 + $0x6c8] sm:$0xff]
  %v232 = vld [vmem:[%s0 + $0x6d0] sm:$0xff]
  %v233 = vld [vmem:[%s0 + $0x6d8] sm:$0xff]
  %v234 = vld [vmem:[%s0 + $0x6e0] sm:$0xff]
  %v235 = vld [vmem:[%s0 + $0x6e8] sm:$0xff]
  %v236 = vld [vmem:[%s0 + $0x6f0] sm:$0xff]
  %v237 = vld [vmem:[%s0 + $0x6f8] sm:$0xff]
  %v238 = vld [vmem:[%s0 + $0x700] sm:$0xff]
  %v239 = vld [vmem:[%s0 + $0x708] sm:$0xff]
  %v240 = vld [vmem:[%s0 + $0x710] sm:$0xff]
  %v241 = vld [vmem:[%s0 + $0x718] sm:$0xff]
  %v242 = vld [vmem:[%s0 + $0x720] sm:$0xff]
  %v243 = vld [vmem:[%s0 + $0x728] sm:$0xff]
  %v244 = vld [vmem:[%s0 + $0x730] sm:$0xff]
  %v245 = vld [vmem:[%s0 + $0x738] sm:$0xff]
  %v246 = vld [vmem:[%s0 + $0x740] sm:$0xff]
  %v247 = vld [vmem:[%s0 + $0x748] sm:$0xff]
  %v248 = vld [vmem:[%s0 + $0x750] sm:$0xff]
  %v249 = vld [vmem:[%s0 + $0x758] sm:$0xff]
  %v250 = vld [vmem:[%s0 + $0x760] sm:$0xff]
  %v251 = vld [vmem:[%s0 + $0x768] sm:$0xff]
  %v252 = vld [vmem:[%s0 + $0x770] sm:$0xff]
  %v253 = vld [vmem:[%s0 + $0x778] sm:$0xff]
  %v254 = vld [vmem:[%s0 + $0x780] sm:$0xff]
  %v255 = vld [vmem:[%s0 + $0x788] sm:$0xff]
  %v256 = vld [vmem:[%s0 + $0x790] sm:$0xff]
  %v257 = vld [vmem:[%s0 + $0x798] sm:$0xff]
  %v258 = vld [vmem:[%s0 + $0x7a0] sm:$0xff]
  %v259 = vld [vmem:[%s0 + $0x7a8] sm:$0xff]
  %v260 = vld [vmem:[%s0 + $0x7b0] sm:$0xff]
  %v261 = vld [vmem:[%s0 + $0x7b8] sm:$0xff]
  %v262 = vld [vmem:[%s0 + $0x7c0] sm:$0xff]
  %v263 = vld [vmem:[%s0 + $0x7c8] sm:$0xff]
  %v264 = vld [vmem:[%s0 + $0x7d0] sm:$0xff]
  %v265 = vld [vmem:[%s0 + $0x7d8] sm:$0xff]
  %v266 = vld [vmem:[%s0 + $0x7e0] sm:$0xff]
  %v267 = vld [vmem:[%s0 + $0x7e8] sm:$0xff]
  %v268 = vld [vmem:[%s0 + $0x7f0] sm:$0xff]
  %v269 = vld [vmem:[%s0 + $0x7f8] sm:$0xff]
  %v270 = vld [vmem:[%s1] sm:$0x1]
  %v272 = vlaneseq
  %v273 = vshrl.u32 %v272, 7
  %v274 = vsub.s32 0, %v273
  %v275 = vrot.slane %v270, %v274
  %v277 = vmul.f32 %v14, %v275
  %v278 = vmul.f32 %v15, %v275
  %v279 = vmul.f32 %v16, %v275
  %v280 = vmul.f32 %v17, %v275
  %v281 = vmul.f32 %v18, %v275
  %v282 = vmul.f32 %v19, %v275
  %v283 = vmul.f32 %v20, %v275
  %v284 = vmul.f32 %v21, %v275
  %v285 = vmul.f32 %v22, %v275
  %v286 = vmul.f32 %v23, %v275
  %v287 = vmul.f32 %v24, %v275
  %v288 = vmul.f32 %v25, %v275
  %v289 = vmul.f32 %v26, %v275
  %v290 = vmul.f32 %v27, %v275
  %v291 = vmul.f32 %v28, %v275
  %v292 = vmul.f32 %v29, %v275
  %v293 = vmul.f32 %v30, %v275
  %v294 = vmul.f32 %v31, %v275
  %v295 = vmul.f32 %v32, %v275
  %v296 = vmul.f32 %v33, %v275
  %v297 = vmul.f32 %v34, %v275
  %v298 = vmul.f32 %v35, %v275
  %v299 = vmul.f32 %v36, %v275
  %v300 = vmul.f32 %v37, %v275
  %v301 = vmul.f32 %v38, %v275
  %v302 = vmul.f32 %v39, %v275
  %v303 = vmul.f32 %v40, %v275
  %v304 = vmul.f32 %v41, %v275
  %v305 = vmul.f32 %v42, %v275
  %v306 = vmul.f32 %v43, %v275
  %v307 = vmul.f32 %v44, %v275
  %v308 = vmul.f32 %v45, %v275
  %v309 = vmul.f32 %v46, %v275
  %v310 = vmul.f32 %v47, %v275
  %v311 = vmul.f32 %v48, %v275
  %v312 = vmul.f32 %v49, %v275
  %v313 = vmul.f32 %v50, %v275
  %v314 = vmul.f32 %v51, %v275
  %v315 = vmul.f32 %v52, %v275
  %v316 = vmul.f32 %v53, %v275
  %v317 = vmul.f32 %v54, %v275
  %v318 = vmul.f32 %v55, %v275
  %v319 = vmul.f32 %v56, %v275
  %v320 = vmul.f32 %v57, %v275
  %v321 = vmul.f32 %v58, %v275
  %v322 = vmul.f32 %v59, %v275
  %v323 = vmul.f32 %v60, %v275
  %v324 = vmul.f32 %v61, %v275
  %v325 = vmul.f32 %v62, %v275
  %v326 = vmul.f32 %v63, %v275
  %v327 = vmul.f32 %v64, %v275
  %v328 = vmul.f32 %v65, %v275
  %v329 = vmul.f32 %v66, %v275
  %v330 = vmul.f32 %v67, %v275
  %v331 = vmul.f32 %v68, %v275
  %v332 = vmul.f32 %v69, %v275
  %v333 = vmul.f32 %v70, %v275
  %v334 = vmul.f32 %v71, %v275
  %v335 = vmul.f32 %v72, %v275
  %v336 = vmul.f32 %v73, %v275
  %v337 = vmul.f32 %v74, %v275
  %v338 = vmul.f32 %v75, %v275
  %v339 = vmul.f32 %v76, %v275
  %v340 = vmul.f32 %v77, %v275
  %v341 = vmul.f32 %v78, %v275
  %v342 = vmul.f32 %v79, %v275
  %v343 = vmul.f32 %v80, %v275
  %v344 = vmul.f32 %v81, %v275
  %v345 = vmul.f32 %v82, %v275
  %v346 = vmul.f32 %v83, %v275
  %v347 = vmul.f32 %v84, %v275
  %v348 = vmul.f32 %v85, %v275
  %v349 = vmul.f32 %v86, %v275
  %v350 = vmul.f32 %v87, %v275
  %v351 = vmul.f32 %v88, %v275
  %v352 = vmul.f32 %v89, %v275
  %v353 = vmul.f32 %v90, %v275
  %v354 = vmul.f32 %v91, %v275
  %v355 = vmul.f32 %v92, %v275
  %v356 = vmul.f32 %v93, %v275
  %v357 = vmul.f32 %v94, %v275
  %v358 = vmul.f32 %v95, %v275
  %v359 = vmul.f32 %v96, %v275
  %v360 = vmul.f32 %v97, %v275
  %v361 = vmul.f32 %v98, %v275
  %v362 = vmul.f32 %v99, %v275
  %v363 = vmul.f32 %v100, %v275
  %v364 = vmul.f32 %v101, %v275
  %v365 = vmul.f32 %v102, %v275
  %v366 = vmul.f32 %v103, %v275
  %v367 = vmul.f32 %v104, %v275
  %v368 = vmul.f32 %v105, %v275
  %v369 = vmul.f32 %v106, %v275
  %v370 = vmul.f32 %v107, %v275
  %v371 = vmul.f32 %v108, %v275
  %v372 = vmul.f32 %v109, %v275
  %v373 = vmul.f32 %v110, %v275
  %v374 = vmul.f32 %v111, %v275
  %v375 = vmul.f32 %v112, %v275
  %v376 = vmul.f32 %v113, %v275
  %v377 = vmul.f32 %v114, %v275
  %v378 = vmul.f32 %v115, %v275
  %v379 = vmul.f32 %v116, %v275
  %v380 = vmul.f32 %v117, %v275
  %v381 = vmul.f32 %v118, %v275
  %v382 = vmul.f32 %v119, %v275
  %v383 = vmul.f32 %v120, %v275
  %v384 = vmul.f32 %v121, %v275
  %v385 = vmul.f32 %v122, %v275
  %v386 = vmul.f32 %v123, %v275
  %v387 = vmul.f32 %v124, %v275
  %v388 = vmul.f32 %v125, %v275
  %v389 = vmul.f32 %v126, %v275
  %v390 = vmul.f32 %v127, %v275
  %v391 = vmul.f32 %v128, %v275
  %v392 = vmul.f32 %v129, %v275
  %v393 = vmul.f32 %v130, %v275
  %v394 = vmul.f32 %v131, %v275
  %v395 = vmul.f32 %v132, %v275
  %v396 = vmul.f32 %v133, %v275
  %v397 = vmul.f32 %v134, %v275
  %v398 = vmul.f32 %v135, %v275
  %v399 = vmul.f32 %v136, %v275
  %v400 = vmul.f32 %v137, %v275
  %v401 = vmul.f32 %v138, %v275
  %v402 = vmul.f32 %v139, %v275
  %v403 = vmul.f32 %v140, %v275
  %v404 = vmul.f32 %v141, %v275
  %v405 = vmul.f32 %v142, %v275
  %v406 = vmul.f32 %v143, %v275
  %v407 = vmul.f32 %v144, %v275
  %v408 = vmul.f32 %v145, %v275
  %v409 = vmul.f32 %v146, %v275
  %v410 = vmul.f32 %v147, %v275
  %v411 = vmul.f32 %v148, %v275
  %v412 = vmul.f32 %v149, %v275
  %v413 = vmul.f32 %v150, %v275
  %v414 = vmul.f32 %v151, %v275
  %v415 = vmul.f32 %v152, %v275
  %v416 = vmul.f32 %v153, %v275
  %v417 = vmul.f32 %v154, %v275
  %v418 = vmul.f32 %v155, %v275
  %v419 = vmul.f32 %v156, %v275
  %v420 = vmul.f32 %v157, %v275
  %v421 = vmul.f32 %v158, %v275
  %v422 = vmul.f32 %v159, %v275
  %v423 = vmul.f32 %v160, %v275
  %v424 = vmul.f32 %v161, %v275
  %v425 = vmul.f32 %v162, %v275
  %v426 = vmul.f32 %v163, %v275
  %v427 = vmul.f32 %v164, %v275
  %v428 = vmul.f32 %v165, %v275
  %v429 = vmul.f32 %v166, %v275
  %v430 = vmul.f32 %v167, %v275
  %v431 = vmul.f32 %v168, %v275
  %v432 = vmul.f32 %v169, %v275
  %v433 = vmul.f32 %v170, %v275
  %v434 = vmul.f32 %v171, %v275
  %v435 = vmul.f32 %v172, %v275
  %v436 = vmul.f32 %v173, %v275
  %v437 = vmul.f32 %v174, %v275
  %v438 = vmul.f32 %v175, %v275
  %v439 = vmul.f32 %v176, %v275
  %v440 = vmul.f32 %v177, %v275
  %v441 = vmul.f32 %v178, %v275
  %v442 = vmul.f32 %v179, %v275
  %v443 = vmul.f32 %v180, %v275
  %v444 = vmul.f32 %v181, %v275
  %v445 = vmul.f32 %v182, %v275
  %v446 = vmul.f32 %v183, %v275
  %v447 = vmul.f32 %v184, %v275
  %v448 = vmul.f32 %v185, %v275
  %v449 = vmul.f32 %v186, %v275
  %v450 = vmul.f32 %v187, %v275
  %v451 = vmul.f32 %v188, %v275
  %v452 = vmul.f32 %v189, %v275
  %v453 = vmul.f32 %v190, %v275
  %v454 = vmul.f32 %v191, %v275
  %v455 = vmul.f32 %v192, %v275
  %v456 = vmul.f32 %v193, %v275
  %v457 = vmul.f32 %v194, %v275
  %v458 = vmul.f32 %v195, %v275
  %v459 = vmul.f32 %v196, %v275
  %v460 = vmul.f32 %v197, %v275
  %v461 = vmul.f32 %v198, %v275
  %v462 = vmul.f32 %v199, %v275
  %v463 = vmul.f32 %v200, %v275
  %v464 = vmul.f32 %v201, %v275
  %v465 = vmul.f32 %v202, %v275
  %v466 = vmul.f32 %v203, %v275
  %v467 = vmul.f32 %v204, %v275
  %v468 = vmul.f32 %v205, %v275
  %v469 = vmul.f32 %v206, %v275
  %v470 = vmul.f32 %v207, %v275
  %v471 = vmul.f32 %v208, %v275
  %v472 = vmul.f32 %v209, %v275
  %v473 = vmul.f32 %v210, %v275
  %v474 = vmul.f32 %v211, %v275
  %v475 = vmul.f32 %v212, %v275
  %v476 = vmul.f32 %v213, %v275
  %v477 = vmul.f32 %v214, %v275
  %v478 = vmul.f32 %v215, %v275
  %v479 = vmul.f32 %v216, %v275
  %v480 = vmul.f32 %v217, %v275
  %v481 = vmul.f32 %v218, %v275
  %v482 = vmul.f32 %v219, %v275
  %v483 = vmul.f32 %v220, %v275
  %v484 = vmul.f32 %v221, %v275
  %v485 = vmul.f32 %v222, %v275
  %v486 = vmul.f32 %v223, %v275
  %v487 = vmul.f32 %v224, %v275
  %v488 = vmul.f32 %v225, %v275
  %v489 = vmul.f32 %v226, %v275
  %v490 = vmul.f32 %v227, %v275
  %v491 = vmul.f32 %v228, %v275
  %v492 = vmul.f32 %v229, %v275
  %v493 = vmul.f32 %v230, %v275
  %v494 = vmul.f32 %v231, %v275
  %v495 = vmul.f32 %v232, %v275
  %v496 = vmul.f32 %v233, %v275
  %v497 = vmul.f32 %v234, %v275
  %v498 = vmul.f32 %v235, %v275
  %v499 = vmul.f32 %v236, %v275
  %v500 = vmul.f32 %v237, %v275
  %v501 = vmul.f32 %v238, %v275
  %v502 = vmul.f32 %v239, %v275
  %v503 = vmul.f32 %v240, %v275
  %v504 = vmul.f32 %v241, %v275
  %v505 = vmul.f32 %v242, %v275
  %v506 = vmul.f32 %v243, %v275
  %v507 = vmul.f32 %v244, %v275
  %v508 = vmul.f32 %v245, %v275
  %v509 = vmul.f32 %v246, %v275
  %v510 = vmul.f32 %v247, %v275
  %v511 = vmul.f32 %v248, %v275
  %v512 = vmul.f32 %v249, %v275
  %v513 = vmul.f32 %v250, %v275
  %v514 = vmul.f32 %v251, %v275
  %v515 = vmul.f32 %v252, %v275
  %v516 = vmul.f32 %v253, %v275
  %v517 = vmul.f32 %v254, %v275
  %v518 = vmul.f32 %v255, %v275
  %v519 = vmul.f32 %v256, %v275
  %v520 = vmul.f32 %v257, %v275
  %v521 = vmul.f32 %v258, %v275
  %v522 = vmul.f32 %v259, %v275
  %v523 = vmul.f32 %v260, %v275
  %v524 = vmul.f32 %v261, %v275
  %v525 = vmul.f32 %v262, %v275
  %v526 = vmul.f32 %v263, %v275
  %v527 = vmul.f32 %v264, %v275
  %v528 = vmul.f32 %v265, %v275
  %v529 = vmul.f32 %v266, %v275
  %v530 = vmul.f32 %v267, %v275
  %v531 = vmul.f32 %v268, %v275
  %v532 = vmul.f32 %v269, %v275
  %v533 = vld [vmem:[%s2] sm:$0x1]
  %v535 = vlaneseq
  %v536 = vshrl.u32 %v535, 7
  %v537 = vsub.s32 0, %v536
  %v538 = vrot.slane %v533, %v537
  %v540 = vadd.f32 %v277, %v538
  %v541 = vadd.f32 %v278, %v538
  %v542 = vadd.f32 %v279, %v538
  %v543 = vadd.f32 %v280, %v538
  %v544 = vadd.f32 %v281, %v538
  %v545 = vadd.f32 %v282, %v538
  %v546 = vadd.f32 %v283, %v538
  %v547 = vadd.f32 %v284, %v538
  %v548 = vadd.f32 %v285, %v538
  %v549 = vadd.f32 %v286, %v538
  %v550 = vadd.f32 %v287, %v538
  %v551 = vadd.f32 %v288, %v538
  %v552 = vadd.f32 %v289, %v538
  %v553 = vadd.f32 %v290, %v538
  %v554 = vadd.f32 %v291, %v538
  %v555 = vadd.f32 %v292, %v538
  %v556 = vadd.f32 %v293, %v538
  %v557 = vadd.f32 %v294, %v538
  %v558 = vadd.f32 %v295, %v538
  %v559 = vadd.f32 %v296, %v538
  %v560 = vadd.f32 %v297, %v538
  %v561 = vadd.f32 %v298, %v538
  %v562 = vadd.f32 %v299, %v538
  %v563 = vadd.f32 %v300, %v538
  %v564 = vadd.f32 %v301, %v538
  %v565 = vadd.f32 %v302, %v538
  %v566 = vadd.f32 %v303, %v538
  %v567 = vadd.f32 %v304, %v538
  %v568 = vadd.f32 %v305, %v538
  %v569 = vadd.f32 %v306, %v538
  %v570 = vadd.f32 %v307, %v538
  %v571 = vadd.f32 %v308, %v538
  %v572 = vadd.f32 %v309, %v538
  %v573 = vadd.f32 %v310, %v538
  %v574 = vadd.f32 %v311, %v538
  %v575 = vadd.f32 %v312, %v538
  %v576 = vadd.f32 %v313, %v538
  %v577 = vadd.f32 %v314, %v538
  %v578 = vadd.f32 %v315, %v538
  %v579 = vadd.f32 %v316, %v538
  %v580 = vadd.f32 %v317, %v538
  %v581 = vadd.f32 %v318, %v538
  %v582 = vadd.f32 %v319, %v538
  %v583 = vadd.f32 %v320, %v538
  %v584 = vadd.f32 %v321, %v538
  %v585 = vadd.f32 %v322, %v538
  %v586 = vadd.f32 %v323, %v538
  %v587 = vadd.f32 %v324, %v538
  %v588 = vadd.f32 %v325, %v538
  %v589 = vadd.f32 %v326, %v538
  %v590 = vadd.f32 %v327, %v538
  %v591 = vadd.f32 %v328, %v538
  %v592 = vadd.f32 %v329, %v538
  %v593 = vadd.f32 %v330, %v538
  %v594 = vadd.f32 %v331, %v538
  %v595 = vadd.f32 %v332, %v538
  %v596 = vadd.f32 %v333, %v538
  %v597 = vadd.f32 %v334, %v538
  %v598 = vadd.f32 %v335, %v538
  %v599 = vadd.f32 %v336, %v538
  %v600 = vadd.f32 %v337, %v538
  %v601 = vadd.f32 %v338, %v538
  %v602 = vadd.f32 %v339, %v538
  %v603 = vadd.f32 %v340, %v538
  %v604 = vadd.f32 %v341, %v538
  %v605 = vadd.f32 %v342, %v538
  %v606 = vadd.f32 %v343, %v538
  %v607 = vadd.f32 %v344, %v538
  %v608 = vadd.f32 %v345, %v538
  %v609 = vadd.f32 %v346, %v538
  %v610 = vadd.f32 %v347, %v538
  %v611 = vadd.f32 %v348, %v538
  %v612 = vadd.f32 %v349, %v538
  %v613 = vadd.f32 %v350, %v538
  %v614 = vadd.f32 %v351, %v538
  %v615 = vadd.f32 %v352, %v538
  %v616 = vadd.f32 %v353, %v538
  %v617 = vadd.f32 %v354, %v538
  %v618 = vadd.f32 %v355, %v538
  %v619 = vadd.f32 %v356, %v538
  %v620 = vadd.f32 %v357, %v538
  %v621 = vadd.f32 %v358, %v538
  %v622 = vadd.f32 %v359, %v538
  %v623 = vadd.f32 %v360, %v538
  %v624 = vadd.f32 %v361, %v538
  %v625 = vadd.f32 %v362, %v538
  %v626 = vadd.f32 %v363, %v538
  %v627 = vadd.f32 %v364, %v538
  %v628 = vadd.f32 %v365, %v538
  %v629 = vadd.f32 %v366, %v538
  %v630 = vadd.f32 %v367, %v538
  %v631 = vadd.f32 %v368, %v538
  %v632 = vadd.f32 %v369, %v538
  %v633 = vadd.f32 %v370, %v538
  %v634 = vadd.f32 %v371, %v538
  %v635 = vadd.f32 %v372, %v538
  %v636 = vadd.f32 %v373, %v538
  %v637 = vadd.f32 %v374, %v538
  %v638 = vadd.f32 %v375, %v538
  %v639 = vadd.f32 %v376, %v538
  %v640 = vadd.f32 %v377, %v538
  %v641 = vadd.f32 %v378, %v538
  %v642 = vadd.f32 %v379, %v538
  %v643 = vadd.f32 %v380, %v538
  %v644 = vadd.f32 %v381, %v538
  %v645 = vadd.f32 %v382, %v538
  %v646 = vadd.f32 %v383, %v538
  %v647 = vadd.f32 %v384, %v538
  %v648 = vadd.f32 %v385, %v538
  %v649 = vadd.f32 %v386, %v538
  %v650 = vadd.f32 %v387, %v538
  %v651 = vadd.f32 %v388, %v538
  %v652 = vadd.f32 %v389, %v538
  %v653 = vadd.f32 %v390, %v538
  %v654 = vadd.f32 %v391, %v538
  %v655 = vadd.f32 %v392, %v538
  %v656 = vadd.f32 %v393, %v538
  %v657 = vadd.f32 %v394, %v538
  %v658 = vadd.f32 %v395, %v538
  %v659 = vadd.f32 %v396, %v538
  %v660 = vadd.f32 %v397, %v538
  %v661 = vadd.f32 %v398, %v538
  %v662 = vadd.f32 %v399, %v538
  %v663 = vadd.f32 %v400, %v538
  %v664 = vadd.f32 %v401, %v538
  %v665 = vadd.f32 %v402, %v538
  %v666 = vadd.f32 %v403, %v538
  %v667 = vadd.f32 %v404, %v538
  %v668 = vadd.f32 %v405, %v538
  %v669 = vadd.f32 %v406, %v538
  %v670 = vadd.f32 %v407, %v538
  %v671 = vadd.f32 %v408, %v538
  %v672 = vadd.f32 %v409, %v538
  %v673 = vadd.f32 %v410, %v538
  %v674 = vadd.f32 %v411, %v538
  %v675 = vadd.f32 %v412, %v538
  %v676 = vadd.f32 %v413, %v538
  %v677 = vadd.f32 %v414, %v538
  %v678 = vadd.f32 %v415, %v538
  %v679 = vadd.f32 %v416, %v538
  %v680 = vadd.f32 %v417, %v538
  %v681 = vadd.f32 %v418, %v538
  %v682 = vadd.f32 %v419, %v538
  %v683 = vadd.f32 %v420, %v538
  %v684 = vadd.f32 %v421, %v538
  %v685 = vadd.f32 %v422, %v538
  %v686 = vadd.f32 %v423, %v538
  %v687 = vadd.f32 %v424, %v538
  %v688 = vadd.f32 %v425, %v538
  %v689 = vadd.f32 %v426, %v538
  %v690 = vadd.f32 %v427, %v538
  %v691 = vadd.f32 %v428, %v538
  %v692 = vadd.f32 %v429, %v538
  %v693 = vadd.f32 %v430, %v538
  %v694 = vadd.f32 %v431, %v538
  %v695 = vadd.f32 %v432, %v538
  %v696 = vadd.f32 %v433, %v538
  %v697 = vadd.f32 %v434, %v538
  %v698 = vadd.f32 %v435, %v538
  %v699 = vadd.f32 %v436, %v538
  %v700 = vadd.f32 %v437, %v538
  %v701 = vadd.f32 %v438, %v538
  %v702 = vadd.f32 %v439, %v538
  %v703 = vadd.f32 %v440, %v538
  %v704 = vadd.f32 %v441, %v538
  %v705 = vadd.f32 %v442, %v538
  %v706 = vadd.f32 %v443, %v538
  %v707 = vadd.f32 %v444, %v538
  %v708 = vadd.f32 %v445, %v538
  %v709 = vadd.f32 %v446, %v538
  %v710 = vadd.f32 %v447, %v538
  %v711 = vadd.f32 %v448, %v538
  %v712 = vadd.f32 %v449, %v538
  %v713 = vadd.f32 %v450, %v538
  %v714 = vadd.f32 %v451, %v538
  %v715 = vadd.f32 %v452, %v538
  %v716 = vadd.f32 %v453, %v538
  %v717 = vadd.f32 %v454, %v538
  %v718 = vadd.f32 %v455, %v538
  %v719 = vadd.f32 %v456, %v538
  %v720 = vadd.f32 %v457, %v538
  %v721 = vadd.f32 %v458, %v538
  %v722 = vadd.f32 %v459, %v538
  %v723 = vadd.f32 %v460, %v538
  %v724 = vadd.f32 %v461, %v538
  %v725 = vadd.f32 %v462, %v538
  %v726 = vadd.f32 %v463, %v538
  %v727 = vadd.f32 %v464, %v538
  %v728 = vadd.f32 %v465, %v538
  %v729 = vadd.f32 %v466, %v538
  %v730 = vadd.f32 %v467, %v538
  %v731 = vadd.f32 %v468, %v538
  %v732 = vadd.f32 %v469, %v538
  %v733 = vadd.f32 %v470, %v538
  %v734 = vadd.f32 %v471, %v538
  %v735 = vadd.f32 %v472, %v538
  %v736 = vadd.f32 %v473, %v538
  %v737 = vadd.f32 %v474, %v538
  %v738 = vadd.f32 %v475, %v538
  %v739 = vadd.f32 %v476, %v538
  %v740 = vadd.f32 %v477, %v538
  %v741 = vadd.f32 %v478, %v538
  %v742 = vadd.f32 %v479, %v538
  %v743 = vadd.f32 %v480, %v538
  %v744 = vadd.f32 %v481, %v538
  %v745 = vadd.f32 %v482, %v538
  %v746 = vadd.f32 %v483, %v538
  %v747 = vadd.f32 %v484, %v538
  %v748 = vadd.f32 %v485, %v538
  %v749 = vadd.f32 %v486, %v538
  %v750 = vadd.f32 %v487, %v538
  %v751 = vadd.f32 %v488, %v538
  %v752 = vadd.f32 %v489, %v538
  %v753 = vadd.f32 %v490, %v538
  %v754 = vadd.f32 %v491, %v538
  %v755 = vadd.f32 %v492, %v538
  %v756 = vadd.f32 %v493, %v538
  %v757 = vadd.f32 %v494, %v538
  %v758 = vadd.f32 %v495, %v538
  %v759 = vadd.f32 %v496, %v538
  %v760 = vadd.f32 %v497, %v538
  %v761 = vadd.f32 %v498, %v538
  %v762 = vadd.f32 %v499, %v538
  %v763 = vadd.f32 %v500, %v538
  %v764 = vadd.f32 %v501, %v538
  %v765 = vadd.f32 %v502, %v538
  %v766 = vadd.f32 %v503, %v538
  %v767 = vadd.f32 %v504, %v538
  %v768 = vadd.f32 %v505, %v538
  %v769 = vadd.f32 %v506, %v538
  %v770 = vadd.f32 %v507, %v538
  %v771 = vadd.f32 %v508, %v538
  %v772 = vadd.f32 %v509, %v538
  %v773 = vadd.f32 %v510, %v538
  %v774 = vadd.f32 %v511, %v538
  %v775 = vadd.f32 %v512, %v538
  %v776 = vadd.f32 %v513, %v538
  %v777 = vadd.f32 %v514, %v538
  %v778 = vadd.f32 %v515, %v538
  %v779 = vadd.f32 %v516, %v538
  %v780 = vadd.f32 %v517, %v538
  %v781 = vadd.f32 %v518, %v538
  %v782 = vadd.f32 %v519, %v538
  %v783 = vadd.f32 %v520, %v538
  %v784 = vadd.f32 %v521, %v538
  %v785 = vadd.f32 %v522, %v538
  %v786 = vadd.f32 %v523, %v538
  %v787 = vadd.f32 %v524, %v538
  %v788 = vadd.f32 %v525, %v538
  %v789 = vadd.f32 %v526, %v538
  %v790 = vadd.f32 %v527, %v538
  %v791 = vadd.f32 %v528, %v538
  %v792 = vadd.f32 %v529, %v538
  %v793 = vadd.f32 %v530, %v538
  %v794 = vadd.f32 %v531, %v538
  %v795 = vadd.f32 %v532, %v538
  %v796 = vmax.f32 %v540, 0.0
  %v797 = vmax.f32 %v541, 0.0
  %v798 = vmax.f32 %v542, 0.0
  %v799 = vmax.f32 %v543, 0.0
  %v800 = vmax.f32 %v544, 0.0
  %v801 = vmax.f32 %v545, 0.0
  %v802 = vmax.f32 %v546, 0.0
  %v803 = vmax.f32 %v547, 0.0
  %v804 = vmax.f32 %v548, 0.0
  %v805 = vmax.f32 %v549, 0.0
  %v806 = vmax.f32 %v550, 0.0
  %v807 = vmax.f32 %v551, 0.0
  %v808 = vmax.f32 %v552, 0.0
  %v809 = vmax.f32 %v553, 0.0
  %v810 = vmax.f32 %v554, 0.0
  %v811 = vmax.f32 %v555, 0.0
  %v812 = vmax.f32 %v556, 0.0
  %v813 = vmax.f32 %v557, 0.0
  %v814 = vmax.f32 %v558, 0.0
  %v815 = vmax.f32 %v559, 0.0
  %v816 = vmax.f32 %v560, 0.0
  %v817 = vmax.f32 %v561, 0.0
  %v818 = vmax.f32 %v562, 0.0
  %v819 = vmax.f32 %v563, 0.0
  %v820 = vmax.f32 %v564, 0.0
  %v821 = vmax.f32 %v565, 0.0
  %v822 = vmax.f32 %v566, 0.0
  %v823 = vmax.f32 %v567, 0.0
  %v824 = vmax.f32 %v568, 0.0
  %v825 = vmax.f32 %v569, 0.0
  %v826 = vmax.f32 %v570, 0.0
  %v827 = vmax.f32 %v571, 0.0
  %v828 = vmax.f32 %v572, 0.0
  %v829 = vmax.f32 %v573, 0.0
  %v830 = vmax.f32 %v574, 0.0
  %v831 = vmax.f32 %v575, 0.0
  %v832 = vmax.f32 %v576, 0.0
  %v833 = vmax.f32 %v577, 0.0
  %v834 = vmax.f32 %v578, 0.0
  %v835 = vmax.f32 %v579, 0.0
  %v836 = vmax.f32 %v580, 0.0
  %v837 = vmax.f32 %v581, 0.0
  %v838 = vmax.f32 %v582, 0.0
  %v839 = vmax.f32 %v583, 0.0
  %v840 = vmax.f32 %v584, 0.0
  %v841 = vmax.f32 %v585, 0.0
  %v842 = vmax.f32 %v586, 0.0
  %v843 = vmax.f32 %v587, 0.0
  %v844 = vmax.f32 %v588, 0.0
  %v845 = vmax.f32 %v589, 0.0
  %v846 = vmax.f32 %v590, 0.0
  %v847 = vmax.f32 %v591, 0.0
  %v848 = vmax.f32 %v592, 0.0
  %v849 = vmax.f32 %v593, 0.0
  %v850 = vmax.f32 %v594, 0.0
  %v851 = vmax.f32 %v595, 0.0
  %v852 = vmax.f32 %v596, 0.0
  %v853 = vmax.f32 %v597, 0.0
  %v854 = vmax.f32 %v598, 0.0
  %v855 = vmax.f32 %v599, 0.0
  %v856 = vmax.f32 %v600, 0.0
  %v857 = vmax.f32 %v601, 0.0
  %v858 = vmax.f32 %v602, 0.0
  %v859 = vmax.f32 %v603, 0.0
  %v860 = vmax.f32 %v604, 0.0
  %v861 = vmax.f32 %v605, 0.0
  %v862 = vmax.f32 %v606, 0.0
  %v863 = vmax.f32 %v607, 0.0
  %v864 = vmax.f32 %v608, 0.0
  %v865 = vmax.f32 %v609, 0.0
  %v866 = vmax.f32 %v610, 0.0
  %v867 = vmax.f32 %v611, 0.0
  %v868 = vmax.f32 %v612, 0.0
  %v869 = vmax.f32 %v613, 0.0
  %v870 = vmax.f32 %v614, 0.0
  %v871 = vmax.f32 %v615, 0.0
  %v872 = vmax.f32 %v616, 0.0
  %v873 = vmax.f32 %v617, 0.0
  %v874 = vmax.f32 %v618, 0.0
  %v875 = vmax.f32 %v619, 0.0
  %v876 = vmax.f32 %v620, 0.0
  %v877 = vmax.f32 %v621, 0.0
  %v878 = vmax.f32 %v622, 0.0
  %v879 = vmax.f32 %v623, 0.0
  %v880 = vmax.f32 %v624, 0.0
  %v881 = vmax.f32 %v625, 0.0
  %v882 = vmax.f32 %v626, 0.0
  %v883 = vmax.f32 %v627, 0.0
  %v884 = vmax.f32 %v628, 0.0
  %v885 = vmax.f32 %v629, 0.0
  %v886 = vmax.f32 %v630, 0.0
  %v887 = vmax.f32 %v631, 0.0
  %v888 = vmax.f32 %v632, 0.0
  %v889 = vmax.f32 %v633, 0.0
  %v890 = vmax.f32 %v634, 0.0
  %v891 = vmax.f32 %v635, 0.0
  %v892 = vmax.f32 %v636, 0.0
  %v893 = vmax.f32 %v637, 0.0
  %v894 = vmax.f32 %v638, 0.0
  %v895 = vmax.f32 %v639, 0.0
  %v896 = vmax.f32 %v640, 0.0
  %v897 = vmax.f32 %v641, 0.0
  %v898 = vmax.f32 %v642, 0.0
  %v899 = vmax.f32 %v643, 0.0
  %v900 = vmax.f32 %v644, 0.0
  %v901 = vmax.f32 %v645, 0.0
  %v902 = vmax.f32 %v646, 0.0
  %v903 = vmax.f32 %v647, 0.0
  %v904 = vmax.f32 %v648, 0.0
  %v905 = vmax.f32 %v649, 0.0
  %v906 = vmax.f32 %v650, 0.0
  %v907 = vmax.f32 %v651, 0.0
  %v908 = vmax.f32 %v652, 0.0
  %v909 = vmax.f32 %v653, 0.0
  %v910 = vmax.f32 %v654, 0.0
  %v911 = vmax.f32 %v655, 0.0
  %v912 = vmax.f32 %v656, 0.0
  %v913 = vmax.f32 %v657, 0.0
  %v914 = vmax.f32 %v658, 0.0
  %v915 = vmax.f32 %v659, 0.0
  %v916 = vmax.f32 %v660, 0.0
  %v917 = vmax.f32 %v661, 0.0
  %v918 = vmax.f32 %v662, 0.0
  %v919 = vmax.f32 %v663, 0.0
  %v920 = vmax.f32 %v664, 0.0
  %v921 = vmax.f32 %v665, 0.0
  %v922 = vmax.f32 %v666, 0.0
  %v923 = vmax.f32 %v667, 0.0
  %v924 = vmax.f32 %v668, 0.0
  %v925 = vmax.f32 %v669, 0.0
  %v926 = vmax.f32 %v670, 0.0
  %v927 = vmax.f32 %v671, 0.0
  %v928 = vmax.f32 %v672, 0.0
  %v929 = vmax.f32 %v673, 0.0
  %v930 = vmax.f32 %v674, 0.0
  %v931 = vmax.f32 %v675, 0.0
  %v932 = vmax.f32 %v676, 0.0
  %v933 = vmax.f32 %v677, 0.0
  %v934 = vmax.f32 %v678, 0.0
  %v935 = vmax.f32 %v679, 0.0
  %v936 = vmax.f32 %v680, 0.0
  %v937 = vmax.f32 %v681, 0.0
  %v938 = vmax.f32 %v682, 0.0
  %v939 = vmax.f32 %v683, 0.0
  %v940 = vmax.f32 %v684, 0.0
  %v941 = vmax.f32 %v685, 0.0
  %v942 = vmax.f32 %v686, 0.0
  %v943 = vmax.f32 %v687, 0.0
  %v944 = vmax.f32 %v688, 0.0
  %v945 = vmax.f32 %v689, 0.0
  %v946 = vmax.f32 %v690, 0.0
  %v947 = vmax.f32 %v691, 0.0
  %v948 = vmax.f32 %v692, 0.0
  %v949 = vmax.f32 %v693, 0.0
  %v950 = vmax.f32 %v694, 0.0
  %v951 = vmax.f32 %v695, 0.0
  %v952 = vmax.f32 %v696, 0.0
  %v953 = vmax.f32 %v697, 0.0
  %v954 = vmax.f32 %v698, 0.0
  %v955 = vmax.f32 %v699, 0.0
  %v956 = vmax.f32 %v700, 0.0
  %v957 = vmax.f32 %v701, 0.0
  %v958 = vmax.f32 %v702, 0.0
  %v959 = vmax.f32 %v703, 0.0
  %v960 = vmax.f32 %v704, 0.0
  %v961 = vmax.f32 %v705, 0.0
  %v962 = vmax.f32 %v706, 0.0
  %v963 = vmax.f32 %v707, 0.0
  %v964 = vmax.f32 %v708, 0.0
  %v965 = vmax.f32 %v709, 0.0
  %v966 = vmax.f32 %v710, 0.0
  %v967 = vmax.f32 %v711, 0.0
  %v968 = vmax.f32 %v712, 0.0
  %v969 = vmax.f32 %v713, 0.0
  %v970 = vmax.f32 %v714, 0.0
  %v971 = vmax.f32 %v715, 0.0
  %v972 = vmax.f32 %v716, 0.0
  %v973 = vmax.f32 %v717, 0.0
  %v974 = vmax.f32 %v718, 0.0
  %v975 = vmax.f32 %v719, 0.0
  %v976 = vmax.f32 %v720, 0.0
  %v977 = vmax.f32 %v721, 0.0
  %v978 = vmax.f32 %v722, 0.0
  %v979 = vmax.f32 %v723, 0.0
  %v980 = vmax.f32 %v724, 0.0
  %v981 = vmax.f32 %v725, 0.0
  %v982 = vmax.f32 %v726, 0.0
  %v983 = vmax.f32 %v727, 0.0
  %v984 = vmax.f32 %v728, 0.0
  %v985 = vmax.f32 %v729, 0.0
  %v986 = vmax.f32 %v730, 0.0
  %v987 = vmax.f32 %v731, 0.0
  %v988 = vmax.f32 %v732, 0.0
  %v989 = vmax.f32 %v733, 0.0
  %v990 = vmax.f32 %v734, 0.0
  %v991 = vmax.f32 %v735, 0.0
  %v992 = vmax.f32 %v736, 0.0
  %v993 = vmax.f32 %v737, 0.0
  %v994 = vmax.f32 %v738, 0.0
  %v995 = vmax.f32 %v739, 0.0
  %v996 = vmax.f32 %v740, 0.0
  %v997 = vmax.f32 %v741, 0.0
  %v998 = vmax.f32 %v742, 0.0
  %v999 = vmax.f32 %v743, 0.0
  %v1000 = vmax.f32 %v744, 0.0
  %v1001 = vmax.f32 %v745, 0.0
  %v1002 = vmax.f32 %v746, 0.0
  %v1003 = vmax.f32 %v747, 0.0
  %v1004 = vmax.f32 %v748, 0.0
  %v1005 = vmax.f32 %v749, 0.0
  %v1006 = vmax.f32 %v750, 0.0
  %v1007 = vmax.f32 %v751, 0.0
  %v1008 = vmax.f32 %v752, 0.0
  %v1009 = vmax.f32 %v753, 0.0
  %v1010 = vmax.f32 %v754, 0.0
  %v1011 = vmax.f32 %v755, 0.0
  %v1012 = vmax.f32 %v756, 0.0
  %v1013 = vmax.f32 %v757, 0.0
  %v1014 = vmax.f32 %v758, 0.0
  %v1015 = vmax.f32 %v759, 0.0
  %v1016 = vmax.f32 %v760, 0.0
  %v1017 = vmax.f32 %v761, 0.0
  %v1018 = vmax.f32 %v762, 0.0
  %v1019 = vmax.f32 %v763, 0.0
  %v1020 = vmax.f32 %v764, 0.0
  %v1021 = vmax.f32 %v765, 0.0
  %v1022 = vmax.f32 %v766, 0.0
  %v1023 = vmax.f32 %v767, 0.0
  %v1024 = vmax.f32 %v768, 0.0
  %v1025 = vmax.f32 %v769, 0.0
  %v1026 = vmax.f32 %v770, 0.0
  %v1027 = vmax.f32 %v771, 0.0
  %v1028 = vmax.f32 %v772, 0.0
  %v1029 = vmax.f32 %v773, 0.0
  %v1030 = vmax.f32 %v774, 0.0
  %v1031 = vmax.f32 %v775, 0.0
  %v1032 = vmax.f32 %v776, 0.0
  %v1033 = vmax.f32 %v777, 0.0
  %v1034 = vmax.f32 %v778, 0.0
  %v1035 = vmax.f32 %v779, 0.0
  %v1036 = vmax.f32 %v780, 0.0
  %v1037 = vmax.f32 %v781, 0.0
  %v1038 = vmax.f32 %v782, 0.0
  %v1039 = vmax.f32 %v783, 0.0
  %v1040 = vmax.f32 %v784, 0.0
  %v1041 = vmax.f32 %v785, 0.0
  %v1042 = vmax.f32 %v786, 0.0
  %v1043 = vmax.f32 %v787, 0.0
  %v1044 = vmax.f32 %v788, 0.0
  %v1045 = vmax.f32 %v789, 0.0
  %v1046 = vmax.f32 %v790, 0.0
  %v1047 = vmax.f32 %v791, 0.0
  %v1048 = vmax.f32 %v792, 0.0
  %v1049 = vmax.f32 %v793, 0.0
  %v1050 = vmax.f32 %v794, 0.0
  %v1051 = vmax.f32 %v795, 0.0
  %vm1052 = vcmask 130048
  %1053 = vst.msk [vmem:[%s3] sm:$0xff] %vm1052, %v796
  %1054 = vst.msk [vmem:[%s3 + $0x8] sm:$0xff] %vm1052, %v797
  %1055 = vst.msk [vmem:[%s3 + $0x10] sm:$0xff] %vm1052, %v798
  %1056 = vst.msk [vmem:[%s3 + $0x18] sm:$0xff] %vm1052, %v799
  %1057 = vst.msk [vmem:[%s3 + $0x20] sm:$0xff] %vm1052, %v800
  %1058 = vst.msk [vmem:[%s3 + $0x28] sm:$0xff] %vm1052, %v801
  %1059 = vst.msk [vmem:[%s3 + $0x30] sm:$0xff] %vm1052, %v802
  %1060 = vst.msk [vmem:[%s3 + $0x38] sm:$0xff] %vm1052, %v803
  %1061 = vst.msk [vmem:[%s3 + $0x40] sm:$0xff] %vm1052, %v804
  %1062 = vst.msk [vmem:[%s3 + $0x48] sm:$0xff] %vm1052, %v805
  %1063 = vst.msk [vmem:[%s3 + $0x50] sm:$0xff] %vm1052, %v806
  %1064 = vst.msk [vmem:[%s3 + $0x58] sm:$0xff] %vm1052, %v807
  %1065 = vst.msk [vmem:[%s3 + $0x60] sm:$0xff] %vm1052, %v808
  %1066 = vst.msk [vmem:[%s3 + $0x68] sm:$0xff] %vm1052, %v809
  %1067 = vst.msk [vmem:[%s3 + $0x70] sm:$0xff] %vm1052, %v810
  %1068 = vst.msk [vmem:[%s3 + $0x78] sm:$0xff] %vm1052, %v811
  %1069 = vst.msk [vmem:[%s3 + $0x80] sm:$0xff] %vm1052, %v812
  %1070 = vst.msk [vmem:[%s3 + $0x88] sm:$0xff] %vm1052, %v813
  %1071 = vst.msk [vmem:[%s3 + $0x90] sm:$0xff] %vm1052, %v814
  %1072 = vst.msk [vmem:[%s3 + $0x98] sm:$0xff] %vm1052, %v815
  %1073 = vst.msk [vmem:[%s3 + $0xa0] sm:$0xff] %vm1052, %v816
  %1074 = vst.msk [vmem:[%s3 + $0xa8] sm:$0xff] %vm1052, %v817
  %1075 = vst.msk [vmem:[%s3 + $0xb0] sm:$0xff] %vm1052, %v818
  %1076 = vst.msk [vmem:[%s3 + $0xb8] sm:$0xff] %vm1052, %v819
  %1077 = vst.msk [vmem:[%s3 + $0xc0] sm:$0xff] %vm1052, %v820
  %1078 = vst.msk [vmem:[%s3 + $0xc8] sm:$0xff] %vm1052, %v821
  %1079 = vst.msk [vmem:[%s3 + $0xd0] sm:$0xff] %vm1052, %v822
  %1080 = vst.msk [vmem:[%s3 + $0xd8] sm:$0xff] %vm1052, %v823
  %1081 = vst.msk [vmem:[%s3 + $0xe0] sm:$0xff] %vm1052, %v824
  %1082 = vst.msk [vmem:[%s3 + $0xe8] sm:$0xff] %vm1052, %v825
  %1083 = vst.msk [vmem:[%s3 + $0xf0] sm:$0xff] %vm1052, %v826
  %1084 = vst.msk [vmem:[%s3 + $0xf8] sm:$0xff] %vm1052, %v827
  %1085 = vst.msk [vmem:[%s3 + $0x100] sm:$0xff] %vm1052, %v828
  %1086 = vst.msk [vmem:[%s3 + $0x108] sm:$0xff] %vm1052, %v829
  %1087 = vst.msk [vmem:[%s3 + $0x110] sm:$0xff] %vm1052, %v830
  %1088 = vst.msk [vmem:[%s3 + $0x118] sm:$0xff] %vm1052, %v831
  %1089 = vst.msk [vmem:[%s3 + $0x120] sm:$0xff] %vm1052, %v832
  %1090 = vst.msk [vmem:[%s3 + $0x128] sm:$0xff] %vm1052, %v833
  %1091 = vst.msk [vmem:[%s3 + $0x130] sm:$0xff] %vm1052, %v834
  %1092 = vst.msk [vmem:[%s3 + $0x138] sm:$0xff] %vm1052, %v835
  %1093 = vst.msk [vmem:[%s3 + $0x140] sm:$0xff] %vm1052, %v836
  %1094 = vst.msk [vmem:[%s3 + $0x148] sm:$0xff] %vm1052, %v837
  %1095 = vst.msk [vmem:[%s3 + $0x150] sm:$0xff] %vm1052, %v838
  %1096 = vst.msk [vmem:[%s3 + $0x158] sm:$0xff] %vm1052, %v839
  %1097 = vst.msk [vmem:[%s3 + $0x160] sm:$0xff] %vm1052, %v840
  %1098 = vst.msk [vmem:[%s3 + $0x168] sm:$0xff] %vm1052, %v841
  %1099 = vst.msk [vmem:[%s3 + $0x170] sm:$0xff] %vm1052, %v842
  %1100 = vst.msk [vmem:[%s3 + $0x178] sm:$0xff] %vm1052, %v843
  %1101 = vst.msk [vmem:[%s3 + $0x180] sm:$0xff] %vm1052, %v844
  %1102 = vst.msk [vmem:[%s3 + $0x188] sm:$0xff] %vm1052, %v845
  %1103 = vst.msk [vmem:[%s3 + $0x190] sm:$0xff] %vm1052, %v846
  %1104 = vst.msk [vmem:[%s3 + $0x198] sm:$0xff] %vm1052, %v847
  %1105 = vst.msk [vmem:[%s3 + $0x1a0] sm:$0xff] %vm1052, %v848
  %1106 = vst.msk [vmem:[%s3 + $0x1a8] sm:$0xff] %vm1052, %v849
  %1107 = vst.msk [vmem:[%s3 + $0x1b0] sm:$0xff] %vm1052, %v850
  %1108 = vst.msk [vmem:[%s3 + $0x1b8] sm:$0xff] %vm1052, %v851
  %1109 = vst.msk [vmem:[%s3 + $0x1c0] sm:$0xff] %vm1052, %v852
  %1110 = vst.msk [vmem:[%s3 + $0x1c8] sm:$0xff] %vm1052, %v853
  %1111 = vst.msk [vmem:[%s3 + $0x1d0] sm:$0xff] %vm1052, %v854
  %1112 = vst.msk [vmem:[%s3 + $0x1d8] sm:$0xff] %vm1052, %v855
  %1113 = vst.msk [vmem:[%s3 + $0x1e0] sm:$0xff] %vm1052, %v856
  %1114 = vst.msk [vmem:[%s3 + $0x1e8] sm:$0xff] %vm1052, %v857
  %1115 = vst.msk [vmem:[%s3 + $0x1f0] sm:$0xff] %vm1052, %v858
  %1116 = vst.msk [vmem:[%s3 + $0x1f8] sm:$0xff] %vm1052, %v859
  %1117 = vst.msk [vmem:[%s3 + $0x200] sm:$0xff] %vm1052, %v860
  %1118 = vst.msk [vmem:[%s3 + $0x208] sm:$0xff] %vm1052, %v861
  %1119 = vst.msk [vmem:[%s3 + $0x210] sm:$0xff] %vm1052, %v862
  %1120 = vst.msk [vmem:[%s3 + $0x218] sm:$0xff] %vm1052, %v863
  %1121 = vst.msk [vmem:[%s3 + $0x220] sm:$0xff] %vm1052, %v864
  %1122 = vst.msk [vmem:[%s3 + $0x228] sm:$0xff] %vm1052, %v865
  %1123 = vst.msk [vmem:[%s3 + $0x230] sm:$0xff] %vm1052, %v866
  %1124 = vst.msk [vmem:[%s3 + $0x238] sm:$0xff] %vm1052, %v867
  %1125 = vst.msk [vmem:[%s3 + $0x240] sm:$0xff] %vm1052, %v868
  %1126 = vst.msk [vmem:[%s3 + $0x248] sm:$0xff] %vm1052, %v869
  %1127 = vst.msk [vmem:[%s3 + $0x250] sm:$0xff] %vm1052, %v870
  %1128 = vst.msk [vmem:[%s3 + $0x258] sm:$0xff] %vm1052, %v871
  %1129 = vst.msk [vmem:[%s3 + $0x260] sm:$0xff] %vm1052, %v872
  %1130 = vst.msk [vmem:[%s3 + $0x268] sm:$0xff] %vm1052, %v873
  %1131 = vst.msk [vmem:[%s3 + $0x270] sm:$0xff] %vm1052, %v874
  %1132 = vst.msk [vmem:[%s3 + $0x278] sm:$0xff] %vm1052, %v875
  %1133 = vst.msk [vmem:[%s3 + $0x280] sm:$0xff] %vm1052, %v876
  %1134 = vst.msk [vmem:[%s3 + $0x288] sm:$0xff] %vm1052, %v877
  %1135 = vst.msk [vmem:[%s3 + $0x290] sm:$0xff] %vm1052, %v878
  %1136 = vst.msk [vmem:[%s3 + $0x298] sm:$0xff] %vm1052, %v879
  %1137 = vst.msk [vmem:[%s3 + $0x2a0] sm:$0xff] %vm1052, %v880
  %1138 = vst.msk [vmem:[%s3 + $0x2a8] sm:$0xff] %vm1052, %v881
  %1139 = vst.msk [vmem:[%s3 + $0x2b0] sm:$0xff] %vm1052, %v882
  %1140 = vst.msk [vmem:[%s3 + $0x2b8] sm:$0xff] %vm1052, %v883
  %1141 = vst.msk [vmem:[%s3 + $0x2c0] sm:$0xff] %vm1052, %v884
  %1142 = vst.msk [vmem:[%s3 + $0x2c8] sm:$0xff] %vm1052, %v885
  %1143 = vst.msk [vmem:[%s3 + $0x2d0] sm:$0xff] %vm1052, %v886
  %1144 = vst.msk [vmem:[%s3 + $0x2d8] sm:$0xff] %vm1052, %v887
  %1145 = vst.msk [vmem:[%s3 + $0x2e0] sm:$0xff] %vm1052, %v888
  %1146 = vst.msk [vmem:[%s3 + $0x2e8] sm:$0xff] %vm1052, %v889
  %1147 = vst.msk [vmem:[%s3 + $0x2f0] sm:$0xff] %vm1052, %v890
  %1148 = vst.msk [vmem:[%s3 + $0x2f8] sm:$0xff] %vm1052, %v891
  %1149 = vst.msk [vmem:[%s3 + $0x300] sm:$0xff] %vm1052, %v892
  %1150 = vst.msk [vmem:[%s3 + $0x308] sm:$0xff] %vm1052, %v893
  %1151 = vst.msk [vmem:[%s3 + $0x310] sm:$0xff] %vm1052, %v894
  %1152 = vst.msk [vmem:[%s3 + $0x318] sm:$0xff] %vm1052, %v895
  %1153 = vst.msk [vmem:[%s3 + $0x320] sm:$0xff] %vm1052, %v896
  %1154 = vst.msk [vmem:[%s3 + $0x328] sm:$0xff] %vm1052, %v897
  %1155 = vst.msk [vmem:[%s3 + $0x330] sm:$0xff] %vm1052, %v898
  %1156 = vst.msk [vmem:[%s3 + $0x338] sm:$0xff] %vm1052, %v899
  %1157 = vst.msk [vmem:[%s3 + $0x340] sm:$0xff] %vm1052, %v900
  %1158 = vst.msk [vmem:[%s3 + $0x348] sm:$0xff] %vm1052, %v901
  %1159 = vst.msk [vmem:[%s3 + $0x350] sm:$0xff] %vm1052, %v902
  %1160 = vst.msk [vmem:[%s3 + $0x358] sm:$0xff] %vm1052, %v903
  %1161 = vst.msk [vmem:[%s3 + $0x360] sm:$0xff] %vm1052, %v904
  %1162 = vst.msk [vmem:[%s3 + $0x368] sm:$0xff] %vm1052, %v905
  %1163 = vst.msk [vmem:[%s3 + $0x370] sm:$0xff] %vm1052, %v906
  %1164 = vst.msk [vmem:[%s3 + $0x378] sm:$0xff] %vm1052, %v907
  %1165 = vst.msk [vmem:[%s3 + $0x380] sm:$0xff] %vm1052, %v908
  %1166 = vst.msk [vmem:[%s3 + $0x388] sm:$0xff] %vm1052, %v909
  %1167 = vst.msk [vmem:[%s3 + $0x390] sm:$0xff] %vm1052, %v910
  %1168 = vst.msk [vmem:[%s3 + $0x398] sm:$0xff] %vm1052, %v911
  %1169 = vst.msk [vmem:[%s3 + $0x3a0] sm:$0xff] %vm1052, %v912
  %1170 = vst.msk [vmem:[%s3 + $0x3a8] sm:$0xff] %vm1052, %v913
  %1171 = vst.msk [vmem:[%s3 + $0x3b0] sm:$0xff] %vm1052, %v914
  %1172 = vst.msk [vmem:[%s3 + $0x3b8] sm:$0xff] %vm1052, %v915
  %1173 = vst.msk [vmem:[%s3 + $0x3c0] sm:$0xff] %vm1052, %v916
  %1174 = vst.msk [vmem:[%s3 + $0x3c8] sm:$0xff] %vm1052, %v917
  %1175 = vst.msk [vmem:[%s3 + $0x3d0] sm:$0xff] %vm1052, %v918
  %1176 = vst.msk [vmem:[%s3 + $0x3d8] sm:$0xff] %vm1052, %v919
  %1177 = vst.msk [vmem:[%s3 + $0x3e0] sm:$0xff] %vm1052, %v920
  %1178 = vst.msk [vmem:[%s3 + $0x3e8] sm:$0xff] %vm1052, %v921
  %1179 = vst.msk [vmem:[%s3 + $0x3f0] sm:$0xff] %vm1052, %v922
  %1180 = vst.msk [vmem:[%s3 + $0x3f8] sm:$0xff] %vm1052, %v923
  %1181 = vst.msk [vmem:[%s3 + $0x400] sm:$0xff] %vm1052, %v924
  %1182 = vst.msk [vmem:[%s3 + $0x408] sm:$0xff] %vm1052, %v925
  %1183 = vst.msk [vmem:[%s3 + $0x410] sm:$0xff] %vm1052, %v926
  %1184 = vst.msk [vmem:[%s3 + $0x418] sm:$0xff] %vm1052, %v927
  %1185 = vst.msk [vmem:[%s3 + $0x420] sm:$0xff] %vm1052, %v928
  %1186 = vst.msk [vmem:[%s3 + $0x428] sm:$0xff] %vm1052, %v929
  %1187 = vst.msk [vmem:[%s3 + $0x430] sm:$0xff] %vm1052, %v930
  %1188 = vst.msk [vmem:[%s3 + $0x438] sm:$0xff] %vm1052, %v931
  %1189 = vst.msk [vmem:[%s3 + $0x440] sm:$0xff] %vm1052, %v932
  %1190 = vst.msk [vmem:[%s3 + $0x448] sm:$0xff] %vm1052, %v933
  %1191 = vst.msk [vmem:[%s3 + $0x450] sm:$0xff] %vm1052, %v934
  %1192 = vst.msk [vmem:[%s3 + $0x458] sm:$0xff] %vm1052, %v935
  %1193 = vst.msk [vmem:[%s3 + $0x460] sm:$0xff] %vm1052, %v936
  %1194 = vst.msk [vmem:[%s3 + $0x468] sm:$0xff] %vm1052, %v937
  %1195 = vst.msk [vmem:[%s3 + $0x470] sm:$0xff] %vm1052, %v938
  %1196 = vst.msk [vmem:[%s3 + $0x478] sm:$0xff] %vm1052, %v939
  %1197 = vst.msk [vmem:[%s3 + $0x480] sm:$0xff] %vm1052, %v940
  %1198 = vst.msk [vmem:[%s3 + $0x488] sm:$0xff] %vm1052, %v941
  %1199 = vst.msk [vmem:[%s3 + $0x490] sm:$0xff] %vm1052, %v942
  %1200 = vst.msk [vmem:[%s3 + $0x498] sm:$0xff] %vm1052, %v943
  %1201 = vst.msk [vmem:[%s3 + $0x4a0] sm:$0xff] %vm1052, %v944
  %1202 = vst.msk [vmem:[%s3 + $0x4a8] sm:$0xff] %vm1052, %v945
  %1203 = vst.msk [vmem:[%s3 + $0x4b0] sm:$0xff] %vm1052, %v946
  %1204 = vst.msk [vmem:[%s3 + $0x4b8] sm:$0xff] %vm1052, %v947
  %1205 = vst.msk [vmem:[%s3 + $0x4c0] sm:$0xff] %vm1052, %v948
  %1206 = vst.msk [vmem:[%s3 + $0x4c8] sm:$0xff] %vm1052, %v949
  %1207 = vst.msk [vmem:[%s3 + $0x4d0] sm:$0xff] %vm1052, %v950
  %1208 = vst.msk [vmem:[%s3 + $0x4d8] sm:$0xff] %vm1052, %v951
  %1209 = vst.msk [vmem:[%s3 + $0x4e0] sm:$0xff] %vm1052, %v952
  %1210 = vst.msk [vmem:[%s3 + $0x4e8] sm:$0xff] %vm1052, %v953
  %1211 = vst.msk [vmem:[%s3 + $0x4f0] sm:$0xff] %vm1052, %v954
  %1212 = vst.msk [vmem:[%s3 + $0x4f8] sm:$0xff] %vm1052, %v955
  %1213 = vst.msk [vmem:[%s3 + $0x500] sm:$0xff] %vm1052, %v956
  %1214 = vst.msk [vmem:[%s3 + $0x508] sm:$0xff] %vm1052, %v957
  %1215 = vst.msk [vmem:[%s3 + $0x510] sm:$0xff] %vm1052, %v958
  %1216 = vst.msk [vmem:[%s3 + $0x518] sm:$0xff] %vm1052, %v959
  %1217 = vst.msk [vmem:[%s3 + $0x520] sm:$0xff] %vm1052, %v960
  %1218 = vst.msk [vmem:[%s3 + $0x528] sm:$0xff] %vm1052, %v961
  %1219 = vst.msk [vmem:[%s3 + $0x530] sm:$0xff] %vm1052, %v962
  %1220 = vst.msk [vmem:[%s3 + $0x538] sm:$0xff] %vm1052, %v963
  %1221 = vst.msk [vmem:[%s3 + $0x540] sm:$0xff] %vm1052, %v964
  %1222 = vst.msk [vmem:[%s3 + $0x548] sm:$0xff] %vm1052, %v965
  %1223 = vst.msk [vmem:[%s3 + $0x550] sm:$0xff] %vm1052, %v966
  %1224 = vst.msk [vmem:[%s3 + $0x558] sm:$0xff] %vm1052, %v967
  %1225 = vst.msk [vmem:[%s3 + $0x560] sm:$0xff] %vm1052, %v968
  %1226 = vst.msk [vmem:[%s3 + $0x568] sm:$0xff] %vm1052, %v969
  %1227 = vst.msk [vmem:[%s3 + $0x570] sm:$0xff] %vm1052, %v970
  %1228 = vst.msk [vmem:[%s3 + $0x578] sm:$0xff] %vm1052, %v971
  %1229 = vst.msk [vmem:[%s3 + $0x580] sm:$0xff] %vm1052, %v972
  %1230 = vst.msk [vmem:[%s3 + $0x588] sm:$0xff] %vm1052, %v973
  %1231 = vst.msk [vmem:[%s3 + $0x590] sm:$0xff] %vm1052, %v974
  %1232 = vst.msk [vmem:[%s3 + $0x598] sm:$0xff] %vm1052, %v975
  %1233 = vst.msk [vmem:[%s3 + $0x5a0] sm:$0xff] %vm1052, %v976
  %1234 = vst.msk [vmem:[%s3 + $0x5a8] sm:$0xff] %vm1052, %v977
  %1235 = vst.msk [vmem:[%s3 + $0x5b0] sm:$0xff] %vm1052, %v978
  %1236 = vst.msk [vmem:[%s3 + $0x5b8] sm:$0xff] %vm1052, %v979
  %1237 = vst.msk [vmem:[%s3 + $0x5c0] sm:$0xff] %vm1052, %v980
  %1238 = vst.msk [vmem:[%s3 + $0x5c8] sm:$0xff] %vm1052, %v981
  %1239 = vst.msk [vmem:[%s3 + $0x5d0] sm:$0xff] %vm1052, %v982
  %1240 = vst.msk [vmem:[%s3 + $0x5d8] sm:$0xff] %vm1052, %v983
  %1241 = vst.msk [vmem:[%s3 + $0x5e0] sm:$0xff] %vm1052, %v984
  %1242 = vst.msk [vmem:[%s3 + $0x5e8] sm:$0xff] %vm1052, %v985
  %1243 = vst.msk [vmem:[%s3 + $0x5f0] sm:$0xff] %vm1052, %v986
  %1244 = vst.msk [vmem:[%s3 + $0x5f8] sm:$0xff] %vm1052, %v987
  %1245 = vst.msk [vmem:[%s3 + $0x600] sm:$0xff] %vm1052, %v988
  %1246 = vst.msk [vmem:[%s3 + $0x608] sm:$0xff] %vm1052, %v989
  %1247 = vst.msk [vmem:[%s3 + $0x610] sm:$0xff] %vm1052, %v990
  %1248 = vst.msk [vmem:[%s3 + $0x618] sm:$0xff] %vm1052, %v991
  %1249 = vst.msk [vmem:[%s3 + $0x620] sm:$0xff] %vm1052, %v992
  %1250 = vst.msk [vmem:[%s3 + $0x628] sm:$0xff] %vm1052, %v993
  %1251 = vst.msk [vmem:[%s3 + $0x630] sm:$0xff] %vm1052, %v994
  %1252 = vst.msk [vmem:[%s3 + $0x638] sm:$0xff] %vm1052, %v995
  %1253 = vst.msk [vmem:[%s3 + $0x640] sm:$0xff] %vm1052, %v996
  %1254 = vst.msk [vmem:[%s3 + $0x648] sm:$0xff] %vm1052, %v997
  %1255 = vst.msk [vmem:[%s3 + $0x650] sm:$0xff] %vm1052, %v998
  %1256 = vst.msk [vmem:[%s3 + $0x658] sm:$0xff] %vm1052, %v999
  %1257 = vst.msk [vmem:[%s3 + $0x660] sm:$0xff] %vm1052, %v1000
  %1258 = vst.msk [vmem:[%s3 + $0x668] sm:$0xff] %vm1052, %v1001
  %1259 = vst.msk [vmem:[%s3 + $0x670] sm:$0xff] %vm1052, %v1002
  %1260 = vst.msk [vmem:[%s3 + $0x678] sm:$0xff] %vm1052, %v1003
  %1261 = vst.msk [vmem:[%s3 + $0x680] sm:$0xff] %vm1052, %v1004
  %1262 = vst.msk [vmem:[%s3 + $0x688] sm:$0xff] %vm1052, %v1005
  %1263 = vst.msk [vmem:[%s3 + $0x690] sm:$0xff] %vm1052, %v1006
  %1264 = vst.msk [vmem:[%s3 + $0x698] sm:$0xff] %vm1052, %v1007
  %1265 = vst.msk [vmem:[%s3 + $0x6a0] sm:$0xff] %vm1052, %v1008
  %1266 = vst.msk [vmem:[%s3 + $0x6a8] sm:$0xff] %vm1052, %v1009
  %1267 = vst.msk [vmem:[%s3 + $0x6b0] sm:$0xff] %vm1052, %v1010
  %1268 = vst.msk [vmem:[%s3 + $0x6b8] sm:$0xff] %vm1052, %v1011
  %1269 = vst.msk [vmem:[%s3 + $0x6c0] sm:$0xff] %vm1052, %v1012
  %1270 = vst.msk [vmem:[%s3 + $0x6c8] sm:$0xff] %vm1052, %v1013
  %1271 = vst.msk [vmem:[%s3 + $0x6d0] sm:$0xff] %vm1052, %v1014
  %1272 = vst.msk [vmem:[%s3 + $0x6d8] sm:$0xff] %vm1052, %v1015
  %1273 = vst.msk [vmem:[%s3 + $0x6e0] sm:$0xff] %vm1052, %v1016
  %1274 = vst.msk [vmem:[%s3 + $0x6e8] sm:$0xff] %vm1052, %v1017
  %1275 = vst.msk [vmem:[%s3 + $0x6f0] sm:$0xff] %vm1052, %v1018
  %1276 = vst.msk [vmem:[%s3 + $0x6f8] sm:$0xff] %vm1052, %v1019
  %1277 = vst.msk [vmem:[%s3 + $0x700] sm:$0xff] %vm1052, %v1020
  %1278 = vst.msk [vmem:[%s3 + $0x708] sm:$0xff] %vm1052, %v1021
  %1279 = vst.msk [vmem:[%s3 + $0x710] sm:$0xff] %vm1052, %v1022
  %1280 = vst.msk [vmem:[%s3 + $0x718] sm:$0xff] %vm1052, %v1023
  %1281 = vst.msk [vmem:[%s3 + $0x720] sm:$0xff] %vm1052, %v1024
  %1282 = vst.msk [vmem:[%s3 + $0x728] sm:$0xff] %vm1052, %v1025
  %1283 = vst.msk [vmem:[%s3 + $0x730] sm:$0xff] %vm1052, %v1026
  %1284 = vst.msk [vmem:[%s3 + $0x738] sm:$0xff] %vm1052, %v1027
  %1285 = vst.msk [vmem:[%s3 + $0x740] sm:$0xff] %vm1052, %v1028
  %1286 = vst.msk [vmem:[%s3 + $0x748] sm:$0xff] %vm1052, %v1029
  %1287 = vst.msk [vmem:[%s3 + $0x750] sm:$0xff] %vm1052, %v1030
  %1288 = vst.msk [vmem:[%s3 + $0x758] sm:$0xff] %vm1052, %v1031
  %1289 = vst.msk [vmem:[%s3 + $0x760] sm:$0xff] %vm1052, %v1032
  %1290 = vst.msk [vmem:[%s3 + $0x768] sm:$0xff] %vm1052, %v1033
  %1291 = vst.msk [vmem:[%s3 + $0x770] sm:$0xff] %vm1052, %v1034
  %1292 = vst.msk [vmem:[%s3 + $0x778] sm:$0xff] %vm1052, %v1035
  %1293 = vst.msk [vmem:[%s3 + $0x780] sm:$0xff] %vm1052, %v1036
  %1294 = vst.msk [vmem:[%s3 + $0x788] sm:$0xff] %vm1052, %v1037
  %1295 = vst.msk [vmem:[%s3 + $0x790] sm:$0xff] %vm1052, %v1038
  %1296 = vst.msk [vmem:[%s3 + $0x798] sm:$0xff] %vm1052, %v1039
  %1297 = vst.msk [vmem:[%s3 + $0x7a0] sm:$0xff] %vm1052, %v1040
  %1298 = vst.msk [vmem:[%s3 + $0x7a8] sm:$0xff] %vm1052, %v1041
  %1299 = vst.msk [vmem:[%s3 + $0x7b0] sm:$0xff] %vm1052, %v1042
  %1300 = vst.msk [vmem:[%s3 + $0x7b8] sm:$0xff] %vm1052, %v1043
  %1301 = vst.msk [vmem:[%s3 + $0x7c0] sm:$0xff] %vm1052, %v1044
  %1302 = vst.msk [vmem:[%s3 + $0x7c8] sm:$0xff] %vm1052, %v1045
  %1303 = vst.msk [vmem:[%s3 + $0x7d0] sm:$0xff] %vm1052, %v1046
  %1304 = vst.msk [vmem:[%s3 + $0x7d8] sm:$0xff] %vm1052, %v1047
  %1305 = vst.msk [vmem:[%s3 + $0x7e0] sm:$0xff] %vm1052, %v1048
  %1306 = vst.msk [vmem:[%s3 + $0x7e8] sm:$0xff] %vm1052, %v1049
  %1307 = vst.msk [vmem:[%s3 + $0x7f0] sm:$0xff] %vm1052, %v1050
  %1308 = vst.msk [vmem:[%s3 + $0x7f8] sm:$0xff] %vm1052, %v1051
  // Predicated region
  $region14: #{upsample_forward.5} parent=0 // pred_check
    _
  $region15: #{upsample_forward.5} parent=0 // pred_check_branch
    %1310 = sbr.rel (0) target = $region17
  $region16: #{upsample_forward.5} parent=0 // pred_region
    _
  $region17: #{upsample_forward.5} parent=0 // pred_fallthru
    _
  // Predicated region
  $region18: #{upsample_forward.5} parent=0 // pred_check
    _
  $region19: #{upsample_forward.5} parent=0 // pred_check_branch
    %1312 = sbr.rel (0) target = $region21
  $region20: #{upsample_forward.5} parent=0 // pred_region
    _
  $region21: #{upsample_forward.5} parent=0 // pred_fallthru
    _

// kernel: upsample_forward.3
$region0: #{upsample_forward.3}
  #allocation0 [shape = 'u32[]', space=smem, size = 0x4, offset = 0x4, fixed_abs, tag = 'smem constant byte address 0x4 - core index']
  #allocation1 [shape = 'u32[144,128]{1,0:T(1,128)}', space=vmem, size = 0x12000, scoped, tag = 'internal scratch']
  %s0 = inlined_call_operand.vmem [shape: f32[512,8], index: 0, kind: input, shape index: {}]
  %s1 = inlined_call_operand.vmem [shape: f32[2,8,32], index: 1, kind: input, shape index: {}]
  %s2 = inlined_call_operand.vmem [shape: f32[1,32], index: 2, kind: input, shape index: {}]
  %s3 = inlined_call_operand.vmem [shape: f32[32,2,16,32], index: 3, kind: output, shape index: {0}]
  %s4 = inlined_call_operand.vmem [shape: f32[1,8,32], index: 4, kind: output, shape index: {1}]
  %s5 = inlined_call_operand.vmem [shape: f32[1,8,32], index: 5, kind: output, shape index: {2}]
  %6 = xla_tuple %s3, %s4, %s5
  %s7 = sld [smem:[#allocation0]]
  $region38: #{upsample_forward.3} parent=0
    _
  %s9 = ssub.s32 1, %s7
  %s10 = scalar_select 0, %s9, %s7
  // Predicated region
  $region2: #{upsample_forward.3} parent=0 // pred_check
    _
  $region3: #{upsample_forward.3} parent=0 // pred_check_branch
    %12 = sbr.rel (0) target = $region5
  $region4: #{upsample_forward.3} parent=0 // pred_region
    _
  $region5: #{upsample_forward.3} parent=0 // pred_fallthru
    _
  // Predicated region
  $region6: #{upsample_forward.3} parent=0 // pred_check
    _
  $region7: #{upsample_forward.3} parent=0 // pred_check_branch
    %14 = sbr.rel (0) target = $region9
  $region8: #{upsample_forward.3} parent=0 // pred_region
    _
  $region9: #{upsample_forward.3} parent=0 // pred_fallthru
    _
  // Predicated region
  $region10: #{upsample_forward.3} parent=0 // pred_check
    _
  $region11: #{upsample_forward.3} parent=0 // pred_check_branch
    %16 = sbr.rel (0) target = $region13
  $region12: #{upsample_forward.3} parent=0 // pred_region
    _
  $region13: #{upsample_forward.3} parent=0 // pred_fallthru
    _
  %v17 = vld [vmem:[%s0] sm:$0xff]
  %v18 = vld [vmem:[%s0 + $0x8] sm:$0xff]
  %v19 = vld [vmem:[%s0 + $0x10] sm:$0xff]
  %v20 = vld [vmem:[%s0 + $0x18] sm:$0xff]
  %v21 = vld [vmem:[%s0 + $0x20] sm:$0xff]
  %v22 = vld [vmem:[%s0 + $0x28] sm:$0xff]
  %v23 = vld [vmem:[%s0 + $0x30] sm:$0xff]
  %v24 = vld [vmem:[%s0 + $0x38] sm:$0xff]
  %v25 = vld [vmem:[%s0 + $0x40] sm:$0xff]
  %v26 = vld [vmem:[%s0 + $0x48] sm:$0xff]
  %v27 = vld [vmem:[%s0 + $0x50] sm:$0xff]
  %v28 = vld [vmem:[%s0 + $0x58] sm:$0xff]
  %v29 = vld [vmem:[%s0 + $0x60] sm:$0xff]
  %v30 = vld [vmem:[%s0 + $0x68] sm:$0xff]
  %v31 = vld [vmem:[%s0 + $0x70] sm:$0xff]
  %v32 = vld [vmem:[%s0 + $0x78] sm:$0xff]
  %v33 = vld [vmem:[%s0 + $0x80] sm:$0xff]
  %v34 = vld [vmem:[%s0 + $0x88] sm:$0xff]
  %v35 = vld [vmem:[%s0 + $0x90] sm:$0xff]
  %v36 = vld [vmem:[%s0 + $0x98] sm:$0xff]
  %v37 = vld [vmem:[%s0 + $0xa0] sm:$0xff]
  %v38 = vld [vmem:[%s0 + $0xa8] sm:$0xff]
  %v39 = vld [vmem:[%s0 + $0xb0] sm:$0xff]
  %v40 = vld [vmem:[%s0 + $0xb8] sm:$0xff]
  %v41 = vld [vmem:[%s0 + $0xc0] sm:$0xff]
  %v42 = vld [vmem:[%s0 + $0xc8] sm:$0xff]
  %v43 = vld [vmem:[%s0 + $0xd0] sm:$0xff]
  %v44 = vld [vmem:[%s0 + $0xd8] sm:$0xff]
  %v45 = vld [vmem:[%s0 + $0xe0] sm:$0xff]
  %v46 = vld [vmem:[%s0 + $0xe8] sm:$0xff]
  %v47 = vld [vmem:[%s0 + $0xf0] sm:$0xff]
  %v48 = vld [vmem:[%s0 + $0xf8] sm:$0xff]
  %v49 = vld [vmem:[%s0 + $0x100] sm:$0xff]
  %v50 = vld [vmem:[%s0 + $0x108] sm:$0xff]
  %v51 = vld [vmem:[%s0 + $0x110] sm:$0xff]
  %v52 = vld [vmem:[%s0 + $0x118] sm:$0xff]
  %v53 = vld [vmem:[%s0 + $0x120] sm:$0xff]
  %v54 = vld [vmem:[%s0 + $0x128] sm:$0xff]
  %v55 = vld [vmem:[%s0 + $0x130] sm:$0xff]
  %v56 = vld [vmem:[%s0 + $0x138] sm:$0xff]
  %v57 = vld [vmem:[%s0 + $0x140] sm:$0xff]
  %v58 = vld [vmem:[%s0 + $0x148] sm:$0xff]
  %v59 = vld [vmem:[%s0 + $0x150] sm:$0xff]
  %v60 = vld [vmem:[%s0 + $0x158] sm:$0xff]
  %v61 = vld [vmem:[%s0 + $0x160] sm:$0xff]
  %v62 = vld [vmem:[%s0 + $0x168] sm:$0xff]
  %v63 = vld [vmem:[%s0 + $0x170] sm:$0xff]
  %v64 = vld [vmem:[%s0 + $0x178] sm:$0xff]
  %v65 = vld [vmem:[%s0 + $0x180] sm:$0xff]
  %v66 = vld [vmem:[%s0 + $0x188] sm:$0xff]
  %v67 = vld [vmem:[%s0 + $0x190] sm:$0xff]
  %v68 = vld [vmem:[%s0 + $0x198] sm:$0xff]
  %v69 = vld [vmem:[%s0 + $0x1a0] sm:$0xff]
  %v70 = vld [vmem:[%s0 + $0x1a8] sm:$0xff]
  %v71 = vld [vmem:[%s0 + $0x1b0] sm:$0xff]
  %v72 = vld [vmem:[%s0 + $0x1b8] sm:$0xff]
  %v73 = vld [vmem:[%s0 + $0x1c0] sm:$0xff]
  %v74 = vld [vmem:[%s0 + $0x1c8] sm:$0xff]
  %v75 = vld [vmem:[%s0 + $0x1d0] sm:$0xff]
  %v76 = vld [vmem:[%s0 + $0x1d8] sm:$0xff]
  %v77 = vld [vmem:[%s0 + $0x1e0] sm:$0xff]
  %v78 = vld [vmem:[%s0 + $0x1e8] sm:$0xff]
  %v79 = vld [vmem:[%s0 + $0x1f0] sm:$0xff]
  %v80 = vld [vmem:[%s0 + $0x1f8] sm:$0xff]
  %v81 = vld [vmem:[%s2] sm:$0x1]
  %v82 = vld [vmem:[%s1] sm:$0xff]
  %v84 = vlaneseq
  %v85 = vshrl.u32 %v84, 7
  %v86 = vsub.s32 0, %v85
  %v87 = vrot.slane %v81, %v86
  %vm89 = vcmask 64512
  %v91 = vsel %vm89, %v17, 0
  %v94 = vsel %vm89, %v18, 0
  %v97 = vsel %vm89, %v19, 0
  %v100 = vsel %vm89, %v20, 0
  %v103 = vsel %vm89, %v21, 0
  %v106 = vsel %vm89, %v22, 0
  %v109 = vsel %vm89, %v23, 0
  %v112 = vsel %vm89, %v24, 0
  %v115 = vsel %vm89, %v25, 0
  %v118 = vsel %vm89, %v26, 0
  %v121 = vsel %vm89, %v27, 0
  %v124 = vsel %vm89, %v28, 0
  %v127 = vsel %vm89, %v29, 0
  %v130 = vsel %vm89, %v30, 0
  %v133 = vsel %vm89, %v31, 0
  %v136 = vsel %vm89, %v32, 0
  %v139 = vsel %vm89, %v33, 0
  %v142 = vsel %vm89, %v34, 0
  %v145 = vsel %vm89, %v35, 0
  %v148 = vsel %vm89, %v36, 0
  %v151 = vsel %vm89, %v37, 0
  %v154 = vsel %vm89, %v38, 0
  %v157 = vsel %vm89, %v39, 0
  %v160 = vsel %vm89, %v40, 0
  %v163 = vsel %vm89, %v41, 0
  %v166 = vsel %vm89, %v42, 0
  %v169 = vsel %vm89, %v43, 0
  %v172 = vsel %vm89, %v44, 0
  %v175 = vsel %vm89, %v45, 0
  %v178 = vsel %vm89, %v46, 0
  %v181 = vsel %vm89, %v47, 0
  %v184 = vsel %vm89, %v48, 0
  %v187 = vsel %vm89, %v49, 0
  %v190 = vsel %vm89, %v50, 0
  %v193 = vsel %vm89, %v51, 0
  %v196 = vsel %vm89, %v52, 0
  %v199 = vsel %vm89, %v53, 0
  %v202 = vsel %vm89, %v54, 0
  %v205 = vsel %vm89, %v55, 0
  %v208 = vsel %vm89, %v56, 0
  %v211 = vsel %vm89, %v57, 0
  %v214 = vsel %vm89, %v58, 0
  %v217 = vsel %vm89, %v59, 0
  %v220 = vsel %vm89, %v60, 0
  %v223 = vsel %vm89, %v61, 0
  %v226 = vsel %vm89, %v62, 0
  %v229 = vsel %vm89, %v63, 0
  %v232 = vsel %vm89, %v64, 0
  %v235 = vsel %vm89, %v65, 0
  %v238 = vsel %vm89, %v66, 0
  %v241 = vsel %vm89, %v67, 0
  %v244 = vsel %vm89, %v68, 0
  %v247 = vsel %vm89, %v69, 0
  %v250 = vsel %vm89, %v70, 0
  %v253 = vsel %vm89, %v71, 0
  %v256 = vsel %vm89, %v72, 0
  %v259 = vsel %vm89, %v73, 0
  %v262 = vsel %vm89, %v74, 0
  %v265 = vsel %vm89, %v75, 0
  %v268 = vsel %vm89, %v76, 0
  %v271 = vsel %vm89, %v77, 0
  %v274 = vsel %vm89, %v78, 0
  %v277 = vsel %vm89, %v79, 0
  %v280 = vsel %vm89, %v80, 0
  %282 = vmatprep.subr.mxu0 0.0
  %283 = vmatpush1.msra.mxu0 0.0
  %284 = vmatprep.subr.mxu0 0.0
  %285 = vmatpush1.msra.mxu0 0.0
  %286 = vmatprep.subr.mxu0 0.0
  %287 = vmatpush1.msra.mxu0 0.0
  %288 = vmatprep.subr.mxu0 0.0
  %289 = vmatpush1.msra.mxu0 0.0
  %290 = vmatprep.subr.mxu0 0.0
  %291 = vmatpush1.msra.mxu0 0.0
  %292 = vmatprep.subr.mxu0 0.0
  %293 = vmatpush1.msra.mxu0 0.0
  %294 = vmatprep.subr.mxu0 0.0
  %295 = vmatpush1.msra.mxu0 0.0
  %296 = vmatprep.subr.mxu0 0.0
  %297 = vmatpush1.msra.mxu0 0.0
  %298 = vmatprep.subr.mxu0 0.0
  %299 = vmatpush1.msra.mxu0 0.0
  %300 = vmatprep.subr.mxu0 0.0
  %301 = vmatpush1.msra.mxu0 0.0
  %302 = vmatprep.subr.mxu0 0.0
  %303 = vmatpush1.msra.mxu0 0.0
  %304 = vmatprep.subr.mxu0 0.0
  %305 = vmatpush1.msra.mxu0 0.0
  %306 = vmatprep.subr.mxu0 0.0
  %307 = vmatpush1.msra.mxu0 0.0
  %308 = vmatprep.subr.mxu0 0.0
  %309 = vmatpush1.msra.mxu0 0.0
  %310 = vmatprep.subr.mxu0 0.0
  %311 = vmatpush1.msra.mxu0 0.0
  %312 = vmatprep.subr.mxu0 0.0
  %313 = vmatpush1.msra.mxu0 %v82
  %314 = vmatprep.subr.mxu0 0.0
  %315 = vmatpush2.msra.mxu0 0.0
  %316 = vmatprep.subr.mxu0 0.0
  %317 = vmatpush2.msra.mxu0 0.0
  %318 = vmatprep.subr.mxu0 0.0
  %319 = vmatpush2.msra.mxu0 0.0
  %320 = vmatprep.subr.mxu0 0.0
  %321 = vmatpush2.msra.mxu0 0.0
  %322 = vmatprep.subr.mxu0 0.0
  %323 = vmatpush2.msra.mxu0 0.0
  %324 = vmatprep.subr.mxu0 0.0
  %325 = vmatpush2.msra.mxu0 0.0
  %326 = vmatprep.subr.mxu0 0.0
  %327 = vmatpush2.msra.mxu0 0.0
  %328 = vmatprep.subr.mxu0 0.0
  %329 = vmatpush2.msra.mxu0 0.0
  %330 = vmatprep.subr.mxu0 0.0
  %331 = vmatpush2.msra.mxu0 0.0
  %332 = vmatprep.subr.mxu0 0.0
  %333 = vmatpush2.msra.mxu0 0.0
  %334 = vmatprep.subr.mxu0 0.0
  %335 = vmatpush2.msra.mxu0 0.0
  %336 = vmatprep.subr.mxu0 0.0
  %337 = vmatpush2.msra.mxu0 0.0
  %338 = vmatprep.subr.mxu0 0.0
  %339 = vmatpush2.msra.mxu0 0.0
  %340 = vmatprep.subr.mxu0 0.0
  %341 = vmatpush2.msra.mxu0 0.0
  %342 = vmatprep.subr.mxu0 0.0
  %343 = vmatpush2.msra.mxu0 0.0
  %344 = vmatprep.subr.mxu0 0.0
  %345 = vmatpush2.msra.mxu0 0.0
  %346 = vmatprep.mubr.f32.mxu0 0.0
  %347 = vmatmul.mubr.f32.gmra.mxu0 %v91
  %v348 = vpop.f32.mrf.mxu0
  %v349 = vadd.f32 %v87, %v348
  %v350 = vpop.f32.mrf.mxu0
  %351 = vmatprep.mubr.f32.mxu0 0.0
  %352 = vmatmul.mubr.f32.gmra.mxu0 %v94
  %v353 = vpop.f32.mrf.mxu0
  %v354 = vadd.f32 %v87, %v353
  %v355 = vpop.f32.mrf.mxu0
  %356 = vmatprep.mubr.f32.mxu0 0.0
  %357 = vmatmul.mubr.f32.gmra.mxu0 %v97
  %v358 = vpop.f32.mrf.mxu0
  %v359 = vadd.f32 %v87, %v358
  %v360 = vpop.f32.mrf.mxu0
  %361 = vmatprep.mubr.f32.mxu0 0.0
  %362 = vmatmul.mubr.f32.gmra.mxu0 %v100
  %v363 = vpop.f32.mrf.mxu0
  %v364 = vadd.f32 %v87, %v363
  %v365 = vpop.f32.mrf.mxu0
  %366 = vmatprep.mubr.f32.mxu0 0.0
  %367 = vmatmul.mubr.f32.gmra.mxu0 %v103
  %v368 = vpop.f32.mrf.mxu0
  %v369 = vadd.f32 %v87, %v368
  %v370 = vpop.f32.mrf.mxu0
  %371 = vmatprep.mubr.f32.mxu0 0.0
  %372 = vmatmul.mubr.f32.gmra.mxu0 %v106
  %v373 = vpop.f32.mrf.mxu0
  %v374 = vadd.f32 %v87, %v373
  %v375 = vpop.f32.mrf.mxu0
  %376 = vmatprep.mubr.f32.mxu0 0.0
  %377 = vmatmul.mubr.f32.gmra.mxu0 %v109
  %v378 = vpop.f32.mrf.mxu0
  %v379 = vadd.f32 %v87, %v378
  %v380 = vpop.f32.mrf.mxu0
  %381 = vmatprep.mubr.f32.mxu0 0.0
  %382 = vmatmul.mubr.f32.gmra.mxu0 %v112
  %v383 = vpop.f32.mrf.mxu0
  %v384 = vadd.f32 %v87, %v383
  %v385 = vpop.f32.mrf.mxu0
  %386 = vmatprep.mubr.f32.mxu0 0.0
  %387 = vmatmul.mubr.f32.gmra.mxu0 %v115
  %v388 = vpop.f32.mrf.mxu0
  %v389 = vadd.f32 %v87, %v388
  %v390 = vpop.f32.mrf.mxu0
  %391 = vmatprep.mubr.f32.mxu0 0.0
  %392 = vmatmul.mubr.f32.gmra.mxu0 %v118
  %v393 = vpop.f32.mrf.mxu0
  %v394 = vadd.f32 %v87, %v393
  %v395 = vpop.f32.mrf.mxu0
  %396 = vmatprep.mubr.f32.mxu0 0.0
  %397 = vmatmul.mubr.f32.gmra.mxu0 %v121
  %v398 = vpop.f32.mrf.mxu0
  %v399 = vadd.f32 %v87, %v398
  %v400 = vpop.f32.mrf.mxu0
  %401 = vmatprep.mubr.f32.mxu0 0.0
  %402 = vmatmul.mubr.f32.gmra.mxu0 %v124
  %v403 = vpop.f32.mrf.mxu0
  %v404 = vadd.f32 %v87, %v403
  %v405 = vpop.f32.mrf.mxu0
  %406 = vmatprep.mubr.f32.mxu0 0.0
  %407 = vmatmul.mubr.f32.gmra.mxu0 %v127
  %v408 = vpop.f32.mrf.mxu0
  %v409 = vadd.f32 %v87, %v408
  %v410 = vpop.f32.mrf.mxu0
  %411 = vmatprep.mubr.f32.mxu0 0.0
  %412 = vmatmul.mubr.f32.gmra.mxu0 %v130
  %v413 = vpop.f32.mrf.mxu0
  %v414 = vadd.f32 %v87, %v413
  %v415 = vpop.f32.mrf.mxu0
  %416 = vmatprep.mubr.f32.mxu0 0.0
  %417 = vmatmul.mubr.f32.gmra.mxu0 %v133
  %v418 = vpop.f32.mrf.mxu0
  %v419 = vadd.f32 %v87, %v418
  %v420 = vpop.f32.mrf.mxu0
  %421 = vmatprep.mubr.f32.mxu0 0.0
  %422 = vmatmul.mubr.f32.gmra.mxu0 %v136
  %v423 = vpop.f32.mrf.mxu0
  %v424 = vadd.f32 %v87, %v423
  %v425 = vpop.f32.mrf.mxu0
  %426 = vmatprep.mubr.f32.mxu0 0.0
  %427 = vmatmul.mubr.f32.gmra.mxu0 %v139
  %v428 = vpop.f32.mrf.mxu0
  %v429 = vadd.f32 %v87, %v428
  %v430 = vpop.f32.mrf.mxu0
  %431 = vmatprep.mubr.f32.mxu0 0.0
  %432 = vmatmul.mubr.f32.gmra.mxu0 %v142
  %v433 = vpop.f32.mrf.mxu0
  %v434 = vadd.f32 %v87, %v433
  %v435 = vpop.f32.mrf.mxu0
  %436 = vmatprep.mubr.f32.mxu0 0.0
  %437 = vmatmul.mubr.f32.gmra.mxu0 %v145
  %v438 = vpop.f32.mrf.mxu0
  %v439 = vadd.f32 %v87, %v438
  %v440 = vpop.f32.mrf.mxu0
  %441 = vmatprep.mubr.f32.mxu0 0.0
  %442 = vmatmul.mubr.f32.gmra.mxu0 %v148
  %v443 = vpop.f32.mrf.mxu0
  %v444 = vadd.f32 %v87, %v443
  %v445 = vpop.f32.mrf.mxu0
  %446 = vmatprep.mubr.f32.mxu0 0.0
  %447 = vmatmul.mubr.f32.gmra.mxu0 %v151
  %v448 = vpop.f32.mrf.mxu0
  %v449 = vadd.f32 %v87, %v448
  %v450 = vpop.f32.mrf.mxu0
  %451 = vmatprep.mubr.f32.mxu0 0.0
  %452 = vmatmul.mubr.f32.gmra.mxu0 %v154
  %v453 = vpop.f32.mrf.mxu0
  %v454 = vadd.f32 %v87, %v453
  %v455 = vpop.f32.mrf.mxu0
  %456 = vmatprep.mubr.f32.mxu0 0.0
  %457 = vmatmul.mubr.f32.gmra.mxu0 %v157
  %v458 = vpop.f32.mrf.mxu0
  %v459 = vadd.f32 %v87, %v458
  %v460 = vpop.f32.mrf.mxu0
  %461 = vmatprep.mubr.f32.mxu0 0.0
  %462 = vmatmul.mubr.f32.gmra.mxu0 %v160
  %v463 = vpop.f32.mrf.mxu0
  %v464 = vadd.f32 %v87, %v463
  %v465 = vpop.f32.mrf.mxu0
  %466 = vmatprep.mubr.f32.mxu0 0.0
  %467 = vmatmul.mubr.f32.gmra.mxu0 %v163
  %v468 = vpop.f32.mrf.mxu0
  %v469 = vadd.f32 %v87, %v468
  %v470 = vpop.f32.mrf.mxu0
  %471 = vmatprep.mubr.f32.mxu0 0.0
  %472 = vmatmul.mubr.f32.gmra.mxu0 %v166
  %v473 = vpop.f32.mrf.mxu0
  %v474 = vadd.f32 %v87, %v473
  %v475 = vpop.f32.mrf.mxu0
  %476 = vmatprep.mubr.f32.mxu0 0.0
  %477 = vmatmul.mubr.f32.gmra.mxu0 %v169
  %v478 = vpop.f32.mrf.mxu0
  %v479 = vadd.f32 %v87, %v478
  %v480 = vpop.f32.mrf.mxu0
  %481 = vmatprep.mubr.f32.mxu0 0.0
  %482 = vmatmul.mubr.f32.gmra.mxu0 %v172
  %v483 = vpop.f32.mrf.mxu0
  %v484 = vadd.f32 %v87, %v483
  %v485 = vpop.f32.mrf.mxu0
  %486 = vmatprep.mubr.f32.mxu0 0.0
  %487 = vmatmul.mubr.f32.gmra.mxu0 %v175
  %v488 = vpop.f32.mrf.mxu0
  %v489 = vadd.f32 %v87, %v488
  %v490 = vpop.f32.mrf.mxu0
  %491 = vmatprep.mubr.f32.mxu0 0.0
  %492 = vmatmul.mubr.f32.gmra.mxu0 %v178
  %v493 = vpop.f32.mrf.mxu0
  %v494 = vadd.f32 %v87, %v493
  %v495 = vpop.f32.mrf.mxu0
  %496 = vmatprep.mubr.f32.mxu0 0.0
  %497 = vmatmul.mubr.f32.gmra.mxu0 %v181
  %v498 = vpop.f32.mrf.mxu0
  %v499 = vadd.f32 %v87, %v498
  %v500 = vpop.f32.mrf.mxu0
  %501 = vmatprep.mubr.f32.mxu0 0.0
  %502 = vmatmul.mubr.f32.gmra.mxu0 %v184
  %v503 = vpop.f32.mrf.mxu0
  %v504 = vadd.f32 %v87, %v503
  %v505 = vpop.f32.mrf.mxu0
  %506 = vmatprep.mubr.f32.mxu0 0.0
  %507 = vmatmul.mubr.f32.gmra.mxu0 %v187
  %v508 = vpop.f32.mrf.mxu0
  %v509 = vadd.f32 %v87, %v508
  %v510 = vpop.f32.mrf.mxu0
  %511 = vmatprep.mubr.f32.mxu0 0.0
  %512 = vmatmul.mubr.f32.gmra.mxu0 %v190
  %v513 = vpop.f32.mrf.mxu0
  %v514 = vadd.f32 %v87, %v513
  %v515 = vpop.f32.mrf.mxu0
  %516 = vmatprep.mubr.f32.mxu0 0.0
  %517 = vmatmul.mubr.f32.gmra.mxu0 %v193
  %v518 = vpop.f32.mrf.mxu0
  %v519 = vadd.f32 %v87, %v518
  %v520 = vpop.f32.mrf.mxu0
  %521 = vmatprep.mubr.f32.mxu0 0.0
  %522 = vmatmul.mubr.f32.gmra.mxu0 %v196
  %v523 = vpop.f32.mrf.mxu0
  %v524 = vadd.f32 %v87, %v523
  %v525 = vpop.f32.mrf.mxu0
  %526 = vmatprep.mubr.f32.mxu0 0.0
  %527 = vmatmul.mubr.f32.gmra.mxu0 %v199
  %v528 = vpop.f32.mrf.mxu0
  %v529 = vadd.f32 %v87, %v528
  %v530 = vpop.f32.mrf.mxu0
  %531 = vmatprep.mubr.f32.mxu0 0.0
  %532 = vmatmul.mubr.f32.gmra.mxu0 %v202
  %v533 = vpop.f32.mrf.mxu0
  %v534 = vadd.f32 %v87, %v533
  %v535 = vpop.f32.mrf.mxu0
  %536 = vmatprep.mubr.f32.mxu0 0.0
  %537 = vmatmul.mubr.f32.gmra.mxu0 %v205
  %v538 = vpop.f32.mrf.mxu0
  %v539 = vadd.f32 %v87, %v538
  %v540 = vpop.f32.mrf.mxu0
  %541 = vmatprep.mubr.f32.mxu0 0.0
  %542 = vmatmul.mubr.f32.gmra.mxu0 %v208
  %v543 = vpop.f32.mrf.mxu0
  %v544 = vadd.f32 %v87, %v543
  %v545 = vpop.f32.mrf.mxu0
  %546 = vmatprep.mubr.f32.mxu0 0.0
  %547 = vmatmul.mubr.f32.gmra.mxu0 %v211
  %v548 = vpop.f32.mrf.mxu0
  %v549 = vadd.f32 %v87, %v548
  %v550 = vpop.f32.mrf.mxu0
  %551 = vmatprep.mubr.f32.mxu0 0.0
  %552 = vmatmul.mubr.f32.gmra.mxu0 %v214
  %v553 = vpop.f32.mrf.mxu0
  %v554 = vadd.f32 %v87, %v553
  %v555 = vpop.f32.mrf.mxu0
  %556 = vmatprep.mubr.f32.mxu0 0.0
  %557 = vmatmul.mubr.f32.gmra.mxu0 %v217
  %v558 = vpop.f32.mrf.mxu0
  %v559 = vadd.f32 %v87, %v558
  %v560 = vpop.f32.mrf.mxu0
  %561 = vmatprep.mubr.f32.mxu0 0.0
  %562 = vmatmul.mubr.f32.gmra.mxu0 %v220
  %v563 = vpop.f32.mrf.mxu0
  %v564 = vadd.f32 %v87, %v563
  %v565 = vpop.f32.mrf.mxu0
  %566 = vmatprep.mubr.f32.mxu0 0.0
  %567 = vmatmul.mubr.f32.gmra.mxu0 %v223
  %v568 = vpop.f32.mrf.mxu0
  %v569 = vadd.f32 %v87, %v568
  %v570 = vpop.f32.mrf.mxu0
  %571 = vmatprep.mubr.f32.mxu0 0.0
  %572 = vmatmul.mubr.f32.gmra.mxu0 %v226
  %v573 = vpop.f32.mrf.mxu0
  %v574 = vadd.f32 %v87, %v573
  %v575 = vpop.f32.mrf.mxu0
  %576 = vmatprep.mubr.f32.mxu0 0.0
  %577 = vmatmul.mubr.f32.gmra.mxu0 %v229
  %v578 = vpop.f32.mrf.mxu0
  %v579 = vadd.f32 %v87, %v578
  %v580 = vpop.f32.mrf.mxu0
  %581 = vmatprep.mubr.f32.mxu0 0.0
  %582 = vmatmul.mubr.f32.gmra.mxu0 %v232
  %v583 = vpop.f32.mrf.mxu0
  %v584 = vadd.f32 %v87, %v583
  %v585 = vpop.f32.mrf.mxu0
  %586 = vmatprep.mubr.f32.mxu0 0.0
  %587 = vmatmul.mubr.f32.gmra.mxu0 %v235
  %v588 = vpop.f32.mrf.mxu0
  %v589 = vadd.f32 %v87, %v588
  %v590 = vpop.f32.mrf.mxu0
  %591 = vmatprep.mubr.f32.mxu0 0.0
  %592 = vmatmul.mubr.f32.gmra.mxu0 %v238
  %v593 = vpop.f32.mrf.mxu0
  %v594 = vadd.f32 %v87, %v593
  %v595 = vpop.f32.mrf.mxu0
  %596 = vmatprep.mubr.f32.mxu0 0.0
  %597 = vmatmul.mubr.f32.gmra.mxu0 %v241
  %v598 = vpop.f32.mrf.mxu0
  %v599 = vadd.f32 %v87, %v598
  %v600 = vpop.f32.mrf.mxu0
  %601 = vmatprep.mubr.f32.mxu0 0.0
  %602 = vmatmul.mubr.f32.gmra.mxu0 %v244
  %v603 = vpop.f32.mrf.mxu0
  %v604 = vadd.f32 %v87, %v603
  %v605 = vpop.f32.mrf.mxu0
  %606 = vmatprep.mubr.f32.mxu0 0.0
  %607 = vmatmul.mubr.f32.gmra.mxu0 %v247
  %v608 = vpop.f32.mrf.mxu0
  %v609 = vadd.f32 %v87, %v608
  %v610 = vpop.f32.mrf.mxu0
  %611 = vmatprep.mubr.f32.mxu0 0.0
  %612 = vmatmul.mubr.f32.gmra.mxu0 %v250
  %v613 = vpop.f32.mrf.mxu0
  %v614 = vadd.f32 %v87, %v613
  %v615 = vpop.f32.mrf.mxu0
  %616 = vmatprep.mubr.f32.mxu0 0.0
  %617 = vmatmul.mubr.f32.gmra.mxu0 %v253
  %v618 = vpop.f32.mrf.mxu0
  %v619 = vadd.f32 %v87, %v618
  %v620 = vpop.f32.mrf.mxu0
  %621 = vmatprep.mubr.f32.mxu0 0.0
  %622 = vmatmul.mubr.f32.gmra.mxu0 %v256
  %v623 = vpop.f32.mrf.mxu0
  %v624 = vadd.f32 %v87, %v623
  %v625 = vpop.f32.mrf.mxu0
  %626 = vmatprep.mubr.f32.mxu0 0.0
  %627 = vmatmul.mubr.f32.gmra.mxu0 %v259
  %v628 = vpop.f32.mrf.mxu0
  %v629 = vadd.f32 %v87, %v628
  %v630 = vpop.f32.mrf.mxu0
  %631 = vmatprep.mubr.f32.mxu0 0.0
  %632 = vmatmul.mubr.f32.gmra.mxu0 %v262
  %v633 = vpop.f32.mrf.mxu0
  %v634 = vadd.f32 %v87, %v633
  %v635 = vpop.f32.mrf.mxu0
  %636 = vmatprep.mubr.f32.mxu0 0.0
  %637 = vmatmul.mubr.f32.gmra.mxu0 %v265
  %v638 = vpop.f32.mrf.mxu0
  %v639 = vadd.f32 %v87, %v638
  %v640 = vpop.f32.mrf.mxu0
  %641 = vmatprep.mubr.f32.mxu0 0.0
  %642 = vmatmul.mubr.f32.gmra.mxu0 %v268
  %v643 = vpop.f32.mrf.mxu0
  %v644 = vadd.f32 %v87, %v643
  %v645 = vpop.f32.mrf.mxu0
  %646 = vmatprep.mubr.f32.mxu0 0.0
  %647 = vmatmul.mubr.f32.gmra.mxu0 %v271
  %v648 = vpop.f32.mrf.mxu0
  %v649 = vadd.f32 %v87, %v648
  %v650 = vpop.f32.mrf.mxu0
  %651 = vmatprep.mubr.f32.mxu0 0.0
  %652 = vmatmul.mubr.f32.gmra.mxu0 %v274
  %v653 = vpop.f32.mrf.mxu0
  %v654 = vadd.f32 %v87, %v653
  %v655 = vpop.f32.mrf.mxu0
  %656 = vmatprep.mubr.f32.mxu0 0.0
  %657 = vmatmul.mubr.f32.gmra.mxu0 %v277
  %v658 = vpop.f32.mrf.mxu0
  %v659 = vadd.f32 %v87, %v658
  %v660 = vpop.f32.mrf.mxu0
  %661 = vmatprep.mubr.f32.mxu0 0.0
  %662 = vmatmul.mubr.f32.gmra.mxu0 %v280
  %v663 = vpop.f32.mrf.mxu0
  %v664 = vadd.f32 %v87, %v663
  %v665 = vpop.f32.mrf.mxu0
  %666 = vdwg.mxu0
  %vm667 = vcmask 261120
  %668 = vst.msk [vmem:[%s3] sm:$0xff] %vm667, %v349
  %669 = vst.msk [vmem:[%s3 + $0x8] sm:$0xff] %vm667, %v354
  %670 = vst.msk [vmem:[%s3 + $0x20] sm:$0xff] %vm667, %v359
  %671 = vst.msk [vmem:[%s3 + $0x28] sm:$0xff] %vm667, %v364
  %672 = vst.msk [vmem:[%s3 + $0x40] sm:$0xff] %vm667, %v369
  %673 = vst.msk [vmem:[%s3 + $0x48] sm:$0xff] %vm667, %v374
  %674 = vst.msk [vmem:[%s3 + $0x60] sm:$0xff] %vm667, %v379
  %675 = vst.msk [vmem:[%s3 + $0x68] sm:$0xff] %vm667, %v384
  %676 = vst.msk [vmem:[%s3 + $0x80] sm:$0xff] %vm667, %v389
  %677 = vst.msk [vmem:[%s3 + $0x88] sm:$0xff] %vm667, %v394
  %678 = vst.msk [vmem:[%s3 + $0xa0] sm:$0xff] %vm667, %v399
  %679 = vst.msk [vmem:[%s3 + $0xa8] sm:$0xff] %vm667, %v404
  %680 = vst.msk [vmem:[%s3 + $0xc0] sm:$0xff] %vm667, %v409
  %681 = vst.msk [vmem:[%s3 + $0xc8] sm:$0xff] %vm667, %v414
  %682 = vst.msk [vmem:[%s3 + $0xe0] sm:$0xff] %vm667, %v419
  %683 = vst.msk [vmem:[%s3 + $0xe8] sm:$0xff] %vm667, %v424
  %684 = vst.msk [vmem:[%s3 + $0x100] sm:$0xff] %vm667, %v429
  %685 = vst.msk [vmem:[%s3 + $0x108] sm:$0xff] %vm667, %v434
  %686 = vst.msk [vmem:[%s3 + $0x120] sm:$0xff] %vm667, %v439
  %687 = vst.msk [vmem:[%s3 + $0x128] sm:$0xff] %vm667, %v444
  %688 = vst.msk [vmem:[%s3 + $0x140] sm:$0xff] %vm667, %v449
  %689 = vst.msk [vmem:[%s3 + $0x148] sm:$0xff] %vm667, %v454
  %690 = vst.msk [vmem:[%s3 + $0x160] sm:$0xff] %vm667, %v459
  %691 = vst.msk [vmem:[%s3 + $0x168] sm:$0xff] %vm667, %v464
  %692 = vst.msk [vmem:[%s3 + $0x180] sm:$0xff] %vm667, %v469
  %693 = vst.msk [vmem:[%s3 + $0x188] sm:$0xff] %vm667, %v474
  %694 = vst.msk [vmem:[%s3 + $0x1a0] sm:$0xff] %vm667, %v479
  %695 = vst.msk [vmem:[%s3 + $0x1a8] sm:$0xff] %vm667, %v484
  %696 = vst.msk [vmem:[%s3 + $0x1c0] sm:$0xff] %vm667, %v489
  %697 = vst.msk [vmem:[%s3 + $0x1c8] sm:$0xff] %vm667, %v494
  %698 = vst.msk [vmem:[%s3 + $0x1e0] sm:$0xff] %vm667, %v499
  %699 = vst.msk [vmem:[%s3 + $0x1e8] sm:$0xff] %vm667, %v504
  %700 = vst.msk [vmem:[%s3 + $0x200] sm:$0xff] %vm667, %v509
  %701 = vst.msk [vmem:[%s3 + $0x208] sm:$0xff] %vm667, %v514
  %702 = vst.msk [vmem:[%s3 + $0x220] sm:$0xff] %vm667, %v519
  %703 = vst.msk [vmem:[%s3 + $0x228] sm:$0xff] %vm667, %v524
  %704 = vst.msk [vmem:[%s3 + $0x240] sm:$0xff] %vm667, %v529
  %705 = vst.msk [vmem:[%s3 + $0x248] sm:$0xff] %vm667, %v534
  %706 = vst.msk [vmem:[%s3 + $0x260] sm:$0xff] %vm667, %v539
  %707 = vst.msk [vmem:[%s3 + $0x268] sm:$0xff] %vm667, %v544
  %708 = vst.msk [vmem:[%s3 + $0x280] sm:$0xff] %vm667, %v549
  %709 = vst.msk [vmem:[%s3 + $0x288] sm:$0xff] %vm667, %v554
  %710 = vst.msk [vmem:[%s3 + $0x2a0] sm:$0xff] %vm667, %v559
  %711 = vst.msk [vmem:[%s3 + $0x2a8] sm:$0xff] %vm667, %v564
  %712 = vst.msk [vmem:[%s3 + $0x2c0] sm:$0xff] %vm667, %v569
  %713 = vst.msk [vmem:[%s3 + $0x2c8] sm:$0xff] %vm667, %v574
  %714 = vst.msk [vmem:[%s3 + $0x2e0] sm:$0xff] %vm667, %v579
  %715 = vst.msk [vmem:[%s3 + $0x2e8] sm:$0xff] %vm667, %v584
  %716 = vst.msk [vmem:[%s3 + $0x300] sm:$0xff] %vm667, %v589
  %717 = vst.msk [vmem:[%s3 + $0x308] sm:$0xff] %vm667, %v594
  %718 = vst.msk [vmem:[%s3 + $0x320] sm:$0xff] %vm667, %v599
  %719 = vst.msk [vmem:[%s3 + $0x328] sm:$0xff] %vm667, %v604
  %720 = vst.msk [vmem:[%s3 + $0x340] sm:$0xff] %vm667, %v609
  %721 = vst.msk [vmem:[%s3 + $0x348] sm:$0xff] %vm667, %v614
  %722 = vst.msk [vmem:[%s3 + $0x360] sm:$0xff] %vm667, %v619
  %723 = vst.msk [vmem:[%s3 + $0x368] sm:$0xff] %vm667, %v624
  %724 = vst.msk [vmem:[%s3 + $0x380] sm:$0xff] %vm667, %v629
  %725 = vst.msk [vmem:[%s3 + $0x388] sm:$0xff] %vm667, %v634
  %726 = vst.msk [vmem:[%s3 + $0x3a0] sm:$0xff] %vm667, %v639
  %727 = vst.msk [vmem:[%s3 + $0x3a8] sm:$0xff] %vm667, %v644
  %728 = vst.msk [vmem:[%s3 + $0x3c0] sm:$0xff] %vm667, %v649
  %729 = vst.msk [vmem:[%s3 + $0x3c8] sm:$0xff] %vm667, %v654
  %730 = vst.msk [vmem:[%s3 + $0x3e0] sm:$0xff] %vm667, %v659
  %731 = vst.msk [vmem:[%s3 + $0x3e8] sm:$0xff] %vm667, %v664
  %v732 = vsel %vm667, %v349, 0.0
  %v733 = vsel %vm667, %v354, 0.0
  %v734 = vadd.f32 %v732, %v733
  %v735 = vsel %vm667, %v359, 0.0
  %v736 = vadd.f32 %v734, %v735
  %v737 = vsel %vm667, %v364, 0.0
  %v738 = vadd.f32 %v736, %v737
  %v739 = vsel %vm667, %v369, 0.0
  %v740 = vadd.f32 %v738, %v739
  %v741 = vsel %vm667, %v374, 0.0
  %v742 = vadd.f32 %v740, %v741
  %v743 = vsel %vm667, %v379, 0.0
  %v744 = vadd.f32 %v742, %v743
  %v745 = vsel %vm667, %v384, 0.0
  %v746 = vadd.f32 %v744, %v745
  %v747 = vsel %vm667, %v389, 0.0
  %v748 = vadd.f32 %v746, %v747
  %v749 = vsel %vm667, %v394, 0.0
  %v750 = vadd.f32 %v748, %v749
  %v751 = vsel %vm667, %v399, 0.0
  %v752 = vadd.f32 %v750, %v751
  %v753 = vsel %vm667, %v404, 0.0
  %v754 = vadd.f32 %v752, %v753
  %v755 = vsel %vm667, %v409, 0.0
  %v756 = vadd.f32 %v754, %v755
  %v757 = vsel %vm667, %v414, 0.0
  %v758 = vadd.f32 %v756, %v757
  %v759 = vsel %vm667, %v419, 0.0
  %v760 = vadd.f32 %v758, %v759
  %v761 = vsel %vm667, %v424, 0.0
  %v762 = vadd.f32 %v760, %v761
  %v763 = vsel %vm667, %v429, 0.0
  %v764 = vadd.f32 %v762, %v763
  %v765 = vsel %vm667, %v434, 0.0
  %v766 = vadd.f32 %v764, %v765
  %v767 = vsel %vm667, %v439, 0.0
  %v768 = vadd.f32 %v766, %v767
  %v769 = vsel %vm667, %v444, 0.0
  %v770 = vadd.f32 %v768, %v769
  %v771 = vsel %vm667, %v449, 0.0
  %v772 = vadd.f32 %v770, %v771
  %v773 = vsel %vm667, %v454, 0.0
  %v774 = vadd.f32 %v772, %v773
  %v775 = vsel %vm667, %v459, 0.0
  %v776 = vadd.f32 %v774, %v775
  %v777 = vsel %vm667, %v464, 0.0
  %v778 = vadd.f32 %v776, %v777
  %v779 = vsel %vm667, %v469, 0.0
  %v780 = vadd.f32 %v778, %v779
  %v781 = vsel %vm667, %v474, 0.0
  %v782 = vadd.f32 %v780, %v781
  %v783 = vsel %vm667, %v479, 0.0
  %v784 = vadd.f32 %v782, %v783
  %v785 = vsel %vm667, %v484, 0.0
  %v786 = vadd.f32 %v784, %v785
  %v787 = vsel %vm667, %v489, 0.0
  %v788 = vadd.f32 %v786, %v787
  %v789 = vsel %vm667, %v494, 0.0
  %v790 = vadd.f32 %v788, %v789
  %v791 = vsel %vm667, %v499, 0.0
  %v792 = vadd.f32 %v790, %v791
  %v793 = vsel %vm667, %v504, 0.0
  %v794 = vadd.f32 %v792, %v793
  %v795 = vsel %vm667, %v509, 0.0
  %v796 = vadd.f32 %v794, %v795
  %v797 = vsel %vm667, %v514, 0.0
  %v798 = vadd.f32 %v796, %v797
  %v799 = vsel %vm667, %v519, 0.0
  %v800 = vadd.f32 %v798, %v799
  %v801 = vsel %vm667, %v524, 0.0
  %v802 = vadd.f32 %v800, %v801
  %v803 = vsel %vm667, %v529, 0.0
  %v804 = vadd.f32 %v802, %v803
  %v805 = vsel %vm667, %v534, 0.0
  %v806 = vadd.f32 %v804, %v805
  %v807 = vsel %vm667, %v539, 0.0
  %v808 = vadd.f32 %v806, %v807
  %v809 = vsel %vm667, %v544, 0.0
  %v810 = vadd.f32 %v808, %v809
  %v811 = vsel %vm667, %v549, 0.0
  %v812 = vadd.f32 %v810, %v811
  %v813 = vsel %vm667, %v554, 0.0
  %v814 = vadd.f32 %v812, %v813
  %v815 = vsel %vm667, %v559, 0.0
  %v816 = vadd.f32 %v814, %v815
  %v817 = vsel %vm667, %v564, 0.0
  %v818 = vadd.f32 %v816, %v817
  %v819 = vsel %vm667, %v569, 0.0
  %v820 = vadd.f32 %v818, %v819
  %v821 = vsel %vm667, %v574, 0.0
  %v822 = vadd.f32 %v820, %v821
  %v823 = vsel %vm667, %v579, 0.0
  %v824 = vadd.f32 %v822, %v823
  %v825 = vsel %vm667, %v584, 0.0
  %v826 = vadd.f32 %v824, %v825
  %v827 = vsel %vm667, %v589, 0.0
  %v828 = vadd.f32 %v826, %v827
  %v829 = vsel %vm667, %v594, 0.0
  %v830 = vadd.f32 %v828, %v829
  %v831 = vsel %vm667, %v599, 0.0
  %v832 = vadd.f32 %v830, %v831
  %v833 = vsel %vm667, %v604, 0.0
  %v834 = vadd.f32 %v832, %v833
  %v835 = vsel %vm667, %v609, 0.0
  %v836 = vadd.f32 %v834, %v835
  %v837 = vsel %vm667, %v614, 0.0
  %v838 = vadd.f32 %v836, %v837
  %v839 = vsel %vm667, %v619, 0.0
  %v840 = vadd.f32 %v838, %v839
  %v841 = vsel %vm667, %v624, 0.0
  %v842 = vadd.f32 %v840, %v841
  %v843 = vsel %vm667, %v629, 0.0
  %v844 = vadd.f32 %v842, %v843
  %v845 = vsel %vm667, %v634, 0.0
  %v846 = vadd.f32 %v844, %v845
  %v847 = vsel %vm667, %v639, 0.0
  %v848 = vadd.f32 %v846, %v847
  %v849 = vsel %vm667, %v644, 0.0
  %v850 = vadd.f32 %v848, %v849
  %v851 = vsel %vm667, %v649, 0.0
  %v852 = vadd.f32 %v850, %v851
  %v853 = vsel %vm667, %v654, 0.0
  %v854 = vadd.f32 %v852, %v853
  %v855 = vsel %vm667, %v659, 0.0
  %v856 = vadd.f32 %v854, %v855
  %v857 = vsel %vm667, %v664, 0.0
  %v858 = vadd.f32 %v856, %v857
  %v859 = vadd.f32 %v858, 0.0
  %v860 = vmul.f32 %v349, %v349
  %v861 = vmul.f32 %v354, %v354
  %v862 = vmul.f32 %v359, %v359
  %v863 = vmul.f32 %v364, %v364
  %v864 = vmul.f32 %v369, %v369
  %v865 = vmul.f32 %v374, %v374
  %v866 = vmul.f32 %v379, %v379
  %v867 = vmul.f32 %v384, %v384
  %v868 = vmul.f32 %v389, %v389
  %v869 = vmul.f32 %v394, %v394
  %v870 = vmul.f32 %v399, %v399
  %v871 = vmul.f32 %v404, %v404
  %v872 = vmul.f32 %v409, %v409
  %v873 = vmul.f32 %v414, %v414
  %v874 = vmul.f32 %v419, %v419
  %v875 = vmul.f32 %v424, %v424
  %v876 = vmul.f32 %v429, %v429
  %v877 = vmul.f32 %v434, %v434
  %v878 = vmul.f32 %v439, %v439
  %v879 = vmul.f32 %v444, %v444
  %v880 = vmul.f32 %v449, %v449
  %v881 = vmul.f32 %v454, %v454
  %v882 = vmul.f32 %v459, %v459
  %v883 = vmul.f32 %v464, %v464
  %v884 = vmul.f32 %v469, %v469
  %v885 = vmul.f32 %v474, %v474
  %v886 = vmul.f32 %v479, %v479
  %v887 = vmul.f32 %v484, %v484
  %v888 = vmul.f32 %v489, %v489
  %v889 = vmul.f32 %v494, %v494
  %v890 = vmul.f32 %v499, %v499
  %v891 = vmul.f32 %v504, %v504
  %v892 = vmul.f32 %v509, %v509
  %v893 = vmul.f32 %v514, %v514
  %v894 = vmul.f32 %v519, %v519
  %v895 = vmul.f32 %v524, %v524
  %v896 = vmul.f32 %v529, %v529
  %v897 = vmul.f32 %v534, %v534
  %v898 = vmul.f32 %v539, %v539
  %v899 = vmul.f32 %v544, %v544
  %v900 = vmul.f32 %v549, %v549
  %v901 = vmul.f32 %v554, %v554
  %v902 = vmul.f32 %v559, %v559
  %v903 = vmul.f32 %v564, %v564
  %v904 = vmul.f32 %v569, %v569
  %v905 = vmul.f32 %v574, %v574
  %v906 = vmul.f32 %v579, %v579
  %v907 = vmul.f32 %v584, %v584
  %v908 = vmul.f32 %v589, %v589
  %v909 = vmul.f32 %v594, %v594
  %v910 = vmul.f32 %v599, %v599
  %v911 = vmul.f32 %v604, %v604
  %v912 = vmul.f32 %v609, %v609
  %v913 = vmul.f32 %v614, %v614
  %v914 = vmul.f32 %v619, %v619
  %v915 = vmul.f32 %v624, %v624
  %v916 = vmul.f32 %v629, %v629
  %v917 = vmul.f32 %v634, %v634
  %v918 = vmul.f32 %v639, %v639
  %v919 = vmul.f32 %v644, %v644
  %v920 = vmul.f32 %v649, %v649
  %v921 = vmul.f32 %v654, %v654
  %v922 = vmul.f32 %v659, %v659
  %v923 = vmul.f32 %v664, %v664
  %v924 = vsel %vm667, %v860, 0.0
  %v925 = vsel %vm667, %v861, 0.0
  %v926 = vadd.f32 %v924, %v925
  %v927 = vsel %vm667, %v862, 0.0
  %v928 = vadd.f32 %v926, %v927
  %v929 = vsel %vm667, %v863, 0.0
  %v930 = vadd.f32 %v928, %v929
  %v931 = vsel %vm667, %v864, 0.0
  %v932 = vadd.f32 %v930, %v931
  %v933 = vsel %vm667, %v865, 0.0
  %v934 = vadd.f32 %v932, %v933
  %v935 = vsel %vm667, %v866, 0.0
  %v936 = vadd.f32 %v934, %v935
  %v937 = vsel %vm667, %v867, 0.0
  %v938 = vadd.f32 %v936, %v937
  %v939 = vsel %vm667, %v868, 0.0
  %v940 = vadd.f32 %v938, %v939
  %v941 = vsel %vm667, %v869, 0.0
  %v942 = vadd.f32 %v940, %v941
  %v943 = vsel %vm667, %v870, 0.0
  %v944 = vadd.f32 %v942, %v943
  %v945 = vsel %vm667, %v871, 0.0
  %v946 = vadd.f32 %v944, %v945
  %v947 = vsel %vm667, %v872, 0.0
  %v948 = vadd.f32 %v946, %v947
  %v949 = vsel %vm667, %v873, 0.0
  %v950 = vadd.f32 %v948, %v949
  %v951 = vsel %vm667, %v874, 0.0
  %v952 = vadd.f32 %v950, %v951
  %v953 = vsel %vm667, %v875, 0.0
  %v954 = vadd.f32 %v952, %v953
  %v955 = vsel %vm667, %v876, 0.0
  %v956 = vadd.f32 %v954, %v955
  %v957 = vsel %vm667, %v877, 0.0
  %v958 = vadd.f32 %v956, %v957
  %v959 = vsel %vm667, %v878, 0.0
  %v960 = vadd.f32 %v958, %v959
  %v961 = vsel %vm667, %v879, 0.0
  %v962 = vadd.f32 %v960, %v961
  %v963 = vsel %vm667, %v880, 0.0
  %v964 = vadd.f32 %v962, %v963
  %v965 = vsel %vm667, %v881, 0.0
  %v966 = vadd.f32 %v964, %v965
  %v967 = vsel %vm667, %v882, 0.0
  %v968 = vadd.f32 %v966, %v967
  %v969 = vsel %vm667, %v883, 0.0
  %v970 = vadd.f32 %v968, %v969
  %v971 = vsel %vm667, %v884, 0.0
  %v972 = vadd.f32 %v970, %v971
  %v973 = vsel %vm667, %v885, 0.0
  %v974 = vadd.f32 %v972, %v973
  %v975 = vsel %vm667, %v886, 0.0
  %v976 = vadd.f32 %v974, %v975
  %v977 = vsel %vm667, %v887, 0.0
  %v978 = vadd.f32 %v976, %v977
  %v979 = vsel %vm667, %v888, 0.0
  %v980 = vadd.f32 %v978, %v979
  %v981 = vsel %vm667, %v889, 0.0
  %v982 = vadd.f32 %v980, %v981
  %v983 = vsel %vm667, %v890, 0.0
  %v984 = vadd.f32 %v982, %v983
  %v985 = vsel %vm667, %v891, 0.0
  %v986 = vadd.f32 %v984, %v985
  %v987 = vsel %vm667, %v892, 0.0
  %v988 = vadd.f32 %v986, %v987
  %v989 = vsel %vm667, %v893, 0.0
  %v990 = vadd.f32 %v988, %v989
  %v991 = vsel %vm667, %v894, 0.0
  %v992 = vadd.f32 %v990, %v991
  %v993 = vsel %vm667, %v895, 0.0
  %v994 = vadd.f32 %v992, %v993
  %v995 = vsel %vm667, %v896, 0.0
  %v996 = vadd.f32 %v994, %v995
  %v997 = vsel %vm667, %v897, 0.0
  %v998 = vadd.f32 %v996, %v997
  %v999 = vsel %vm667, %v898, 0.0
  %v1000 = vadd.f32 %v998, %v999
  %v1001 = vsel %vm667, %v899, 0.0
  %v1002 = vadd.f32 %v1000, %v1001
  %v1003 = vsel %vm667, %v900, 0.0
  %v1004 = vadd.f32 %v1002, %v1003
  %v1005 = vsel %vm667, %v901, 0.0
  %v1006 = vadd.f32 %v1004, %v1005
  %v1007 = vsel %vm667, %v902, 0.0
  %v1008 = vadd.f32 %v1006, %v1007
  %v1009 = vsel %vm667, %v903, 0.0
  %v1010 = vadd.f32 %v1008, %v1009
  %v1011 = vsel %vm667, %v904, 0.0
  %v1012 = vadd.f32 %v1010, %v1011
  %v1013 = vsel %vm667, %v905, 0.0
  %v1014 = vadd.f32 %v1012, %v1013
  %v1015 = vsel %vm667, %v906, 0.0
  %v1016 = vadd.f32 %v1014, %v1015
  %v1017 = vsel %vm667, %v907, 0.0
  %v1018 = vadd.f32 %v1016, %v1017
  %v1019 = vsel %vm667, %v908, 0.0
  %v1020 = vadd.f32 %v1018, %v1019
  %v1021 = vsel %vm667, %v909, 0.0
  %v1022 = vadd.f32 %v1020, %v1021
  %v1023 = vsel %vm667, %v910, 0.0
  %v1024 = vadd.f32 %v1022, %v1023
  %v1025 = vsel %vm667, %v911, 0.0
  %v1026 = vadd.f32 %v1024, %v1025
  %v1027 = vsel %vm667, %v912, 0.0
  %v1028 = vadd.f32 %v1026, %v1027
  %v1029 = vsel %vm667, %v913, 0.0
  %v1030 = vadd.f32 %v1028, %v1029
  %v1031 = vsel %vm667, %v914, 0.0
  %v1032 = vadd.f32 %v1030, %v1031
  %v1033 = vsel %vm667, %v915, 0.0
  %v1034 = vadd.f32 %v1032, %v1033
  %v1035 = vsel %vm667, %v916, 0.0
  %v1036 = vadd.f32 %v1034, %v1035
  %v1037 = vsel %vm667, %v917, 0.0
  %v1038 = vadd.f32 %v1036, %v1037
  %v1039 = vsel %vm667, %v918, 0.0
  %v1040 = vadd.f32 %v1038, %v1039
  %v1041 = vsel %vm667, %v919, 0.0
  %v1042 = vadd.f32 %v1040, %v1041
  %v1043 = vsel %vm667, %v920, 0.0
  %v1044 = vadd.f32 %v1042, %v1043
  %v1045 = vsel %vm667, %v921, 0.0
  %v1046 = vadd.f32 %v1044, %v1045
  %v1047 = vsel %vm667, %v922, 0.0
  %v1048 = vadd.f32 %v1046, %v1047
  %v1049 = vsel %vm667, %v923, 0.0
  %v1050 = vadd.f32 %v1048, %v1049
  %v1051 = vadd.f32 %v1050, 0.0
  %s1052 = scalar_lea.vmem %s1, 8
  %v1053 = vld [vmem:[%s1052] sm:$0xff]
  %1054 = vmatprep.subr.mxu0 0.0
  %1055 = vmatpush1.msra.mxu0 0.0
  %1056 = vmatprep.subr.mxu0 0.0
  %1057 = vmatpush1.msra.mxu0 0.0
  %1058 = vmatprep.subr.mxu0 0.0
  %1059 = vmatpush1.msra.mxu0 0.0
  %1060 = vmatprep.subr.mxu0 0.0
  %1061 = vmatpush1.msra.mxu0 0.0
  %1062 = vmatprep.subr.mxu0 0.0
  %1063 = vmatpush1.msra.mxu0 0.0
  %1064 = vmatprep.subr.mxu0 0.0
  %1065 = vmatpush1.msra.mxu0 0.0
  %1066 = vmatprep.subr.mxu0 0.0
  %1067 = vmatpush1.msra.mxu0 0.0
  %1068 = vmatprep.subr.mxu0 0.0
  %1069 = vmatpush1.msra.mxu0 0.0
  %1070 = vmatprep.subr.mxu0 0.0
  %1071 = vmatpush1.msra.mxu0 0.0
  %1072 = vmatprep.subr.mxu0 0.0
  %1073 = vmatpush1.msra.mxu0 0.0
  %1074 = vmatprep.subr.mxu0 0.0
  %1075 = vmatpush1.msra.mxu0 0.0
  %1076 = vmatprep.subr.mxu0 0.0
  %1077 = vmatpush1.msra.mxu0 0.0
  %1078 = vmatprep.subr.mxu0 0.0
  %1079 = vmatpush1.msra.mxu0 0.0
  %1080 = vmatprep.subr.mxu0 0.0
  %1081 = vmatpush1.msra.mxu0 0.0
  %1082 = vmatprep.subr.mxu0 0.0
  %1083 = vmatpush1.msra.mxu0 0.0
  %1084 = vmatprep.subr.mxu0 0.0
  %1085 = vmatpush1.msra.mxu0 %v1053
  %1086 = vmatprep.subr.mxu0 0.0
  %1087 = vmatpush2.msra.mxu0 0.0
  %1088 = vmatprep.subr.mxu0 0.0
  %1089 = vmatpush2.msra.mxu0 0.0
  %1090 = vmatprep.subr.mxu0 0.0
  %1091 = vmatpush2.msra.mxu0 0.0
  %1092 = vmatprep.subr.mxu0 0.0
  %1093 = vmatpush2.msra.mxu0 0.0
  %1094 = vmatprep.subr.mxu0 0.0
  %1095 = vmatpush2.msra.mxu0 0.0
  %1096 = vmatprep.subr.mxu0 0.0
  %1097 = vmatpush2.msra.mxu0 0.0
  %1098 = vmatprep.subr.mxu0 0.0
  %1099 = vmatpush2.msra.mxu0 0.0
  %1100 = vmatprep.subr.mxu0 0.0
  %1101 = vmatpush2.msra.mxu0 0.0
  %1102 = vmatprep.subr.mxu0 0.0
  %1103 = vmatpush2.msra.mxu0 0.0
  %1104 = vmatprep.subr.mxu0 0.0
  %1105 = vmatpush2.msra.mxu0 0.0
  %1106 = vmatprep.subr.mxu0 0.0
  %1107 = vmatpush2.msra.mxu0 0.0
  %1108 = vmatprep.subr.mxu0 0.0
  %1109 = vmatpush2.msra.mxu0 0.0
  %1110 = vmatprep.subr.mxu0 0.0
  %1111 = vmatpush2.msra.mxu0 0.0
  %1112 = vmatprep.subr.mxu0 0.0
  %1113 = vmatpush2.msra.mxu0 0.0
  %1114 = vmatprep.subr.mxu0 0.0
  %1115 = vmatpush2.msra.mxu0 0.0
  %1116 = vmatprep.subr.mxu0 0.0
  %1117 = vmatpush2.msra.mxu0 0.0
  %1118 = vmatprep.mubr.f32.mxu0 0.0
  %1119 = vmatmul.mubr.f32.gmra.mxu0 %v91
  %v1120 = vpop.f32.mrf.mxu0
  %v1121 = vadd.f32 %v87, %v1120
  %v1122 = vpop.f32.mrf.mxu0
  %1123 = vmatprep.mubr.f32.mxu0 0.0
  %1124 = vmatmul.mubr.f32.gmra.mxu0 %v94
  %v1125 = vpop.f32.mrf.mxu0
  %v1126 = vadd.f32 %v87, %v1125
  %v1127 = vpop.f32.mrf.mxu0
  %1128 = vmatprep.mubr.f32.mxu0 0.0
  %1129 = vmatmul.mubr.f32.gmra.mxu0 %v97
  %v1130 = vpop.f32.mrf.mxu0
  %v1131 = vadd.f32 %v87, %v1130
  %v1132 = vpop.f32.mrf.mxu0
  %1133 = vmatprep.mubr.f32.mxu0 0.0
  %1134 = vmatmul.mubr.f32.gmra.mxu0 %v100
  %v1135 = vpop.f32.mrf.mxu0
  %v1136 = vadd.f32 %v87, %v1135
  %v1137 = vpop.f32.mrf.mxu0
  %1138 = vmatprep.mubr.f32.mxu0 0.0
  %1139 = vmatmul.mubr.f32.gmra.mxu0 %v103
  %v1140 = vpop.f32.mrf.mxu0
  %v1141 = vadd.f32 %v87, %v1140
  %v1142 = vpop.f32.mrf.mxu0
  %1143 = vmatprep.mubr.f32.mxu0 0.0
  %1144 = vmatmul.mubr.f32.gmra.mxu0 %v106
  %v1145 = vpop.f32.mrf.mxu0
  %v1146 = vadd.f32 %v87, %v1145
  %v1147 = vpop.f32.mrf.mxu0
  %1148 = vmatprep.mubr.f32.mxu0 0.0
  %1149 = vmatmul.mubr.f32.gmra.mxu0 %v109
  %v1150 = vpop.f32.mrf.mxu0
  %v1151 = vadd.f32 %v87, %v1150
  %v1152 = vpop.f32.mrf.mxu0
  %1153 = vmatprep.mubr.f32.mxu0 0.0
  %1154 = vmatmul.mubr.f32.gmra.mxu0 %v112
  %v1155 = vpop.f32.mrf.mxu0
  %v1156 = vadd.f32 %v87, %v1155
  %v1157 = vpop.f32.mrf.mxu0
  %1158 = vmatprep.mubr.f32.mxu0 0.0
  %1159 = vmatmul.mubr.f32.gmra.mxu0 %v115
  %v1160 = vpop.f32.mrf.mxu0
  %v1161 = vadd.f32 %v87, %v1160
  %v1162 = vpop.f32.mrf.mxu0
  %1163 = vmatprep.mubr.f32.mxu0 0.0
  %1164 = vmatmul.mubr.f32.gmra.mxu0 %v118
  %v1165 = vpop.f32.mrf.mxu0
  %v1166 = vadd.f32 %v87, %v1165
  %v1167 = vpop.f32.mrf.mxu0
  %1168 = vmatprep.mubr.f32.mxu0 0.0
  %1169 = vmatmul.mubr.f32.gmra.mxu0 %v121
  %v1170 = vpop.f32.mrf.mxu0
  %v1171 = vadd.f32 %v87, %v1170
  %v1172 = vpop.f32.mrf.mxu0
  %1173 = vmatprep.mubr.f32.mxu0 0.0
  %1174 = vmatmul.mubr.f32.gmra.mxu0 %v124
  %v1175 = vpop.f32.mrf.mxu0
  %v1176 = vadd.f32 %v87, %v1175
  %v1177 = vpop.f32.mrf.mxu0
  %1178 = vmatprep.mubr.f32.mxu0 0.0
  %1179 = vmatmul.mubr.f32.gmra.mxu0 %v127
  %v1180 = vpop.f32.mrf.mxu0
  %v1181 = vadd.f32 %v87, %v1180
  %v1182 = vpop.f32.mrf.mxu0
  %1183 = vmatprep.mubr.f32.mxu0 0.0
  %1184 = vmatmul.mubr.f32.gmra.mxu0 %v130
  %v1185 = vpop.f32.mrf.mxu0
  %v1186 = vadd.f32 %v87, %v1185
  %v1187 = vpop.f32.mrf.mxu0
  %1188 = vmatprep.mubr.f32.mxu0 0.0
  %1189 = vmatmul.mubr.f32.gmra.mxu0 %v133
  %v1190 = vpop.f32.mrf.mxu0
  %v1191 = vadd.f32 %v87, %v1190
  %v1192 = vpop.f32.mrf.mxu0
  %1193 = vmatprep.mubr.f32.mxu0 0.0
  %1194 = vmatmul.mubr.f32.gmra.mxu0 %v136
  %v1195 = vpop.f32.mrf.mxu0
  %v1196 = vadd.f32 %v87, %v1195
  %v1197 = vpop.f32.mrf.mxu0
  %1198 = vmatprep.mubr.f32.mxu0 0.0
  %1199 = vmatmul.mubr.f32.gmra.mxu0 %v139
  %v1200 = vpop.f32.mrf.mxu0
  %v1201 = vadd.f32 %v87, %v1200
  %v1202 = vpop.f32.mrf.mxu0
  %1203 = vmatprep.mubr.f32.mxu0 0.0
  %1204 = vmatmul.mubr.f32.gmra.mxu0 %v142
  %v1205 = vpop.f32.mrf.mxu0
  %v1206 = vadd.f32 %v87, %v1205
  %v1207 = vpop.f32.mrf.mxu0
  %1208 = vmatprep.mubr.f32.mxu0 0.0
  %1209 = vmatmul.mubr.f32.gmra.mxu0 %v145
  %v1210 = vpop.f32.mrf.mxu0
  %v1211 = vadd.f32 %v87, %v1210
  %v1212 = vpop.f32.mrf.mxu0
  %1213 = vmatprep.mubr.f32.mxu0 0.0
  %1214 = vmatmul.mubr.f32.gmra.mxu0 %v148
  %v1215 = vpop.f32.mrf.mxu0
  %v1216 = vadd.f32 %v87, %v1215
  %v1217 = vpop.f32.mrf.mxu0
  %1218 = vmatprep.mubr.f32.mxu0 0.0
  %1219 = vmatmul.mubr.f32.gmra.mxu0 %v151
  %v1220 = vpop.f32.mrf.mxu0
  %v1221 = vadd.f32 %v87, %v1220
  %v1222 = vpop.f32.mrf.mxu0
  %1223 = vmatprep.mubr.f32.mxu0 0.0
  %1224 = vmatmul.mubr.f32.gmra.mxu0 %v154
  %v1225 = vpop.f32.mrf.mxu0
  %v1226 = vadd.f32 %v87, %v1225
  %v1227 = vpop.f32.mrf.mxu0
  %1228 = vmatprep.mubr.f32.mxu0 0.0
  %1229 = vmatmul.mubr.f32.gmra.mxu0 %v157
  %v1230 = vpop.f32.mrf.mxu0
  %v1231 = vadd.f32 %v87, %v1230
  %v1232 = vpop.f32.mrf.mxu0
  %1233 = vmatprep.mubr.f32.mxu0 0.0
  %1234 = vmatmul.mubr.f32.gmra.mxu0 %v160
  %v1235 = vpop.f32.mrf.mxu0
  %v1236 = vadd.f32 %v87, %v1235
  %v1237 = vpop.f32.mrf.mxu0
  %1238 = vmatprep.mubr.f32.mxu0 0.0
  %1239 = vmatmul.mubr.f32.gmra.mxu0 %v163
  %v1240 = vpop.f32.mrf.mxu0
  %v1241 = vadd.f32 %v87, %v1240
  %v1242 = vpop.f32.mrf.mxu0
  %1243 = vmatprep.mubr.f32.mxu0 0.0
  %1244 = vmatmul.mubr.f32.gmra.mxu0 %v166
  %v1245 = vpop.f32.mrf.mxu0
  %v1246 = vadd.f32 %v87, %v1245
  %v1247 = vpop.f32.mrf.mxu0
  %1248 = vmatprep.mubr.f32.mxu0 0.0
  %1249 = vmatmul.mubr.f32.gmra.mxu0 %v169
  %v1250 = vpop.f32.mrf.mxu0
  %v1251 = vadd.f32 %v87, %v1250
  %v1252 = vpop.f32.mrf.mxu0
  %1253 = vmatprep.mubr.f32.mxu0 0.0
  %1254 = vmatmul.mubr.f32.gmra.mxu0 %v172
  %v1255 = vpop.f32.mrf.mxu0
  %v1256 = vadd.f32 %v87, %v1255
  %v1257 = vpop.f32.mrf.mxu0
  %1258 = vmatprep.mubr.f32.mxu0 0.0
  %1259 = vmatmul.mubr.f32.gmra.mxu0 %v175
  %v1260 = vpop.f32.mrf.mxu0
  %v1261 = vadd.f32 %v87, %v1260
  %v1262 = vpop.f32.mrf.mxu0
  %1263 = vmatprep.mubr.f32.mxu0 0.0
  %1264 = vmatmul.mubr.f32.gmra.mxu0 %v178
  %v1265 = vpop.f32.mrf.mxu0
  %v1266 = vadd.f32 %v87, %v1265
  %v1267 = vpop.f32.mrf.mxu0
  %1268 = vmatprep.mubr.f32.mxu0 0.0
  %1269 = vmatmul.mubr.f32.gmra.mxu0 %v181
  %v1270 = vpop.f32.mrf.mxu0
  %v1271 = vadd.f32 %v87, %v1270
  %v1272 = vpop.f32.mrf.mxu0
  %1273 = vmatprep.mubr.f32.mxu0 0.0
  %1274 = vmatmul.mubr.f32.gmra.mxu0 %v184
  %v1275 = vpop.f32.mrf.mxu0
  %v1276 = vadd.f32 %v87, %v1275
  %v1277 = vpop.f32.mrf.mxu0
  %1278 = vmatprep.mubr.f32.mxu0 0.0
  %1279 = vmatmul.mubr.f32.gmra.mxu0 %v187
  %v1280 = vpop.f32.mrf.mxu0
  %v1281 = vadd.f32 %v87, %v1280
  %v1282 = vpop.f32.mrf.mxu0
  %1283 = vmatprep.mubr.f32.mxu0 0.0
  %1284 = vmatmul.mubr.f32.gmra.mxu0 %v190
  %v1285 = vpop.f32.mrf.mxu0
  %v1286 = vadd.f32 %v87, %v1285
  %v1287 = vpop.f32.mrf.mxu0
  %1288 = vmatprep.mubr.f32.mxu0 0.0
  %1289 = vmatmul.mubr.f32.gmra.mxu0 %v193
  %v1290 = vpop.f32.mrf.mxu0
  %v1291 = vadd.f32 %v87, %v1290
  %v1292 = vpop.f32.mrf.mxu0
  %1293 = vmatprep.mubr.f32.mxu0 0.0
  %1294 = vmatmul.mubr.f32.gmra.mxu0 %v196
  %v1295 = vpop.f32.mrf.mxu0
  %v1296 = vadd.f32 %v87, %v1295
  %v1297 = vpop.f32.mrf.mxu0
  %1298 = vmatprep.mubr.f32.mxu0 0.0
  %1299 = vmatmul.mubr.f32.gmra.mxu0 %v199
  %v1300 = vpop.f32.mrf.mxu0
  %v1301 = vadd.f32 %v87, %v1300
  %v1302 = vpop.f32.mrf.mxu0
  %1303 = vmatprep.mubr.f32.mxu0 0.0
  %1304 = vmatmul.mubr.f32.gmra.mxu0 %v202
  %v1305 = vpop.f32.mrf.mxu0
  %v1306 = vadd.f32 %v87, %v1305
  %v1307 = vpop.f32.mrf.mxu0
  %1308 = vmatprep.mubr.f32.mxu0 0.0
  %1309 = vmatmul.mubr.f32.gmra.mxu0 %v205
  %v1310 = vpop.f32.mrf.mxu0
  %v1311 = vadd.f32 %v87, %v1310
  %v1312 = vpop.f32.mrf.mxu0
  %1313 = vmatprep.mubr.f32.mxu0 0.0
  %1314 = vmatmul.mubr.f32.gmra.mxu0 %v208
  %v1315 = vpop.f32.mrf.mxu0
  %v1316 = vadd.f32 %v87, %v1315
  %v1317 = vpop.f32.mrf.mxu0
  %1318 = vmatprep.mubr.f32.mxu0 0.0
  %1319 = vmatmul.mubr.f32.gmra.mxu0 %v211
  %v1320 = vpop.f32.mrf.mxu0
  %v1321 = vadd.f32 %v87, %v1320
  %v1322 = vpop.f32.mrf.mxu0
  %1323 = vmatprep.mubr.f32.mxu0 0.0
  %1324 = vmatmul.mubr.f32.gmra.mxu0 %v214
  %v1325 = vpop.f32.mrf.mxu0
  %v1326 = vadd.f32 %v87, %v1325
  %v1327 = vpop.f32.mrf.mxu0
  %1328 = vmatprep.mubr.f32.mxu0 0.0
  %1329 = vmatmul.mubr.f32.gmra.mxu0 %v217
  %v1330 = vpop.f32.mrf.mxu0
  %v1331 = vadd.f32 %v87, %v1330
  %v1332 = vpop.f32.mrf.mxu0
  %1333 = vmatprep.mubr.f32.mxu0 0.0
  %1334 = vmatmul.mubr.f32.gmra.mxu0 %v220
  %v1335 = vpop.f32.mrf.mxu0
  %v1336 = vadd.f32 %v87, %v1335
  %v1337 = vpop.f32.mrf.mxu0
  %1338 = vmatprep.mubr.f32.mxu0 0.0
  %1339 = vmatmul.mubr.f32.gmra.mxu0 %v223
  %v1340 = vpop.f32.mrf.mxu0
  %v1341 = vadd.f32 %v87, %v1340
  %v1342 = vpop.f32.mrf.mxu0
  %1343 = vmatprep.mubr.f32.mxu0 0.0
  %1344 = vmatmul.mubr.f32.gmra.mxu0 %v226
  %v1345 = vpop.f32.mrf.mxu0
  %v1346 = vadd.f32 %v87, %v1345
  %v1347 = vpop.f32.mrf.mxu0
  %1348 = vmatprep.mubr.f32.mxu0 0.0
  %1349 = vmatmul.mubr.f32.gmra.mxu0 %v229
  %v1350 = vpop.f32.mrf.mxu0
  %v1351 = vadd.f32 %v87, %v1350
  %v1352 = vpop.f32.mrf.mxu0
  %1353 = vmatprep.mubr.f32.mxu0 0.0
  %1354 = vmatmul.mubr.f32.gmra.mxu0 %v232
  %v1355 = vpop.f32.mrf.mxu0
  %v1356 = vadd.f32 %v87, %v1355
  %v1357 = vpop.f32.mrf.mxu0
  %1358 = vmatprep.mubr.f32.mxu0 0.0
  %1359 = vmatmul.mubr.f32.gmra.mxu0 %v235
  %v1360 = vpop.f32.mrf.mxu0
  %v1361 = vadd.f32 %v87, %v1360
  %v1362 = vpop.f32.mrf.mxu0
  %1363 = vmatprep.mubr.f32.mxu0 0.0
  %1364 = vmatmul.mubr.f32.gmra.mxu0 %v238
  %v1365 = vpop.f32.mrf.mxu0
  %v1366 = vadd.f32 %v87, %v1365
  %v1367 = vpop.f32.mrf.mxu0
  %1368 = vmatprep.mubr.f32.mxu0 0.0
  %1369 = vmatmul.mubr.f32.gmra.mxu0 %v241
  %v1370 = vpop.f32.mrf.mxu0
  %v1371 = vadd.f32 %v87, %v1370
  %v1372 = vpop.f32.mrf.mxu0
  %1373 = vmatprep.mubr.f32.mxu0 0.0
  %1374 = vmatmul.mubr.f32.gmra.mxu0 %v244
  %v1375 = vpop.f32.mrf.mxu0
  %v1376 = vadd.f32 %v87, %v1375
  %v1377 = vpop.f32.mrf.mxu0
  %1378 = vmatprep.mubr.f32.mxu0 0.0
  %1379 = vmatmul.mubr.f32.gmra.mxu0 %v247
  %v1380 = vpop.f32.mrf.mxu0
  %v1381 = vadd.f32 %v87, %v1380
  %v1382 = vpop.f32.mrf.mxu0
  %1383 = vmatprep.mubr.f32.mxu0 0.0
  %1384 = vmatmul.mubr.f32.gmra.mxu0 %v250
  %v1385 = vpop.f32.mrf.mxu0
  %v1386 = vadd.f32 %v87, %v1385
  %v1387 = vpop.f32.mrf.mxu0
  %1388 = vmatprep.mubr.f32.mxu0 0.0
  %1389 = vmatmul.mubr.f32.gmra.mxu0 %v253
  %v1390 = vpop.f32.mrf.mxu0
  %v1391 = vadd.f32 %v87, %v1390
  %v1392 = vpop.f32.mrf.mxu0
  %1393 = vmatprep.mubr.f32.mxu0 0.0
  %1394 = vmatmul.mubr.f32.gmra.mxu0 %v256
  %v1395 = vpop.f32.mrf.mxu0
  %v1396 = vadd.f32 %v87, %v1395
  %v1397 = vpop.f32.mrf.mxu0
  %1398 = vmatprep.mubr.f32.mxu0 0.0
  %1399 = vmatmul.mubr.f32.gmra.mxu0 %v259
  %v1400 = vpop.f32.mrf.mxu0
  %v1401 = vadd.f32 %v87, %v1400
  %v1402 = vpop.f32.mrf.mxu0
  %1403 = vmatprep.mubr.f32.mxu0 0.0
  %1404 = vmatmul.mubr.f32.gmra.mxu0 %v262
  %v1405 = vpop.f32.mrf.mxu0
  %v1406 = vadd.f32 %v87, %v1405
  %v1407 = vpop.f32.mrf.mxu0
  %1408 = vmatprep.mubr.f32.mxu0 0.0
  %1409 = vmatmul.mubr.f32.gmra.mxu0 %v265
  %v1410 = vpop.f32.mrf.mxu0
  %v1411 = vadd.f32 %v87, %v1410
  %v1412 = vpop.f32.mrf.mxu0
  %1413 = vmatprep.mubr.f32.mxu0 0.0
  %1414 = vmatmul.mubr.f32.gmra.mxu0 %v268
  %v1415 = vpop.f32.mrf.mxu0
  %v1416 = vadd.f32 %v87, %v1415
  %v1417 = vpop.f32.mrf.mxu0
  %1418 = vmatprep.mubr.f32.mxu0 0.0
  %1419 = vmatmul.mubr.f32.gmra.mxu0 %v271
  %v1420 = vpop.f32.mrf.mxu0
  %v1421 = vadd.f32 %v87, %v1420
  %v1422 = vpop.f32.mrf.mxu0
  %1423 = vmatprep.mubr.f32.mxu0 0.0
  %1424 = vmatmul.mubr.f32.gmra.mxu0 %v274
  %v1425 = vpop.f32.mrf.mxu0
  %v1426 = vadd.f32 %v87, %v1425
  %v1427 = vpop.f32.mrf.mxu0
  %1428 = vmatprep.mubr.f32.mxu0 0.0
  %1429 = vmatmul.mubr.f32.gmra.mxu0 %v277
  %v1430 = vpop.f32.mrf.mxu0
  %v1431 = vadd.f32 %v87, %v1430
  %v1432 = vpop.f32.mrf.mxu0
  %1433 = vmatprep.mubr.f32.mxu0 0.0
  %1434 = vmatmul.mubr.f32.gmra.mxu0 %v280
  %v1435 = vpop.f32.mrf.mxu0
  %v1436 = vadd.f32 %v87, %v1435
  %v1437 = vpop.f32.mrf.mxu0
  %1438 = vdwg.mxu0
  %s1439 = scalar_lea.vmem %s3, 16
  %1440 = vst.msk [vmem:[%s1439] sm:$0xff] %vm667, %v1121
  %1441 = vst.msk [vmem:[%s1439 + $0x8] sm:$0xff] %vm667, %v1126
  %1442 = vst.msk [vmem:[%s1439 + $0x20] sm:$0xff] %vm667, %v1131
  %1443 = vst.msk [vmem:[%s1439 + $0x28] sm:$0xff] %vm667, %v1136
  %1444 = vst.msk [vmem:[%s1439 + $0x40] sm:$0xff] %vm667, %v1141
  %1445 = vst.msk [vmem:[%s1439 + $0x48] sm:$0xff] %vm667, %v1146
  %1446 = vst.msk [vmem:[%s1439 + $0x60] sm:$0xff] %vm667, %v1151
  %1447 = vst.msk [vmem:[%s1439 + $0x68] sm:$0xff] %vm667, %v1156
  %1448 = vst.msk [vmem:[%s1439 + $0x80] sm:$0xff] %vm667, %v1161
  %1449 = vst.msk [vmem:[%s1439 + $0x88] sm:$0xff] %vm667, %v1166
  %1450 = vst.msk [vmem:[%s1439 + $0xa0] sm:$0xff] %vm667, %v1171
  %1451 = vst.msk [vmem:[%s1439 + $0xa8] sm:$0xff] %vm667, %v1176
  %1452 = vst.msk [vmem:[%s1439 + $0xc0] sm:$0xff] %vm667, %v1181
  %1453 = vst.msk [vmem:[%s1439 + $0xc8] sm:$0xff] %vm667, %v1186
  %1454 = vst.msk [vmem:[%s1439 + $0xe0] sm:$0xff] %vm667, %v1191
  %1455 = vst.msk [vmem:[%s1439 + $0xe8] sm:$0xff] %vm667, %v1196
  %1456 = vst.msk [vmem:[%s1439 + $0x100] sm:$0xff] %vm667, %v1201
  %1457 = vst.msk [vmem:[%s1439 + $0x108] sm:$0xff] %vm667, %v1206
  %1458 = vst.msk [vmem:[%s1439 + $0x120] sm:$0xff] %vm667, %v1211
  %1459 = vst.msk [vmem:[%s1439 + $0x128] sm:$0xff] %vm667, %v1216
  %1460 = vst.msk [vmem:[%s1439 + $0x140] sm:$0xff] %vm667, %v1221
  %1461 = vst.msk [vmem:[%s1439 + $0x148] sm:$0xff] %vm667, %v1226
  %1462 = vst.msk [vmem:[%s1439 + $0x160] sm:$0xff] %vm667, %v1231
  %1463 = vst.msk [vmem:[%s1439 + $0x168] sm:$0xff] %vm667, %v1236
  %1464 = vst.msk [vmem:[%s1439 + $0x180] sm:$0xff] %vm667, %v1241
  %1465 = vst.msk [vmem:[%s1439 + $0x188] sm:$0xff] %vm667, %v1246
  %1466 = vst.msk [vmem:[%s1439 + $0x1a0] sm:$0xff] %vm667, %v1251
  %1467 = vst.msk [vmem:[%s1439 + $0x1a8] sm:$0xff] %vm667, %v1256
  %1468 = vst.msk [vmem:[%s1439 + $0x1c0] sm:$0xff] %vm667, %v1261
  %1469 = vst.msk [vmem:[%s1439 + $0x1c8] sm:$0xff] %vm667, %v1266
  %1470 = vst.msk [vmem:[%s1439 + $0x1e0] sm:$0xff] %vm667, %v1271
  %1471 = vst.msk [vmem:[%s1439 + $0x1e8] sm:$0xff] %vm667, %v1276
  %1472 = vst.msk [vmem:[%s1439 + $0x200] sm:$0xff] %vm667, %v1281
  %1473 = vst.msk [vmem:[%s1439 + $0x208] sm:$0xff] %vm667, %v1286
  %1474 = vst.msk [vmem:[%s1439 + $0x220] sm:$0xff] %vm667, %v1291
  %1475 = vst.msk [vmem:[%s1439 + $0x228] sm:$0xff] %vm667, %v1296
  %1476 = vst.msk [vmem:[%s1439 + $0x240] sm:$0xff] %vm667, %v1301
  %1477 = vst.msk [vmem:[%s1439 + $0x248] sm:$0xff] %vm667, %v1306
  %1478 = vst.msk [vmem:[%s1439 + $0x260] sm:$0xff] %vm667, %v1311
  %1479 = vst.msk [vmem:[%s1439 + $0x268] sm:$0xff] %vm667, %v1316
  %1480 = vst.msk [vmem:[%s1439 + $0x280] sm:$0xff] %vm667, %v1321
  %1481 = vst.msk [vmem:[%s1439 + $0x288] sm:$0xff] %vm667, %v1326
  %1482 = vst.msk [vmem:[%s1439 + $0x2a0] sm:$0xff] %vm667, %v1331
  %1483 = vst.msk [vmem:[%s1439 + $0x2a8] sm:$0xff] %vm667, %v1336
  %1484 = vst.msk [vmem:[%s1439 + $0x2c0] sm:$0xff] %vm667, %v1341
  %1485 = vst.msk [vmem:[%s1439 + $0x2c8] sm:$0xff] %vm667, %v1346
  %1486 = vst.msk [vmem:[%s1439 + $0x2e0] sm:$0xff] %vm667, %v1351
  %1487 = vst.msk [vmem:[%s1439 + $0x2e8] sm:$0xff] %vm667, %v1356
  %1488 = vst.msk [vmem:[%s1439 + $0x300] sm:$0xff] %vm667, %v1361
  %1489 = vst.msk [vmem:[%s1439 + $0x308] sm:$0xff] %vm667, %v1366
  %1490 = vst.msk [vmem:[%s1439 + $0x320] sm:$0xff] %vm667, %v1371
  %1491 = vst.msk [vmem:[%s1439 + $0x328] sm:$0xff] %vm667, %v1376
  %1492 = vst.msk [vmem:[%s1439 + $0x340] sm:$0xff] %vm667, %v1381
  %1493 = vst.msk [vmem:[%s1439 + $0x348] sm:$0xff] %vm667, %v1386
  %1494 = vst.msk [vmem:[%s1439 + $0x360] sm:$0xff] %vm667, %v1391
  %1495 = vst.msk [vmem:[%s1439 + $0x368] sm:$0xff] %vm667, %v1396
  %1496 = vst.msk [vmem:[%s1439 + $0x380] sm:$0xff] %vm667, %v1401
  %1497 = vst.msk [vmem:[%s1439 + $0x388] sm:$0xff] %vm667, %v1406
  %1498 = vst.msk [vmem:[%s1439 + $0x3a0] sm:$0xff] %vm667, %v1411
  %1499 = vst.msk [vmem:[%s1439 + $0x3a8] sm:$0xff] %vm667, %v1416
  %1500 = vst.msk [vmem:[%s1439 + $0x3c0] sm:$0xff] %vm667, %v1421
  %1501 = vst.msk [vmem:[%s1439 + $0x3c8] sm:$0xff] %vm667, %v1426
  %1502 = vst.msk [vmem:[%s1439 + $0x3e0] sm:$0xff] %vm667, %v1431
  %1503 = vst.msk [vmem:[%s1439 + $0x3e8] sm:$0xff] %vm667, %v1436
  %v1504 = vsel %vm667, %v1121, 0.0
  %v1505 = vsel %vm667, %v1126, 0.0
  %v1506 = vadd.f32 %v1504, %v1505
  %v1507 = vsel %vm667, %v1131, 0.0
  %v1508 = vadd.f32 %v1506, %v1507
  %v1509 = vsel %vm667, %v1136, 0.0
  %v1510 = vadd.f32 %v1508, %v1509
  %v1511 = vsel %vm667, %v1141, 0.0
  %v1512 = vadd.f32 %v1510, %v1511
  %v1513 = vsel %vm667, %v1146, 0.0
  %v1514 = vadd.f32 %v1512, %v1513
  %v1515 = vsel %vm667, %v1151, 0.0
  %v1516 = vadd.f32 %v1514, %v1515
  %v1517 = vsel %vm667, %v1156, 0.0
  %v1518 = vadd.f32 %v1516, %v1517
  %v1519 = vsel %vm667, %v1161, 0.0
  %v1520 = vadd.f32 %v1518, %v1519
  %v1521 = vsel %vm667, %v1166, 0.0
  %v1522 = vadd.f32 %v1520, %v1521
  %v1523 = vsel %vm667, %v1171, 0.0
  %v1524 = vadd.f32 %v1522, %v1523
  %v1525 = vsel %vm667, %v1176, 0.0
  %v1526 = vadd.f32 %v1524, %v1525
  %v1527 = vsel %vm667, %v1181, 0.0
  %v1528 = vadd.f32 %v1526, %v1527
  %v1529 = vsel %vm667, %v1186, 0.0
  %v1530 = vadd.f32 %v1528, %v1529
  %v1531 = vsel %vm667, %v1191, 0.0
  %v1532 = vadd.f32 %v1530, %v1531
  %v1533 = vsel %vm667, %v1196, 0.0
  %v1534 = vadd.f32 %v1532, %v1533
  %v1535 = vsel %vm667, %v1201, 0.0
  %v1536 = vadd.f32 %v1534, %v1535
  %v1537 = vsel %vm667, %v1206, 0.0
  %v1538 = vadd.f32 %v1536, %v1537
  %v1539 = vsel %vm667, %v1211, 0.0
  %v1540 = vadd.f32 %v1538, %v1539
  %v1541 = vsel %vm667, %v1216, 0.0
  %v1542 = vadd.f32 %v1540, %v1541
  %v1543 = vsel %vm667, %v1221, 0.0
  %v1544 = vadd.f32 %v1542, %v1543
  %v1545 = vsel %vm667, %v1226, 0.0
  %v1546 = vadd.f32 %v1544, %v1545
  %v1547 = vsel %vm667, %v1231, 0.0
  %v1548 = vadd.f32 %v1546, %v1547
  %v1549 = vsel %vm667, %v1236, 0.0
  %v1550 = vadd.f32 %v1548, %v1549
  %v1551 = vsel %vm667, %v1241, 0.0
  %v1552 = vadd.f32 %v1550, %v1551
  %v1553 = vsel %vm667, %v1246, 0.0
  %v1554 = vadd.f32 %v1552, %v1553
  %v1555 = vsel %vm667, %v1251, 0.0
  %v1556 = vadd.f32 %v1554, %v1555
  %v1557 = vsel %vm667, %v1256, 0.0
  %v1558 = vadd.f32 %v1556, %v1557
  %v1559 = vsel %vm667, %v1261, 0.0
  %v1560 = vadd.f32 %v1558, %v1559
  %v1561 = vsel %vm667, %v1266, 0.0
  %v1562 = vadd.f32 %v1560, %v1561
  %v1563 = vsel %vm667, %v1271, 0.0
  %v1564 = vadd.f32 %v1562, %v1563
  %v1565 = vsel %vm667, %v1276, 0.0
  %v1566 = vadd.f32 %v1564, %v1565
  %v1567 = vsel %vm667, %v1281, 0.0
  %v1568 = vadd.f32 %v1566, %v1567
  %v1569 = vsel %vm667, %v1286, 0.0
  %v1570 = vadd.f32 %v1568, %v1569
  %v1571 = vsel %vm667, %v1291, 0.0
  %v1572 = vadd.f32 %v1570, %v1571
  %v1573 = vsel %vm667, %v1296, 0.0
  %v1574 = vadd.f32 %v1572, %v1573
  %v1575 = vsel %vm667, %v1301, 0.0
  %v1576 = vadd.f32 %v1574, %v1575
  %v1577 = vsel %vm667, %v1306, 0.0
  %v1578 = vadd.f32 %v1576, %v1577
  %v1579 = vsel %vm667, %v1311, 0.0
  %v1580 = vadd.f32 %v1578, %v1579
  %v1581 = vsel %vm667, %v1316, 0.0
  %v1582 = vadd.f32 %v1580, %v1581
  %v1583 = vsel %vm667, %v1321, 0.0
  %v1584 = vadd.f32 %v1582, %v1583
  %v1585 = vsel %vm667, %v1326, 0.0
  %v1586 = vadd.f32 %v1584, %v1585
  %v1587 = vsel %vm667, %v1331, 0.0
  %v1588 = vadd.f32 %v1586, %v1587
  %v1589 = vsel %vm667, %v1336, 0.0
  %v1590 = vadd.f32 %v1588, %v1589
  %v1591 = vsel %vm667, %v1341, 0.0
  %v1592 = vadd.f32 %v1590, %v1591
  %v1593 = vsel %vm667, %v1346, 0.0
  %v1594 = vadd.f32 %v1592, %v1593
  %v1595 = vsel %vm667, %v1351, 0.0
  %v1596 = vadd.f32 %v1594, %v1595
  %v1597 = vsel %vm667, %v1356, 0.0
  %v1598 = vadd.f32 %v1596, %v1597
  %v1599 = vsel %vm667, %v1361, 0.0
  %v1600 = vadd.f32 %v1598, %v1599
  %v1601 = vsel %vm667, %v1366, 0.0
  %v1602 = vadd.f32 %v1600, %v1601
  %v1603 = vsel %vm667, %v1371, 0.0
  %v1604 = vadd.f32 %v1602, %v1603
  %v1605 = vsel %vm667, %v1376, 0.0
  %v1606 = vadd.f32 %v1604, %v1605
  %v1607 = vsel %vm667, %v1381, 0.0
  %v1608 = vadd.f32 %v1606, %v1607
  %v1609 = vsel %vm667, %v1386, 0.0
  %v1610 = vadd.f32 %v1608, %v1609
  %v1611 = vsel %vm667, %v1391, 0.0
  %v1612 = vadd.f32 %v1610, %v1611
  %v1613 = vsel %vm667, %v1396, 0.0
  %v1614 = vadd.f32 %v1612, %v1613
  %v1615 = vsel %vm667, %v1401, 0.0
  %v1616 = vadd.f32 %v1614, %v1615
  %v1617 = vsel %vm667, %v1406, 0.0
  %v1618 = vadd.f32 %v1616, %v1617
  %v1619 = vsel %vm667, %v1411, 0.0
  %v1620 = vadd.f32 %v1618, %v1619
  %v1621 = vsel %vm667, %v1416, 0.0
  %v1622 = vadd.f32 %v1620, %v1621
  %v1623 = vsel %vm667, %v1421, 0.0
  %v1624 = vadd.f32 %v1622, %v1623
  %v1625 = vsel %vm667, %v1426, 0.0
  %v1626 = vadd.f32 %v1624, %v1625
  %v1627 = vsel %vm667, %v1431, 0.0
  %v1628 = vadd.f32 %v1626, %v1627
  %v1629 = vsel %vm667, %v1436, 0.0
  %v1630 = vadd.f32 %v1628, %v1629
  %v1631 = vadd.f32 %v859, %v1630
  %v1632 = vmul.f32 %v1121, %v1121
  %v1633 = vmul.f32 %v1126, %v1126
  %v1634 = vmul.f32 %v1131, %v1131
  %v1635 = vmul.f32 %v1136, %v1136
  %v1636 = vmul.f32 %v1141, %v1141
  %v1637 = vmul.f32 %v1146, %v1146
  %v1638 = vmul.f32 %v1151, %v1151
  %v1639 = vmul.f32 %v1156, %v1156
  %v1640 = vmul.f32 %v1161, %v1161
  %v1641 = vmul.f32 %v1166, %v1166
  %v1642 = vmul.f32 %v1171, %v1171
  %v1643 = vmul.f32 %v1176, %v1176
  %v1644 = vmul.f32 %v1181, %v1181
  %v1645 = vmul.f32 %v1186, %v1186
  %v1646 = vmul.f32 %v1191, %v1191
  %v1647 = vmul.f32 %v1196, %v1196
  %v1648 = vmul.f32 %v1201, %v1201
  %v1649 = vmul.f32 %v1206, %v1206
  %v1650 = vmul.f32 %v1211, %v1211
  %v1651 = vmul.f32 %v1216, %v1216
  %v1652 = vmul.f32 %v1221, %v1221
  %v1653 = vmul.f32 %v1226, %v1226
  %v1654 = vmul.f32 %v1231, %v1231
  %v1655 = vmul.f32 %v1236, %v1236
  %v1656 = vmul.f32 %v1241, %v1241
  %v1657 = vmul.f32 %v1246, %v1246
  %v1658 = vmul.f32 %v1251, %v1251
  %v1659 = vmul.f32 %v1256, %v1256
  %v1660 = vmul.f32 %v1261, %v1261
  %v1661 = vmul.f32 %v1266, %v1266
  %v1662 = vmul.f32 %v1271, %v1271
  %v1663 = vmul.f32 %v1276, %v1276
  %v1664 = vmul.f32 %v1281, %v1281
  %v1665 = vmul.f32 %v1286, %v1286
  %v1666 = vmul.f32 %v1291, %v1291
  %v1667 = vmul.f32 %v1296, %v1296
  %v1668 = vmul.f32 %v1301, %v1301
  %v1669 = vmul.f32 %v1306, %v1306
  %v1670 = vmul.f32 %v1311, %v1311
  %v1671 = vmul.f32 %v1316, %v1316
  %v1672 = vmul.f32 %v1321, %v1321
  %v1673 = vmul.f32 %v1326, %v1326
  %v1674 = vmul.f32 %v1331, %v1331
  %v1675 = vmul.f32 %v1336, %v1336
  %v1676 = vmul.f32 %v1341, %v1341
  %v1677 = vmul.f32 %v1346, %v1346
  %v1678 = vmul.f32 %v1351, %v1351
  %v1679 = vmul.f32 %v1356, %v1356
  %v1680 = vmul.f32 %v1361, %v1361
  %v1681 = vmul.f32 %v1366, %v1366
  %v1682 = vmul.f32 %v1371, %v1371
  %v1683 = vmul.f32 %v1376, %v1376
  %v1684 = vmul.f32 %v1381, %v1381
  %v1685 = vmul.f32 %v1386, %v1386
  %v1686 = vmul.f32 %v1391, %v1391
  %v1687 = vmul.f32 %v1396, %v1396
  %v1688 = vmul.f32 %v1401, %v1401
  %v1689 = vmul.f32 %v1406, %v1406
  %v1690 = vmul.f32 %v1411, %v1411
  %v1691 = vmul.f32 %v1416, %v1416
  %v1692 = vmul.f32 %v1421, %v1421
  %v1693 = vmul.f32 %v1426, %v1426
  %v1694 = vmul.f32 %v1431, %v1431
  %v1695 = vmul.f32 %v1436, %v1436
  %v1696 = vsel %vm667, %v1632, 0.0
  %v1697 = vsel %vm667, %v1633, 0.0
  %v1698 = vadd.f32 %v1696, %v1697
  %v1699 = vsel %vm667, %v1634, 0.0
  %v1700 = vadd.f32 %v1698, %v1699
  %v1701 = vsel %vm667, %v1635, 0.0
  %v1702 = vadd.f32 %v1700, %v1701
  %v1703 = vsel %vm667, %v1636, 0.0
  %v1704 = vadd.f32 %v1702, %v1703
  %v1705 = vsel %vm667, %v1637, 0.0
  %v1706 = vadd.f32 %v1704, %v1705
  %v1707 = vsel %vm667, %v1638, 0.0
  %v1708 = vadd.f32 %v1706, %v1707
  %v1709 = vsel %vm667, %v1639, 0.0
  %v1710 = vadd.f32 %v1708, %v1709
  %v1711 = vsel %vm667, %v1640, 0.0
  %v1712 = vadd.f32 %v1710, %v1711
  %v1713 = vsel %vm667, %v1641, 0.0
  %v1714 = vadd.f32 %v1712, %v1713
  %v1715 = vsel %vm667, %v1642, 0.0
  %v1716 = vadd.f32 %v1714, %v1715
  %v1717 = vsel %vm667, %v1643, 0.0
  %v1718 = vadd.f32 %v1716, %v1717
  %v1719 = vsel %vm667, %v1644, 0.0
  %v1720 = vadd.f32 %v1718, %v1719
  %v1721 = vsel %vm667, %v1645, 0.0
  %v1722 = vadd.f32 %v1720, %v1721
  %v1723 = vsel %vm667, %v1646, 0.0
  %v1724 = vadd.f32 %v1722, %v1723
  %v1725 = vsel %vm667, %v1647, 0.0
  %v1726 = vadd.f32 %v1724, %v1725
  %v1727 = vsel %vm667, %v1648, 0.0
  %v1728 = vadd.f32 %v1726, %v1727
  %v1729 = vsel %vm667, %v1649, 0.0
  %v1730 = vadd.f32 %v1728, %v1729
  %v1731 = vsel %vm667, %v1650, 0.0
  %v1732 = vadd.f32 %v1730, %v1731
  %v1733 = vsel %vm667, %v1651, 0.0
  %v1734 = vadd.f32 %v1732, %v1733
  %v1735 = vsel %vm667, %v1652, 0.0
  %v1736 = vadd.f32 %v1734, %v1735
  %v1737 = vsel %vm667, %v1653, 0.0
  %v1738 = vadd.f32 %v1736, %v1737
  %v1739 = vsel %vm667, %v1654, 0.0
  %v1740 = vadd.f32 %v1738, %v1739
  %v1741 = vsel %vm667, %v1655, 0.0
  %v1742 = vadd.f32 %v1740, %v1741
  %v1743 = vsel %vm667, %v1656, 0.0
  %v1744 = vadd.f32 %v1742, %v1743
  %v1745 = vsel %vm667, %v1657, 0.0
  %v1746 = vadd.f32 %v1744, %v1745
  %v1747 = vsel %vm667, %v1658, 0.0
  %v1748 = vadd.f32 %v1746, %v1747
  %v1749 = vsel %vm667, %v1659, 0.0
  %v1750 = vadd.f32 %v1748, %v1749
  %v1751 = vsel %vm667, %v1660, 0.0
  %v1752 = vadd.f32 %v1750, %v1751
  %v1753 = vsel %vm667, %v1661, 0.0
  %v1754 = vadd.f32 %v1752, %v1753
  %v1755 = vsel %vm667, %v1662, 0.0
  %v1756 = vadd.f32 %v1754, %v1755
  %v1757 = vsel %vm667, %v1663, 0.0
  %v1758 = vadd.f32 %v1756, %v1757
  %v1759 = vsel %vm667, %v1664, 0.0
  %v1760 = vadd.f32 %v1758, %v1759
  %v1761 = vsel %vm667, %v1665, 0.0
  %v1762 = vadd.f32 %v1760, %v1761
  %v1763 = vsel %vm667, %v1666, 0.0
  %v1764 = vadd.f32 %v1762, %v1763
  %v1765 = vsel %vm667, %v1667, 0.0
  %v1766 = vadd.f32 %v1764, %v1765
  %v1767 = vsel %vm667, %v1668, 0.0
  %v1768 = vadd.f32 %v1766, %v1767
  %v1769 = vsel %vm667, %v1669, 0.0
  %v1770 = vadd.f32 %v1768, %v1769
  %v1771 = vsel %vm667, %v1670, 0.0
  %v1772 = vadd.f32 %v1770, %v1771
  %v1773 = vsel %vm667, %v1671, 0.0
  %v1774 = vadd.f32 %v1772, %v1773
  %v1775 = vsel %vm667, %v1672, 0.0
  %v1776 = vadd.f32 %v1774, %v1775
  %v1777 = vsel %vm667, %v1673, 0.0
  %v1778 = vadd.f32 %v1776, %v1777
  %v1779 = vsel %vm667, %v1674, 0.0
  %v1780 = vadd.f32 %v1778, %v1779
  %v1781 = vsel %vm667, %v1675, 0.0
  %v1782 = vadd.f32 %v1780, %v1781
  %v1783 = vsel %vm667, %v1676, 0.0
  %v1784 = vadd.f32 %v1782, %v1783
  %v1785 = vsel %vm667, %v1677, 0.0
  %v1786 = vadd.f32 %v1784, %v1785
  %v1787 = vsel %vm667, %v1678, 0.0
  %v1788 = vadd.f32 %v1786, %v1787
  %v1789 = vsel %vm667, %v1679, 0.0
  %v1790 = vadd.f32 %v1788, %v1789
  %v1791 = vsel %vm667, %v1680, 0.0
  %v1792 = vadd.f32 %v1790, %v1791
  %v1793 = vsel %vm667, %v1681, 0.0
  %v1794 = vadd.f32 %v1792, %v1793
  %v1795 = vsel %vm667, %v1682, 0.0
  %v1796 = vadd.f32 %v1794, %v1795
  %v1797 = vsel %vm667, %v1683, 0.0
  %v1798 = vadd.f32 %v1796, %v1797
  %v1799 = vsel %vm667, %v1684, 0.0
  %v1800 = vadd.f32 %v1798, %v1799
  %v1801 = vsel %vm667, %v1685, 0.0
  %v1802 = vadd.f32 %v1800, %v1801
  %v1803 = vsel %vm667, %v1686, 0.0
  %v1804 = vadd.f32 %v1802, %v1803
  %v1805 = vsel %vm667, %v1687, 0.0
  %v1806 = vadd.f32 %v1804, %v1805
  %v1807 = vsel %vm667, %v1688, 0.0
  %v1808 = vadd.f32 %v1806, %v1807
  %v1809 = vsel %vm667, %v1689, 0.0
  %v1810 = vadd.f32 %v1808, %v1809
  %v1811 = vsel %vm667, %v1690, 0.0
  %v1812 = vadd.f32 %v1810, %v1811
  %v1813 = vsel %vm667, %v1691, 0.0
  %v1814 = vadd.f32 %v1812, %v1813
  %v1815 = vsel %vm667, %v1692, 0.0
  %v1816 = vadd.f32 %v1814, %v1815
  %v1817 = vsel %vm667, %v1693, 0.0
  %v1818 = vadd.f32 %v1816, %v1817
  %v1819 = vsel %vm667, %v1694, 0.0
  %v1820 = vadd.f32 %v1818, %v1819
  %v1821 = vsel %vm667, %v1695, 0.0
  %v1822 = vadd.f32 %v1820, %v1821
  %v1823 = vadd.f32 %v1051, %v1822
  %1824 = vst.msk [vmem:[%s4] sm:$0xff] %vm667, %v1631
  %1825 = vst.msk [vmem:[%s5] sm:$0xff] %vm667, %v1823
  // Predicated region
  $region14: #{upsample_forward.3} parent=0 // pred_check
    _
  $region15: #{upsample_forward.3} parent=0 // pred_check_branch
    %1827 = sbr.rel (0) target = $region17
  $region16: #{upsample_forward.3} parent=0 // pred_region
    _
  $region17: #{upsample_forward.3} parent=0 // pred_fallthru
    _
  // Predicated region
  $region18: #{upsample_forward.3} parent=0 // pred_check
    _
  $region19: #{upsample_forward.3} parent=0 // pred_check_branch
    %1829 = sbr.rel (0) target = $region21
  $region20: #{upsample_forward.3} parent=0 // pred_region
    _
  $region21: #{upsample_forward.3} parent=0 // pred_fallthru
    _
  // Predicated region
  $region22: #{upsample_forward.3} parent=0 // pred_check
    _
  $region23: #{upsample_forward.3} parent=0 // pred_check_branch
    %1831 = sbr.rel (0) target = $region25
  $region24: #{upsample_forward.3} parent=0 // pred_region
    _
  $region25: #{upsample_forward.3} parent=0 // pred_fallthru
    _
  // Predicated region
  $region26: #{upsample_forward.3} parent=0 // pred_check
    _
  $region27: #{upsample_forward.3} parent=0 // pred_check_branch
    %1833 = sbr.rel (0) target = $region29
  $region28: #{upsample_forward.3} parent=0 // pred_region
    _
  $region29: #{upsample_forward.3} parent=0 // pred_fallthru
    _
  // Predicated region
  $region30: #{upsample_forward.3} parent=0 // pred_check
    _
  $region31: #{upsample_forward.3} parent=0 // pred_check_branch
    %1835 = sbr.rel (0) target = $region33
  $region32: #{upsample_forward.3} parent=0 // pred_region
    _
  $region33: #{upsample_forward.3} parent=0 // pred_fallthru
    _
  // Predicated region
  $region34: #{upsample_forward.3} parent=0 // pred_check
    _
  $region35: #{upsample_forward.3} parent=0 // pred_check_branch
    %1837 = sbr.rel (0) target = $region37
  $region36: #{upsample_forward.3} parent=0 // pred_region
    _
  $region37: #{upsample_forward.3} parent=0 // pred_fallthru
    _

// kernel: upsample_forward.4
$region0: #{upsample_forward.4}
  #allocation0 [shape = 'u32[]', space=smem, size = 0x4, offset = 0x4, fixed_abs, tag = 'smem constant byte address 0x4 - core index']
  #allocation1 [shape = 'u32[144,128]{1,0:T(1,128)}', space=vmem, size = 0x12000, scoped, tag = 'internal scratch']
  #allocation2 [shape = 'f32[34,34,16]{2,1,0:T(8,128)}', space=vmem, size = 0xaa000, scoped, tag = 'scratch operand']
  %s0 = inlined_call_operand.vmem [shape: f32[2,32,32,16], index: 0, kind: input, shape index: {}]
  %s1 = inlined_call_operand.vmem [shape: f32[1,16], index: 1, kind: input, shape index: {}]
  %s2 = inlined_call_operand.vmem [shape: f32[1,16], index: 2, kind: input, shape index: {}]
  %s3 = inlined_call_operand.vmem [shape: f32[144,16], index: 3, kind: input, shape index: {}]
  %s4 = inlined_call_operand.vmem [shape: f32[2,32,32,16], index: 4, kind: output, shape index: {0}]
  %s5 = inlined_call_operand.vmem [shape: f32[2,8,16], index: 5, kind: output, shape index: {1}]
  %s6 = inlined_call_operand.vmem [shape: f32[2,8,16], index: 6, kind: output, shape index: {2}]
  %7 = xla_tuple %s4, %s5, %s6
  %s8 = sld [smem:[#allocation0]]
  $region65: #{upsample_forward.4} parent=0
    _
  %s10 = ssub.s32 1, %s8
  %s11 = scalar_select 0, %s10, %s8
  loop: start=0, step=1, limit=4
  $region2: #{upsample_forward.4} parent=0 // loop_pre_header
    _
  $region3: #{upsample_forward.4} parent=0 // loop_header
    %s13 = sphi 0, %s17
    %p14 = scmp.ge.s32.totalorder %s13, 4
    %s23 = sphi 0, %s25
    %s26 = sphi 0, %s23
    %s27 = sphi 0, %s26
    %s43 = sphi 0, %s27
    %s47 = sphi 0, %s47
    %s49 = sphi 0, %s47
    %s50 = sphi 0, %s49
    %s64 = sphi 0, %s50
    %s68 = sphi 0, %s68
    %s70 = sphi 0, %s68
    %s71 = sphi 0, %s70
    %s85 = sphi 0, %s71
    %s89 = sphi 0, %s89
    %s91 = sphi 0, %s89
    %s92 = sphi 0, %s91
    %s106 = sphi 0, %s92
    %s112 = sphi 0, %s114
    %s115 = sphi 0, %s112
    %s116 = sphi 0, %s115
    %s132 = sphi 0, %s116
    %s138 = sphi 0, %s140
    %s141 = sphi 0, %s138
    %s142 = sphi 0, %s141
    %s158 = sphi 0, %s142
    %s164 = sphi 0, %s166
    %s167 = sphi 0, %s164
    %s168 = sphi 0, %s167
    %s184 = sphi 0, %s168
  $region4: #{upsample_forward.4} parent=0 // loop_header_branch
    %16 = sbr.rel (%p14) target = $region8
  $region5: #{upsample_forward.4} parent=0 // loop_body
    %s18 = ssub.s32 %s13, 1
    %s19 = ssub.s32 %s13, 2
    %s20 = sadd.s32 %s13, 1
    %s21 = ssub.s32 %s13, %s20
    %p22 = scmp.eq.s32.totalorder %s21, 0
    %s24 = sadd.s32 %s23, 1
    %s25 = scalar_select %p22, %s23, %s24
    %p28 = pneg %p22
    %p29 = scmp.eq.s32.totalorder %s13, 1
    %p30 = por %p28, %p29
    %p31 = scmp.ne.s32.totalorder %s23, %s26
    %p32 = scmp.eq.s32.totalorder %s13, 0
    %p33 = por %p31, %p32
    %p34 = scmp.ne.s32.totalorder %s23, %s26
    %p35 = scmp.eq.s32.totalorder %s18, 1
    %p36 = por %p34, %p35
    %p37 = scmp.ne.s32.totalorder %s26, %s27
    %p38 = scmp.eq.s32.totalorder %s18, 0
    %p39 = por %p37, %p38
    %p40 = scmp.ne.s32.totalorder %s26, %s27
    %p41 = scmp.eq.s32.totalorder %s19, 1
    %p42 = por %p40, %p41
    %p44 = scmp.ne.s32.totalorder %s27, %s43
    %p45 = scmp.eq.s32.totalorder %s19, 0
    %p46 = por %p44, %p45
    %s48 = sadd.s32 %s47, 1
    %p51 = scmp.eq.s32.totalorder %s13, 1
    %p52 = scmp.ne.s32.totalorder %s47, %s49
    %p53 = scmp.eq.s32.totalorder %s13, 0
    %p54 = por %p52, %p53
    %p55 = scmp.ne.s32.totalorder %s47, %s49
    %p56 = scmp.eq.s32.totalorder %s18, 1
    %p57 = por %p55, %p56
    %p58 = scmp.ne.s32.totalorder %s49, %s50
    %p59 = scmp.eq.s32.totalorder %s18, 0
    %p60 = por %p58, %p59
    %p61 = scmp.ne.s32.totalorder %s49, %s50
    %p62 = scmp.eq.s32.totalorder %s19, 1
    %p63 = por %p61, %p62
    %p65 = scmp.ne.s32.totalorder %s50, %s64
    %p66 = scmp.eq.s32.totalorder %s19, 0
    %p67 = por %p65, %p66
    %s69 = sadd.s32 %s68, 1
    %p72 = scmp.eq.s32.totalorder %s13, 1
    %p73 = scmp.ne.s32.totalorder %s68, %s70
    %p74 = scmp.eq.s32.totalorder %s13, 0
    %p75 = por %p73, %p74
    %p76 = scmp.ne.s32.totalorder %s68, %s70
    %p77 = scmp.eq.s32.totalorder %s18, 1
    %p78 = por %p76, %p77
    %p79 = scmp.ne.s32.totalorder %s70, %s71
    %p80 = scmp.eq.s32.totalorder %s18, 0
    %p81 = por %p79, %p80
    %p82 = scmp.ne.s32.totalorder %s70, %s71
    %p83 = scmp.eq.s32.totalorder %s19, 1
    %p84 = por %p82, %p83
    %p86 = scmp.ne.s32.totalorder %s71, %s85
    %p87 = scmp.eq.s32.totalorder %s19, 0
    %p88 = por %p86, %p87
    %s90 = sadd.s32 %s89, 1
    %p93 = scmp.eq.s32.totalorder %s13, 1
    %p94 = scmp.ne.s32.totalorder %s89, %s91
    %p95 = scmp.eq.s32.totalorder %s13, 0
    %p96 = por %p94, %p95
    %p97 = scmp.ne.s32.totalorder %s89, %s91
    %p98 = scmp.eq.s32.totalorder %s18, 1
    %p99 = por %p97, %p98
    %p100 = scmp.ne.s32.totalorder %s91, %s92
    %p101 = scmp.eq.s32.totalorder %s18, 0
    %p102 = por %p100, %p101
    %p103 = scmp.ne.s32.totalorder %s91, %s92
    %p104 = scmp.eq.s32.totalorder %s19, 1
    %p105 = por %p103, %p104
    %p107 = scmp.ne.s32.totalorder %s92, %s106
    %p108 = scmp.eq.s32.totalorder %s19, 0
    %p109 = por %p107, %p108
    %s110 = ssub.s32 %s13, %s20
    %p111 = scmp.eq.s32.totalorder %s110, 0
    %s113 = sadd.s32 %s112, 1
    %s114 = scalar_select %p111, %s112, %s113
    %p117 = pneg %p111
    %p118 = scmp.eq.s32.totalorder %s13, 1
    %p119 = por %p117, %p118
    %p120 = scmp.ne.s32.totalorder %s112, %s115
    %p121 = scmp.eq.s32.totalorder %s13, 0
    %p122 = por %p120, %p121
    %p123 = scmp.ne.s32.totalorder %s112, %s115
    %p124 = scmp.eq.s32.totalorder %s18, 1
    %p125 = por %p123, %p124
    %p126 = scmp.ne.s32.totalorder %s115, %s116
    %p127 = scmp.eq.s32.totalorder %s18, 0
    %p128 = por %p126, %p127
    %p129 = scmp.ne.s32.totalorder %s115, %s116
    %p130 = scmp.eq.s32.totalorder %s19, 1
    %p131 = por %p129, %p130
    %p133 = scmp.ne.s32.totalorder %s116, %s132
    %p134 = scmp.eq.s32.totalorder %s19, 0
    %p135 = por %p133, %p134
    %s136 = ssub.s32 %s13, %s20
    %p137 = scmp.eq.s32.totalorder %s136, 0
    %s139 = sadd.s32 %s138, 1
    %s140 = scalar_select %p137, %s138, %s139
    %p143 = pneg %p137
    %p144 = scmp.eq.s32.totalorder %s13, 1
    %p145 = por %p143, %p144
    %p146 = scmp.ne.s32.totalorder %s138, %s141
    %p147 = scmp.eq.s32.totalorder %s13, 0
    %p148 = por %p146, %p147
    %p149 = scmp.ne.s32.totalorder %s138, %s141
    %p150 = scmp.eq.s32.totalorder %s18, 1
    %p151 = por %p149, %p150
    %p152 = scmp.ne.s32.totalorder %s141, %s142
    %p153 = scmp.eq.s32.totalorder %s18, 0
    %p154 = por %p152, %p153
    %p155 = scmp.ne.s32.totalorder %s141, %s142
    %p156 = scmp.eq.s32.totalorder %s19, 1
    %p157 = por %p155, %p156
    %p159 = scmp.ne.s32.totalorder %s142, %s158
    %p160 = scmp.eq.s32.totalorder %s19, 0
    %p161 = por %p159, %p160
    %s162 = ssub.s32 %s13, %s20
    %p163 = scmp.eq.s32.totalorder %s162, 0
    %s165 = sadd.s32 %s164, 1
    %s166 = scalar_select %p163, %s164, %s165
    %p169 = pneg %p163
    %p170 = scmp.eq.s32.totalorder %s13, 1
    %p171 = por %p169, %p170
    %p172 = scmp.ne.s32.totalorder %s164, %s167
    %p173 = scmp.eq.s32.totalorder %s13, 0
    %p174 = por %p172, %p173
    %p175 = scmp.ne.s32.totalorder %s164, %s167
    %p176 = scmp.eq.s32.totalorder %s18, 1
    %p177 = por %p175, %p176
    %p178 = scmp.ne.s32.totalorder %s167, %s168
    %p179 = scmp.eq.s32.totalorder %s18, 0
    %p180 = por %p178, %p179
    %p181 = scmp.ne.s32.totalorder %s167, %s168
    %p182 = scmp.eq.s32.totalorder %s19, 1
    %p183 = por %p181, %p182
    %p185 = scmp.ne.s32.totalorder %s168, %s184
    %p186 = scmp.eq.s32.totalorder %s19, 0
    %p187 = por %p185, %p186
    %p188 = scmp.le.s32.totalorder 1, %s13
    %p189 = scmp.lt.s32.totalorder %s13, 3
    %p190 = pnand %p188, %p189
    %p191 = pneg %p190
    // Predicated region
    $region9: #{upsample_forward.4} parent=5 // pred_check
      _
    $region10: #{upsample_forward.4} parent=5 // pred_check_branch
      %193 = sbr.rel (%p190) target = $region12
    $region11: #{upsample_forward.4} parent=5 // pred_region
      %s194 = ssub.s32 %s13, 1
      // Predicated region
      $region13: #{upsample_forward.4} parent=11 // pred_check
        %p195 = pneg %p60
      $region14: #{upsample_forward.4} parent=11 // pred_check_branch
        %197 = sbr.rel (%p195) target = $region16
      $region15: #{upsample_forward.4} parent=11 // pred_region
        _
      $region16: #{upsample_forward.4} parent=11 // pred_fallthru
        _
      // Predicated region
      $region17: #{upsample_forward.4} parent=11 // pred_check
        %p198 = pneg %p81
      $region18: #{upsample_forward.4} parent=11 // pred_check_branch
        %200 = sbr.rel (%p198) target = $region20
      $region19: #{upsample_forward.4} parent=11 // pred_region
        _
      $region20: #{upsample_forward.4} parent=11 // pred_fallthru
        _
      // Predicated region
      $region21: #{upsample_forward.4} parent=11 // pred_check
        %p201 = pneg %p102
      $region22: #{upsample_forward.4} parent=11 // pred_check_branch
        %203 = sbr.rel (%p201) target = $region24
      $region23: #{upsample_forward.4} parent=11 // pred_region
        _
      $region24: #{upsample_forward.4} parent=11 // pred_fallthru
        _
    $region12: #{upsample_forward.4} parent=5 // pred_fallthru
      _
    %p204 = scmp.lt.s32.totalorder %s13, 2
    // Predicated region
    $region25: #{upsample_forward.4} parent=5 // pred_check
      %p205 = pneg %p204
    $region26: #{upsample_forward.4} parent=5 // pred_check_branch
      %207 = sbr.rel (%p205) target = $region28
    $region27: #{upsample_forward.4} parent=5 // pred_region
      // Predicated region
      $region29: #{upsample_forward.4} parent=27 // pred_check
        %p208 = pneg %p33
      $region30: #{upsample_forward.4} parent=27 // pred_check_branch
        %210 = sbr.rel (%p208) target = $region32
      $region31: #{upsample_forward.4} parent=27 // pred_region
        %p211 = scmp.lt.s32.totalorder %s13, 1
        %s212 = scalar_select %p211, %s13, 1
        %s213 = smul.addr %s212, 128
        %s214 = smul.addr %s213, 8
        %s215 = scalar_lea.vmem %s0, %s214
      $region32: #{upsample_forward.4} parent=27 // pred_fallthru
        _
    $region28: #{upsample_forward.4} parent=5 // pred_fallthru
      _
    %p216 = scmp.le.s32.totalorder 1, %s13
    %p217 = scmp.lt.s32.totalorder %s13, 3
    %p218 = pnand %p216, %p217
    %p219 = pneg %p218
    // Predicated region
    $region33: #{upsample_forward.4} parent=5 // pred_check
      _
    $region34: #{upsample_forward.4} parent=5 // pred_check_branch
      %221 = sbr.rel (%p218) target = $region36
    $region35: #{upsample_forward.4} parent=5 // pred_region
      %s222 = ssub.s32 %s13, 1
      %p223 = scmp.lt.s32.totalorder %s18, 1
      %s224 = scalar_select %p223, %s18, 1
      %s225 = smul.addr %s224, 128
      %s226 = smul.addr %s225, 8
      %s227 = scalar_lea.vmem %s0, %s226
      %p228 = pneg %p39
      %p229 = pneg %p36
      %p230 = pneg %p60
      %p231 = pneg %p57
      %p232 = pneg %p81
      %p233 = pneg %p78
      %p234 = pneg %p102
      %p235 = pneg %p99
      %p236 = pneg %p128
      %p237 = pneg %p125
      %p238 = scmp.lt.s32.totalorder %s18, 1
      %s239 = scalar_select %p238, %s18, 1
      %s240 = smul.addr %s239, 128
      %s241 = smul.addr %s240, 8
      %s242 = scalar_lea.vmem %s4, %s241
      %p243 = pneg %p154
      %p244 = pneg %p151
      %p245 = scmp.lt.s32.totalorder %s18, 1
      %s246 = scalar_select %p245, %s18, 1
      %s247 = smul.addr %s246, 8
      %s248 = scalar_lea.vmem %s5, %s247
      %p249 = pneg %p180
      %p250 = pneg %p177
      %p251 = scmp.lt.s32.totalorder %s18, 1
      %s252 = scalar_select %p251, %s18, 1
      %s253 = smul.addr %s252, 8
      %s254 = scalar_lea.vmem %s6, %s253
      %p255 = scmp.lt.s32.totalorder %s18, 1
      %s256 = scalar_select %p255, %s18, 1
      %s257 = smul.addr %s256, 128
      %s258 = smul.addr %s257, 8
      %s259 = scalar_lea.vmem %s0, %s258
      %p260 = scmp.lt.s32.totalorder %s18, 1
      %s261 = scalar_select %p260, %s18, 1
      %s262 = smul.addr %s261, 128
      %s263 = smul.addr %s262, 8
      %s264 = scalar_lea.vmem %s4, %s263
      %p265 = scmp.lt.s32.totalorder %s18, 1
      %s266 = scalar_select %p265, %s18, 1
      %s267 = smul.addr %s266, 8
      %s268 = scalar_lea.vmem %s5, %s267
      %p269 = scmp.lt.s32.totalorder %s18, 1
      %s270 = scalar_select %p269, %s18, 1
      %s271 = smul.addr %s270, 8
      %s272 = scalar_lea.vmem %s6, %s271
      %vm273 = vcmask 130048
      %274 = vst.msk [vmem:[#allocation2] sm:$0xff] %vm273, 0.0
      %275 = vst.msk [vmem:[#allocation2 + $0x8] sm:$0xff] %vm273, 0.0
      %276 = vst.msk [vmem:[#allocation2 + $0x10] sm:$0xff] %vm273, 0.0
      %277 = vst.msk [vmem:[#allocation2 + $0x18] sm:$0xff] %vm273, 0.0
      %vm278 = vcmask 123904
      %279 = vst.msk [vmem:[#allocation2 + $0x20] sm:$0x3] %vm278, 0.0
      %280 = vst.msk [vmem:[#allocation2 + $0x28] sm:$0xff] %vm273, 0.0
      %281 = vst.msk [vmem:[#allocation2 + $0x30] sm:$0xff] %vm273, 0.0
      %282 = vst.msk [vmem:[#allocation2 + $0x38] sm:$0xff] %vm273, 0.0
      %283 = vst.msk [vmem:[#allocation2 + $0x40] sm:$0xff] %vm273, 0.0
      %284 = vst.msk [vmem:[#allocation2 + $0x48] sm:$0x3] %vm278, 0.0
      %285 = vst.msk [vmem:[#allocation2 + $0x50] sm:$0xff] %vm273, 0.0
      %286 = vst.msk [vmem:[#allocation2 + $0x58] sm:$0xff] %vm273, 0.0
      %287 = vst.msk [vmem:[#allocation2 + $0x60] sm:$0xff] %vm273, 0.0
      %288 = vst.msk [vmem:[#allocation2 + $0x68] sm:$0xff] %vm273, 0.0
      %289 = vst.msk [vmem:[#allocation2 + $0x70] sm:$0x3] %vm278, 0.0
      %290 = vst.msk [vmem:[#allocation2 + $0x78] sm:$0xff] %vm273, 0.0
      %291 = vst.msk [vmem:[#allocation2 + $0x80] sm:$0xff] %vm273, 0.0
      %292 = vst.msk [vmem:[#allocation2 + $0x88] sm:$0xff] %vm273, 0.0
      %293 = vst.msk [vmem:[#allocation2 + $0x90] sm:$0xff] %vm273, 0.0
      %294 = vst.msk [vmem:[#allocation2 + $0x98] sm:$0x3] %vm278, 0.0
      %295 = vst.msk [vmem:[#allocation2 + $0xa0] sm:$0xff] %vm273, 0.0
      %296 = vst.msk [vmem:[#allocation2 + $0xa8] sm:$0xff] %vm273, 0.0
      %297 = vst.msk [vmem:[#allocation2 + $0xb0] sm:$0xff] %vm273, 0.0
      %298 = vst.msk [vmem:[#allocation2 + $0xb8] sm:$0xff] %vm273, 0.0
      %299 = vst.msk [vmem:[#allocation2 + $0xc0] sm:$0x3] %vm278, 0.0
      %300 = vst.msk [vmem:[#allocation2 + $0xc8] sm:$0xff] %vm273, 0.0
      %301 = vst.msk [vmem:[#allocation2 + $0xd0] sm:$0xff] %vm273, 0.0
      %302 = vst.msk [vmem:[#allocation2 + $0xd8] sm:$0xff] %vm273, 0.0
      %303 = vst.msk [vmem:[#allocation2 + $0xe0] sm:$0xff] %vm273, 0.0
      %304 = vst.msk [vmem:[#allocation2 + $0xe8] sm:$0x3] %vm278, 0.0
      %305 = vst.msk [vmem:[#allocation2 + $0xf0] sm:$0xff] %vm273, 0.0
      %306 = vst.msk [vmem:[#allocation2 + $0xf8] sm:$0xff] %vm273, 0.0
      %307 = vst.msk [vmem:[#allocation2 + $0x100] sm:$0xff] %vm273, 0.0
      %308 = vst.msk [vmem:[#allocation2 + $0x108] sm:$0xff] %vm273, 0.0
      %309 = vst.msk [vmem:[#allocation2 + $0x110] sm:$0x3] %vm278, 0.0
      %310 = vst.msk [vmem:[#allocation2 + $0x118] sm:$0xff] %vm273, 0.0
      %311 = vst.msk [vmem:[#allocation2 + $0x120] sm:$0xff] %vm273, 0.0
      %312 = vst.msk [vmem:[#allocation2 + $0x128] sm:$0xff] %vm273, 0.0
      %313 = vst.msk [vmem:[#allocation2 + $0x130] sm:$0xff] %vm273, 0.0
      %314 = vst.msk [vmem:[#allocation2 + $0x138] sm:$0x3] %vm278, 0.0
      %315 = vst.msk [vmem:[#allocation2 + $0x140] sm:$0xff] %vm273, 0.0
      %316 = vst.msk [vmem:[#allocation2 + $0x148] sm:$0xff] %vm273, 0.0
      %317 = vst.msk [vmem:[#allocation2 + $0x150] sm:$0xff] %vm273, 0.0
      %318 = vst.msk [vmem:[#allocation2 + $0x158] sm:$0xff] %vm273, 0.0
      %319 = vst.msk [vmem:[#allocation2 + $0x160] sm:$0x3] %vm278, 0.0
      %320 = vst.msk [vmem:[#allocation2 + $0x168] sm:$0xff] %vm273, 0.0
      %321 = vst.msk [vmem:[#allocation2 + $0x170] sm:$0xff] %vm273, 0.0
      %322 = vst.msk [vmem:[#allocation2 + $0x178] sm:$0xff] %vm273, 0.0
      %323 = vst.msk [vmem:[#allocation2 + $0x180] sm:$0xff] %vm273, 0.0
      %324 = vst.msk [vmem:[#allocation2 + $0x188] sm:$0x3] %vm278, 0.0
      %325 = vst.msk [vmem:[#allocation2 + $0x190] sm:$0xff] %vm273, 0.0
      %326 = vst.msk [vmem:[#allocation2 + $0x198] sm:$0xff] %vm273, 0.0
      %327 = vst.msk [vmem:[#allocation2 + $0x1a0] sm:$0xff] %vm273, 0.0
      %328 = vst.msk [vmem:[#allocation2 + $0x1a8] sm:$0xff] %vm273, 0.0
      %329 = vst.msk [vmem:[#allocation2 + $0x1b0] sm:$0x3] %vm278, 0.0
      %330 = vst.msk [vmem:[#allocation2 + $0x1b8] sm:$0xff] %vm273, 0.0
      %331 = vst.msk [vmem:[#allocation2 + $0x1c0] sm:$0xff] %vm273, 0.0
      %332 = vst.msk [vmem:[#allocation2 + $0x1c8] sm:$0xff] %vm273, 0.0
      %333 = vst.msk [vmem:[#allocation2 + $0x1d0] sm:$0xff] %vm273, 0.0
      %334 = vst.msk [vmem:[#allocation2 + $0x1d8] sm:$0x3] %vm278, 0.0
      %335 = vst.msk [vmem:[#allocation2 + $0x1e0] sm:$0xff] %vm273, 0.0
      %336 = vst.msk [vmem:[#allocation2 + $0x1e8] sm:$0xff] %vm273, 0.0
      %337 = vst.msk [vmem:[#allocation2 + $0x1f0] sm:$0xff] %vm273, 0.0
      %338 = vst.msk [vmem:[#allocation2 + $0x1f8] sm:$0xff] %vm273, 0.0
      %339 = vst.msk [vmem:[#allocation2 + $0x200] sm:$0x3] %vm278, 0.0
      %340 = vst.msk [vmem:[#allocation2 + $0x208] sm:$0xff] %vm273, 0.0
      %341 = vst.msk [vmem:[#allocation2 + $0x210] sm:$0xff] %vm273, 0.0
      %342 = vst.msk [vmem:[#allocation2 + $0x218] sm:$0xff] %vm273, 0.0
      %343 = vst.msk [vmem:[#allocation2 + $0x220] sm:$0xff] %vm273, 0.0
      %344 = vst.msk [vmem:[#allocation2 + $0x228] sm:$0x3] %vm278, 0.0
      %345 = vst.msk [vmem:[#allocation2 + $0x230] sm:$0xff] %vm273, 0.0
      %346 = vst.msk [vmem:[#allocation2 + $0x238] sm:$0xff] %vm273, 0.0
      %347 = vst.msk [vmem:[#allocation2 + $0x240] sm:$0xff] %vm273, 0.0
      %348 = vst.msk [vmem:[#allocation2 + $0x248] sm:$0xff] %vm273, 0.0
      %349 = vst.msk [vmem:[#allocation2 + $0x250] sm:$0x3] %vm278, 0.0
      %350 = vst.msk [vmem:[#allocation2 + $0x258] sm:$0xff] %vm273, 0.0
      %351 = vst.msk [vmem:[#allocation2 + $0x260] sm:$0xff] %vm273, 0.0
      %352 = vst.msk [vmem:[#allocation2 + $0x268] sm:$0xff] %vm273, 0.0
      %353 = vst.msk [vmem:[#allocation2 + $0x270] sm:$0xff] %vm273, 0.0
      %354 = vst.msk [vmem:[#allocation2 + $0x278] sm:$0x3] %vm278, 0.0
      %355 = vst.msk [vmem:[#allocation2 + $0x280] sm:$0xff] %vm273, 0.0
      %356 = vst.msk [vmem:[#allocation2 + $0x288] sm:$0xff] %vm273, 0.0
      %357 = vst.msk [vmem:[#allocation2 + $0x290] sm:$0xff] %vm273, 0.0
      %358 = vst.msk [vmem:[#allocation2 + $0x298] sm:$0xff] %vm273, 0.0
      %359 = vst.msk [vmem:[#allocation2 + $0x2a0] sm:$0x3] %vm278, 0.0
      %360 = vst.msk [vmem:[#allocation2 + $0x2a8] sm:$0xff] %vm273, 0.0
      %361 = vst.msk [vmem:[#allocation2 + $0x2b0] sm:$0xff] %vm273, 0.0
      %362 = vst.msk [vmem:[#allocation2 + $0x2b8] sm:$0xff] %vm273, 0.0
      %363 = vst.msk [vmem:[#allocation2 + $0x2c0] sm:$0xff] %vm273, 0.0
      %364 = vst.msk [vmem:[#allocation2 + $0x2c8] sm:$0x3] %vm278, 0.0
      %365 = vst.msk [vmem:[#allocation2 + $0x2d0] sm:$0xff] %vm273, 0.0
      %366 = vst.msk [vmem:[#allocation2 + $0x2d8] sm:$0xff] %vm273, 0.0
      %367 = vst.msk [vmem:[#allocation2 + $0x2e0] sm:$0xff] %vm273, 0.0
      %368 = vst.msk [vmem:[#allocation2 + $0x2e8] sm:$0xff] %vm273, 0.0
      %369 = vst.msk [vmem:[#allocation2 + $0x2f0] sm:$0x3] %vm278, 0.0
      %370 = vst.msk [vmem:[#allocation2 + $0x2f8] sm:$0xff] %vm273, 0.0
      %371 = vst.msk [vmem:[#allocation2 + $0x300] sm:$0xff] %vm273, 0.0
      %372 = vst.msk [vmem:[#allocation2 + $0x308] sm:$0xff] %vm273, 0.0
      %373 = vst.msk [vmem:[#allocation2 + $0x310] sm:$0xff] %vm273, 0.0
      %374 = vst.msk [vmem:[#allocation2 + $0x318] sm:$0x3] %vm278, 0.0
      %375 = vst.msk [vmem:[#allocation2 + $0x320] sm:$0xff] %vm273, 0.0
      %376 = vst.msk [vmem:[#allocation2 + $0x328] sm:$0xff] %vm273, 0.0
      %377 = vst.msk [vmem:[#allocation2 + $0x330] sm:$0xff] %vm273, 0.0
      %378 = vst.msk [vmem:[#allocation2 + $0x338] sm:$0xff] %vm273, 0.0
      %379 = vst.msk [vmem:[#allocation2 + $0x340] sm:$0x3] %vm278, 0.0
      %380 = vst.msk [vmem:[#allocation2 + $0x348] sm:$0xff] %vm273, 0.0
      %381 = vst.msk [vmem:[#allocation2 + $0x350] sm:$0xff] %vm273, 0.0
      %382 = vst.msk [vmem:[#allocation2 + $0x358] sm:$0xff] %vm273, 0.0
      %383 = vst.msk [vmem:[#allocation2 + $0x360] sm:$0xff] %vm273, 0.0
      %384 = vst.msk [vmem:[#allocation2 + $0x368] sm:$0x3] %vm278, 0.0
      %385 = vst.msk [vmem:[#allocation2 + $0x370] sm:$0xff] %vm273, 0.0
      %386 = vst.msk [vmem:[#allocation2 + $0x378] sm:$0xff] %vm273, 0.0
      %387 = vst.msk [vmem:[#allocation2 + $0x380] sm:$0xff] %vm273, 0.0
      %388 = vst.msk [vmem:[#allocation2 + $0x388] sm:$0xff] %vm273, 0.0
      %389 = vst.msk [vmem:[#allocation2 + $0x390] sm:$0x3] %vm278, 0.0
      %390 = vst.msk [vmem:[#allocation2 + $0x398] sm:$0xff] %vm273, 0.0
      %391 = vst.msk [vmem:[#allocation2 + $0x3a0] sm:$0xff] %vm273, 0.0
      %392 = vst.msk [vmem:[#allocation2 + $0x3a8] sm:$0xff] %vm273, 0.0
      %393 = vst.msk [vmem:[#allocation2 + $0x3b0] sm:$0xff] %vm273, 0.0
      %394 = vst.msk [vmem:[#allocation2 + $0x3b8] sm:$0x3] %vm278, 0.0
      %395 = vst.msk [vmem:[#allocation2 + $0x3c0] sm:$0xff] %vm273, 0.0
      %396 = vst.msk [vmem:[#allocation2 + $0x3c8] sm:$0xff] %vm273, 0.0
      %397 = vst.msk [vmem:[#allocation2 + $0x3d0] sm:$0xff] %vm273, 0.0
      %398 = vst.msk [vmem:[#allocation2 + $0x3d8] sm:$0xff] %vm273, 0.0
      %399 = vst.msk [vmem:[#allocation2 + $0x3e0] sm:$0x3] %vm278, 0.0
      %400 = vst.msk [vmem:[#allocation2 + $0x3e8] sm:$0xff] %vm273, 0.0
      %401 = vst.msk [vmem:[#allocation2 + $0x3f0] sm:$0xff] %vm273, 0.0
      %402 = vst.msk [vmem:[#allocation2 + $0x3f8] sm:$0xff] %vm273, 0.0
      %403 = vst.msk [vmem:[#allocation2 + $0x400] sm:$0xff] %vm273, 0.0
      %404 = vst.msk [vmem:[#allocation2 + $0x408] sm:$0x3] %vm278, 0.0
      %405 = vst.msk [vmem:[#allocation2 + $0x410] sm:$0xff] %vm273, 0.0
      %406 = vst.msk [vmem:[#allocation2 + $0x418] sm:$0xff] %vm273, 0.0
      %407 = vst.msk [vmem:[#allocation2 + $0x420] sm:$0xff] %vm273, 0.0
      %408 = vst.msk [vmem:[#allocation2 + $0x428] sm:$0xff] %vm273, 0.0
      %409 = vst.msk [vmem:[#allocation2 + $0x430] sm:$0x3] %vm278, 0.0
      %410 = vst.msk [vmem:[#allocation2 + $0x438] sm:$0xff] %vm273, 0.0
      %411 = vst.msk [vmem:[#allocation2 + $0x440] sm:$0xff] %vm273, 0.0
      %412 = vst.msk [vmem:[#allocation2 + $0x448] sm:$0xff] %vm273, 0.0
      %413 = vst.msk [vmem:[#allocation2 + $0x450] sm:$0xff] %vm273, 0.0
      %414 = vst.msk [vmem:[#allocation2 + $0x458] sm:$0x3] %vm278, 0.0
      %415 = vst.msk [vmem:[#allocation2 + $0x460] sm:$0xff] %vm273, 0.0
      %416 = vst.msk [vmem:[#allocation2 + $0x468] sm:$0xff] %vm273, 0.0
      %417 = vst.msk [vmem:[#allocation2 + $0x470] sm:$0xff] %vm273, 0.0
      %418 = vst.msk [vmem:[#allocation2 + $0x478] sm:$0xff] %vm273, 0.0
      %419 = vst.msk [vmem:[#allocation2 + $0x480] sm:$0x3] %vm278, 0.0
      %420 = vst.msk [vmem:[#allocation2 + $0x488] sm:$0xff] %vm273, 0.0
      %421 = vst.msk [vmem:[#allocation2 + $0x490] sm:$0xff] %vm273, 0.0
      %422 = vst.msk [vmem:[#allocation2 + $0x498] sm:$0xff] %vm273, 0.0
      %423 = vst.msk [vmem:[#allocation2 + $0x4a0] sm:$0xff] %vm273, 0.0
      %424 = vst.msk [vmem:[#allocation2 + $0x4a8] sm:$0x3] %vm278, 0.0
      %425 = vst.msk [vmem:[#allocation2 + $0x4b0] sm:$0xff] %vm273, 0.0
      %426 = vst.msk [vmem:[#allocation2 + $0x4b8] sm:$0xff] %vm273, 0.0
      %427 = vst.msk [vmem:[#allocation2 + $0x4c0] sm:$0xff] %vm273, 0.0
      %428 = vst.msk [vmem:[#allocation2 + $0x4c8] sm:$0xff] %vm273, 0.0
      %429 = vst.msk [vmem:[#allocation2 + $0x4d0] sm:$0x3] %vm278, 0.0
      %430 = vst.msk [vmem:[#allocation2 + $0x4d8] sm:$0xff] %vm273, 0.0
      %431 = vst.msk [vmem:[#allocation2 + $0x4e0] sm:$0xff] %vm273, 0.0
      %432 = vst.msk [vmem:[#allocation2 + $0x4e8] sm:$0xff] %vm273, 0.0
      %433 = vst.msk [vmem:[#allocation2 + $0x4f0] sm:$0xff] %vm273, 0.0
      %434 = vst.msk [vmem:[#allocation2 + $0x4f8] sm:$0x3] %vm278, 0.0
      %435 = vst.msk [vmem:[#allocation2 + $0x500] sm:$0xff] %vm273, 0.0
      %436 = vst.msk [vmem:[#allocation2 + $0x508] sm:$0xff] %vm273, 0.0
      %437 = vst.msk [vmem:[#allocation2 + $0x510] sm:$0xff] %vm273, 0.0
      %438 = vst.msk [vmem:[#allocation2 + $0x518] sm:$0xff] %vm273, 0.0
      %439 = vst.msk [vmem:[#allocation2 + $0x520] sm:$0x3] %vm278, 0.0
      %440 = vst.msk [vmem:[#allocation2 + $0x528] sm:$0xff] %vm273, 0.0
      %441 = vst.msk [vmem:[#allocation2 + $0x530] sm:$0xff] %vm273, 0.0
      %442 = vst.msk [vmem:[#allocation2 + $0x538] sm:$0xff] %vm273, 0.0
      %443 = vst.msk [vmem:[#allocation2 + $0x540] sm:$0xff] %vm273, 0.0
      %444 = vst.msk [vmem:[#allocation2 + $0x548] sm:$0x3] %vm278, 0.0
      %v445 = vld [vmem:[%s259] sm:$0xff]
      %v446 = vld [vmem:[%s259 + $0x8] sm:$0xff]
      %v447 = vld [vmem:[%s259 + $0x10] sm:$0xff]
      %v448 = vld [vmem:[%s259 + $0x18] sm:$0xff]
      %v449 = vld [vmem:[%s259 + $0x20] sm:$0xff]
      %v450 = vld [vmem:[%s259 + $0x28] sm:$0xff]
      %v451 = vld [vmem:[%s259 + $0x30] sm:$0xff]
      %v452 = vld [vmem:[%s259 + $0x38] sm:$0xff]
      %v453 = vld [vmem:[%s259 + $0x40] sm:$0xff]
      %v454 = vld [vmem:[%s259 + $0x48] sm:$0xff]
      %v455 = vld [vmem:[%s259 + $0x50] sm:$0xff]
      %v456 = vld [vmem:[%s259 + $0x58] sm:$0xff]
      %v457 = vld [vmem:[%s259 + $0x60] sm:$0xff]
      %v458 = vld [vmem:[%s259 + $0x68] sm:$0xff]
      %v459 = vld [vmem:[%s259 + $0x70] sm:$0xff]
      %v460 = vld [vmem:[%s259 + $0x78] sm:$0xff]
      %v461 = vld [vmem:[%s259 + $0x80] sm:$0xff]
      %v462 = vld [vmem:[%s259 + $0x88] sm:$0xff]
      %v463 = vld [vmem:[%s259 + $0x90] sm:$0xff]
      %v464 = vld [vmem:[%s259 + $0x98] sm:$0xff]
      %v465 = vld [vmem:[%s259 + $0xa0] sm:$0xff]
      %v466 = vld [vmem:[%s259 + $0xa8] sm:$0xff]
      %v467 = vld [vmem:[%s259 + $0xb0] sm:$0xff]
      %v468 = vld [vmem:[%s259 + $0xb8] sm:$0xff]
      %v469 = vld [vmem:[%s259 + $0xc0] sm:$0xff]
      %v470 = vld [vmem:[%s259 + $0xc8] sm:$0xff]
      %v471 = vld [vmem:[%s259 + $0xd0] sm:$0xff]
      %v472 = vld [vmem:[%s259 + $0xd8] sm:$0xff]
      %v473 = vld [vmem:[%s259 + $0xe0] sm:$0xff]
      %v474 = vld [vmem:[%s259 + $0xe8] sm:$0xff]
      %v475 = vld [vmem:[%s259 + $0xf0] sm:$0xff]
      %v476 = vld [vmem:[%s259 + $0xf8] sm:$0xff]
      %v477 = vld [vmem:[%s259 + $0x100] sm:$0xff]
      %v478 = vld [vmem:[%s259 + $0x108] sm:$0xff]
      %v479 = vld [vmem:[%s259 + $0x110] sm:$0xff]
      %v480 = vld [vmem:[%s259 + $0x118] sm:$0xff]
      %v481 = vld [vmem:[%s259 + $0x120] sm:$0xff]
      %v482 = vld [vmem:[%s259 + $0x128] sm:$0xff]
      %v483 = vld [vmem:[%s259 + $0x130] sm:$0xff]
      %v484 = vld [vmem:[%s259 + $0x138] sm:$0xff]
      %v485 = vld [vmem:[%s259 + $0x140] sm:$0xff]
      %v486 = vld [vmem:[%s259 + $0x148] sm:$0xff]
      %v487 = vld [vmem:[%s259 + $0x150] sm:$0xff]
      %v488 = vld [vmem:[%s259 + $0x158] sm:$0xff]
      %v489 = vld [vmem:[%s259 + $0x160] sm:$0xff]
      %v490 = vld [vmem:[%s259 + $0x168] sm:$0xff]
      %v491 = vld [vmem:[%s259 + $0x170] sm:$0xff]
      %v492 = vld [vmem:[%s259 + $0x178] sm:$0xff]
      %v493 = vld [vmem:[%s259 + $0x180] sm:$0xff]
      %v494 = vld [vmem:[%s259 + $0x188] sm:$0xff]
      %v495 = vld [vmem:[%s259 + $0x190] sm:$0xff]
      %v496 = vld [vmem:[%s259 + $0x198] sm:$0xff]
      %v497 = vld [vmem:[%s259 + $0x1a0] sm:$0xff]
      %v498 = vld [vmem:[%s259 + $0x1a8] sm:$0xff]
      %v499 = vld [vmem:[%s259 + $0x1b0] sm:$0xff]
      %v500 = vld [vmem:[%s259 + $0x1b8] sm:$0xff]
      %v501 = vld [vmem:[%s259 + $0x1c0] sm:$0xff]
      %v502 = vld [vmem:[%s259 + $0x1c8] sm:$0xff]
      %v503 = vld [vmem:[%s259 + $0x1d0] sm:$0xff]
      %v504 = vld [vmem:[%s259 + $0x1d8] sm:$0xff]
      %v505 = vld [vmem:[%s259 + $0x1e0] sm:$0xff]
      %v506 = vld [vmem:[%s259 + $0x1e8] sm:$0xff]
      %v507 = vld [vmem:[%s259 + $0x1f0] sm:$0xff]
      %v508 = vld [vmem:[%s259 + $0x1f8] sm:$0xff]
      %v509 = vld [vmem:[%s259 + $0x200] sm:$0xff]
      %v510 = vld [vmem:[%s259 + $0x208] sm:$0xff]
      %v511 = vld [vmem:[%s259 + $0x210] sm:$0xff]
      %v512 = vld [vmem:[%s259 + $0x218] sm:$0xff]
      %v513 = vld [vmem:[%s259 + $0x220] sm:$0xff]
      %v514 = vld [vmem:[%s259 + $0x228] sm:$0xff]
      %v515 = vld [vmem:[%s259 + $0x230] sm:$0xff]
      %v516 = vld [vmem:[%s259 + $0x238] sm:$0xff]
      %v517 = vld [vmem:[%s259 + $0x240] sm:$0xff]
      %v518 = vld [vmem:[%s259 + $0x248] sm:$0xff]
      %v519 = vld [vmem:[%s259 + $0x250] sm:$0xff]
      %v520 = vld [vmem:[%s259 + $0x258] sm:$0xff]
      %v521 = vld [vmem:[%s259 + $0x260] sm:$0xff]
      %v522 = vld [vmem:[%s259 + $0x268] sm:$0xff]
      %v523 = vld [vmem:[%s259 + $0x270] sm:$0xff]
      %v524 = vld [vmem:[%s259 + $0x278] sm:$0xff]
      %v525 = vld [vmem:[%s259 + $0x280] sm:$0xff]
      %v526 = vld [vmem:[%s259 + $0x288] sm:$0xff]
      %v527 = vld [vmem:[%s259 + $0x290] sm:$0xff]
      %v528 = vld [vmem:[%s259 + $0x298] sm:$0xff]
      %v529 = vld [vmem:[%s259 + $0x2a0] sm:$0xff]
      %v530 = vld [vmem:[%s259 + $0x2a8] sm:$0xff]
      %v531 = vld [vmem:[%s259 + $0x2b0] sm:$0xff]
      %v532 = vld [vmem:[%s259 + $0x2b8] sm:$0xff]
      %v533 = vld [vmem:[%s259 + $0x2c0] sm:$0xff]
      %v534 = vld [vmem:[%s259 + $0x2c8] sm:$0xff]
      %v535 = vld [vmem:[%s259 + $0x2d0] sm:$0xff]
      %v536 = vld [vmem:[%s259 + $0x2d8] sm:$0xff]
      %v537 = vld [vmem:[%s259 + $0x2e0] sm:$0xff]
      %v538 = vld [vmem:[%s259 + $0x2e8] sm:$0xff]
      %v539 = vld [vmem:[%s259 + $0x2f0] sm:$0xff]
      %v540 = vld [vmem:[%s259 + $0x2f8] sm:$0xff]
      %v541 = vld [vmem:[%s259 + $0x300] sm:$0xff]
      %v542 = vld [vmem:[%s259 + $0x308] sm:$0xff]
      %v543 = vld [vmem:[%s259 + $0x310] sm:$0xff]
      %v544 = vld [vmem:[%s259 + $0x318] sm:$0xff]
      %v545 = vld [vmem:[%s259 + $0x320] sm:$0xff]
      %v546 = vld [vmem:[%s259 + $0x328] sm:$0xff]
      %v547 = vld [vmem:[%s259 + $0x330] sm:$0xff]
      %v548 = vld [vmem:[%s259 + $0x338] sm:$0xff]
      %v549 = vld [vmem:[%s259 + $0x340] sm:$0xff]
      %v550 = vld [vmem:[%s259 + $0x348] sm:$0xff]
      %v551 = vld [vmem:[%s259 + $0x350] sm:$0xff]
      %v552 = vld [vmem:[%s259 + $0x358] sm:$0xff]
      %v553 = vld [vmem:[%s259 + $0x360] sm:$0xff]
      %v554 = vld [vmem:[%s259 + $0x368] sm:$0xff]
      %v555 = vld [vmem:[%s259 + $0x370] sm:$0xff]
      %v556 = vld [vmem:[%s259 + $0x378] sm:$0xff]
      %v557 = vld [vmem:[%s259 + $0x380] sm:$0xff]
      %v558 = vld [vmem:[%s259 + $0x388] sm:$0xff]
      %v559 = vld [vmem:[%s259 + $0x390] sm:$0xff]
      %v560 = vld [vmem:[%s259 + $0x398] sm:$0xff]
      %v561 = vld [vmem:[%s259 + $0x3a0] sm:$0xff]
      %v562 = vld [vmem:[%s259 + $0x3a8] sm:$0xff]
      %v563 = vld [vmem:[%s259 + $0x3b0] sm:$0xff]
      %v564 = vld [vmem:[%s259 + $0x3b8] sm:$0xff]
      %v565 = vld [vmem:[%s259 + $0x3c0] sm:$0xff]
      %v566 = vld [vmem:[%s259 + $0x3c8] sm:$0xff]
      %v567 = vld [vmem:[%s259 + $0x3d0] sm:$0xff]
      %v568 = vld [vmem:[%s259 + $0x3d8] sm:$0xff]
      %v569 = vld [vmem:[%s259 + $0x3e0] sm:$0xff]
      %v570 = vld [vmem:[%s259 + $0x3e8] sm:$0xff]
      %v571 = vld [vmem:[%s259 + $0x3f0] sm:$0xff]
      %v572 = vld [vmem:[%s259 + $0x3f8] sm:$0xff]
      %v573 = vld [vmem:[%s1] sm:$0x1]
      %v575 = vlaneseq
      %v576 = vshrl.u32 %v575, 7
      %v577 = vsub.s32 0, %v576
      %v578 = vrot.slane %v573, %v577
      %v580 = vmul.f32 %v445, %v578
      %v581 = vmul.f32 %v446, %v578
      %v582 = vmul.f32 %v447, %v578
      %v583 = vmul.f32 %v448, %v578
      %v584 = vmul.f32 %v449, %v578
      %v585 = vmul.f32 %v450, %v578
      %v586 = vmul.f32 %v451, %v578
      %v587 = vmul.f32 %v452, %v578
      %v588 = vmul.f32 %v453, %v578
      %v589 = vmul.f32 %v454, %v578
      %v590 = vmul.f32 %v455, %v578
      %v591 = vmul.f32 %v456, %v578
      %v592 = vmul.f32 %v457, %v578
      %v593 = vmul.f32 %v458, %v578
      %v594 = vmul.f32 %v459, %v578
      %v595 = vmul.f32 %v460, %v578
      %v596 = vmul.f32 %v461, %v578
      %v597 = vmul.f32 %v462, %v578
      %v598 = vmul.f32 %v463, %v578
      %v599 = vmul.f32 %v464, %v578
      %v600 = vmul.f32 %v465, %v578
      %v601 = vmul.f32 %v466, %v578
      %v602 = vmul.f32 %v467, %v578
      %v603 = vmul.f32 %v468, %v578
      %v604 = vmul.f32 %v469, %v578
      %v605 = vmul.f32 %v470, %v578
      %v606 = vmul.f32 %v471, %v578
      %v607 = vmul.f32 %v472, %v578
      %v608 = vmul.f32 %v473, %v578
      %v609 = vmul.f32 %v474, %v578
      %v610 = vmul.f32 %v475, %v578
      %v611 = vmul.f32 %v476, %v578
      %v612 = vmul.f32 %v477, %v578
      %v613 = vmul.f32 %v478, %v578
      %v614 = vmul.f32 %v479, %v578
      %v615 = vmul.f32 %v480, %v578
      %v616 = vmul.f32 %v481, %v578
      %v617 = vmul.f32 %v482, %v578
      %v618 = vmul.f32 %v483, %v578
      %v619 = vmul.f32 %v484, %v578
      %v620 = vmul.f32 %v485, %v578
      %v621 = vmul.f32 %v486, %v578
      %v622 = vmul.f32 %v487, %v578
      %v623 = vmul.f32 %v488, %v578
      %v624 = vmul.f32 %v489, %v578
      %v625 = vmul.f32 %v490, %v578
      %v626 = vmul.f32 %v491, %v578
      %v627 = vmul.f32 %v492, %v578
      %v628 = vmul.f32 %v493, %v578
      %v629 = vmul.f32 %v494, %v578
      %v630 = vmul.f32 %v495, %v578
      %v631 = vmul.f32 %v496, %v578
      %v632 = vmul.f32 %v497, %v578
      %v633 = vmul.f32 %v498, %v578
      %v634 = vmul.f32 %v499, %v578
      %v635 = vmul.f32 %v500, %v578
      %v636 = vmul.f32 %v501, %v578
      %v637 = vmul.f32 %v502, %v578
      %v638 = vmul.f32 %v503, %v578
      %v639 = vmul.f32 %v504, %v578
      %v640 = vmul.f32 %v505, %v578
      %v641 = vmul.f32 %v506, %v578
      %v642 = vmul.f32 %v507, %v578
      %v643 = vmul.f32 %v508, %v578
      %v644 = vmul.f32 %v509, %v578
      %v645 = vmul.f32 %v510, %v578
      %v646 = vmul.f32 %v511, %v578
      %v647 = vmul.f32 %v512, %v578
      %v648 = vmul.f32 %v513, %v578
      %v649 = vmul.f32 %v514, %v578
      %v650 = vmul.f32 %v515, %v578
      %v651 = vmul.f32 %v516, %v578
      %v652 = vmul.f32 %v517, %v578
      %v653 = vmul.f32 %v518, %v578
      %v654 = vmul.f32 %v519, %v578
      %v655 = vmul.f32 %v520, %v578
      %v656 = vmul.f32 %v521, %v578
      %v657 = vmul.f32 %v522, %v578
      %v658 = vmul.f32 %v523, %v578
      %v659 = vmul.f32 %v524, %v578
      %v660 = vmul.f32 %v525, %v578
      %v661 = vmul.f32 %v526, %v578
      %v662 = vmul.f32 %v527, %v578
      %v663 = vmul.f32 %v528, %v578
      %v664 = vmul.f32 %v529, %v578
      %v665 = vmul.f32 %v530, %v578
      %v666 = vmul.f32 %v531, %v578
      %v667 = vmul.f32 %v532, %v578
      %v668 = vmul.f32 %v533, %v578
      %v669 = vmul.f32 %v534, %v578
      %v670 = vmul.f32 %v535, %v578
      %v671 = vmul.f32 %v536, %v578
      %v672 = vmul.f32 %v537, %v578
      %v673 = vmul.f32 %v538, %v578
      %v674 = vmul.f32 %v539, %v578
      %v675 = vmul.f32 %v540, %v578
      %v676 = vmul.f32 %v541, %v578
      %v677 = vmul.f32 %v542, %v578
      %v678 = vmul.f32 %v543, %v578
      %v679 = vmul.f32 %v544, %v578
      %v680 = vmul.f32 %v545, %v578
      %v681 = vmul.f32 %v546, %v578
      %v682 = vmul.f32 %v547, %v578
      %v683 = vmul.f32 %v548, %v578
      %v684 = vmul.f32 %v549, %v578
      %v685 = vmul.f32 %v550, %v578
      %v686 = vmul.f32 %v551, %v578
      %v687 = vmul.f32 %v552, %v578
      %v688 = vmul.f32 %v553, %v578
      %v689 = vmul.f32 %v554, %v578
      %v690 = vmul.f32 %v555, %v578
      %v691 = vmul.f32 %v556, %v578
      %v692 = vmul.f32 %v557, %v578
      %v693 = vmul.f32 %v558, %v578
      %v694 = vmul.f32 %v559, %v578
      %v695 = vmul.f32 %v560, %v578
      %v696 = vmul.f32 %v561, %v578
      %v697 = vmul.f32 %v562, %v578
      %v698 = vmul.f32 %v563, %v578
      %v699 = vmul.f32 %v564, %v578
      %v700 = vmul.f32 %v565, %v578
      %v701 = vmul.f32 %v566, %v578
      %v702 = vmul.f32 %v567, %v578
      %v703 = vmul.f32 %v568, %v578
      %v704 = vmul.f32 %v569, %v578
      %v705 = vmul.f32 %v570, %v578
      %v706 = vmul.f32 %v571, %v578
      %v707 = vmul.f32 %v572, %v578
      %v708 = vld [vmem:[%s2] sm:$0x1]
      %v710 = vlaneseq
      %v711 = vshrl.u32 %v710, 7
      %v712 = vsub.s32 0, %v711
      %v713 = vrot.slane %v708, %v712
      %v715 = vadd.f32 %v580, %v713
      %v716 = vadd.f32 %v581, %v713
      %v717 = vadd.f32 %v582, %v713
      %v718 = vadd.f32 %v583, %v713
      %v719 = vadd.f32 %v584, %v713
      %v720 = vadd.f32 %v585, %v713
      %v721 = vadd.f32 %v586, %v713
      %v722 = vadd.f32 %v587, %v713
      %v723 = vadd.f32 %v588, %v713
      %v724 = vadd.f32 %v589, %v713
      %v725 = vadd.f32 %v590, %v713
      %v726 = vadd.f32 %v591, %v713
      %v727 = vadd.f32 %v592, %v713
      %v728 = vadd.f32 %v593, %v713
      %v729 = vadd.f32 %v594, %v713
      %v730 = vadd.f32 %v595, %v713
      %v731 = vadd.f32 %v596, %v713
      %v732 = vadd.f32 %v597, %v713
      %v733 = vadd.f32 %v598, %v713
      %v734 = vadd.f32 %v599, %v713
      %v735 = vadd.f32 %v600, %v713
      %v736 = vadd.f32 %v601, %v713
      %v737 = vadd.f32 %v602, %v713
      %v738 = vadd.f32 %v603, %v713
      %v739 = vadd.f32 %v604, %v713
      %v740 = vadd.f32 %v605, %v713
      %v741 = vadd.f32 %v606, %v713
      %v742 = vadd.f32 %v607, %v713
      %v743 = vadd.f32 %v608, %v713
      %v744 = vadd.f32 %v609, %v713
      %v745 = vadd.f32 %v610, %v713
      %v746 = vadd.f32 %v611, %v713
      %v747 = vadd.f32 %v612, %v713
      %v748 = vadd.f32 %v613, %v713
      %v749 = vadd.f32 %v614, %v713
      %v750 = vadd.f32 %v615, %v713
      %v751 = vadd.f32 %v616, %v713
      %v752 = vadd.f32 %v617, %v713
      %v753 = vadd.f32 %v618, %v713
      %v754 = vadd.f32 %v619, %v713
      %v755 = vadd.f32 %v620, %v713
      %v756 = vadd.f32 %v621, %v713
      %v757 = vadd.f32 %v622, %v713
      %v758 = vadd.f32 %v623, %v713
      %v759 = vadd.f32 %v624, %v713
      %v760 = vadd.f32 %v625, %v713
      %v761 = vadd.f32 %v626, %v713
      %v762 = vadd.f32 %v627, %v713
      %v763 = vadd.f32 %v628, %v713
      %v764 = vadd.f32 %v629, %v713
      %v765 = vadd.f32 %v630, %v713
      %v766 = vadd.f32 %v631, %v713
      %v767 = vadd.f32 %v632, %v713
      %v768 = vadd.f32 %v633, %v713
      %v769 = vadd.f32 %v634, %v713
      %v770 = vadd.f32 %v635, %v713
      %v771 = vadd.f32 %v636, %v713
      %v772 = vadd.f32 %v637, %v713
      %v773 = vadd.f32 %v638, %v713
      %v774 = vadd.f32 %v639, %v713
      %v775 = vadd.f32 %v640, %v713
      %v776 = vadd.f32 %v641, %v713
      %v777 = vadd.f32 %v642, %v713
      %v778 = vadd.f32 %v643, %v713
      %v779 = vadd.f32 %v644, %v713
      %v780 = vadd.f32 %v645, %v713
      %v781 = vadd.f32 %v646, %v713
      %v782 = vadd.f32 %v647, %v713
      %v783 = vadd.f32 %v648, %v713
      %v784 = vadd.f32 %v649, %v713
      %v785 = vadd.f32 %v650, %v713
      %v786 = vadd.f32 %v651, %v713
      %v787 = vadd.f32 %v652, %v713
      %v788 = vadd.f32 %v653, %v713
      %v789 = vadd.f32 %v654, %v713
      %v790 = vadd.f32 %v655, %v713
      %v791 = vadd.f32 %v656, %v713
      %v792 = vadd.f32 %v657, %v713
      %v793 = vadd.f32 %v658, %v713
      %v794 = vadd.f32 %v659, %v713
      %v795 = vadd.f32 %v660, %v713
      %v796 = vadd.f32 %v661, %v713
      %v797 = vadd.f32 %v662, %v713
      %v798 = vadd.f32 %v663, %v713
      %v799 = vadd.f32 %v664, %v713
      %v800 = vadd.f32 %v665, %v713
      %v801 = vadd.f32 %v666, %v713
      %v802 = vadd.f32 %v667, %v713
      %v803 = vadd.f32 %v668, %v713
      %v804 = vadd.f32 %v669, %v713
      %v805 = vadd.f32 %v670, %v713
      %v806 = vadd.f32 %v671, %v713
      %v807 = vadd.f32 %v672, %v713
      %v808 = vadd.f32 %v673, %v713
      %v809 = vadd.f32 %v674, %v713
      %v810 = vadd.f32 %v675, %v713
      %v811 = vadd.f32 %v676, %v713
      %v812 = vadd.f32 %v677, %v713
      %v813 = vadd.f32 %v678, %v713
      %v814 = vadd.f32 %v679, %v713
      %v815 = vadd.f32 %v680, %v713
      %v816 = vadd.f32 %v681, %v713
      %v817 = vadd.f32 %v682, %v713
      %v818 = vadd.f32 %v683, %v713
      %v819 = vadd.f32 %v684, %v713
      %v820 = vadd.f32 %v685, %v713
      %v821 = vadd.f32 %v686, %v713
      %v822 = vadd.f32 %v687, %v713
      %v823 = vadd.f32 %v688, %v713
      %v824 = vadd.f32 %v689, %v713
      %v825 = vadd.f32 %v690, %v713
      %v826 = vadd.f32 %v691, %v713
      %v827 = vadd.f32 %v692, %v713
      %v828 = vadd.f32 %v693, %v713
      %v829 = vadd.f32 %v694, %v713
      %v830 = vadd.f32 %v695, %v713
      %v831 = vadd.f32 %v696, %v713
      %v832 = vadd.f32 %v697, %v713
      %v833 = vadd.f32 %v698, %v713
      %v834 = vadd.f32 %v699, %v713
      %v835 = vadd.f32 %v700, %v713
      %v836 = vadd.f32 %v701, %v713
      %v837 = vadd.f32 %v702, %v713
      %v838 = vadd.f32 %v703, %v713
      %v839 = vadd.f32 %v704, %v713
      %v840 = vadd.f32 %v705, %v713
      %v841 = vadd.f32 %v706, %v713
      %v842 = vadd.f32 %v707, %v713
      %s843 = scalar_lea.vmem [#allocation2], 40
      %844 = vst.msk [vmem:[%s843 + $0x1] sm:$0xff] %vm273, %v715
      %845 = vst.msk [vmem:[%s843 + $0x9] sm:$0xff] %vm273, %v716
      %846 = vst.msk [vmem:[%s843 + $0x11] sm:$0xff] %vm273, %v717
      %847 = vst.msk [vmem:[%s843 + $0x19] sm:$0xff] %vm273, %v718
      %848 = vst.msk [vmem:[%s843 + $0x29] sm:$0xff] %vm273, %v719
      %849 = vst.msk [vmem:[%s843 + $0x31] sm:$0xff] %vm273, %v720
      %850 = vst.msk [vmem:[%s843 + $0x39] sm:$0xff] %vm273, %v721
      %851 = vst.msk [vmem:[%s843 + $0x41] sm:$0xff] %vm273, %v722
      %852 = vst.msk [vmem:[%s843 + $0x51] sm:$0xff] %vm273, %v723
      %853 = vst.msk [vmem:[%s843 + $0x59] sm:$0xff] %vm273, %v724
      %854 = vst.msk [vmem:[%s843 + $0x61] sm:$0xff] %vm273, %v725
      %855 = vst.msk [vmem:[%s843 + $0x69] sm:$0xff] %vm273, %v726
      %856 = vst.msk [vmem:[%s843 + $0x79] sm:$0xff] %vm273, %v727
      %857 = vst.msk [vmem:[%s843 + $0x81] sm:$0xff] %vm273, %v728
      %858 = vst.msk [vmem:[%s843 + $0x89] sm:$0xff] %vm273, %v729
      %859 = vst.msk [vmem:[%s843 + $0x91] sm:$0xff] %vm273, %v730
      %860 = vst.msk [vmem:[%s843 + $0xa1] sm:$0xff] %vm273, %v731
      %861 = vst.msk [vmem:[%s843 + $0xa9] sm:$0xff] %vm273, %v732
      %862 = vst.msk [vmem:[%s843 + $0xb1] sm:$0xff] %vm273, %v733
      %863 = vst.msk [vmem:[%s843 + $0xb9] sm:$0xff] %vm273, %v734
      %864 = vst.msk [vmem:[%s843 + $0xc9] sm:$0xff] %vm273, %v735
      %865 = vst.msk [vmem:[%s843 + $0xd1] sm:$0xff] %vm273, %v736
      %866 = vst.msk [vmem:[%s843 + $0xd9] sm:$0xff] %vm273, %v737
      %867 = vst.msk [vmem:[%s843 + $0xe1] sm:$0xff] %vm273, %v738
      %868 = vst.msk [vmem:[%s843 + $0xf1] sm:$0xff] %vm273, %v739
      %869 = vst.msk [vmem:[%s843 + $0xf9] sm:$0xff] %vm273, %v740
      %870 = vst.msk [vmem:[%s843 + $0x101] sm:$0xff] %vm273, %v741
      %871 = vst.msk [vmem:[%s843 + $0x109] sm:$0xff] %vm273, %v742
      %872 = vst.msk [vmem:[%s843 + $0x119] sm:$0xff] %vm273, %v743
      %873 = vst.msk [vmem:[%s843 + $0x121] sm:$0xff] %vm273, %v744
      %874 = vst.msk [vmem:[%s843 + $0x129] sm:$0xff] %vm273, %v745
      %875 = vst.msk [vmem:[%s843 + $0x131] sm:$0xff] %vm273, %v746
      %876 = vst.msk [vmem:[%s843 + $0x141] sm:$0xff] %vm273, %v747
      %877 = vst.msk [vmem:[%s843 + $0x149] sm:$0xff] %vm273, %v748
      %878 = vst.msk [vmem:[%s843 + $0x151] sm:$0xff] %vm273, %v749
      %879 = vst.msk [vmem:[%s843 + $0x159] sm:$0xff] %vm273, %v750
      %880 = vst.msk [vmem:[%s843 + $0x169] sm:$0xff] %vm273, %v751
      %881 = vst.msk [vmem:[%s843 + $0x171] sm:$0xff] %vm273, %v752
      %882 = vst.msk [vmem:[%s843 + $0x179] sm:$0xff] %vm273, %v753
      %883 = vst.msk [vmem:[%s843 + $0x181] sm:$0xff] %vm273, %v754
      %884 = vst.msk [vmem:[%s843 + $0x191] sm:$0xff] %vm273, %v755
      %885 = vst.msk [vmem:[%s843 + $0x199] sm:$0xff] %vm273, %v756
      %886 = vst.msk [vmem:[%s843 + $0x1a1] sm:$0xff] %vm273, %v757
      %887 = vst.msk [vmem:[%s843 + $0x1a9] sm:$0xff] %vm273, %v758
      %888 = vst.msk [vmem:[%s843 + $0x1b9] sm:$0xff] %vm273, %v759
      %889 = vst.msk [vmem:[%s843 + $0x1c1] sm:$0xff] %vm273, %v760
      %890 = vst.msk [vmem:[%s843 + $0x1c9] sm:$0xff] %vm273, %v761
      %891 = vst.msk [vmem:[%s843 + $0x1d1] sm:$0xff] %vm273, %v762
      %892 = vst.msk [vmem:[%s843 + $0x1e1] sm:$0xff] %vm273, %v763
      %893 = vst.msk [vmem:[%s843 + $0x1e9] sm:$0xff] %vm273, %v764
      %894 = vst.msk [vmem:[%s843 + $0x1f1] sm:$0xff] %vm273, %v765
      %895 = vst.msk [vmem:[%s843 + $0x1f9] sm:$0xff] %vm273, %v766
      %896 = vst.msk [vmem:[%s843 + $0x209] sm:$0xff] %vm273, %v767
      %897 = vst.msk [vmem:[%s843 + $0x211] sm:$0xff] %vm273, %v768
      %898 = vst.msk [vmem:[%s843 + $0x219] sm:$0xff] %vm273, %v769
      %899 = vst.msk [vmem:[%s843 + $0x221] sm:$0xff] %vm273, %v770
      %900 = vst.msk [vmem:[%s843 + $0x231] sm:$0xff] %vm273, %v771
      %901 = vst.msk [vmem:[%s843 + $0x239] sm:$0xff] %vm273, %v772
      %902 = vst.msk [vmem:[%s843 + $0x241] sm:$0xff] %vm273, %v773
      %903 = vst.msk [vmem:[%s843 + $0x249] sm:$0xff] %vm273, %v774
      %904 = vst.msk [vmem:[%s843 + $0x259] sm:$0xff] %vm273, %v775
      %905 = vst.msk [vmem:[%s843 + $0x261] sm:$0xff] %vm273, %v776
      %906 = vst.msk [vmem:[%s843 + $0x269] sm:$0xff] %vm273, %v777
      %907 = vst.msk [vmem:[%s843 + $0x271] sm:$0xff] %vm273, %v778
      %908 = vst.msk [vmem:[%s843 + $0x281] sm:$0xff] %vm273, %v779
      %909 = vst.msk [vmem:[%s843 + $0x289] sm:$0xff] %vm273, %v780
      %910 = vst.msk [vmem:[%s843 + $0x291] sm:$0xff] %vm273, %v781
      %911 = vst.msk [vmem:[%s843 + $0x299] sm:$0xff] %vm273, %v782
      %912 = vst.msk [vmem:[%s843 + $0x2a9] sm:$0xff] %vm273, %v783
      %913 = vst.msk [vmem:[%s843 + $0x2b1] sm:$0xff] %vm273, %v784
      %914 = vst.msk [vmem:[%s843 + $0x2b9] sm:$0xff] %vm273, %v785
      %915 = vst.msk [vmem:[%s843 + $0x2c1] sm:$0xff] %vm273, %v786
      %916 = vst.msk [vmem:[%s843 + $0x2d1] sm:$0xff] %vm273, %v787
      %917 = vst.msk [vmem:[%s843 + $0x2d9] sm:$0xff] %vm273, %v788
      %918 = vst.msk [vmem:[%s843 + $0x2e1] sm:$0xff] %vm273, %v789
      %919 = vst.msk [vmem:[%s843 + $0x2e9] sm:$0xff] %vm273, %v790
      %920 = vst.msk [vmem:[%s843 + $0x2f9] sm:$0xff] %vm273, %v791
      %921 = vst.msk [vmem:[%s843 + $0x301] sm:$0xff] %vm273, %v792
      %922 = vst.msk [vmem:[%s843 + $0x309] sm:$0xff] %vm273, %v793
      %923 = vst.msk [vmem:[%s843 + $0x311] sm:$0xff] %vm273, %v794
      %924 = vst.msk [vmem:[%s843 + $0x321] sm:$0xff] %vm273, %v795
      %925 = vst.msk [vmem:[%s843 + $0x329] sm:$0xff] %vm273, %v796
      %926 = vst.msk [vmem:[%s843 + $0x331] sm:$0xff] %vm273, %v797
      %927 = vst.msk [vmem:[%s843 + $0x339] sm:$0xff] %vm273, %v798
      %928 = vst.msk [vmem:[%s843 + $0x349] sm:$0xff] %vm273, %v799
      %929 = vst.msk [vmem:[%s843 + $0x351] sm:$0xff] %vm273, %v800
      %930 = vst.msk [vmem:[%s843 + $0x359] sm:$0xff] %vm273, %v801
      %931 = vst.msk [vmem:[%s843 + $0x361] sm:$0xff] %vm273, %v802
      %932 = vst.msk [vmem:[%s843 + $0x371] sm:$0xff] %vm273, %v803
      %933 = vst.msk [vmem:[%s843 + $0x379] sm:$0xff] %vm273, %v804
      %934 = vst.msk [vmem:[%s843 + $0x381] sm:$0xff] %vm273, %v805
      %935 = vst.msk [vmem:[%s843 + $0x389] sm:$0xff] %vm273, %v806
      %936 = vst.msk [vmem:[%s843 + $0x399] sm:$0xff] %vm273, %v807
      %937 = vst.msk [vmem:[%s843 + $0x3a1] sm:$0xff] %vm273, %v808
      %938 = vst.msk [vmem:[%s843 + $0x3a9] sm:$0xff] %vm273, %v809
      %939 = vst.msk [vmem:[%s843 + $0x3b1] sm:$0xff] %vm273, %v810
      %940 = vst.msk [vmem:[%s843 + $0x3c1] sm:$0xff] %vm273, %v811
      %941 = vst.msk [vmem:[%s843 + $0x3c9] sm:$0xff] %vm273, %v812
      %942 = vst.msk [vmem:[%s843 + $0x3d1] sm:$0xff] %vm273, %v813
      %943 = vst.msk [vmem:[%s843 + $0x3d9] sm:$0xff] %vm273, %v814
      %944 = vst.msk [vmem:[%s843 + $0x3e9] sm:$0xff] %vm273, %v815
      %945 = vst.msk [vmem:[%s843 + $0x3f1] sm:$0xff] %vm273, %v816
      %946 = vst.msk [vmem:[%s843 + $0x3f9] sm:$0xff] %vm273, %v817
      %947 = vst.msk [vmem:[%s843 + $0x401] sm:$0xff] %vm273, %v818
      %948 = vst.msk [vmem:[%s843 + $0x411] sm:$0xff] %vm273, %v819
      %949 = vst.msk [vmem:[%s843 + $0x419] sm:$0xff] %vm273, %v820
      %950 = vst.msk [vmem:[%s843 + $0x421] sm:$0xff] %vm273, %v821
      %951 = vst.msk [vmem:[%s843 + $0x429] sm:$0xff] %vm273, %v822
      %952 = vst.msk [vmem:[%s843 + $0x439] sm:$0xff] %vm273, %v823
      %953 = vst.msk [vmem:[%s843 + $0x441] sm:$0xff] %vm273, %v824
      %954 = vst.msk [vmem:[%s843 + $0x449] sm:$0xff] %vm273, %v825
      %955 = vst.msk [vmem:[%s843 + $0x451] sm:$0xff] %vm273, %v826
      %956 = vst.msk [vmem:[%s843 + $0x461] sm:$0xff] %vm273, %v827
      %957 = vst.msk [vmem:[%s843 + $0x469] sm:$0xff] %vm273, %v828
      %958 = vst.msk [vmem:[%s843 + $0x471] sm:$0xff] %vm273, %v829
      %959 = vst.msk [vmem:[%s843 + $0x479] sm:$0xff] %vm273, %v830
      %960 = vst.msk [vmem:[%s843 + $0x489] sm:$0xff] %vm273, %v831
      %961 = vst.msk [vmem:[%s843 + $0x491] sm:$0xff] %vm273, %v832
      %962 = vst.msk [vmem:[%s843 + $0x499] sm:$0xff] %vm273, %v833
      %963 = vst.msk [vmem:[%s843 + $0x4a1] sm:$0xff] %vm273, %v834
      %964 = vst.msk [vmem:[%s843 + $0x4b1] sm:$0xff] %vm273, %v835
      %965 = vst.msk [vmem:[%s843 + $0x4b9] sm:$0xff] %vm273, %v836
      %966 = vst.msk [vmem:[%s843 + $0x4c1] sm:$0xff] %vm273, %v837
      %967 = vst.msk [vmem:[%s843 + $0x4c9] sm:$0xff] %vm273, %v838
      %968 = vst.msk [vmem:[%s843 + $0x4d9] sm:$0xff] %vm273, %v839
      %969 = vst.msk [vmem:[%s843 + $0x4e1] sm:$0xff] %vm273, %v840
      %970 = vst.msk [vmem:[%s843 + $0x4e9] sm:$0xff] %vm273, %v841
      %971 = vst.msk [vmem:[%s843 + $0x4f1] sm:$0xff] %vm273, %v842
      %v972 = vld [vmem:[#allocation2] sm:$0xff]
      %v973 = vld [vmem:[#allocation2 + $0x8] sm:$0xff]
      %v974 = vld [vmem:[#allocation2 + $0x10] sm:$0xff]
      %v975 = vld [vmem:[#allocation2 + $0x18] sm:$0xff]
      %v976 = vld [vmem:[#allocation2 + $0x28] sm:$0xff]
      %v977 = vld [vmem:[#allocation2 + $0x30] sm:$0xff]
      %v978 = vld [vmem:[#allocation2 + $0x38] sm:$0xff]
      %v979 = vld [vmem:[#allocation2 + $0x40] sm:$0xff]
      %v980 = vld [vmem:[#allocation2 + $0x50] sm:$0xff]
      %v981 = vld [vmem:[#allocation2 + $0x58] sm:$0xff]
      %v982 = vld [vmem:[#allocation2 + $0x60] sm:$0xff]
      %v983 = vld [vmem:[#allocation2 + $0x68] sm:$0xff]
      %v984 = vld [vmem:[#allocation2 + $0x78] sm:$0xff]
      %v985 = vld [vmem:[#allocation2 + $0x80] sm:$0xff]
      %v986 = vld [vmem:[#allocation2 + $0x88] sm:$0xff]
      %v987 = vld [vmem:[#allocation2 + $0x90] sm:$0xff]
      %v988 = vld [vmem:[#allocation2 + $0xa0] sm:$0xff]
      %v989 = vld [vmem:[#allocation2 + $0xa8] sm:$0xff]
      %v990 = vld [vmem:[#allocation2 + $0xb0] sm:$0xff]
      %v991 = vld [vmem:[#allocation2 + $0xb8] sm:$0xff]
      %v992 = vld [vmem:[#allocation2 + $0xc8] sm:$0xff]
      %v993 = vld [vmem:[#allocation2 + $0xd0] sm:$0xff]
      %v994 = vld [vmem:[#allocation2 + $0xd8] sm:$0xff]
      %v995 = vld [vmem:[#allocation2 + $0xe0] sm:$0xff]
      %v996 = vld [vmem:[#allocation2 + $0xf0] sm:$0xff]
      %v997 = vld [vmem:[#allocation2 + $0xf8] sm:$0xff]
      %v998 = vld [vmem:[#allocation2 + $0x100] sm:$0xff]
      %v999 = vld [vmem:[#allocation2 + $0x108] sm:$0xff]
      %v1000 = vld [vmem:[#allocation2 + $0x118] sm:$0xff]
      %v1001 = vld [vmem:[#allocation2 + $0x120] sm:$0xff]
      %v1002 = vld [vmem:[#allocation2 + $0x128] sm:$0xff]
      %v1003 = vld [vmem:[#allocation2 + $0x130] sm:$0xff]
      %v1004 = vld [vmem:[#allocation2 + $0x140] sm:$0xff]
      %v1005 = vld [vmem:[#allocation2 + $0x148] sm:$0xff]
      %v1006 = vld [vmem:[#allocation2 + $0x150] sm:$0xff]
      %v1007 = vld [vmem:[#allocation2 + $0x158] sm:$0xff]
      %v1008 = vld [vmem:[#allocation2 + $0x168] sm:$0xff]
      %v1009 = vld [vmem:[#allocation2 + $0x170] sm:$0xff]
      %v1010 = vld [vmem:[#allocation2 + $0x178] sm:$0xff]
      %v1011 = vld [vmem:[#allocation2 + $0x180] sm:$0xff]
      %v1012 = vld [vmem:[#allocation2 + $0x190] sm:$0xff]
      %v1013 = vld [vmem:[#allocation2 + $0x198] sm:$0xff]
      %v1014 = vld [vmem:[#allocation2 + $0x1a0] sm:$0xff]
      %v1015 = vld [vmem:[#allocation2 + $0x1a8] sm:$0xff]
      %v1016 = vld [vmem:[#allocation2 + $0x1b8] sm:$0xff]
      %v1017 = vld [vmem:[#allocation2 + $0x1c0] sm:$0xff]
      %v1018 = vld [vmem:[#allocation2 + $0x1c8] sm:$0xff]
      %v1019 = vld [vmem:[#allocation2 + $0x1d0] sm:$0xff]
      %v1020 = vld [vmem:[#allocation2 + $0x1e0] sm:$0xff]
      %v1021 = vld [vmem:[#allocation2 + $0x1e8] sm:$0xff]
      %v1022 = vld [vmem:[#allocation2 + $0x1f0] sm:$0xff]
      %v1023 = vld [vmem:[#allocation2 + $0x1f8] sm:$0xff]
      %v1024 = vld [vmem:[#allocation2 + $0x208] sm:$0xff]
      %v1025 = vld [vmem:[#allocation2 + $0x210] sm:$0xff]
      %v1026 = vld [vmem:[#allocation2 + $0x218] sm:$0xff]
      %v1027 = vld [vmem:[#allocation2 + $0x220] sm:$0xff]
      %v1028 = vld [vmem:[#allocation2 + $0x230] sm:$0xff]
      %v1029 = vld [vmem:[#allocation2 + $0x238] sm:$0xff]
      %v1030 = vld [vmem:[#allocation2 + $0x240] sm:$0xff]
      %v1031 = vld [vmem:[#allocation2 + $0x248] sm:$0xff]
      %v1032 = vld [vmem:[#allocation2 + $0x258] sm:$0xff]
      %v1033 = vld [vmem:[#allocation2 + $0x260] sm:$0xff]
      %v1034 = vld [vmem:[#allocation2 + $0x268] sm:$0xff]
      %v1035 = vld [vmem:[#allocation2 + $0x270] sm:$0xff]
      %v1036 = vld [vmem:[#allocation2 + $0x280] sm:$0xff]
      %v1037 = vld [vmem:[#allocation2 + $0x288] sm:$0xff]
      %v1038 = vld [vmem:[#allocation2 + $0x290] sm:$0xff]
      %v1039 = vld [vmem:[#allocation2 + $0x298] sm:$0xff]
      %v1040 = vld [vmem:[#allocation2 + $0x2a8] sm:$0xff]
      %v1041 = vld [vmem:[#allocation2 + $0x2b0] sm:$0xff]
      %v1042 = vld [vmem:[#allocation2 + $0x2b8] sm:$0xff]
      %v1043 = vld [vmem:[#allocation2 + $0x2c0] sm:$0xff]
      %v1044 = vld [vmem:[#allocation2 + $0x2d0] sm:$0xff]
      %v1045 = vld [vmem:[#allocation2 + $0x2d8] sm:$0xff]
      %v1046 = vld [vmem:[#allocation2 + $0x2e0] sm:$0xff]
      %v1047 = vld [vmem:[#allocation2 + $0x2e8] sm:$0xff]
      %v1048 = vld [vmem:[#allocation2 + $0x2f8] sm:$0xff]
      %v1049 = vld [vmem:[#allocation2 + $0x300] sm:$0xff]
      %v1050 = vld [vmem:[#allocation2 + $0x308] sm:$0xff]
      %v1051 = vld [vmem:[#allocation2 + $0x310] sm:$0xff]
      %v1052 = vld [vmem:[#allocation2 + $0x320] sm:$0xff]
      %v1053 = vld [vmem:[#allocation2 + $0x328] sm:$0xff]
      %v1054 = vld [vmem:[#allocation2 + $0x330] sm:$0xff]
      %v1055 = vld [vmem:[#allocation2 + $0x338] sm:$0xff]
      %v1056 = vld [vmem:[#allocation2 + $0x348] sm:$0xff]
      %v1057 = vld [vmem:[#allocation2 + $0x350] sm:$0xff]
      %v1058 = vld [vmem:[#allocation2 + $0x358] sm:$0xff]
      %v1059 = vld [vmem:[#allocation2 + $0x360] sm:$0xff]
      %v1060 = vld [vmem:[#allocation2 + $0x370] sm:$0xff]
      %v1061 = vld [vmem:[#allocation2 + $0x378] sm:$0xff]
      %v1062 = vld [vmem:[#allocation2 + $0x380] sm:$0xff]
      %v1063 = vld [vmem:[#allocation2 + $0x388] sm:$0xff]
      %v1064 = vld [vmem:[#allocation2 + $0x398] sm:$0xff]
      %v1065 = vld [vmem:[#allocation2 + $0x3a0] sm:$0xff]
      %v1066 = vld [vmem:[#allocation2 + $0x3a8] sm:$0xff]
      %v1067 = vld [vmem:[#allocation2 + $0x3b0] sm:$0xff]
      %v1068 = vld [vmem:[#allocation2 + $0x3c0] sm:$0xff]
      %v1069 = vld [vmem:[#allocation2 + $0x3c8] sm:$0xff]
      %v1070 = vld [vmem:[#allocation2 + $0x3d0] sm:$0xff]
      %v1071 = vld [vmem:[#allocation2 + $0x3d8] sm:$0xff]
      %v1072 = vld [vmem:[#allocation2 + $0x3e8] sm:$0xff]
      %v1073 = vld [vmem:[#allocation2 + $0x3f0] sm:$0xff]
      %v1074 = vld [vmem:[#allocation2 + $0x3f8] sm:$0xff]
      %v1075 = vld [vmem:[#allocation2 + $0x400] sm:$0xff]
      %v1076 = vld [vmem:[#allocation2 + $0x410] sm:$0xff]
      %v1077 = vld [vmem:[#allocation2 + $0x418] sm:$0xff]
      %v1078 = vld [vmem:[#allocation2 + $0x420] sm:$0xff]
      %v1079 = vld [vmem:[#allocation2 + $0x428] sm:$0xff]
      %v1080 = vld [vmem:[#allocation2 + $0x438] sm:$0xff]
      %v1081 = vld [vmem:[#allocation2 + $0x440] sm:$0xff]
      %v1082 = vld [vmem:[#allocation2 + $0x448] sm:$0xff]
      %v1083 = vld [vmem:[#allocation2 + $0x450] sm:$0xff]
      %v1084 = vld [vmem:[#allocation2 + $0x460] sm:$0xff]
      %v1085 = vld [vmem:[#allocation2 + $0x468] sm:$0xff]
      %v1086 = vld [vmem:[#allocation2 + $0x470] sm:$0xff]
      %v1087 = vld [vmem:[#allocation2 + $0x478] sm:$0xff]
      %v1088 = vld [vmem:[#allocation2 + $0x488] sm:$0xff]
      %v1089 = vld [vmem:[#allocation2 + $0x490] sm:$0xff]
      %v1090 = vld [vmem:[#allocation2 + $0x498] sm:$0xff]
      %v1091 = vld [vmem:[#allocation2 + $0x4a0] sm:$0xff]
      %v1092 = vld [vmem:[#allocation2 + $0x4b0] sm:$0xff]
      %v1093 = vld [vmem:[#allocation2 + $0x4b8] sm:$0xff]
      %v1094 = vld [vmem:[#allocation2 + $0x4c0] sm:$0xff]
      %v1095 = vld [vmem:[#allocation2 + $0x4c8] sm:$0xff]
      %v1096 = vld [vmem:[#allocation2 + $0x4d8] sm:$0xff]
      %v1097 = vld [vmem:[#allocation2 + $0x4e0] sm:$0xff]
      %v1098 = vld [vmem:[#allocation2 + $0x4e8] sm:$0xff]
      %v1099 = vld [vmem:[#allocation2 + $0x4f0] sm:$0xff]
      %v1100 = vld [vmem:[#allocation2 + $0x1] sm:$0xff]
      %v1101 = vld [vmem:[#allocation2 + $0x9] sm:$0xff]
      %v1102 = vld [vmem:[#allocation2 + $0x11] sm:$0xff]
      %v1103 = vld [vmem:[#allocation2 + $0x19] sm:$0xff]
      %v1104 = vld [vmem:[#allocation2 + $0x29] sm:$0xff]
      %v1105 = vld [vmem:[#allocation2 + $0x31] sm:$0xff]
      %v1106 = vld [vmem:[#allocation2 + $0x39] sm:$0xff]
      %v1107 = vld [vmem:[#allocation2 + $0x41] sm:$0xff]
      %v1108 = vld [vmem:[#allocation2 + $0x51] sm:$0xff]
      %v1109 = vld [vmem:[#allocation2 + $0x59] sm:$0xff]
      %v1110 = vld [vmem:[#allocation2 + $0x61] sm:$0xff]
      %v1111 = vld [vmem:[#allocation2 + $0x69] sm:$0xff]
      %v1112 = vld [vmem:[#allocation2 + $0x79] sm:$0xff]
      %v1113 = vld [vmem:[#allocation2 + $0x81] sm:$0xff]
      %v1114 = vld [vmem:[#allocation2 + $0x89] sm:$0xff]
      %v1115 = vld [vmem:[#allocation2 + $0x91] sm:$0xff]
      %v1116 = vld [vmem:[#allocation2 + $0xa1] sm:$0xff]
      %v1117 = vld [vmem:[#allocation2 + $0xa9] sm:$0xff]
      %v1118 = vld [vmem:[#allocation2 + $0xb1] sm:$0xff]
      %v1119 = vld [vmem:[#allocation2 + $0xb9] sm:$0xff]
      %v1120 = vld [vmem:[#allocation2 + $0xc9] sm:$0xff]
      %v1121 = vld [vmem:[#allocation2 + $0xd1] sm:$0xff]
      %v1122 = vld [vmem:[#allocation2 + $0xd9] sm:$0xff]
      %v1123 = vld [vmem:[#allocation2 + $0xe1] sm:$0xff]
      %v1124 = vld [vmem:[#allocation2 + $0xf1] sm:$0xff]
      %v1125 = vld [vmem:[#allocation2 + $0xf9] sm:$0xff]
      %v1126 = vld [vmem:[#allocation2 + $0x101] sm:$0xff]
      %v1127 = vld [vmem:[#allocation2 + $0x109] sm:$0xff]
      %v1128 = vld [vmem:[#allocation2 + $0x119] sm:$0xff]
      %v1129 = vld [vmem:[#allocation2 + $0x121] sm:$0xff]
      %v1130 = vld [vmem:[#allocation2 + $0x129] sm:$0xff]
      %v1131 = vld [vmem:[#allocation2 + $0x131] sm:$0xff]
      %v1132 = vld [vmem:[#allocation2 + $0x141] sm:$0xff]
      %v1133 = vld [vmem:[#allocation2 + $0x149] sm:$0xff]
      %v1134 = vld [vmem:[#allocation2 + $0x151] sm:$0xff]
      %v1135 = vld [vmem:[#allocation2 + $0x159] sm:$0xff]
      %v1136 = vld [vmem:[#allocation2 + $0x169] sm:$0xff]
      %v1137 = vld [vmem:[#allocation2 + $0x171] sm:$0xff]
      %v1138 = vld [vmem:[#allocation2 + $0x179] sm:$0xff]
      %v1139 = vld [vmem:[#allocation2 + $0x181] sm:$0xff]
      %v1140 = vld [vmem:[#allocation2 + $0x191] sm:$0xff]
      %v1141 = vld [vmem:[#allocation2 + $0x199] sm:$0xff]
      %v1142 = vld [vmem:[#allocation2 + $0x1a1] sm:$0xff]
      %v1143 = vld [vmem:[#allocation2 + $0x1a9] sm:$0xff]
      %v1144 = vld [vmem:[#allocation2 + $0x1b9] sm:$0xff]
      %v1145 = vld [vmem:[#allocation2 + $0x1c1] sm:$0xff]
      %v1146 = vld [vmem:[#allocation2 + $0x1c9] sm:$0xff]
      %v1147 = vld [vmem:[#allocation2 + $0x1d1] sm:$0xff]
      %v1148 = vld [vmem:[#allocation2 + $0x1e1] sm:$0xff]
      %v1149 = vld [vmem:[#allocation2 + $0x1e9] sm:$0xff]
      %v1150 = vld [vmem:[#allocation2 + $0x1f1] sm:$0xff]
      %v1151 = vld [vmem:[#allocation2 + $0x1f9] sm:$0xff]
      %v1152 = vld [vmem:[#allocation2 + $0x209] sm:$0xff]
      %v1153 = vld [vmem:[#allocation2 + $0x211] sm:$0xff]
      %v1154 = vld [vmem:[#allocation2 + $0x219] sm:$0xff]
      %v1155 = vld [vmem:[#allocation2 + $0x221] sm:$0xff]
      %v1156 = vld [vmem:[#allocation2 + $0x231] sm:$0xff]
      %v1157 = vld [vmem:[#allocation2 + $0x239] sm:$0xff]
      %v1158 = vld [vmem:[#allocation2 + $0x241] sm:$0xff]
      %v1159 = vld [vmem:[#allocation2 + $0x249] sm:$0xff]
      %v1160 = vld [vmem:[#allocation2 + $0x259] sm:$0xff]
      %v1161 = vld [vmem:[#allocation2 + $0x261] sm:$0xff]
      %v1162 = vld [vmem:[#allocation2 + $0x269] sm:$0xff]
      %v1163 = vld [vmem:[#allocation2 + $0x271] sm:$0xff]
      %v1164 = vld [vmem:[#allocation2 + $0x281] sm:$0xff]
      %v1165 = vld [vmem:[#allocation2 + $0x289] sm:$0xff]
      %v1166 = vld [vmem:[#allocation2 + $0x291] sm:$0xff]
      %v1167 = vld [vmem:[#allocation2 + $0x299] sm:$0xff]
      %v1168 = vld [vmem:[#allocation2 + $0x2a9] sm:$0xff]
      %v1169 = vld [vmem:[#allocation2 + $0x2b1] sm:$0xff]
      %v1170 = vld [vmem:[#allocation2 + $0x2b9] sm:$0xff]
      %v1171 = vld [vmem:[#allocation2 + $0x2c1] sm:$0xff]
      %v1172 = vld [vmem:[#allocation2 + $0x2d1] sm:$0xff]
      %v1173 = vld [vmem:[#allocation2 + $0x2d9] sm:$0xff]
      %v1174 = vld [vmem:[#allocation2 + $0x2e1] sm:$0xff]
      %v1175 = vld [vmem:[#allocation2 + $0x2e9] sm:$0xff]
      %v1176 = vld [vmem:[#allocation2 + $0x2f9] sm:$0xff]
      %v1177 = vld [vmem:[#allocation2 + $0x301] sm:$0xff]
      %v1178 = vld [vmem:[#allocation2 + $0x309] sm:$0xff]
      %v1179 = vld [vmem:[#allocation2 + $0x311] sm:$0xff]
      %v1180 = vld [vmem:[#allocation2 + $0x321] sm:$0xff]
      %v1181 = vld [vmem:[#allocation2 + $0x329] sm:$0xff]
      %v1182 = vld [vmem:[#allocation2 + $0x331] sm:$0xff]
      %v1183 = vld [vmem:[#allocation2 + $0x339] sm:$0xff]
      %v1184 = vld [vmem:[#allocation2 + $0x349] sm:$0xff]
      %v1185 = vld [vmem:[#allocation2 + $0x351] sm:$0xff]
      %v1186 = vld [vmem:[#allocation2 + $0x359] sm:$0xff]
      %v1187 = vld [vmem:[#allocation2 + $0x361] sm:$0xff]
      %v1188 = vld [vmem:[#allocation2 + $0x371] sm:$0xff]
      %v1189 = vld [vmem:[#allocation2 + $0x379] sm:$0xff]
      %v1190 = vld [vmem:[#allocation2 + $0x381] sm:$0xff]
      %v1191 = vld [vmem:[#allocation2 + $0x389] sm:$0xff]
      %v1192 = vld [vmem:[#allocation2 + $0x399] sm:$0xff]
      %v1193 = vld [vmem:[#allocation2 + $0x3a1] sm:$0xff]
      %v1194 = vld [vmem:[#allocation2 + $0x3a9] sm:$0xff]
      %v1195 = vld [vmem:[#allocation2 + $0x3b1] sm:$0xff]
      %v1196 = vld [vmem:[#allocation2 + $0x3c1] sm:$0xff]
      %v1197 = vld [vmem:[#allocation2 + $0x3c9] sm:$0xff]
      %v1198 = vld [vmem:[#allocation2 + $0x3d1] sm:$0xff]
      %v1199 = vld [vmem:[#allocation2 + $0x3d9] sm:$0xff]
      %v1200 = vld [vmem:[#allocation2 + $0x3e9] sm:$0xff]
      %v1201 = vld [vmem:[#allocation2 + $0x3f1] sm:$0xff]
      %v1202 = vld [vmem:[#allocation2 + $0x3f9] sm:$0xff]
      %v1203 = vld [vmem:[#allocation2 + $0x401] sm:$0xff]
      %v1204 = vld [vmem:[#allocation2 + $0x411] sm:$0xff]
      %v1205 = vld [vmem:[#allocation2 + $0x419] sm:$0xff]
      %v1206 = vld [vmem:[#allocation2 + $0x421] sm:$0xff]
      %v1207 = vld [vmem:[#allocation2 + $0x429] sm:$0xff]
      %v1208 = vld [vmem:[#allocation2 + $0x439] sm:$0xff]
      %v1209 = vld [vmem:[#allocation2 + $0x441] sm:$0xff]
      %v1210 = vld [vmem:[#allocation2 + $0x449] sm:$0xff]
      %v1211 = vld [vmem:[#allocation2 + $0x451] sm:$0xff]
      %v1212 = vld [vmem:[#allocation2 + $0x461] sm:$0xff]
      %v1213 = vld [vmem:[#allocation2 + $0x469] sm:$0xff]
      %v1214 = vld [vmem:[#allocation2 + $0x471] sm:$0xff]
      %v1215 = vld [vmem:[#allocation2 + $0x479] sm:$0xff]
      %v1216 = vld [vmem:[#allocation2 + $0x489] sm:$0xff]
      %v1217 = vld [vmem:[#allocation2 + $0x491] sm:$0xff]
      %v1218 = vld [vmem:[#allocation2 + $0x499] sm:$0xff]
      %v1219 = vld [vmem:[#allocation2 + $0x4a1] sm:$0xff]
      %v1220 = vld [vmem:[#allocation2 + $0x4b1] sm:$0xff]
      %v1221 = vld [vmem:[#allocation2 + $0x4b9] sm:$0xff]
      %v1222 = vld [vmem:[#allocation2 + $0x4c1] sm:$0xff]
      %v1223 = vld [vmem:[#allocation2 + $0x4c9] sm:$0xff]
      %v1224 = vld [vmem:[#allocation2 + $0x4d9] sm:$0xff]
      %v1225 = vld [vmem:[#allocation2 + $0x4e1] sm:$0xff]
      %v1226 = vld [vmem:[#allocation2 + $0x4e9] sm:$0xff]
      %v1227 = vld [vmem:[#allocation2 + $0x4f1] sm:$0xff]
      %v1228 = vld [vmem:[#allocation2 + $0x2] sm:$0xff]
      %v1229 = vld [vmem:[#allocation2 + $0xa] sm:$0xff]
      %v1230 = vld [vmem:[#allocation2 + $0x12] sm:$0xff]
      %v1231 = vld [vmem:[#allocation2 + $0x1a] sm:$0xff]
      %v1232 = vld [vmem:[#allocation2 + $0x2a] sm:$0xff]
      %v1233 = vld [vmem:[#allocation2 + $0x32] sm:$0xff]
      %v1234 = vld [vmem:[#allocation2 + $0x3a] sm:$0xff]
      %v1235 = vld [vmem:[#allocation2 + $0x42] sm:$0xff]
      %v1236 = vld [vmem:[#allocation2 + $0x52] sm:$0xff]
      %v1237 = vld [vmem:[#allocation2 + $0x5a] sm:$0xff]
      %v1238 = vld [vmem:[#allocation2 + $0x62] sm:$0xff]
      %v1239 = vld [vmem:[#allocation2 + $0x6a] sm:$0xff]
      %v1240 = vld [vmem:[#allocation2 + $0x7a] sm:$0xff]
      %v1241 = vld [vmem:[#allocation2 + $0x82] sm:$0xff]
      %v1242 = vld [vmem:[#allocation2 + $0x8a] sm:$0xff]
      %v1243 = vld [vmem:[#allocation2 + $0x92] sm:$0xff]
      %v1244 = vld [vmem:[#allocation2 + $0xa2] sm:$0xff]
      %v1245 = vld [vmem:[#allocation2 + $0xaa] sm:$0xff]
      %v1246 = vld [vmem:[#allocation2 + $0xb2] sm:$0xff]
      %v1247 = vld [vmem:[#allocation2 + $0xba] sm:$0xff]
      %v1248 = vld [vmem:[#allocation2 + $0xca] sm:$0xff]
      %v1249 = vld [vmem:[#allocation2 + $0xd2] sm:$0xff]
      %v1250 = vld [vmem:[#allocation2 + $0xda] sm:$0xff]
      %v1251 = vld [vmem:[#allocation2 + $0xe2] sm:$0xff]
      %v1252 = vld [vmem:[#allocation2 + $0xf2] sm:$0xff]
      %v1253 = vld [vmem:[#allocation2 + $0xfa] sm:$0xff]
      %v1254 = vld [vmem:[#allocation2 + $0x102] sm:$0xff]
      %v1255 = vld [vmem:[#allocation2 + $0x10a] sm:$0xff]
      %v1256 = vld [vmem:[#allocation2 + $0x11a] sm:$0xff]
      %v1257 = vld [vmem:[#allocation2 + $0x122] sm:$0xff]
      %v1258 = vld [vmem:[#allocation2 + $0x12a] sm:$0xff]
      %v1259 = vld [vmem:[#allocation2 + $0x132] sm:$0xff]
      %v1260 = vld [vmem:[#allocation2 + $0x142] sm:$0xff]
      %v1261 = vld [vmem:[#allocation2 + $0x14a] sm:$0xff]
      %v1262 = vld [vmem:[#allocation2 + $0x152] sm:$0xff]
      %v1263 = vld [vmem:[#allocation2 + $0x15a] sm:$0xff]
      %v1264 = vld [vmem:[#allocation2 + $0x16a] sm:$0xff]
      %v1265 = vld [vmem:[#allocation2 + $0x172] sm:$0xff]
      %v1266 = vld [vmem:[#allocation2 + $0x17a] sm:$0xff]
      %v1267 = vld [vmem:[#allocation2 + $0x182] sm:$0xff]
      %v1268 = vld [vmem:[#allocation2 + $0x192] sm:$0xff]
      %v1269 = vld [vmem:[#allocation2 + $0x19a] sm:$0xff]
      %v1270 = vld [vmem:[#allocation2 + $0x1a2] sm:$0xff]
      %v1271 = vld [vmem:[#allocation2 + $0x1aa] sm:$0xff]
      %v1272 = vld [vmem:[#allocation2 + $0x1ba] sm:$0xff]
      %v1273 = vld [vmem:[#allocation2 + $0x1c2] sm:$0xff]
      %v1274 = vld [vmem:[#allocation2 + $0x1ca] sm:$0xff]
      %v1275 = vld [vmem:[#allocation2 + $0x1d2] sm:$0xff]
      %v1276 = vld [vmem:[#allocation2 + $0x1e2] sm:$0xff]
      %v1277 = vld [vmem:[#allocation2 + $0x1ea] sm:$0xff]
      %v1278 = vld [vmem:[#allocation2 + $0x1f2] sm:$0xff]
      %v1279 = vld [vmem:[#allocation2 + $0x1fa] sm:$0xff]
      %v1280 = vld [vmem:[#allocation2 + $0x20a] sm:$0xff]
      %v1281 = vld [vmem:[#allocation2 + $0x212] sm:$0xff]
      %v1282 = vld [vmem:[#allocation2 + $0x21a] sm:$0xff]
      %v1283 = vld [vmem:[#allocation2 + $0x222] sm:$0xff]
      %v1284 = vld [vmem:[#allocation2 + $0x232] sm:$0xff]
      %v1285 = vld [vmem:[#allocation2 + $0x23a] sm:$0xff]
      %v1286 = vld [vmem:[#allocation2 + $0x242] sm:$0xff]
      %v1287 = vld [vmem:[#allocation2 + $0x24a] sm:$0xff]
      %v1288 = vld [vmem:[#allocation2 + $0x25a] sm:$0xff]
      %v1289 = vld [vmem:[#allocation2 + $0x262] sm:$0xff]
      %v1290 = vld [vmem:[#allocation2 + $0x26a] sm:$0xff]
      %v1291 = vld [vmem:[#allocation2 + $0x272] sm:$0xff]
      %v1292 = vld [vmem:[#allocation2 + $0x282] sm:$0xff]
      %v1293 = vld [vmem:[#allocation2 + $0x28a] sm:$0xff]
      %v1294 = vld [vmem:[#allocation2 + $0x292] sm:$0xff]
      %v1295 = vld [vmem:[#allocation2 + $0x29a] sm:$0xff]
      %v1296 = vld [vmem:[#allocation2 + $0x2aa] sm:$0xff]
      %v1297 = vld [vmem:[#allocation2 + $0x2b2] sm:$0xff]
      %v1298 = vld [vmem:[#allocation2 + $0x2ba] sm:$0xff]
      %v1299 = vld [vmem:[#allocation2 + $0x2c2] sm:$0xff]
      %v1300 = vld [vmem:[#allocation2 + $0x2d2] sm:$0xff]
      %v1301 = vld [vmem:[#allocation2 + $0x2da] sm:$0xff]
      %v1302 = vld [vmem:[#allocation2 + $0x2e2] sm:$0xff]
      %v1303 = vld [vmem:[#allocation2 + $0x2ea] sm:$0xff]
      %v1304 = vld [vmem:[#allocation2 + $0x2fa] sm:$0xff]
      %v1305 = vld [vmem:[#allocation2 + $0x302] sm:$0xff]
      %v1306 = vld [vmem:[#allocation2 + $0x30a] sm:$0xff]
      %v1307 = vld [vmem:[#allocation2 + $0x312] sm:$0xff]
      %v1308 = vld [vmem:[#allocation2 + $0x322] sm:$0xff]
      %v1309 = vld [vmem:[#allocation2 + $0x32a] sm:$0xff]
      %v1310 = vld [vmem:[#allocation2 + $0x332] sm:$0xff]
      %v1311 = vld [vmem:[#allocation2 + $0x33a] sm:$0xff]
      %v1312 = vld [vmem:[#allocation2 + $0x34a] sm:$0xff]
      %v1313 = vld [vmem:[#allocation2 + $0x352] sm:$0xff]
      %v1314 = vld [vmem:[#allocation2 + $0x35a] sm:$0xff]
      %v1315 = vld [vmem:[#allocation2 + $0x362] sm:$0xff]
      %v1316 = vld [vmem:[#allocation2 + $0x372] sm:$0xff]
      %v1317 = vld [vmem:[#allocation2 + $0x37a] sm:$0xff]
      %v1318 = vld [vmem:[#allocation2 + $0x382] sm:$0xff]
      %v1319 = vld [vmem:[#allocation2 + $0x38a] sm:$0xff]
      %v1320 = vld [vmem:[#allocation2 + $0x39a] sm:$0xff]
      %v1321 = vld [vmem:[#allocation2 + $0x3a2] sm:$0xff]
      %v1322 = vld [vmem:[#allocation2 + $0x3aa] sm:$0xff]
      %v1323 = vld [vmem:[#allocation2 + $0x3b2] sm:$0xff]
      %v1324 = vld [vmem:[#allocation2 + $0x3c2] sm:$0xff]
      %v1325 = vld [vmem:[#allocation2 + $0x3ca] sm:$0xff]
      %v1326 = vld [vmem:[#allocation2 + $0x3d2] sm:$0xff]
      %v1327 = vld [vmem:[#allocation2 + $0x3da] sm:$0xff]
      %v1328 = vld [vmem:[#allocation2 + $0x3ea] sm:$0xff]
      %v1329 = vld [vmem:[#allocation2 + $0x3f2] sm:$0xff]
      %v1330 = vld [vmem:[#allocation2 + $0x3fa] sm:$0xff]
      %v1331 = vld [vmem:[#allocation2 + $0x402] sm:$0xff]
      %v1332 = vld [vmem:[#allocation2 + $0x412] sm:$0xff]
      %v1333 = vld [vmem:[#allocation2 + $0x41a] sm:$0xff]
      %v1334 = vld [vmem:[#allocation2 + $0x422] sm:$0xff]
      %v1335 = vld [vmem:[#allocation2 + $0x42a] sm:$0xff]
      %v1336 = vld [vmem:[#allocation2 + $0x43a] sm:$0xff]
      %v1337 = vld [vmem:[#allocation2 + $0x442] sm:$0xff]
      %v1338 = vld [vmem:[#allocation2 + $0x44a] sm:$0xff]
      %v1339 = vld [vmem:[#allocation2 + $0x452] sm:$0xff]
      %v1340 = vld [vmem:[#allocation2 + $0x462] sm:$0xff]
      %v1341 = vld [vmem:[#allocation2 + $0x46a] sm:$0xff]
      %v1342 = vld [vmem:[#allocation2 + $0x472] sm:$0xff]
      %v1343 = vld [vmem:[#allocation2 + $0x47a] sm:$0xff]
      %v1344 = vld [vmem:[#allocation2 + $0x48a] sm:$0xff]
      %v1345 = vld [vmem:[#allocation2 + $0x492] sm:$0xff]
      %v1346 = vld [vmem:[#allocation2 + $0x49a] sm:$0xff]
      %v1347 = vld [vmem:[#allocation2 + $0x4a2] sm:$0xff]
      %v1348 = vld [vmem:[#allocation2 + $0x4b2] sm:$0xff]
      %v1349 = vld [vmem:[#allocation2 + $0x4ba] sm:$0xff]
      %v1350 = vld [vmem:[#allocation2 + $0x4c2] sm:$0xff]
      %v1351 = vld [vmem:[#allocation2 + $0x4ca] sm:$0xff]
      %v1352 = vld [vmem:[#allocation2 + $0x4da] sm:$0xff]
      %v1353 = vld [vmem:[#allocation2 + $0x4e2] sm:$0xff]
      %v1354 = vld [vmem:[#allocation2 + $0x4ea] sm:$0xff]
      %v1355 = vld [vmem:[#allocation2 + $0x4f2] sm:$0xff]
      %v1356 = vld [vmem:[%s843] sm:$0xff]
      %v1357 = vld [vmem:[%s843 + $0x8] sm:$0xff]
      %v1358 = vld [vmem:[%s843 + $0x10] sm:$0xff]
      %v1359 = vld [vmem:[%s843 + $0x18] sm:$0xff]
      %v1360 = vld [vmem:[%s843 + $0x28] sm:$0xff]
      %v1361 = vld [vmem:[%s843 + $0x30] sm:$0xff]
      %v1362 = vld [vmem:[%s843 + $0x38] sm:$0xff]
      %v1363 = vld [vmem:[%s843 + $0x40] sm:$0xff]
      %v1364 = vld [vmem:[%s843 + $0x50] sm:$0xff]
      %v1365 = vld [vmem:[%s843 + $0x58] sm:$0xff]
      %v1366 = vld [vmem:[%s843 + $0x60] sm:$0xff]
      %v1367 = vld [vmem:[%s843 + $0x68] sm:$0xff]
      %v1368 = vld [vmem:[%s843 + $0x78] sm:$0xff]
      %v1369 = vld [vmem:[%s843 + $0x80] sm:$0xff]
      %v1370 = vld [vmem:[%s843 + $0x88] sm:$0xff]
      %v1371 = vld [vmem:[%s843 + $0x90] sm:$0xff]
      %v1372 = vld [vmem:[%s843 + $0xa0] sm:$0xff]
      %v1373 = vld [vmem:[%s843 + $0xa8] sm:$0xff]
      %v1374 = vld [vmem:[%s843 + $0xb0] sm:$0xff]
      %v1375 = vld [vmem:[%s843 + $0xb8] sm:$0xff]
      %v1376 = vld [vmem:[%s843 + $0xc8] sm:$0xff]
      %v1377 = vld [vmem:[%s843 + $0xd0] sm:$0xff]
      %v1378 = vld [vmem:[%s843 + $0xd8] sm:$0xff]
      %v1379 = vld [vmem:[%s843 + $0xe0] sm:$0xff]
      %v1380 = vld [vmem:[%s843 + $0xf0] sm:$0xff]
      %v1381 = vld [vmem:[%s843 + $0xf8] sm:$0xff]
      %v1382 = vld [vmem:[%s843 + $0x100] sm:$0xff]
      %v1383 = vld [vmem:[%s843 + $0x108] sm:$0xff]
      %v1384 = vld [vmem:[%s843 + $0x118] sm:$0xff]
      %v1385 = vld [vmem:[%s843 + $0x120] sm:$0xff]
      %v1386 = vld [vmem:[%s843 + $0x128] sm:$0xff]
      %v1387 = vld [vmem:[%s843 + $0x130] sm:$0xff]
      %v1388 = vld [vmem:[%s843 + $0x140] sm:$0xff]
      %v1389 = vld [vmem:[%s843 + $0x148] sm:$0xff]
      %v1390 = vld [vmem:[%s843 + $0x150] sm:$0xff]
      %v1391 = vld [vmem:[%s843 + $0x158] sm:$0xff]
      %v1392 = vld [vmem:[%s843 + $0x168] sm:$0xff]
      %v1393 = vld [vmem:[%s843 + $0x170] sm:$0xff]
      %v1394 = vld [vmem:[%s843 + $0x178] sm:$0xff]
      %v1395 = vld [vmem:[%s843 + $0x180] sm:$0xff]
      %v1396 = vld [vmem:[%s843 + $0x190] sm:$0xff]
      %v1397 = vld [vmem:[%s843 + $0x198] sm:$0xff]
      %v1398 = vld [vmem:[%s843 + $0x1a0] sm:$0xff]
      %v1399 = vld [vmem:[%s843 + $0x1a8] sm:$0xff]
      %v1400 = vld [vmem:[%s843 + $0x1b8] sm:$0xff]
      %v1401 = vld [vmem:[%s843 + $0x1c0] sm:$0xff]
      %v1402 = vld [vmem:[%s843 + $0x1c8] sm:$0xff]
      %v1403 = vld [vmem:[%s843 + $0x1d0] sm:$0xff]
      %v1404 = vld [vmem:[%s843 + $0x1e0] sm:$0xff]
      %v1405 = vld [vmem:[%s843 + $0x1e8] sm:$0xff]
      %v1406 = vld [vmem:[%s843 + $0x1f0] sm:$0xff]
      %v1407 = vld [vmem:[%s843 + $0x1f8] sm:$0xff]
      %v1408 = vld [vmem:[%s843 + $0x208] sm:$0xff]
      %v1409 = vld [vmem:[%s843 + $0x210] sm:$0xff]
      %v1410 = vld [vmem:[%s843 + $0x218] sm:$0xff]
      %v1411 = vld [vmem:[%s843 + $0x220] sm:$0xff]
      %v1412 = vld [vmem:[%s843 + $0x230] sm:$0xff]
      %v1413 = vld [vmem:[%s843 + $0x238] sm:$0xff]
      %v1414 = vld [vmem:[%s843 + $0x240] sm:$0xff]
      %v1415 = vld [vmem:[%s843 + $0x248] sm:$0xff]
      %v1416 = vld [vmem:[%s843 + $0x258] sm:$0xff]
      %v1417 = vld [vmem:[%s843 + $0x260] sm:$0xff]
      %v1418 = vld [vmem:[%s843 + $0x268] sm:$0xff]
      %v1419 = vld [vmem:[%s843 + $0x270] sm:$0xff]
      %v1420 = vld [vmem:[%s843 + $0x280] sm:$0xff]
      %v1421 = vld [vmem:[%s843 + $0x288] sm:$0xff]
      %v1422 = vld [vmem:[%s843 + $0x290] sm:$0xff]
      %v1423 = vld [vmem:[%s843 + $0x298] sm:$0xff]
      %v1424 = vld [vmem:[%s843 + $0x2a8] sm:$0xff]
      %v1425 = vld [vmem:[%s843 + $0x2b0] sm:$0xff]
      %v1426 = vld [vmem:[%s843 + $0x2b8] sm:$0xff]
      %v1427 = vld [vmem:[%s843 + $0x2c0] sm:$0xff]
      %v1428 = vld [vmem:[%s843 + $0x2d0] sm:$0xff]
      %v1429 = vld [vmem:[%s843 + $0x2d8] sm:$0xff]
      %v1430 = vld [vmem:[%s843 + $0x2e0] sm:$0xff]
      %v1431 = vld [vmem:[%s843 + $0x2e8] sm:$0xff]
      %v1432 = vld [vmem:[%s843 + $0x2f8] sm:$0xff]
      %v1433 = vld [vmem:[%s843 + $0x300] sm:$0xff]
      %v1434 = vld [vmem:[%s843 + $0x308] sm:$0xff]
      %v1435 = vld [vmem:[%s843 + $0x310] sm:$0xff]
      %v1436 = vld [vmem:[%s843 + $0x320] sm:$0xff]
      %v1437 = vld [vmem:[%s843 + $0x328] sm:$0xff]
      %v1438 = vld [vmem:[%s843 + $0x330] sm:$0xff]
      %v1439 = vld [vmem:[%s843 + $0x338] sm:$0xff]
      %v1440 = vld [vmem:[%s843 + $0x348] sm:$0xff]
      %v1441 = vld [vmem:[%s843 + $0x350] sm:$0xff]
      %v1442 = vld [vmem:[%s843 + $0x358] sm:$0xff]
      %v1443 = vld [vmem:[%s843 + $0x360] sm:$0xff]
      %v1444 = vld [vmem:[%s843 + $0x370] sm:$0xff]
      %v1445 = vld [vmem:[%s843 + $0x378] sm:$0xff]
      %v1446 = vld [vmem:[%s843 + $0x380] sm:$0xff]
      %v1447 = vld [vmem:[%s843 + $0x388] sm:$0xff]
      %v1448 = vld [vmem:[%s843 + $0x398] sm:$0xff]
      %v1449 = vld [vmem:[%s843 + $0x3a0] sm:$0xff]
      %v1450 = vld [vmem:[%s843 + $0x3a8] sm:$0xff]
      %v1451 = vld [vmem:[%s843 + $0x3b0] sm:$0xff]
      %v1452 = vld [vmem:[%s843 + $0x3c0] sm:$0xff]
      %v1453 = vld [vmem:[%s843 + $0x3c8] sm:$0xff]
      %v1454 = vld [vmem:[%s843 + $0x3d0] sm:$0xff]
      %v1455 = vld [vmem:[%s843 + $0x3d8] sm:$0xff]
      %v1456 = vld [vmem:[%s843 + $0x3e8] sm:$0xff]
      %v1457 = vld [vmem:[%s843 + $0x3f0] sm:$0xff]
      %v1458 = vld [vmem:[%s843 + $0x3f8] sm:$0xff]
      %v1459 = vld [vmem:[%s843 + $0x400] sm:$0xff]
      %v1460 = vld [vmem:[%s843 + $0x410] sm:$0xff]
      %v1461 = vld [vmem:[%s843 + $0x418] sm:$0xff]
      %v1462 = vld [vmem:[%s843 + $0x420] sm:$0xff]
      %v1463 = vld [vmem:[%s843 + $0x428] sm:$0xff]
      %v1464 = vld [vmem:[%s843 + $0x438] sm:$0xff]
      %v1465 = vld [vmem:[%s843 + $0x440] sm:$0xff]
      %v1466 = vld [vmem:[%s843 + $0x448] sm:$0xff]
      %v1467 = vld [vmem:[%s843 + $0x450] sm:$0xff]
      %v1468 = vld [vmem:[%s843 + $0x460] sm:$0xff]
      %v1469 = vld [vmem:[%s843 + $0x468] sm:$0xff]
      %v1470 = vld [vmem:[%s843 + $0x470] sm:$0xff]
      %v1471 = vld [vmem:[%s843 + $0x478] sm:$0xff]
      %v1472 = vld [vmem:[%s843 + $0x488] sm:$0xff]
      %v1473 = vld [vmem:[%s843 + $0x490] sm:$0xff]
      %v1474 = vld [vmem:[%s843 + $0x498] sm:$0xff]
      %v1475 = vld [vmem:[%s843 + $0x4a0] sm:$0xff]
      %v1476 = vld [vmem:[%s843 + $0x4b0] sm:$0xff]
      %v1477 = vld [vmem:[%s843 + $0x4b8] sm:$0xff]
      %v1478 = vld [vmem:[%s843 + $0x4c0] sm:$0xff]
      %v1479 = vld [vmem:[%s843 + $0x4c8] sm:$0xff]
      %v1480 = vld [vmem:[%s843 + $0x4d8] sm:$0xff]
      %v1481 = vld [vmem:[%s843 + $0x4e0] sm:$0xff]
      %v1482 = vld [vmem:[%s843 + $0x4e8] sm:$0xff]
      %v1483 = vld [vmem:[%s843 + $0x4f0] sm:$0xff]
      %v1484 = vld [vmem:[%s843 + $0x1] sm:$0xff]
      %v1485 = vld [vmem:[%s843 + $0x9] sm:$0xff]
      %v1486 = vld [vmem:[%s843 + $0x11] sm:$0xff]
      %v1487 = vld [vmem:[%s843 + $0x19] sm:$0xff]
      %v1488 = vld [vmem:[%s843 + $0x29] sm:$0xff]
      %v1489 = vld [vmem:[%s843 + $0x31] sm:$0xff]
      %v1490 = vld [vmem:[%s843 + $0x39] sm:$0xff]
      %v1491 = vld [vmem:[%s843 + $0x41] sm:$0xff]
      %v1492 = vld [vmem:[%s843 + $0x51] sm:$0xff]
      %v1493 = vld [vmem:[%s843 + $0x59] sm:$0xff]
      %v1494 = vld [vmem:[%s843 + $0x61] sm:$0xff]
      %v1495 = vld [vmem:[%s843 + $0x69] sm:$0xff]
      %v1496 = vld [vmem:[%s843 + $0x79] sm:$0xff]
      %v1497 = vld [vmem:[%s843 + $0x81] sm:$0xff]
      %v1498 = vld [vmem:[%s843 + $0x89] sm:$0xff]
      %v1499 = vld [vmem:[%s843 + $0x91] sm:$0xff]
      %v1500 = vld [vmem:[%s843 + $0xa1] sm:$0xff]
      %v1501 = vld [vmem:[%s843 + $0xa9] sm:$0xff]
      %v1502 = vld [vmem:[%s843 + $0xb1] sm:$0xff]
      %v1503 = vld [vmem:[%s843 + $0xb9] sm:$0xff]
      %v1504 = vld [vmem:[%s843 + $0xc9] sm:$0xff]
      %v1505 = vld [vmem:[%s843 + $0xd1] sm:$0xff]
      %v1506 = vld [vmem:[%s843 + $0xd9] sm:$0xff]
      %v1507 = vld [vmem:[%s843 + $0xe1] sm:$0xff]
      %v1508 = vld [vmem:[%s843 + $0xf1] sm:$0xff]
      %v1509 = vld [vmem:[%s843 + $0xf9] sm:$0xff]
      %v1510 = vld [vmem:[%s843 + $0x101] sm:$0xff]
      %v1511 = vld [vmem:[%s843 + $0x109] sm:$0xff]
      %v1512 = vld [vmem:[%s843 + $0x119] sm:$0xff]
      %v1513 = vld [vmem:[%s843 + $0x121] sm:$0xff]
      %v1514 = vld [vmem:[%s843 + $0x129] sm:$0xff]
      %v1515 = vld [vmem:[%s843 + $0x131] sm:$0xff]
      %v1516 = vld [vmem:[%s843 + $0x141] sm:$0xff]
      %v1517 = vld [vmem:[%s843 + $0x149] sm:$0xff]
      %v1518 = vld [vmem:[%s843 + $0x151] sm:$0xff]
      %v1519 = vld [vmem:[%s843 + $0x159] sm:$0xff]
      %v1520 = vld [vmem:[%s843 + $0x169] sm:$0xff]
      %v1521 = vld [vmem:[%s843 + $0x171] sm:$0xff]
      %v1522 = vld [vmem:[%s843 + $0x179] sm:$0xff]
      %v1523 = vld [vmem:[%s843 + $0x181] sm:$0xff]
      %v1524 = vld [vmem:[%s843 + $0x191] sm:$0xff]
      %v1525 = vld [vmem:[%s843 + $0x199] sm:$0xff]
      %v1526 = vld [vmem:[%s843 + $0x1a1] sm:$0xff]
      %v1527 = vld [vmem:[%s843 + $0x1a9] sm:$0xff]
      %v1528 = vld [vmem:[%s843 + $0x1b9] sm:$0xff]
      %v1529 = vld [vmem:[%s843 + $0x1c1] sm:$0xff]
      %v1530 = vld [vmem:[%s843 + $0x1c9] sm:$0xff]
      %v1531 = vld [vmem:[%s843 + $0x1d1] sm:$0xff]
      %v1532 = vld [vmem:[%s843 + $0x1e1] sm:$0xff]
      %v1533 = vld [vmem:[%s843 + $0x1e9] sm:$0xff]
      %v1534 = vld [vmem:[%s843 + $0x1f1] sm:$0xff]
      %v1535 = vld [vmem:[%s843 + $0x1f9] sm:$0xff]
      %v1536 = vld [vmem:[%s843 + $0x209] sm:$0xff]
      %v1537 = vld [vmem:[%s843 + $0x211] sm:$0xff]
      %v1538 = vld [vmem:[%s843 + $0x219] sm:$0xff]
      %v1539 = vld [vmem:[%s843 + $0x221] sm:$0xff]
      %v1540 = vld [vmem:[%s843 + $0x231] sm:$0xff]
      %v1541 = vld [vmem:[%s843 + $0x239] sm:$0xff]
      %v1542 = vld [vmem:[%s843 + $0x241] sm:$0xff]
      %v1543 = vld [vmem:[%s843 + $0x249] sm:$0xff]
      %v1544 = vld [vmem:[%s843 + $0x259] sm:$0xff]
      %v1545 = vld [vmem:[%s843 + $0x261] sm:$0xff]
      %v1546 = vld [vmem:[%s843 + $0x269] sm:$0xff]
      %v1547 = vld [vmem:[%s843 + $0x271] sm:$0xff]
      %v1548 = vld [vmem:[%s843 + $0x281] sm:$0xff]
      %v1549 = vld [vmem:[%s843 + $0x289] sm:$0xff]
      %v1550 = vld [vmem:[%s843 + $0x291] sm:$0xff]
      %v1551 = vld [vmem:[%s843 + $0x299] sm:$0xff]
      %v1552 = vld [vmem:[%s843 + $0x2a9] sm:$0xff]
      %v1553 = vld [vmem:[%s843 + $0x2b1] sm:$0xff]
      %v1554 = vld [vmem:[%s843 + $0x2b9] sm:$0xff]
      %v1555 = vld [vmem:[%s843 + $0x2c1] sm:$0xff]
      %v1556 = vld [vmem:[%s843 + $0x2d1] sm:$0xff]
      %v1557 = vld [vmem:[%s843 + $0x2d9] sm:$0xff]
      %v1558 = vld [vmem:[%s843 + $0x2e1] sm:$0xff]
      %v1559 = vld [vmem:[%s843 + $0x2e9] sm:$0xff]
      %v1560 = vld [vmem:[%s843 + $0x2f9] sm:$0xff]
      %v1561 = vld [vmem:[%s843 + $0x301] sm:$0xff]
      %v1562 = vld [vmem:[%s843 + $0x309] sm:$0xff]
      %v1563 = vld [vmem:[%s843 + $0x311] sm:$0xff]
      %v1564 = vld [vmem:[%s843 + $0x321] sm:$0xff]
      %v1565 = vld [vmem:[%s843 + $0x329] sm:$0xff]
      %v1566 = vld [vmem:[%s843 + $0x331] sm:$0xff]
      %v1567 = vld [vmem:[%s843 + $0x339] sm:$0xff]
      %v1568 = vld [vmem:[%s843 + $0x349] sm:$0xff]
      %v1569 = vld [vmem:[%s843 + $0x351] sm:$0xff]
      %v1570 = vld [vmem:[%s843 + $0x359] sm:$0xff]
      %v1571 = vld [vmem:[%s843 + $0x361] sm:$0xff]
      %v1572 = vld [vmem:[%s843 + $0x371] sm:$0xff]
      %v1573 = vld [vmem:[%s843 + $0x379] sm:$0xff]
      %v1574 = vld [vmem:[%s843 + $0x381] sm:$0xff]
      %v1575 = vld [vmem:[%s843 + $0x389] sm:$0xff]
      %v1576 = vld [vmem:[%s843 + $0x399] sm:$0xff]
      %v1577 = vld [vmem:[%s843 + $0x3a1] sm:$0xff]
      %v1578 = vld [vmem:[%s843 + $0x3a9] sm:$0xff]
      %v1579 = vld [vmem:[%s843 + $0x3b1] sm:$0xff]
      %v1580 = vld [vmem:[%s843 + $0x3c1] sm:$0xff]
      %v1581 = vld [vmem:[%s843 + $0x3c9] sm:$0xff]
      %v1582 = vld [vmem:[%s843 + $0x3d1] sm:$0xff]
      %v1583 = vld [vmem:[%s843 + $0x3d9] sm:$0xff]
      %v1584 = vld [vmem:[%s843 + $0x3e9] sm:$0xff]
      %v1585 = vld [vmem:[%s843 + $0x3f1] sm:$0xff]
      %v1586 = vld [vmem:[%s843 + $0x3f9] sm:$0xff]
      %v1587 = vld [vmem:[%s843 + $0x401] sm:$0xff]
      %v1588 = vld [vmem:[%s843 + $0x411] sm:$0xff]
      %v1589 = vld [vmem:[%s843 + $0x419] sm:$0xff]
      %v1590 = vld [vmem:[%s843 + $0x421] sm:$0xff]
      %v1591 = vld [vmem:[%s843 + $0x429] sm:$0xff]
      %v1592 = vld [vmem:[%s843 + $0x439] sm:$0xff]
      %v1593 = vld [vmem:[%s843 + $0x441] sm:$0xff]
      %v1594 = vld [vmem:[%s843 + $0x449] sm:$0xff]
      %v1595 = vld [vmem:[%s843 + $0x451] sm:$0xff]
      %v1596 = vld [vmem:[%s843 + $0x461] sm:$0xff]
      %v1597 = vld [vmem:[%s843 + $0x469] sm:$0xff]
      %v1598 = vld [vmem:[%s843 + $0x471] sm:$0xff]
      %v1599 = vld [vmem:[%s843 + $0x479] sm:$0xff]
      %v1600 = vld [vmem:[%s843 + $0x489] sm:$0xff]
      %v1601 = vld [vmem:[%s843 + $0x491] sm:$0xff]
      %v1602 = vld [vmem:[%s843 + $0x499] sm:$0xff]
      %v1603 = vld [vmem:[%s843 + $0x4a1] sm:$0xff]
      %v1604 = vld [vmem:[%s843 + $0x4b1] sm:$0xff]
      %v1605 = vld [vmem:[%s843 + $0x4b9] sm:$0xff]
      %v1606 = vld [vmem:[%s843 + $0x4c1] sm:$0xff]
      %v1607 = vld [vmem:[%s843 + $0x4c9] sm:$0xff]
      %v1608 = vld [vmem:[%s843 + $0x4d9] sm:$0xff]
      %v1609 = vld [vmem:[%s843 + $0x4e1] sm:$0xff]
      %v1610 = vld [vmem:[%s843 + $0x4e9] sm:$0xff]
      %v1611 = vld [vmem:[%s843 + $0x4f1] sm:$0xff]
      %v1612 = vld [vmem:[%s843 + $0x2] sm:$0xff]
      %v1613 = vld [vmem:[%s843 + $0xa] sm:$0xff]
      %v1614 = vld [vmem:[%s843 + $0x12] sm:$0xff]
      %v1615 = vld [vmem:[%s843 + $0x1a] sm:$0xff]
      %v1616 = vld [vmem:[%s843 + $0x2a] sm:$0xff]
      %v1617 = vld [vmem:[%s843 + $0x32] sm:$0xff]
      %v1618 = vld [vmem:[%s843 + $0x3a] sm:$0xff]
      %v1619 = vld [vmem:[%s843 + $0x42] sm:$0xff]
      %v1620 = vld [vmem:[%s843 + $0x52] sm:$0xff]
      %v1621 = vld [vmem:[%s843 + $0x5a] sm:$0xff]
      %v1622 = vld [vmem:[%s843 + $0x62] sm:$0xff]
      %v1623 = vld [vmem:[%s843 + $0x6a] sm:$0xff]
      %v1624 = vld [vmem:[%s843 + $0x7a] sm:$0xff]
      %v1625 = vld [vmem:[%s843 + $0x82] sm:$0xff]
      %v1626 = vld [vmem:[%s843 + $0x8a] sm:$0xff]
      %v1627 = vld [vmem:[%s843 + $0x92] sm:$0xff]
      %v1628 = vld [vmem:[%s843 + $0xa2] sm:$0xff]
      %v1629 = vld [vmem:[%s843 + $0xaa] sm:$0xff]
      %v1630 = vld [vmem:[%s843 + $0xb2] sm:$0xff]
      %v1631 = vld [vmem:[%s843 + $0xba] sm:$0xff]
      %v1632 = vld [vmem:[%s843 + $0xca] sm:$0xff]
      %v1633 = vld [vmem:[%s843 + $0xd2] sm:$0xff]
      %v1634 = vld [vmem:[%s843 + $0xda] sm:$0xff]
      %v1635 = vld [vmem:[%s843 + $0xe2] sm:$0xff]
      %v1636 = vld [vmem:[%s843 + $0xf2] sm:$0xff]
      %v1637 = vld [vmem:[%s843 + $0xfa] sm:$0xff]
      %v1638 = vld [vmem:[%s843 + $0x102] sm:$0xff]
      %v1639 = vld [vmem:[%s843 + $0x10a] sm:$0xff]
      %v1640 = vld [vmem:[%s843 + $0x11a] sm:$0xff]
      %v1641 = vld [vmem:[%s843 + $0x122] sm:$0xff]
      %v1642 = vld [vmem:[%s843 + $0x12a] sm:$0xff]
      %v1643 = vld [vmem:[%s843 + $0x132] sm:$0xff]
      %v1644 = vld [vmem:[%s843 + $0x142] sm:$0xff]
      %v1645 = vld [vmem:[%s843 + $0x14a] sm:$0xff]
      %v1646 = vld [vmem:[%s843 + $0x152] sm:$0xff]
      %v1647 = vld [vmem:[%s843 + $0x15a] sm:$0xff]
      %v1648 = vld [vmem:[%s843 + $0x16a] sm:$0xff]
      %v1649 = vld [vmem:[%s843 + $0x172] sm:$0xff]
      %v1650 = vld [vmem:[%s843 + $0x17a] sm:$0xff]
      %v1651 = vld [vmem:[%s843 + $0x182] sm:$0xff]
      %v1652 = vld [vmem:[%s843 + $0x192] sm:$0xff]
      %v1653 = vld [vmem:[%s843 + $0x19a] sm:$0xff]
      %v1654 = vld [vmem:[%s843 + $0x1a2] sm:$0xff]
      %v1655 = vld [vmem:[%s843 + $0x1aa] sm:$0xff]
      %v1656 = vld [vmem:[%s843 + $0x1ba] sm:$0xff]
      %v1657 = vld [vmem:[%s843 + $0x1c2] sm:$0xff]
      %v1658 = vld [vmem:[%s843 + $0x1ca] sm:$0xff]
      %v1659 = vld [vmem:[%s843 + $0x1d2] sm:$0xff]
      %v1660 = vld [vmem:[%s843 + $0x1e2] sm:$0xff]
      %v1661 = vld [vmem:[%s843 + $0x1ea] sm:$0xff]
      %v1662 = vld [vmem:[%s843 + $0x1f2] sm:$0xff]
      %v1663 = vld [vmem:[%s843 + $0x1fa] sm:$0xff]
      %v1664 = vld [vmem:[%s843 + $0x20a] sm:$0xff]
      %v1665 = vld [vmem:[%s843 + $0x212] sm:$0xff]
      %v1666 = vld [vmem:[%s843 + $0x21a] sm:$0xff]
      %v1667 = vld [vmem:[%s843 + $0x222] sm:$0xff]
      %v1668 = vld [vmem:[%s843 + $0x232] sm:$0xff]
      %v1669 = vld [vmem:[%s843 + $0x23a] sm:$0xff]
      %v1670 = vld [vmem:[%s843 + $0x242] sm:$0xff]
      %v1671 = vld [vmem:[%s843 + $0x24a] sm:$0xff]
      %v1672 = vld [vmem:[%s843 + $0x25a] sm:$0xff]
      %v1673 = vld [vmem:[%s843 + $0x262] sm:$0xff]
      %v1674 = vld [vmem:[%s843 + $0x26a] sm:$0xff]
      %v1675 = vld [vmem:[%s843 + $0x272] sm:$0xff]
      %v1676 = vld [vmem:[%s843 + $0x282] sm:$0xff]
      %v1677 = vld [vmem:[%s843 + $0x28a] sm:$0xff]
      %v1678 = vld [vmem:[%s843 + $0x292] sm:$0xff]
      %v1679 = vld [vmem:[%s843 + $0x29a] sm:$0xff]
      %v1680 = vld [vmem:[%s843 + $0x2aa] sm:$0xff]
      %v1681 = vld [vmem:[%s843 + $0x2b2] sm:$0xff]
      %v1682 = vld [vmem:[%s843 + $0x2ba] sm:$0xff]
      %v1683 = vld [vmem:[%s843 + $0x2c2] sm:$0xff]
      %v1684 = vld [vmem:[%s843 + $0x2d2] sm:$0xff]
      %v1685 = vld [vmem:[%s843 + $0x2da] sm:$0xff]
      %v1686 = vld [vmem:[%s843 + $0x2e2] sm:$0xff]
      %v1687 = vld [vmem:[%s843 + $0x2ea] sm:$0xff]
      %v1688 = vld [vmem:[%s843 + $0x2fa] sm:$0xff]
      %v1689 = vld [vmem:[%s843 + $0x302] sm:$0xff]
      %v1690 = vld [vmem:[%s843 + $0x30a] sm:$0xff]
      %v1691 = vld [vmem:[%s843 + $0x312] sm:$0xff]
      %v1692 = vld [vmem:[%s843 + $0x322] sm:$0xff]
      %v1693 = vld [vmem:[%s843 + $0x32a] sm:$0xff]
      %v1694 = vld [vmem:[%s843 + $0x332] sm:$0xff]
      %v1695 = vld [vmem:[%s843 + $0x33a] sm:$0xff]
      %v1696 = vld [vmem:[%s843 + $0x34a] sm:$0xff]
      %v1697 = vld [vmem:[%s843 + $0x352] sm:$0xff]
      %v1698 = vld [vmem:[%s843 + $0x35a] sm:$0xff]
      %v1699 = vld [vmem:[%s843 + $0x362] sm:$0xff]
      %v1700 = vld [vmem:[%s843 + $0x372] sm:$0xff]
      %v1701 = vld [vmem:[%s843 + $0x37a] sm:$0xff]
      %v1702 = vld [vmem:[%s843 + $0x382] sm:$0xff]
      %v1703 = vld [vmem:[%s843 + $0x38a] sm:$0xff]
      %v1704 = vld [vmem:[%s843 + $0x39a] sm:$0xff]
      %v1705 = vld [vmem:[%s843 + $0x3a2] sm:$0xff]
      %v1706 = vld [vmem:[%s843 + $0x3aa] sm:$0xff]
      %v1707 = vld [vmem:[%s843 + $0x3b2] sm:$0xff]
      %v1708 = vld [vmem:[%s843 + $0x3c2] sm:$0xff]
      %v1709 = vld [vmem:[%s843 + $0x3ca] sm:$0xff]
      %v1710 = vld [vmem:[%s843 + $0x3d2] sm:$0xff]
      %v1711 = vld [vmem:[%s843 + $0x3da] sm:$0xff]
      %v1712 = vld [vmem:[%s843 + $0x3ea] sm:$0xff]
      %v1713 = vld [vmem:[%s843 + $0x3f2] sm:$0xff]
      %v1714 = vld [vmem:[%s843 + $0x3fa] sm:$0xff]
      %v1715 = vld [vmem:[%s843 + $0x402] sm:$0xff]
      %v1716 = vld [vmem:[%s843 + $0x412] sm:$0xff]
      %v1717 = vld [vmem:[%s843 + $0x41a] sm:$0xff]
      %v1718 = vld [vmem:[%s843 + $0x422] sm:$0xff]
      %v1719 = vld [vmem:[%s843 + $0x42a] sm:$0xff]
      %v1720 = vld [vmem:[%s843 + $0x43a] sm:$0xff]
      %v1721 = vld [vmem:[%s843 + $0x442] sm:$0xff]
      %v1722 = vld [vmem:[%s843 + $0x44a] sm:$0xff]
      %v1723 = vld [vmem:[%s843 + $0x452] sm:$0xff]
      %v1724 = vld [vmem:[%s843 + $0x462] sm:$0xff]
      %v1725 = vld [vmem:[%s843 + $0x46a] sm:$0xff]
      %v1726 = vld [vmem:[%s843 + $0x472] sm:$0xff]
      %v1727 = vld [vmem:[%s843 + $0x47a] sm:$0xff]
      %v1728 = vld [vmem:[%s843 + $0x48a] sm:$0xff]
      %v1729 = vld [vmem:[%s843 + $0x492] sm:$0xff]
      %v1730 = vld [vmem:[%s843 + $0x49a] sm:$0xff]
      %v1731 = vld [vmem:[%s843 + $0x4a2] sm:$0xff]
      %v1732 = vld [vmem:[%s843 + $0x4b2] sm:$0xff]
      %v1733 = vld [vmem:[%s843 + $0x4ba] sm:$0xff]
      %v1734 = vld [vmem:[%s843 + $0x4c2] sm:$0xff]
      %v1735 = vld [vmem:[%s843 + $0x4ca] sm:$0xff]
      %v1736 = vld [vmem:[%s843 + $0x4da] sm:$0xff]
      %v1737 = vld [vmem:[%s843 + $0x4e2] sm:$0xff]
      %v1738 = vld [vmem:[%s843 + $0x4ea] sm:$0xff]
      %v1739 = vld [vmem:[%s843 + $0x4f2] sm:$0xff]
      %s1740 = scalar_lea.vmem [#allocation2], 80
      %v1741 = vld [vmem:[%s1740] sm:$0xff]
      %v1742 = vld [vmem:[%s1740 + $0x8] sm:$0xff]
      %v1743 = vld [vmem:[%s1740 + $0x10] sm:$0xff]
      %v1744 = vld [vmem:[%s1740 + $0x18] sm:$0xff]
      %v1745 = vld [vmem:[%s1740 + $0x28] sm:$0xff]
      %v1746 = vld [vmem:[%s1740 + $0x30] sm:$0xff]
      %v1747 = vld [vmem:[%s1740 + $0x38] sm:$0xff]
      %v1748 = vld [vmem:[%s1740 + $0x40] sm:$0xff]
      %v1749 = vld [vmem:[%s1740 + $0x50] sm:$0xff]
      %v1750 = vld [vmem:[%s1740 + $0x58] sm:$0xff]
      %v1751 = vld [vmem:[%s1740 + $0x60] sm:$0xff]
      %v1752 = vld [vmem:[%s1740 + $0x68] sm:$0xff]
      %v1753 = vld [vmem:[%s1740 + $0x78] sm:$0xff]
      %v1754 = vld [vmem:[%s1740 + $0x80] sm:$0xff]
      %v1755 = vld [vmem:[%s1740 + $0x88] sm:$0xff]
      %v1756 = vld [vmem:[%s1740 + $0x90] sm:$0xff]
      %v1757 = vld [vmem:[%s1740 + $0xa0] sm:$0xff]
      %v1758 = vld [vmem:[%s1740 + $0xa8] sm:$0xff]
      %v1759 = vld [vmem:[%s1740 + $0xb0] sm:$0xff]
      %v1760 = vld [vmem:[%s1740 + $0xb8] sm:$0xff]
      %v1761 = vld [vmem:[%s1740 + $0xc8] sm:$0xff]
      %v1762 = vld [vmem:[%s1740 + $0xd0] sm:$0xff]
      %v1763 = vld [vmem:[%s1740 + $0xd8] sm:$0xff]
      %v1764 = vld [vmem:[%s1740 + $0xe0] sm:$0xff]
      %v1765 = vld [vmem:[%s1740 + $0xf0] sm:$0xff]
      %v1766 = vld [vmem:[%s1740 + $0xf8] sm:$0xff]
      %v1767 = vld [vmem:[%s1740 + $0x100] sm:$0xff]
      %v1768 = vld [vmem:[%s1740 + $0x108] sm:$0xff]
      %v1769 = vld [vmem:[%s1740 + $0x118] sm:$0xff]
      %v1770 = vld [vmem:[%s1740 + $0x120] sm:$0xff]
      %v1771 = vld [vmem:[%s1740 + $0x128] sm:$0xff]
      %v1772 = vld [vmem:[%s1740 + $0x130] sm:$0xff]
      %v1773 = vld [vmem:[%s1740 + $0x140] sm:$0xff]
      %v1774 = vld [vmem:[%s1740 + $0x148] sm:$0xff]
      %v1775 = vld [vmem:[%s1740 + $0x150] sm:$0xff]
      %v1776 = vld [vmem:[%s1740 + $0x158] sm:$0xff]
      %v1777 = vld [vmem:[%s1740 + $0x168] sm:$0xff]
      %v1778 = vld [vmem:[%s1740 + $0x170] sm:$0xff]
      %v1779 = vld [vmem:[%s1740 + $0x178] sm:$0xff]
      %v1780 = vld [vmem:[%s1740 + $0x180] sm:$0xff]
      %v1781 = vld [vmem:[%s1740 + $0x190] sm:$0xff]
      %v1782 = vld [vmem:[%s1740 + $0x198] sm:$0xff]
      %v1783 = vld [vmem:[%s1740 + $0x1a0] sm:$0xff]
      %v1784 = vld [vmem:[%s1740 + $0x1a8] sm:$0xff]
      %v1785 = vld [vmem:[%s1740 + $0x1b8] sm:$0xff]
      %v1786 = vld [vmem:[%s1740 + $0x1c0] sm:$0xff]
      %v1787 = vld [vmem:[%s1740 + $0x1c8] sm:$0xff]
      %v1788 = vld [vmem:[%s1740 + $0x1d0] sm:$0xff]
      %v1789 = vld [vmem:[%s1740 + $0x1e0] sm:$0xff]
      %v1790 = vld [vmem:[%s1740 + $0x1e8] sm:$0xff]
      %v1791 = vld [vmem:[%s1740 + $0x1f0] sm:$0xff]
      %v1792 = vld [vmem:[%s1740 + $0x1f8] sm:$0xff]
      %v1793 = vld [vmem:[%s1740 + $0x208] sm:$0xff]
      %v1794 = vld [vmem:[%s1740 + $0x210] sm:$0xff]
      %v1795 = vld [vmem:[%s1740 + $0x218] sm:$0xff]
      %v1796 = vld [vmem:[%s1740 + $0x220] sm:$0xff]
      %v1797 = vld [vmem:[%s1740 + $0x230] sm:$0xff]
      %v1798 = vld [vmem:[%s1740 + $0x238] sm:$0xff]
      %v1799 = vld [vmem:[%s1740 + $0x240] sm:$0xff]
      %v1800 = vld [vmem:[%s1740 + $0x248] sm:$0xff]
      %v1801 = vld [vmem:[%s1740 + $0x258] sm:$0xff]
      %v1802 = vld [vmem:[%s1740 + $0x260] sm:$0xff]
      %v1803 = vld [vmem:[%s1740 + $0x268] sm:$0xff]
      %v1804 = vld [vmem:[%s1740 + $0x270] sm:$0xff]
      %v1805 = vld [vmem:[%s1740 + $0x280] sm:$0xff]
      %v1806 = vld [vmem:[%s1740 + $0x288] sm:$0xff]
      %v1807 = vld [vmem:[%s1740 + $0x290] sm:$0xff]
      %v1808 = vld [vmem:[%s1740 + $0x298] sm:$0xff]
      %v1809 = vld [vmem:[%s1740 + $0x2a8] sm:$0xff]
      %v1810 = vld [vmem:[%s1740 + $0x2b0] sm:$0xff]
      %v1811 = vld [vmem:[%s1740 + $0x2b8] sm:$0xff]
      %v1812 = vld [vmem:[%s1740 + $0x2c0] sm:$0xff]
      %v1813 = vld [vmem:[%s1740 + $0x2d0] sm:$0xff]
      %v1814 = vld [vmem:[%s1740 + $0x2d8] sm:$0xff]
      %v1815 = vld [vmem:[%s1740 + $0x2e0] sm:$0xff]
      %v1816 = vld [vmem:[%s1740 + $0x2e8] sm:$0xff]
      %v1817 = vld [vmem:[%s1740 + $0x2f8] sm:$0xff]
      %v1818 = vld [vmem:[%s1740 + $0x300] sm:$0xff]
      %v1819 = vld [vmem:[%s1740 + $0x308] sm:$0xff]
      %v1820 = vld [vmem:[%s1740 + $0x310] sm:$0xff]
      %v1821 = vld [vmem:[%s1740 + $0x320] sm:$0xff]
      %v1822 = vld [vmem:[%s1740 + $0x328] sm:$0xff]
      %v1823 = vld [vmem:[%s1740 + $0x330] sm:$0xff]
      %v1824 = vld [vmem:[%s1740 + $0x338] sm:$0xff]
      %v1825 = vld [vmem:[%s1740 + $0x348] sm:$0xff]
      %v1826 = vld [vmem:[%s1740 + $0x350] sm:$0xff]
      %v1827 = vld [vmem:[%s1740 + $0x358] sm:$0xff]
      %v1828 = vld [vmem:[%s1740 + $0x360] sm:$0xff]
      %v1829 = vld [vmem:[%s1740 + $0x370] sm:$0xff]
      %v1830 = vld [vmem:[%s1740 + $0x378] sm:$0xff]
      %v1831 = vld [vmem:[%s1740 + $0x380] sm:$0xff]
      %v1832 = vld [vmem:[%s1740 + $0x388] sm:$0xff]
      %v1833 = vld [vmem:[%s1740 + $0x398] sm:$0xff]
      %v1834 = vld [vmem:[%s1740 + $0x3a0] sm:$0xff]
      %v1835 = vld [vmem:[%s1740 + $0x3a8] sm:$0xff]
      %v1836 = vld [vmem:[%s1740 + $0x3b0] sm:$0xff]
      %v1837 = vld [vmem:[%s1740 + $0x3c0] sm:$0xff]
      %v1838 = vld [vmem:[%s1740 + $0x3c8] sm:$0xff]
      %v1839 = vld [vmem:[%s1740 + $0x3d0] sm:$0xff]
      %v1840 = vld [vmem:[%s1740 + $0x3d8] sm:$0xff]
      %v1841 = vld [vmem:[%s1740 + $0x3e8] sm:$0xff]
      %v1842 = vld [vmem:[%s1740 + $0x3f0] sm:$0xff]
      %v1843 = vld [vmem:[%s1740 + $0x3f8] sm:$0xff]
      %v1844 = vld [vmem:[%s1740 + $0x400] sm:$0xff]
      %v1845 = vld [vmem:[%s1740 + $0x410] sm:$0xff]
      %v1846 = vld [vmem:[%s1740 + $0x418] sm:$0xff]
      %v1847 = vld [vmem:[%s1740 + $0x420] sm:$0xff]
      %v1848 = vld [vmem:[%s1740 + $0x428] sm:$0xff]
      %v1849 = vld [vmem:[%s1740 + $0x438] sm:$0xff]
      %v1850 = vld [vmem:[%s1740 + $0x440] sm:$0xff]
      %v1851 = vld [vmem:[%s1740 + $0x448] sm:$0xff]
      %v1852 = vld [vmem:[%s1740 + $0x450] sm:$0xff]
      %v1853 = vld [vmem:[%s1740 + $0x460] sm:$0xff]
      %v1854 = vld [vmem:[%s1740 + $0x468] sm:$0xff]
      %v1855 = vld [vmem:[%s1740 + $0x470] sm:$0xff]
      %v1856 = vld [vmem:[%s1740 + $0x478] sm:$0xff]
      %v1857 = vld [vmem:[%s1740 + $0x488] sm:$0xff]
      %v1858 = vld [vmem:[%s1740 + $0x490] sm:$0xff]
      %v1859 = vld [vmem:[%s1740 + $0x498] sm:$0xff]
      %v1860 = vld [vmem:[%s1740 + $0x4a0] sm:$0xff]
      %v1861 = vld [vmem:[%s1740 + $0x4b0] sm:$0xff]
      %v1862 = vld [vmem:[%s1740 + $0x4b8] sm:$0xff]
      %v1863 = vld [vmem:[%s1740 + $0x4c0] sm:$0xff]
      %v1864 = vld [vmem:[%s1740 + $0x4c8] sm:$0xff]
      %v1865 = vld [vmem:[%s1740 + $0x4d8] sm:$0xff]
      %v1866 = vld [vmem:[%s1740 + $0x4e0] sm:$0xff]
      %v1867 = vld [vmem:[%s1740 + $0x4e8] sm:$0xff]
      %v1868 = vld [vmem:[%s1740 + $0x4f0] sm:$0xff]
      %v1869 = vld [vmem:[%s1740 + $0x1] sm:$0xff]
      %v1870 = vld [vmem:[%s1740 + $0x9] sm:$0xff]
      %v1871 = vld [vmem:[%s1740 + $0x11] sm:$0xff]
      %v1872 = vld [vmem:[%s1740 + $0x19] sm:$0xff]
      %v1873 = vld [vmem:[%s1740 + $0x29] sm:$0xff]
      %v1874 = vld [vmem:[%s1740 + $0x31] sm:$0xff]
      %v1875 = vld [vmem:[%s1740 + $0x39] sm:$0xff]
      %v1876 = vld [vmem:[%s1740 + $0x41] sm:$0xff]
      %v1877 = vld [vmem:[%s1740 + $0x51] sm:$0xff]
      %v1878 = vld [vmem:[%s1740 + $0x59] sm:$0xff]
      %v1879 = vld [vmem:[%s1740 + $0x61] sm:$0xff]
      %v1880 = vld [vmem:[%s1740 + $0x69] sm:$0xff]
      %v1881 = vld [vmem:[%s1740 + $0x79] sm:$0xff]
      %v1882 = vld [vmem:[%s1740 + $0x81] sm:$0xff]
      %v1883 = vld [vmem:[%s1740 + $0x89] sm:$0xff]
      %v1884 = vld [vmem:[%s1740 + $0x91] sm:$0xff]
      %v1885 = vld [vmem:[%s1740 + $0xa1] sm:$0xff]
      %v1886 = vld [vmem:[%s1740 + $0xa9] sm:$0xff]
      %v1887 = vld [vmem:[%s1740 + $0xb1] sm:$0xff]
      %v1888 = vld [vmem:[%s1740 + $0xb9] sm:$0xff]
      %v1889 = vld [vmem:[%s1740 + $0xc9] sm:$0xff]
      %v1890 = vld [vmem:[%s1740 + $0xd1] sm:$0xff]
      %v1891 = vld [vmem:[%s1740 + $0xd9] sm:$0xff]
      %v1892 = vld [vmem:[%s1740 + $0xe1] sm:$0xff]
      %v1893 = vld [vmem:[%s1740 + $0xf1] sm:$0xff]
      %v1894 = vld [vmem:[%s1740 + $0xf9] sm:$0xff]
      %v1895 = vld [vmem:[%s1740 + $0x101] sm:$0xff]
      %v1896 = vld [vmem:[%s1740 + $0x109] sm:$0xff]
      %v1897 = vld [vmem:[%s1740 + $0x119] sm:$0xff]
      %v1898 = vld [vmem:[%s1740 + $0x121] sm:$0xff]
      %v1899 = vld [vmem:[%s1740 + $0x129] sm:$0xff]
      %v1900 = vld [vmem:[%s1740 + $0x131] sm:$0xff]
      %v1901 = vld [vmem:[%s1740 + $0x141] sm:$0xff]
      %v1902 = vld [vmem:[%s1740 + $0x149] sm:$0xff]
      %v1903 = vld [vmem:[%s1740 + $0x151] sm:$0xff]
      %v1904 = vld [vmem:[%s1740 + $0x159] sm:$0xff]
      %v1905 = vld [vmem:[%s1740 + $0x169] sm:$0xff]
      %v1906 = vld [vmem:[%s1740 + $0x171] sm:$0xff]
      %v1907 = vld [vmem:[%s1740 + $0x179] sm:$0xff]
      %v1908 = vld [vmem:[%s1740 + $0x181] sm:$0xff]
      %v1909 = vld [vmem:[%s1740 + $0x191] sm:$0xff]
      %v1910 = vld [vmem:[%s1740 + $0x199] sm:$0xff]
      %v1911 = vld [vmem:[%s1740 + $0x1a1] sm:$0xff]
      %v1912 = vld [vmem:[%s1740 + $0x1a9] sm:$0xff]
      %v1913 = vld [vmem:[%s1740 + $0x1b9] sm:$0xff]
      %v1914 = vld [vmem:[%s1740 + $0x1c1] sm:$0xff]
      %v1915 = vld [vmem:[%s1740 + $0x1c9] sm:$0xff]
      %v1916 = vld [vmem:[%s1740 + $0x1d1] sm:$0xff]
      %v1917 = vld [vmem:[%s1740 + $0x1e1] sm:$0xff]
      %v1918 = vld [vmem:[%s1740 + $0x1e9] sm:$0xff]
      %v1919 = vld [vmem:[%s1740 + $0x1f1] sm:$0xff]
      %v1920 = vld [vmem:[%s1740 + $0x1f9] sm:$0xff]
      %v1921 = vld [vmem:[%s1740 + $0x209] sm:$0xff]
      %v1922 = vld [vmem:[%s1740 + $0x211] sm:$0xff]
      %v1923 = vld [vmem:[%s1740 + $0x219] sm:$0xff]
      %v1924 = vld [vmem:[%s1740 + $0x221] sm:$0xff]
      %v1925 = vld [vmem:[%s1740 + $0x231] sm:$0xff]
      %v1926 = vld [vmem:[%s1740 + $0x239] sm:$0xff]
      %v1927 = vld [vmem:[%s1740 + $0x241] sm:$0xff]
      %v1928 = vld [vmem:[%s1740 + $0x249] sm:$0xff]
      %v1929 = vld [vmem:[%s1740 + $0x259] sm:$0xff]
      %v1930 = vld [vmem:[%s1740 + $0x261] sm:$0xff]
      %v1931 = vld [vmem:[%s1740 + $0x269] sm:$0xff]
      %v1932 = vld [vmem:[%s1740 + $0x271] sm:$0xff]
      %v1933 = vld [vmem:[%s1740 + $0x281] sm:$0xff]
      %v1934 = vld [vmem:[%s1740 + $0x289] sm:$0xff]
      %v1935 = vld [vmem:[%s1740 + $0x291] sm:$0xff]
      %v1936 = vld [vmem:[%s1740 + $0x299] sm:$0xff]
      %v1937 = vld [vmem:[%s1740 + $0x2a9] sm:$0xff]
      %v1938 = vld [vmem:[%s1740 + $0x2b1] sm:$0xff]
      %v1939 = vld [vmem:[%s1740 + $0x2b9] sm:$0xff]
      %v1940 = vld [vmem:[%s1740 + $0x2c1] sm:$0xff]
      %v1941 = vld [vmem:[%s1740 + $0x2d1] sm:$0xff]
      %v1942 = vld [vmem:[%s1740 + $0x2d9] sm:$0xff]
      %v1943 = vld [vmem:[%s1740 + $0x2e1] sm:$0xff]
      %v1944 = vld [vmem:[%s1740 + $0x2e9] sm:$0xff]
      %v1945 = vld [vmem:[%s1740 + $0x2f9] sm:$0xff]
      %v1946 = vld [vmem:[%s1740 + $0x301] sm:$0xff]
      %v1947 = vld [vmem:[%s1740 + $0x309] sm:$0xff]
      %v1948 = vld [vmem:[%s1740 + $0x311] sm:$0xff]
      %v1949 = vld [vmem:[%s1740 + $0x321] sm:$0xff]
      %v1950 = vld [vmem:[%s1740 + $0x329] sm:$0xff]
      %v1951 = vld [vmem:[%s1740 + $0x331] sm:$0xff]
      %v1952 = vld [vmem:[%s1740 + $0x339] sm:$0xff]
      %v1953 = vld [vmem:[%s1740 + $0x349] sm:$0xff]
      %v1954 = vld [vmem:[%s1740 + $0x351] sm:$0xff]
      %v1955 = vld [vmem:[%s1740 + $0x359] sm:$0xff]
      %v1956 = vld [vmem:[%s1740 + $0x361] sm:$0xff]
      %v1957 = vld [vmem:[%s1740 + $0x371] sm:$0xff]
      %v1958 = vld [vmem:[%s1740 + $0x379] sm:$0xff]
      %v1959 = vld [vmem:[%s1740 + $0x381] sm:$0xff]
      %v1960 = vld [vmem:[%s1740 + $0x389] sm:$0xff]
      %v1961 = vld [vmem:[%s1740 + $0x399] sm:$0xff]
      %v1962 = vld [vmem:[%s1740 + $0x3a1] sm:$0xff]
      %v1963 = vld [vmem:[%s1740 + $0x3a9] sm:$0xff]
      %v1964 = vld [vmem:[%s1740 + $0x3b1] sm:$0xff]
      %v1965 = vld [vmem:[%s1740 + $0x3c1] sm:$0xff]
      %v1966 = vld [vmem:[%s1740 + $0x3c9] sm:$0xff]
      %v1967 = vld [vmem:[%s1740 + $0x3d1] sm:$0xff]
      %v1968 = vld [vmem:[%s1740 + $0x3d9] sm:$0xff]
      %v1969 = vld [vmem:[%s1740 + $0x3e9] sm:$0xff]
      %v1970 = vld [vmem:[%s1740 + $0x3f1] sm:$0xff]
      %v1971 = vld [vmem:[%s1740 + $0x3f9] sm:$0xff]
      %v1972 = vld [vmem:[%s1740 + $0x401] sm:$0xff]
      %v1973 = vld [vmem:[%s1740 + $0x411] sm:$0xff]
      %v1974 = vld [vmem:[%s1740 + $0x419] sm:$0xff]
      %v1975 = vld [vmem:[%s1740 + $0x421] sm:$0xff]
      %v1976 = vld [vmem:[%s1740 + $0x429] sm:$0xff]
      %v1977 = vld [vmem:[%s1740 + $0x439] sm:$0xff]
      %v1978 = vld [vmem:[%s1740 + $0x441] sm:$0xff]
      %v1979 = vld [vmem:[%s1740 + $0x449] sm:$0xff]
      %v1980 = vld [vmem:[%s1740 + $0x451] sm:$0xff]
      %v1981 = vld [vmem:[%s1740 + $0x461] sm:$0xff]
      %v1982 = vld [vmem:[%s1740 + $0x469] sm:$0xff]
      %v1983 = vld [vmem:[%s1740 + $0x471] sm:$0xff]
      %v1984 = vld [vmem:[%s1740 + $0x479] sm:$0xff]
      %v1985 = vld [vmem:[%s1740 + $0x489] sm:$0xff]
      %v1986 = vld [vmem:[%s1740 + $0x491] sm:$0xff]
      %v1987 = vld [vmem:[%s1740 + $0x499] sm:$0xff]
      %v1988 = vld [vmem:[%s1740 + $0x4a1] sm:$0xff]
      %v1989 = vld [vmem:[%s1740 + $0x4b1] sm:$0xff]
      %v1990 = vld [vmem:[%s1740 + $0x4b9] sm:$0xff]
      %v1991 = vld [vmem:[%s1740 + $0x4c1] sm:$0xff]
      %v1992 = vld [vmem:[%s1740 + $0x4c9] sm:$0xff]
      %v1993 = vld [vmem:[%s1740 + $0x4d9] sm:$0xff]
      %v1994 = vld [vmem:[%s1740 + $0x4e1] sm:$0xff]
      %v1995 = vld [vmem:[%s1740 + $0x4e9] sm:$0xff]
      %v1996 = vld [vmem:[%s1740 + $0x4f1] sm:$0xff]
      %v1997 = vld [vmem:[%s1740 + $0x2] sm:$0xff]
      %v1998 = vld [vmem:[%s1740 + $0xa] sm:$0xff]
      %v1999 = vld [vmem:[%s1740 + $0x12] sm:$0xff]
      %v2000 = vld [vmem:[%s1740 + $0x1a] sm:$0xff]
      %v2001 = vld [vmem:[%s1740 + $0x2a] sm:$0xff]
      %v2002 = vld [vmem:[%s1740 + $0x32] sm:$0xff]
      %v2003 = vld [vmem:[%s1740 + $0x3a] sm:$0xff]
      %v2004 = vld [vmem:[%s1740 + $0x42] sm:$0xff]
      %v2005 = vld [vmem:[%s1740 + $0x52] sm:$0xff]
      %v2006 = vld [vmem:[%s1740 + $0x5a] sm:$0xff]
      %v2007 = vld [vmem:[%s1740 + $0x62] sm:$0xff]
      %v2008 = vld [vmem:[%s1740 + $0x6a] sm:$0xff]
      %v2009 = vld [vmem:[%s1740 + $0x7a] sm:$0xff]
      %v2010 = vld [vmem:[%s1740 + $0x82] sm:$0xff]
      %v2011 = vld [vmem:[%s1740 + $0x8a] sm:$0xff]
      %v2012 = vld [vmem:[%s1740 + $0x92] sm:$0xff]
      %v2013 = vld [vmem:[%s1740 + $0xa2] sm:$0xff]
      %v2014 = vld [vmem:[%s1740 + $0xaa] sm:$0xff]
      %v2015 = vld [vmem:[%s1740 + $0xb2] sm:$0xff]
      %v2016 = vld [vmem:[%s1740 + $0xba] sm:$0xff]
      %v2017 = vld [vmem:[%s1740 + $0xca] sm:$0xff]
      %v2018 = vld [vmem:[%s1740 + $0xd2] sm:$0xff]
      %v2019 = vld [vmem:[%s1740 + $0xda] sm:$0xff]
      %v2020 = vld [vmem:[%s1740 + $0xe2] sm:$0xff]
      %v2021 = vld [vmem:[%s1740 + $0xf2] sm:$0xff]
      %v2022 = vld [vmem:[%s1740 + $0xfa] sm:$0xff]
      %v2023 = vld [vmem:[%s1740 + $0x102] sm:$0xff]
      %v2024 = vld [vmem:[%s1740 + $0x10a] sm:$0xff]
      %v2025 = vld [vmem:[%s1740 + $0x11a] sm:$0xff]
      %v2026 = vld [vmem:[%s1740 + $0x122] sm:$0xff]
      %v2027 = vld [vmem:[%s1740 + $0x12a] sm:$0xff]
      %v2028 = vld [vmem:[%s1740 + $0x132] sm:$0xff]
      %v2029 = vld [vmem:[%s1740 + $0x142] sm:$0xff]
      %v2030 = vld [vmem:[%s1740 + $0x14a] sm:$0xff]
      %v2031 = vld [vmem:[%s1740 + $0x152] sm:$0xff]
      %v2032 = vld [vmem:[%s1740 + $0x15a] sm:$0xff]
      %v2033 = vld [vmem:[%s1740 + $0x16a] sm:$0xff]
      %v2034 = vld [vmem:[%s1740 + $0x172] sm:$0xff]
      %v2035 = vld [vmem:[%s1740 + $0x17a] sm:$0xff]
      %v2036 = vld [vmem:[%s1740 + $0x182] sm:$0xff]
      %v2037 = vld [vmem:[%s1740 + $0x192] sm:$0xff]
      %v2038 = vld [vmem:[%s1740 + $0x19a] sm:$0xff]
      %v2039 = vld [vmem:[%s1740 + $0x1a2] sm:$0xff]
      %v2040 = vld [vmem:[%s1740 + $0x1aa] sm:$0xff]
      %v2041 = vld [vmem:[%s1740 + $0x1ba] sm:$0xff]
      %v2042 = vld [vmem:[%s1740 + $0x1c2] sm:$0xff]
      %v2043 = vld [vmem:[%s1740 + $0x1ca] sm:$0xff]
      %v2044 = vld [vmem:[%s1740 + $0x1d2] sm:$0xff]
      %v2045 = vld [vmem:[%s1740 + $0x1e2] sm:$0xff]
      %v2046 = vld [vmem:[%s1740 + $0x1ea] sm:$0xff]
      %v2047 = vld [vmem:[%s1740 + $0x1f2] sm:$0xff]
      %v2048 = vld [vmem:[%s1740 + $0x1fa] sm:$0xff]
      %v2049 = vld [vmem:[%s1740 + $0x20a] sm:$0xff]
      %v2050 = vld [vmem:[%s1740 + $0x212] sm:$0xff]
      %v2051 = vld [vmem:[%s1740 + $0x21a] sm:$0xff]
      %v2052 = vld [vmem:[%s1740 + $0x222] sm:$0xff]
      %v2053 = vld [vmem:[%s1740 + $0x232] sm:$0xff]
      %v2054 = vld [vmem:[%s1740 + $0x23a] sm:$0xff]
      %v2055 = vld [vmem:[%s1740 + $0x242] sm:$0xff]
      %v2056 = vld [vmem:[%s1740 + $0x24a] sm:$0xff]
      %v2057 = vld [vmem:[%s1740 + $0x25a] sm:$0xff]
      %v2058 = vld [vmem:[%s1740 + $0x262] sm:$0xff]
      %v2059 = vld [vmem:[%s1740 + $0x26a] sm:$0xff]
      %v2060 = vld [vmem:[%s1740 + $0x272] sm:$0xff]
      %v2061 = vld [vmem:[%s1740 + $0x282] sm:$0xff]
      %v2062 = vld [vmem:[%s1740 + $0x28a] sm:$0xff]
      %v2063 = vld [vmem:[%s1740 + $0x292] sm:$0xff]
      %v2064 = vld [vmem:[%s1740 + $0x29a] sm:$0xff]
      %v2065 = vld [vmem:[%s1740 + $0x2aa] sm:$0xff]
      %v2066 = vld [vmem:[%s1740 + $0x2b2] sm:$0xff]
      %v2067 = vld [vmem:[%s1740 + $0x2ba] sm:$0xff]
      %v2068 = vld [vmem:[%s1740 + $0x2c2] sm:$0xff]
      %v2069 = vld [vmem:[%s1740 + $0x2d2] sm:$0xff]
      %v2070 = vld [vmem:[%s1740 + $0x2da] sm:$0xff]
      %v2071 = vld [vmem:[%s1740 + $0x2e2] sm:$0xff]
      %v2072 = vld [vmem:[%s1740 + $0x2ea] sm:$0xff]
      %v2073 = vld [vmem:[%s1740 + $0x2fa] sm:$0xff]
      %v2074 = vld [vmem:[%s1740 + $0x302] sm:$0xff]
      %v2075 = vld [vmem:[%s1740 + $0x30a] sm:$0xff]
      %v2076 = vld [vmem:[%s1740 + $0x312] sm:$0xff]
      %v2077 = vld [vmem:[%s1740 + $0x322] sm:$0xff]
      %v2078 = vld [vmem:[%s1740 + $0x32a] sm:$0xff]
      %v2079 = vld [vmem:[%s1740 + $0x332] sm:$0xff]
      %v2080 = vld [vmem:[%s1740 + $0x33a] sm:$0xff]
      %v2081 = vld [vmem:[%s1740 + $0x34a] sm:$0xff]
      %v2082 = vld [vmem:[%s1740 + $0x352] sm:$0xff]
      %v2083 = vld [vmem:[%s1740 + $0x35a] sm:$0xff]
      %v2084 = vld [vmem:[%s1740 + $0x362] sm:$0xff]
      %v2085 = vld [vmem:[%s1740 + $0x372] sm:$0xff]
      %v2086 = vld [vmem:[%s1740 + $0x37a] sm:$0xff]
      %v2087 = vld [vmem:[%s1740 + $0x382] sm:$0xff]
      %v2088 = vld [vmem:[%s1740 + $0x38a] sm:$0xff]
      %v2089 = vld [vmem:[%s1740 + $0x39a] sm:$0xff]
      %v2090 = vld [vmem:[%s1740 + $0x3a2] sm:$0xff]
      %v2091 = vld [vmem:[%s1740 + $0x3aa] sm:$0xff]
      %v2092 = vld [vmem:[%s1740 + $0x3b2] sm:$0xff]
      %v2093 = vld [vmem:[%s1740 + $0x3c2] sm:$0xff]
      %v2094 = vld [vmem:[%s1740 + $0x3ca] sm:$0xff]
      %v2095 = vld [vmem:[%s1740 + $0x3d2] sm:$0xff]
      %v2096 = vld [vmem:[%s1740 + $0x3da] sm:$0xff]
      %v2097 = vld [vmem:[%s1740 + $0x3ea] sm:$0xff]
      %v2098 = vld [vmem:[%s1740 + $0x3f2] sm:$0xff]
      %v2099 = vld [vmem:[%s1740 + $0x3fa] sm:$0xff]
      %v2100 = vld [vmem:[%s1740 + $0x402] sm:$0xff]
      %v2101 = vld [vmem:[%s1740 + $0x412] sm:$0xff]
      %v2102 = vld [vmem:[%s1740 + $0x41a] sm:$0xff]
      %v2103 = vld [vmem:[%s1740 + $0x422] sm:$0xff]
      %v2104 = vld [vmem:[%s1740 + $0x42a] sm:$0xff]
      %v2105 = vld [vmem:[%s1740 + $0x43a] sm:$0xff]
      %v2106 = vld [vmem:[%s1740 + $0x442] sm:$0xff]
      %v2107 = vld [vmem:[%s1740 + $0x44a] sm:$0xff]
      %v2108 = vld [vmem:[%s1740 + $0x452] sm:$0xff]
      %v2109 = vld [vmem:[%s1740 + $0x462] sm:$0xff]
      %v2110 = vld [vmem:[%s1740 + $0x46a] sm:$0xff]
      %v2111 = vld [vmem:[%s1740 + $0x472] sm:$0xff]
      %v2112 = vld [vmem:[%s1740 + $0x47a] sm:$0xff]
      %v2113 = vld [vmem:[%s1740 + $0x48a] sm:$0xff]
      %v2114 = vld [vmem:[%s1740 + $0x492] sm:$0xff]
      %v2115 = vld [vmem:[%s1740 + $0x49a] sm:$0xff]
      %v2116 = vld [vmem:[%s1740 + $0x4a2] sm:$0xff]
      %v2117 = vld [vmem:[%s1740 + $0x4b2] sm:$0xff]
      %v2118 = vld [vmem:[%s1740 + $0x4ba] sm:$0xff]
      %v2119 = vld [vmem:[%s1740 + $0x4c2] sm:$0xff]
      %v2120 = vld [vmem:[%s1740 + $0x4ca] sm:$0xff]
      %v2121 = vld [vmem:[%s1740 + $0x4da] sm:$0xff]
      %v2122 = vld [vmem:[%s1740 + $0x4e2] sm:$0xff]
      %v2123 = vld [vmem:[%s1740 + $0x4ea] sm:$0xff]
      %v2124 = vld [vmem:[%s1740 + $0x4f2] sm:$0xff]
      %2253 = vrot.lane.b32.xlu0 %v1100, 16
      %v2254 = vpop.permute.xlu0 %2253
      %2255 = vrot.lane.b32.xlu0 %v1101, 16
      %v2256 = vpop.permute.xlu0 %2255
      %2257 = vrot.lane.b32.xlu0 %v1102, 16
      %v2258 = vpop.permute.xlu0 %2257
      %2259 = vrot.lane.b32.xlu0 %v1103, 16
      %v2260 = vpop.permute.xlu0 %2259
      %2261 = vrot.lane.b32.xlu0 %v1104, 16
      %v2262 = vpop.permute.xlu0 %2261
      %2263 = vrot.lane.b32.xlu0 %v1105, 16
      %v2264 = vpop.permute.xlu0 %2263
      %2265 = vrot.lane.b32.xlu0 %v1106, 16
      %v2266 = vpop.permute.xlu0 %2265
      %2267 = vrot.lane.b32.xlu0 %v1107, 16
      %v2268 = vpop.permute.xlu0 %2267
      %2269 = vrot.lane.b32.xlu0 %v1108, 16
      %v2270 = vpop.permute.xlu0 %2269
      %2271 = vrot.lane.b32.xlu0 %v1109, 16
      %v2272 = vpop.permute.xlu0 %2271
      %2273 = vrot.lane.b32.xlu0 %v1110, 16
      %v2274 = vpop.permute.xlu0 %2273
      %2275 = vrot.lane.b32.xlu0 %v1111, 16
      %v2276 = vpop.permute.xlu0 %2275
      %2277 = vrot.lane.b32.xlu0 %v1112, 16
      %v2278 = vpop.permute.xlu0 %2277
      %2279 = vrot.lane.b32.xlu0 %v1113, 16
      %v2280 = vpop.permute.xlu0 %2279
      %2281 = vrot.lane.b32.xlu0 %v1114, 16
      %v2282 = vpop.permute.xlu0 %2281
      %2283 = vrot.lane.b32.xlu0 %v1115, 16
      %v2284 = vpop.permute.xlu0 %2283
      %2285 = vrot.lane.b32.xlu0 %v1116, 16
      %v2286 = vpop.permute.xlu0 %2285
      %2287 = vrot.lane.b32.xlu0 %v1117, 16
      %v2288 = vpop.permute.xlu0 %2287
      %2289 = vrot.lane.b32.xlu0 %v1118, 16
      %v2290 = vpop.permute.xlu0 %2289
      %2291 = vrot.lane.b32.xlu0 %v1119, 16
      %v2292 = vpop.permute.xlu0 %2291
      %2293 = vrot.lane.b32.xlu0 %v1120, 16
      %v2294 = vpop.permute.xlu0 %2293
      %2295 = vrot.lane.b32.xlu0 %v1121, 16
      %v2296 = vpop.permute.xlu0 %2295
      %2297 = vrot.lane.b32.xlu0 %v1122, 16
      %v2298 = vpop.permute.xlu0 %2297
      %2299 = vrot.lane.b32.xlu0 %v1123, 16
      %v2300 = vpop.permute.xlu0 %2299
      %2301 = vrot.lane.b32.xlu0 %v1124, 16
      %v2302 = vpop.permute.xlu0 %2301
      %2303 = vrot.lane.b32.xlu0 %v1125, 16
      %v2304 = vpop.permute.xlu0 %2303
      %2305 = vrot.lane.b32.xlu0 %v1126, 16
      %v2306 = vpop.permute.xlu0 %2305
      %2307 = vrot.lane.b32.xlu0 %v1127, 16
      %v2308 = vpop.permute.xlu0 %2307
      %2309 = vrot.lane.b32.xlu0 %v1128, 16
      %v2310 = vpop.permute.xlu0 %2309
      %2311 = vrot.lane.b32.xlu0 %v1129, 16
      %v2312 = vpop.permute.xlu0 %2311
      %2313 = vrot.lane.b32.xlu0 %v1130, 16
      %v2314 = vpop.permute.xlu0 %2313
      %2315 = vrot.lane.b32.xlu0 %v1131, 16
      %v2316 = vpop.permute.xlu0 %2315
      %2317 = vrot.lane.b32.xlu0 %v1132, 16
      %v2318 = vpop.permute.xlu0 %2317
      %2319 = vrot.lane.b32.xlu0 %v1133, 16
      %v2320 = vpop.permute.xlu0 %2319
      %2321 = vrot.lane.b32.xlu0 %v1134, 16
      %v2322 = vpop.permute.xlu0 %2321
      %2323 = vrot.lane.b32.xlu0 %v1135, 16
      %v2324 = vpop.permute.xlu0 %2323
      %2325 = vrot.lane.b32.xlu0 %v1136, 16
      %v2326 = vpop.permute.xlu0 %2325
      %2327 = vrot.lane.b32.xlu0 %v1137, 16
      %v2328 = vpop.permute.xlu0 %2327
      %2329 = vrot.lane.b32.xlu0 %v1138, 16
      %v2330 = vpop.permute.xlu0 %2329
      %2331 = vrot.lane.b32.xlu0 %v1139, 16
      %v2332 = vpop.permute.xlu0 %2331
      %2333 = vrot.lane.b32.xlu0 %v1140, 16
      %v2334 = vpop.permute.xlu0 %2333
      %2335 = vrot.lane.b32.xlu0 %v1141, 16
      %v2336 = vpop.permute.xlu0 %2335
      %2337 = vrot.lane.b32.xlu0 %v1142, 16
      %v2338 = vpop.permute.xlu0 %2337
      %2339 = vrot.lane.b32.xlu0 %v1143, 16
      %v2340 = vpop.permute.xlu0 %2339
      %2341 = vrot.lane.b32.xlu0 %v1144, 16
      %v2342 = vpop.permute.xlu0 %2341
      %2343 = vrot.lane.b32.xlu0 %v1145, 16
      %v2344 = vpop.permute.xlu0 %2343
      %2345 = vrot.lane.b32.xlu0 %v1146, 16
      %v2346 = vpop.permute.xlu0 %2345
      %2347 = vrot.lane.b32.xlu0 %v1147, 16
      %v2348 = vpop.permute.xlu0 %2347
      %2349 = vrot.lane.b32.xlu0 %v1148, 16
      %v2350 = vpop.permute.xlu0 %2349
      %2351 = vrot.lane.b32.xlu0 %v1149, 16
      %v2352 = vpop.permute.xlu0 %2351
      %2353 = vrot.lane.b32.xlu0 %v1150, 16
      %v2354 = vpop.permute.xlu0 %2353
      %2355 = vrot.lane.b32.xlu0 %v1151, 16
      %v2356 = vpop.permute.xlu0 %2355
      %2357 = vrot.lane.b32.xlu0 %v1152, 16
      %v2358 = vpop.permute.xlu0 %2357
      %2359 = vrot.lane.b32.xlu0 %v1153, 16
      %v2360 = vpop.permute.xlu0 %2359
      %2361 = vrot.lane.b32.xlu0 %v1154, 16
      %v2362 = vpop.permute.xlu0 %2361
      %2363 = vrot.lane.b32.xlu0 %v1155, 16
      %v2364 = vpop.permute.xlu0 %2363
      %2365 = vrot.lane.b32.xlu0 %v1156, 16
      %v2366 = vpop.permute.xlu0 %2365
      %2367 = vrot.lane.b32.xlu0 %v1157, 16
      %v2368 = vpop.permute.xlu0 %2367
      %2369 = vrot.lane.b32.xlu0 %v1158, 16
      %v2370 = vpop.permute.xlu0 %2369
      %2371 = vrot.lane.b32.xlu0 %v1159, 16
      %v2372 = vpop.permute.xlu0 %2371
      %2373 = vrot.lane.b32.xlu0 %v1160, 16
      %v2374 = vpop.permute.xlu0 %2373
      %2375 = vrot.lane.b32.xlu0 %v1161, 16
      %v2376 = vpop.permute.xlu0 %2375
      %2377 = vrot.lane.b32.xlu0 %v1162, 16
      %v2378 = vpop.permute.xlu0 %2377
      %2379 = vrot.lane.b32.xlu0 %v1163, 16
      %v2380 = vpop.permute.xlu0 %2379
      %2381 = vrot.lane.b32.xlu0 %v1164, 16
      %v2382 = vpop.permute.xlu0 %2381
      %2383 = vrot.lane.b32.xlu0 %v1165, 16
      %v2384 = vpop.permute.xlu0 %2383
      %2385 = vrot.lane.b32.xlu0 %v1166, 16
      %v2386 = vpop.permute.xlu0 %2385
      %2387 = vrot.lane.b32.xlu0 %v1167, 16
      %v2388 = vpop.permute.xlu0 %2387
      %2389 = vrot.lane.b32.xlu0 %v1168, 16
      %v2390 = vpop.permute.xlu0 %2389
      %2391 = vrot.lane.b32.xlu0 %v1169, 16
      %v2392 = vpop.permute.xlu0 %2391
      %2393 = vrot.lane.b32.xlu0 %v1170, 16
      %v2394 = vpop.permute.xlu0 %2393
      %2395 = vrot.lane.b32.xlu0 %v1171, 16
      %v2396 = vpop.permute.xlu0 %2395
      %2397 = vrot.lane.b32.xlu0 %v1172, 16
      %v2398 = vpop.permute.xlu0 %2397
      %2399 = vrot.lane.b32.xlu0 %v1173, 16
      %v2400 = vpop.permute.xlu0 %2399
      %2401 = vrot.lane.b32.xlu0 %v1174, 16
      %v2402 = vpop.permute.xlu0 %2401
      %2403 = vrot.lane.b32.xlu0 %v1175, 16
      %v2404 = vpop.permute.xlu0 %2403
      %2405 = vrot.lane.b32.xlu0 %v1176, 16
      %v2406 = vpop.permute.xlu0 %2405
      %2407 = vrot.lane.b32.xlu0 %v1177, 16
      %v2408 = vpop.permute.xlu0 %2407
      %2409 = vrot.lane.b32.xlu0 %v1178, 16
      %v2410 = vpop.permute.xlu0 %2409
      %2411 = vrot.lane.b32.xlu0 %v1179, 16
      %v2412 = vpop.permute.xlu0 %2411
      %2413 = vrot.lane.b32.xlu0 %v1180, 16
      %v2414 = vpop.permute.xlu0 %2413
      %2415 = vrot.lane.b32.xlu0 %v1181, 16
      %v2416 = vpop.permute.xlu0 %2415
      %2417 = vrot.lane.b32.xlu0 %v1182, 16
      %v2418 = vpop.permute.xlu0 %2417
      %2419 = vrot.lane.b32.xlu0 %v1183, 16
      %v2420 = vpop.permute.xlu0 %2419
      %2421 = vrot.lane.b32.xlu0 %v1184, 16
      %v2422 = vpop.permute.xlu0 %2421
      %2423 = vrot.lane.b32.xlu0 %v1185, 16
      %v2424 = vpop.permute.xlu0 %2423
      %2425 = vrot.lane.b32.xlu0 %v1186, 16
      %v2426 = vpop.permute.xlu0 %2425
      %2427 = vrot.lane.b32.xlu0 %v1187, 16
      %v2428 = vpop.permute.xlu0 %2427
      %2429 = vrot.lane.b32.xlu0 %v1188, 16
      %v2430 = vpop.permute.xlu0 %2429
      %2431 = vrot.lane.b32.xlu0 %v1189, 16
      %v2432 = vpop.permute.xlu0 %2431
      %2433 = vrot.lane.b32.xlu0 %v1190, 16
      %v2434 = vpop.permute.xlu0 %2433
      %2435 = vrot.lane.b32.xlu0 %v1191, 16
      %v2436 = vpop.permute.xlu0 %2435
      %2437 = vrot.lane.b32.xlu0 %v1192, 16
      %v2438 = vpop.permute.xlu0 %2437
      %2439 = vrot.lane.b32.xlu0 %v1193, 16
      %v2440 = vpop.permute.xlu0 %2439
      %2441 = vrot.lane.b32.xlu0 %v1194, 16
      %v2442 = vpop.permute.xlu0 %2441
      %2443 = vrot.lane.b32.xlu0 %v1195, 16
      %v2444 = vpop.permute.xlu0 %2443
      %2445 = vrot.lane.b32.xlu0 %v1196, 16
      %v2446 = vpop.permute.xlu0 %2445
      %2447 = vrot.lane.b32.xlu0 %v1197, 16
      %v2448 = vpop.permute.xlu0 %2447
      %2449 = vrot.lane.b32.xlu0 %v1198, 16
      %v2450 = vpop.permute.xlu0 %2449
      %2451 = vrot.lane.b32.xlu0 %v1199, 16
      %v2452 = vpop.permute.xlu0 %2451
      %2453 = vrot.lane.b32.xlu0 %v1200, 16
      %v2454 = vpop.permute.xlu0 %2453
      %2455 = vrot.lane.b32.xlu0 %v1201, 16
      %v2456 = vpop.permute.xlu0 %2455
      %2457 = vrot.lane.b32.xlu0 %v1202, 16
      %v2458 = vpop.permute.xlu0 %2457
      %2459 = vrot.lane.b32.xlu0 %v1203, 16
      %v2460 = vpop.permute.xlu0 %2459
      %2461 = vrot.lane.b32.xlu0 %v1204, 16
      %v2462 = vpop.permute.xlu0 %2461
      %2463 = vrot.lane.b32.xlu0 %v1205, 16
      %v2464 = vpop.permute.xlu0 %2463
      %2465 = vrot.lane.b32.xlu0 %v1206, 16
      %v2466 = vpop.permute.xlu0 %2465
      %2467 = vrot.lane.b32.xlu0 %v1207, 16
      %v2468 = vpop.permute.xlu0 %2467
      %2469 = vrot.lane.b32.xlu0 %v1208, 16
      %v2470 = vpop.permute.xlu0 %2469
      %2471 = vrot.lane.b32.xlu0 %v1209, 16
      %v2472 = vpop.permute.xlu0 %2471
      %2473 = vrot.lane.b32.xlu0 %v1210, 16
      %v2474 = vpop.permute.xlu0 %2473
      %2475 = vrot.lane.b32.xlu0 %v1211, 16
      %v2476 = vpop.permute.xlu0 %2475
      %2477 = vrot.lane.b32.xlu0 %v1212, 16
      %v2478 = vpop.permute.xlu0 %2477
      %2479 = vrot.lane.b32.xlu0 %v1213, 16
      %v2480 = vpop.permute.xlu0 %2479
      %2481 = vrot.lane.b32.xlu0 %v1214, 16
      %v2482 = vpop.permute.xlu0 %2481
      %2483 = vrot.lane.b32.xlu0 %v1215, 16
      %v2484 = vpop.permute.xlu0 %2483
      %2485 = vrot.lane.b32.xlu0 %v1216, 16
      %v2486 = vpop.permute.xlu0 %2485
      %2487 = vrot.lane.b32.xlu0 %v1217, 16
      %v2488 = vpop.permute.xlu0 %2487
      %2489 = vrot.lane.b32.xlu0 %v1218, 16
      %v2490 = vpop.permute.xlu0 %2489
      %2491 = vrot.lane.b32.xlu0 %v1219, 16
      %v2492 = vpop.permute.xlu0 %2491
      %2493 = vrot.lane.b32.xlu0 %v1220, 16
      %v2494 = vpop.permute.xlu0 %2493
      %2495 = vrot.lane.b32.xlu0 %v1221, 16
      %v2496 = vpop.permute.xlu0 %2495
      %2497 = vrot.lane.b32.xlu0 %v1222, 16
      %v2498 = vpop.permute.xlu0 %2497
      %2499 = vrot.lane.b32.xlu0 %v1223, 16
      %v2500 = vpop.permute.xlu0 %2499
      %2501 = vrot.lane.b32.xlu0 %v1224, 16
      %v2502 = vpop.permute.xlu0 %2501
      %2503 = vrot.lane.b32.xlu0 %v1225, 16
      %v2504 = vpop.permute.xlu0 %2503
      %2505 = vrot.lane.b32.xlu0 %v1226, 16
      %v2506 = vpop.permute.xlu0 %2505
      %2507 = vrot.lane.b32.xlu0 %v1227, 16
      %v2508 = vpop.permute.xlu0 %2507
      %2765 = vrot.lane.b32.xlu0 %v1228, 32
      %v2766 = vpop.permute.xlu0 %2765
      %2767 = vrot.lane.b32.xlu0 %v1229, 32
      %v2768 = vpop.permute.xlu0 %2767
      %2769 = vrot.lane.b32.xlu0 %v1230, 32
      %v2770 = vpop.permute.xlu0 %2769
      %2771 = vrot.lane.b32.xlu0 %v1231, 32
      %v2772 = vpop.permute.xlu0 %2771
      %2773 = vrot.lane.b32.xlu0 %v1232, 32
      %v2774 = vpop.permute.xlu0 %2773
      %2775 = vrot.lane.b32.xlu0 %v1233, 32
      %v2776 = vpop.permute.xlu0 %2775
      %2777 = vrot.lane.b32.xlu0 %v1234, 32
      %v2778 = vpop.permute.xlu0 %2777
      %2779 = vrot.lane.b32.xlu0 %v1235, 32
      %v2780 = vpop.permute.xlu0 %2779
      %2781 = vrot.lane.b32.xlu0 %v1236, 32
      %v2782 = vpop.permute.xlu0 %2781
      %2783 = vrot.lane.b32.xlu0 %v1237, 32
      %v2784 = vpop.permute.xlu0 %2783
      %2785 = vrot.lane.b32.xlu0 %v1238, 32
      %v2786 = vpop.permute.xlu0 %2785
      %2787 = vrot.lane.b32.xlu0 %v1239, 32
      %v2788 = vpop.permute.xlu0 %2787
      %2789 = vrot.lane.b32.xlu0 %v1240, 32
      %v2790 = vpop.permute.xlu0 %2789
      %2791 = vrot.lane.b32.xlu0 %v1241, 32
      %v2792 = vpop.permute.xlu0 %2791
      %2793 = vrot.lane.b32.xlu0 %v1242, 32
      %v2794 = vpop.permute.xlu0 %2793
      %2795 = vrot.lane.b32.xlu0 %v1243, 32
      %v2796 = vpop.permute.xlu0 %2795
      %2797 = vrot.lane.b32.xlu0 %v1244, 32
      %v2798 = vpop.permute.xlu0 %2797
      %2799 = vrot.lane.b32.xlu0 %v1245, 32
      %v2800 = vpop.permute.xlu0 %2799
      %2801 = vrot.lane.b32.xlu0 %v1246, 32
      %v2802 = vpop.permute.xlu0 %2801
      %2803 = vrot.lane.b32.xlu0 %v1247, 32
      %v2804 = vpop.permute.xlu0 %2803
      %2805 = vrot.lane.b32.xlu0 %v1248, 32
      %v2806 = vpop.permute.xlu0 %2805
      %2807 = vrot.lane.b32.xlu0 %v1249, 32
      %v2808 = vpop.permute.xlu0 %2807
      %2809 = vrot.lane.b32.xlu0 %v1250, 32
      %v2810 = vpop.permute.xlu0 %2809
      %2811 = vrot.lane.b32.xlu0 %v1251, 32
      %v2812 = vpop.permute.xlu0 %2811
      %2813 = vrot.lane.b32.xlu0 %v1252, 32
      %v2814 = vpop.permute.xlu0 %2813
      %2815 = vrot.lane.b32.xlu0 %v1253, 32
      %v2816 = vpop.permute.xlu0 %2815
      %2817 = vrot.lane.b32.xlu0 %v1254, 32
      %v2818 = vpop.permute.xlu0 %2817
      %2819 = vrot.lane.b32.xlu0 %v1255, 32
      %v2820 = vpop.permute.xlu0 %2819
      %2821 = vrot.lane.b32.xlu0 %v1256, 32
      %v2822 = vpop.permute.xlu0 %2821
      %2823 = vrot.lane.b32.xlu0 %v1257, 32
      %v2824 = vpop.permute.xlu0 %2823
      %2825 = vrot.lane.b32.xlu0 %v1258, 32
      %v2826 = vpop.permute.xlu0 %2825
      %2827 = vrot.lane.b32.xlu0 %v1259, 32
      %v2828 = vpop.permute.xlu0 %2827
      %2829 = vrot.lane.b32.xlu0 %v1260, 32
      %v2830 = vpop.permute.xlu0 %2829
      %2831 = vrot.lane.b32.xlu0 %v1261, 32
      %v2832 = vpop.permute.xlu0 %2831
      %2833 = vrot.lane.b32.xlu0 %v1262, 32
      %v2834 = vpop.permute.xlu0 %2833
      %2835 = vrot.lane.b32.xlu0 %v1263, 32
      %v2836 = vpop.permute.xlu0 %2835
      %2837 = vrot.lane.b32.xlu0 %v1264, 32
      %v2838 = vpop.permute.xlu0 %2837
      %2839 = vrot.lane.b32.xlu0 %v1265, 32
      %v2840 = vpop.permute.xlu0 %2839
      %2841 = vrot.lane.b32.xlu0 %v1266, 32
      %v2842 = vpop.permute.xlu0 %2841
      %2843 = vrot.lane.b32.xlu0 %v1267, 32
      %v2844 = vpop.permute.xlu0 %2843
      %2845 = vrot.lane.b32.xlu0 %v1268, 32
      %v2846 = vpop.permute.xlu0 %2845
      %2847 = vrot.lane.b32.xlu0 %v1269, 32
      %v2848 = vpop.permute.xlu0 %2847
      %2849 = vrot.lane.b32.xlu0 %v1270, 32
      %v2850 = vpop.permute.xlu0 %2849
      %2851 = vrot.lane.b32.xlu0 %v1271, 32
      %v2852 = vpop.permute.xlu0 %2851
      %2853 = vrot.lane.b32.xlu0 %v1272, 32
      %v2854 = vpop.permute.xlu0 %2853
      %2855 = vrot.lane.b32.xlu0 %v1273, 32
      %v2856 = vpop.permute.xlu0 %2855
      %2857 = vrot.lane.b32.xlu0 %v1274, 32
      %v2858 = vpop.permute.xlu0 %2857
      %2859 = vrot.lane.b32.xlu0 %v1275, 32
      %v2860 = vpop.permute.xlu0 %2859
      %2861 = vrot.lane.b32.xlu0 %v1276, 32
      %v2862 = vpop.permute.xlu0 %2861
      %2863 = vrot.lane.b32.xlu0 %v1277, 32
      %v2864 = vpop.permute.xlu0 %2863
      %2865 = vrot.lane.b32.xlu0 %v1278, 32
      %v2866 = vpop.permute.xlu0 %2865
      %2867 = vrot.lane.b32.xlu0 %v1279, 32
      %v2868 = vpop.permute.xlu0 %2867
      %2869 = vrot.lane.b32.xlu0 %v1280, 32
      %v2870 = vpop.permute.xlu0 %2869
      %2871 = vrot.lane.b32.xlu0 %v1281, 32
      %v2872 = vpop.permute.xlu0 %2871
      %2873 = vrot.lane.b32.xlu0 %v1282, 32
      %v2874 = vpop.permute.xlu0 %2873
      %2875 = vrot.lane.b32.xlu0 %v1283, 32
      %v2876 = vpop.permute.xlu0 %2875
      %2877 = vrot.lane.b32.xlu0 %v1284, 32
      %v2878 = vpop.permute.xlu0 %2877
      %2879 = vrot.lane.b32.xlu0 %v1285, 32
      %v2880 = vpop.permute.xlu0 %2879
      %2881 = vrot.lane.b32.xlu0 %v1286, 32
      %v2882 = vpop.permute.xlu0 %2881
      %2883 = vrot.lane.b32.xlu0 %v1287, 32
      %v2884 = vpop.permute.xlu0 %2883
      %2885 = vrot.lane.b32.xlu0 %v1288, 32
      %v2886 = vpop.permute.xlu0 %2885
      %2887 = vrot.lane.b32.xlu0 %v1289, 32
      %v2888 = vpop.permute.xlu0 %2887
      %2889 = vrot.lane.b32.xlu0 %v1290, 32
      %v2890 = vpop.permute.xlu0 %2889
      %2891 = vrot.lane.b32.xlu0 %v1291, 32
      %v2892 = vpop.permute.xlu0 %2891
      %2893 = vrot.lane.b32.xlu0 %v1292, 32
      %v2894 = vpop.permute.xlu0 %2893
      %2895 = vrot.lane.b32.xlu0 %v1293, 32
      %v2896 = vpop.permute.xlu0 %2895
      %2897 = vrot.lane.b32.xlu0 %v1294, 32
      %v2898 = vpop.permute.xlu0 %2897
      %2899 = vrot.lane.b32.xlu0 %v1295, 32
      %v2900 = vpop.permute.xlu0 %2899
      %2901 = vrot.lane.b32.xlu0 %v1296, 32
      %v2902 = vpop.permute.xlu0 %2901
      %2903 = vrot.lane.b32.xlu0 %v1297, 32
      %v2904 = vpop.permute.xlu0 %2903
      %2905 = vrot.lane.b32.xlu0 %v1298, 32
      %v2906 = vpop.permute.xlu0 %2905
      %2907 = vrot.lane.b32.xlu0 %v1299, 32
      %v2908 = vpop.permute.xlu0 %2907
      %2909 = vrot.lane.b32.xlu0 %v1300, 32
      %v2910 = vpop.permute.xlu0 %2909
      %2911 = vrot.lane.b32.xlu0 %v1301, 32
      %v2912 = vpop.permute.xlu0 %2911
      %2913 = vrot.lane.b32.xlu0 %v1302, 32
      %v2914 = vpop.permute.xlu0 %2913
      %2915 = vrot.lane.b32.xlu0 %v1303, 32
      %v2916 = vpop.permute.xlu0 %2915
      %2917 = vrot.lane.b32.xlu0 %v1304, 32
      %v2918 = vpop.permute.xlu0 %2917
      %2919 = vrot.lane.b32.xlu0 %v1305, 32
      %v2920 = vpop.permute.xlu0 %2919
      %2921 = vrot.lane.b32.xlu0 %v1306, 32
      %v2922 = vpop.permute.xlu0 %2921
      %2923 = vrot.lane.b32.xlu0 %v1307, 32
      %v2924 = vpop.permute.xlu0 %2923
      %2925 = vrot.lane.b32.xlu0 %v1308, 32
      %v2926 = vpop.permute.xlu0 %2925
      %2927 = vrot.lane.b32.xlu0 %v1309, 32
      %v2928 = vpop.permute.xlu0 %2927
      %2929 = vrot.lane.b32.xlu0 %v1310, 32
      %v2930 = vpop.permute.xlu0 %2929
      %2931 = vrot.lane.b32.xlu0 %v1311, 32
      %v2932 = vpop.permute.xlu0 %2931
      %2933 = vrot.lane.b32.xlu0 %v1312, 32
      %v2934 = vpop.permute.xlu0 %2933
      %2935 = vrot.lane.b32.xlu0 %v1313, 32
      %v2936 = vpop.permute.xlu0 %2935
      %2937 = vrot.lane.b32.xlu0 %v1314, 32
      %v2938 = vpop.permute.xlu0 %2937
      %2939 = vrot.lane.b32.xlu0 %v1315, 32
      %v2940 = vpop.permute.xlu0 %2939
      %2941 = vrot.lane.b32.xlu0 %v1316, 32
      %v2942 = vpop.permute.xlu0 %2941
      %2943 = vrot.lane.b32.xlu0 %v1317, 32
      %v2944 = vpop.permute.xlu0 %2943
      %2945 = vrot.lane.b32.xlu0 %v1318, 32
      %v2946 = vpop.permute.xlu0 %2945
      %2947 = vrot.lane.b32.xlu0 %v1319, 32
      %v2948 = vpop.permute.xlu0 %2947
      %2949 = vrot.lane.b32.xlu0 %v1320, 32
      %v2950 = vpop.permute.xlu0 %2949
      %2951 = vrot.lane.b32.xlu0 %v1321, 32
      %v2952 = vpop.permute.xlu0 %2951
      %2953 = vrot.lane.b32.xlu0 %v1322, 32
      %v2954 = vpop.permute.xlu0 %2953
      %2955 = vrot.lane.b32.xlu0 %v1323, 32
      %v2956 = vpop.permute.xlu0 %2955
      %2957 = vrot.lane.b32.xlu0 %v1324, 32
      %v2958 = vpop.permute.xlu0 %2957
      %2959 = vrot.lane.b32.xlu0 %v1325, 32
      %v2960 = vpop.permute.xlu0 %2959
      %2961 = vrot.lane.b32.xlu0 %v1326, 32
      %v2962 = vpop.permute.xlu0 %2961
      %2963 = vrot.lane.b32.xlu0 %v1327, 32
      %v2964 = vpop.permute.xlu0 %2963
      %2965 = vrot.lane.b32.xlu0 %v1328, 32
      %v2966 = vpop.permute.xlu0 %2965
      %2967 = vrot.lane.b32.xlu0 %v1329, 32
      %v2968 = vpop.permute.xlu0 %2967
      %2969 = vrot.lane.b32.xlu0 %v1330, 32
      %v2970 = vpop.permute.xlu0 %2969
      %2971 = vrot.lane.b32.xlu0 %v1331, 32
      %v2972 = vpop.permute.xlu0 %2971
      %2973 = vrot.lane.b32.xlu0 %v1332, 32
      %v2974 = vpop.permute.xlu0 %2973
      %2975 = vrot.lane.b32.xlu0 %v1333, 32
      %v2976 = vpop.permute.xlu0 %2975
      %2977 = vrot.lane.b32.xlu0 %v1334, 32
      %v2978 = vpop.permute.xlu0 %2977
      %2979 = vrot.lane.b32.xlu0 %v1335, 32
      %v2980 = vpop.permute.xlu0 %2979
      %2981 = vrot.lane.b32.xlu0 %v1336, 32
      %v2982 = vpop.permute.xlu0 %2981
      %2983 = vrot.lane.b32.xlu0 %v1337, 32
      %v2984 = vpop.permute.xlu0 %2983
      %2985 = vrot.lane.b32.xlu0 %v1338, 32
      %v2986 = vpop.permute.xlu0 %2985
      %2987 = vrot.lane.b32.xlu0 %v1339, 32
      %v2988 = vpop.permute.xlu0 %2987
      %2989 = vrot.lane.b32.xlu0 %v1340, 32
      %v2990 = vpop.permute.xlu0 %2989
      %2991 = vrot.lane.b32.xlu0 %v1341, 32
      %v2992 = vpop.permute.xlu0 %2991
      %2993 = vrot.lane.b32.xlu0 %v1342, 32
      %v2994 = vpop.permute.xlu0 %2993
      %2995 = vrot.lane.b32.xlu0 %v1343, 32
      %v2996 = vpop.permute.xlu0 %2995
      %2997 = vrot.lane.b32.xlu0 %v1344, 32
      %v2998 = vpop.permute.xlu0 %2997
      %2999 = vrot.lane.b32.xlu0 %v1345, 32
      %v3000 = vpop.permute.xlu0 %2999
      %3001 = vrot.lane.b32.xlu0 %v1346, 32
      %v3002 = vpop.permute.xlu0 %3001
      %3003 = vrot.lane.b32.xlu0 %v1347, 32
      %v3004 = vpop.permute.xlu0 %3003
      %3005 = vrot.lane.b32.xlu0 %v1348, 32
      %v3006 = vpop.permute.xlu0 %3005
      %3007 = vrot.lane.b32.xlu0 %v1349, 32
      %v3008 = vpop.permute.xlu0 %3007
      %3009 = vrot.lane.b32.xlu0 %v1350, 32
      %v3010 = vpop.permute.xlu0 %3009
      %3011 = vrot.lane.b32.xlu0 %v1351, 32
      %v3012 = vpop.permute.xlu0 %3011
      %3013 = vrot.lane.b32.xlu0 %v1352, 32
      %v3014 = vpop.permute.xlu0 %3013
      %3015 = vrot.lane.b32.xlu0 %v1353, 32
      %v3016 = vpop.permute.xlu0 %3015
      %3017 = vrot.lane.b32.xlu0 %v1354, 32
      %v3018 = vpop.permute.xlu0 %3017
      %3019 = vrot.lane.b32.xlu0 %v1355, 32
      %v3020 = vpop.permute.xlu0 %3019
      %3277 = vrot.lane.b32.xlu0 %v1356, 48
      %v3278 = vpop.permute.xlu0 %3277
      %3279 = vrot.lane.b32.xlu0 %v1357, 48
      %v3280 = vpop.permute.xlu0 %3279
      %3281 = vrot.lane.b32.xlu0 %v1358, 48
      %v3282 = vpop.permute.xlu0 %3281
      %3283 = vrot.lane.b32.xlu0 %v1359, 48
      %v3284 = vpop.permute.xlu0 %3283
      %3285 = vrot.lane.b32.xlu0 %v1360, 48
      %v3286 = vpop.permute.xlu0 %3285
      %3287 = vrot.lane.b32.xlu0 %v1361, 48
      %v3288 = vpop.permute.xlu0 %3287
      %3289 = vrot.lane.b32.xlu0 %v1362, 48
      %v3290 = vpop.permute.xlu0 %3289
      %3291 = vrot.lane.b32.xlu0 %v1363, 48
      %v3292 = vpop.permute.xlu0 %3291
      %3293 = vrot.lane.b32.xlu0 %v1364, 48
      %v3294 = vpop.permute.xlu0 %3293
      %3295 = vrot.lane.b32.xlu0 %v1365, 48
      %v3296 = vpop.permute.xlu0 %3295
      %3297 = vrot.lane.b32.xlu0 %v1366, 48
      %v3298 = vpop.permute.xlu0 %3297
      %3299 = vrot.lane.b32.xlu0 %v1367, 48
      %v3300 = vpop.permute.xlu0 %3299
      %3301 = vrot.lane.b32.xlu0 %v1368, 48
      %v3302 = vpop.permute.xlu0 %3301
      %3303 = vrot.lane.b32.xlu0 %v1369, 48
      %v3304 = vpop.permute.xlu0 %3303
      %3305 = vrot.lane.b32.xlu0 %v1370, 48
      %v3306 = vpop.permute.xlu0 %3305
      %3307 = vrot.lane.b32.xlu0 %v1371, 48
      %v3308 = vpop.permute.xlu0 %3307
      %3309 = vrot.lane.b32.xlu0 %v1372, 48
      %v3310 = vpop.permute.xlu0 %3309
      %3311 = vrot.lane.b32.xlu0 %v1373, 48
      %v3312 = vpop.permute.xlu0 %3311
      %3313 = vrot.lane.b32.xlu0 %v1374, 48
      %v3314 = vpop.permute.xlu0 %3313
      %3315 = vrot.lane.b32.xlu0 %v1375, 48
      %v3316 = vpop.permute.xlu0 %3315
      %3317 = vrot.lane.b32.xlu0 %v1376, 48
      %v3318 = vpop.permute.xlu0 %3317
      %3319 = vrot.lane.b32.xlu0 %v1377, 48
      %v3320 = vpop.permute.xlu0 %3319
      %3321 = vrot.lane.b32.xlu0 %v1378, 48
      %v3322 = vpop.permute.xlu0 %3321
      %3323 = vrot.lane.b32.xlu0 %v1379, 48
      %v3324 = vpop.permute.xlu0 %3323
      %3325 = vrot.lane.b32.xlu0 %v1380, 48
      %v3326 = vpop.permute.xlu0 %3325
      %3327 = vrot.lane.b32.xlu0 %v1381, 48
      %v3328 = vpop.permute.xlu0 %3327
      %3329 = vrot.lane.b32.xlu0 %v1382, 48
      %v3330 = vpop.permute.xlu0 %3329
      %3331 = vrot.lane.b32.xlu0 %v1383, 48
      %v3332 = vpop.permute.xlu0 %3331
      %3333 = vrot.lane.b32.xlu0 %v1384, 48
      %v3334 = vpop.permute.xlu0 %3333
      %3335 = vrot.lane.b32.xlu0 %v1385, 48
      %v3336 = vpop.permute.xlu0 %3335
      %3337 = vrot.lane.b32.xlu0 %v1386, 48
      %v3338 = vpop.permute.xlu0 %3337
      %3339 = vrot.lane.b32.xlu0 %v1387, 48
      %v3340 = vpop.permute.xlu0 %3339
      %3341 = vrot.lane.b32.xlu0 %v1388, 48
      %v3342 = vpop.permute.xlu0 %3341
      %3343 = vrot.lane.b32.xlu0 %v1389, 48
      %v3344 = vpop.permute.xlu0 %3343
      %3345 = vrot.lane.b32.xlu0 %v1390, 48
      %v3346 = vpop.permute.xlu0 %3345
      %3347 = vrot.lane.b32.xlu0 %v1391, 48
      %v3348 = vpop.permute.xlu0 %3347
      %3349 = vrot.lane.b32.xlu0 %v1392, 48
      %v3350 = vpop.permute.xlu0 %3349
      %3351 = vrot.lane.b32.xlu0 %v1393, 48
      %v3352 = vpop.permute.xlu0 %3351
      %3353 = vrot.lane.b32.xlu0 %v1394, 48
      %v3354 = vpop.permute.xlu0 %3353
      %3355 = vrot.lane.b32.xlu0 %v1395, 48
      %v3356 = vpop.permute.xlu0 %3355
      %3357 = vrot.lane.b32.xlu0 %v1396, 48
      %v3358 = vpop.permute.xlu0 %3357
      %3359 = vrot.lane.b32.xlu0 %v1397, 48
      %v3360 = vpop.permute.xlu0 %3359
      %3361 = vrot.lane.b32.xlu0 %v1398, 48
      %v3362 = vpop.permute.xlu0 %3361
      %3363 = vrot.lane.b32.xlu0 %v1399, 48
      %v3364 = vpop.permute.xlu0 %3363
      %3365 = vrot.lane.b32.xlu0 %v1400, 48
      %v3366 = vpop.permute.xlu0 %3365
      %3367 = vrot.lane.b32.xlu0 %v1401, 48
      %v3368 = vpop.permute.xlu0 %3367
      %3369 = vrot.lane.b32.xlu0 %v1402, 48
      %v3370 = vpop.permute.xlu0 %3369
      %3371 = vrot.lane.b32.xlu0 %v1403, 48
      %v3372 = vpop.permute.xlu0 %3371
      %3373 = vrot.lane.b32.xlu0 %v1404, 48
      %v3374 = vpop.permute.xlu0 %3373
      %3375 = vrot.lane.b32.xlu0 %v1405, 48
      %v3376 = vpop.permute.xlu0 %3375
      %3377 = vrot.lane.b32.xlu0 %v1406, 48
      %v3378 = vpop.permute.xlu0 %3377
      %3379 = vrot.lane.b32.xlu0 %v1407, 48
      %v3380 = vpop.permute.xlu0 %3379
      %3381 = vrot.lane.b32.xlu0 %v1408, 48
      %v3382 = vpop.permute.xlu0 %3381
      %3383 = vrot.lane.b32.xlu0 %v1409, 48
      %v3384 = vpop.permute.xlu0 %3383
      %3385 = vrot.lane.b32.xlu0 %v1410, 48
      %v3386 = vpop.permute.xlu0 %3385
      %3387 = vrot.lane.b32.xlu0 %v1411, 48
      %v3388 = vpop.permute.xlu0 %3387
      %3389 = vrot.lane.b32.xlu0 %v1412, 48
      %v3390 = vpop.permute.xlu0 %3389
      %3391 = vrot.lane.b32.xlu0 %v1413, 48
      %v3392 = vpop.permute.xlu0 %3391
      %3393 = vrot.lane.b32.xlu0 %v1414, 48
      %v3394 = vpop.permute.xlu0 %3393
      %3395 = vrot.lane.b32.xlu0 %v1415, 48
      %v3396 = vpop.permute.xlu0 %3395
      %3397 = vrot.lane.b32.xlu0 %v1416, 48
      %v3398 = vpop.permute.xlu0 %3397
      %3399 = vrot.lane.b32.xlu0 %v1417, 48
      %v3400 = vpop.permute.xlu0 %3399
      %3401 = vrot.lane.b32.xlu0 %v1418, 48
      %v3402 = vpop.permute.xlu0 %3401
      %3403 = vrot.lane.b32.xlu0 %v1419, 48
      %v3404 = vpop.permute.xlu0 %3403
      %3405 = vrot.lane.b32.xlu0 %v1420, 48
      %v3406 = vpop.permute.xlu0 %3405
      %3407 = vrot.lane.b32.xlu0 %v1421, 48
      %v3408 = vpop.permute.xlu0 %3407
      %3409 = vrot.lane.b32.xlu0 %v1422, 48
      %v3410 = vpop.permute.xlu0 %3409
      %3411 = vrot.lane.b32.xlu0 %v1423, 48
      %v3412 = vpop.permute.xlu0 %3411
      %3413 = vrot.lane.b32.xlu0 %v1424, 48
      %v3414 = vpop.permute.xlu0 %3413
      %3415 = vrot.lane.b32.xlu0 %v1425, 48
      %v3416 = vpop.permute.xlu0 %3415
      %3417 = vrot.lane.b32.xlu0 %v1426, 48
      %v3418 = vpop.permute.xlu0 %3417
      %3419 = vrot.lane.b32.xlu0 %v1427, 48
      %v3420 = vpop.permute.xlu0 %3419
      %3421 = vrot.lane.b32.xlu0 %v1428, 48
      %v3422 = vpop.permute.xlu0 %3421
      %3423 = vrot.lane.b32.xlu0 %v1429, 48
      %v3424 = vpop.permute.xlu0 %3423
      %3425 = vrot.lane.b32.xlu0 %v1430, 48
      %v3426 = vpop.permute.xlu0 %3425
      %3427 = vrot.lane.b32.xlu0 %v1431, 48
      %v3428 = vpop.permute.xlu0 %3427
      %3429 = vrot.lane.b32.xlu0 %v1432, 48
      %v3430 = vpop.permute.xlu0 %3429
      %3431 = vrot.lane.b32.xlu0 %v1433, 48
      %v3432 = vpop.permute.xlu0 %3431
      %3433 = vrot.lane.b32.xlu0 %v1434, 48
      %v3434 = vpop.permute.xlu0 %3433
      %3435 = vrot.lane.b32.xlu0 %v1435, 48
      %v3436 = vpop.permute.xlu0 %3435
      %3437 = vrot.lane.b32.xlu0 %v1436, 48
      %v3438 = vpop.permute.xlu0 %3437
      %3439 = vrot.lane.b32.xlu0 %v1437, 48
      %v3440 = vpop.permute.xlu0 %3439
      %3441 = vrot.lane.b32.xlu0 %v1438, 48
      %v3442 = vpop.permute.xlu0 %3441
      %3443 = vrot.lane.b32.xlu0 %v1439, 48
      %v3444 = vpop.permute.xlu0 %3443
      %3445 = vrot.lane.b32.xlu0 %v1440, 48
      %v3446 = vpop.permute.xlu0 %3445
      %3447 = vrot.lane.b32.xlu0 %v1441, 48
      %v3448 = vpop.permute.xlu0 %3447
      %3449 = vrot.lane.b32.xlu0 %v1442, 48
      %v3450 = vpop.permute.xlu0 %3449
      %3451 = vrot.lane.b32.xlu0 %v1443, 48
      %v3452 = vpop.permute.xlu0 %3451
      %3453 = vrot.lane.b32.xlu0 %v1444, 48
      %v3454 = vpop.permute.xlu0 %3453
      %3455 = vrot.lane.b32.xlu0 %v1445, 48
      %v3456 = vpop.permute.xlu0 %3455
      %3457 = vrot.lane.b32.xlu0 %v1446, 48
      %v3458 = vpop.permute.xlu0 %3457
      %3459 = vrot.lane.b32.xlu0 %v1447, 48
      %v3460 = vpop.permute.xlu0 %3459
      %3461 = vrot.lane.b32.xlu0 %v1448, 48
      %v3462 = vpop.permute.xlu0 %3461
      %3463 = vrot.lane.b32.xlu0 %v1449, 48
      %v3464 = vpop.permute.xlu0 %3463
      %3465 = vrot.lane.b32.xlu0 %v1450, 48
      %v3466 = vpop.permute.xlu0 %3465
      %3467 = vrot.lane.b32.xlu0 %v1451, 48
      %v3468 = vpop.permute.xlu0 %3467
      %3469 = vrot.lane.b32.xlu0 %v1452, 48
      %v3470 = vpop.permute.xlu0 %3469
      %3471 = vrot.lane.b32.xlu0 %v1453, 48
      %v3472 = vpop.permute.xlu0 %3471
      %3473 = vrot.lane.b32.xlu0 %v1454, 48
      %v3474 = vpop.permute.xlu0 %3473
      %3475 = vrot.lane.b32.xlu0 %v1455, 48
      %v3476 = vpop.permute.xlu0 %3475
      %3477 = vrot.lane.b32.xlu0 %v1456, 48
      %v3478 = vpop.permute.xlu0 %3477
      %3479 = vrot.lane.b32.xlu0 %v1457, 48
      %v3480 = vpop.permute.xlu0 %3479
      %3481 = vrot.lane.b32.xlu0 %v1458, 48
      %v3482 = vpop.permute.xlu0 %3481
      %3483 = vrot.lane.b32.xlu0 %v1459, 48
      %v3484 = vpop.permute.xlu0 %3483
      %3485 = vrot.lane.b32.xlu0 %v1460, 48
      %v3486 = vpop.permute.xlu0 %3485
      %3487 = vrot.lane.b32.xlu0 %v1461, 48
      %v3488 = vpop.permute.xlu0 %3487
      %3489 = vrot.lane.b32.xlu0 %v1462, 48
      %v3490 = vpop.permute.xlu0 %3489
      %3491 = vrot.lane.b32.xlu0 %v1463, 48
      %v3492 = vpop.permute.xlu0 %3491
      %3493 = vrot.lane.b32.xlu0 %v1464, 48
      %v3494 = vpop.permute.xlu0 %3493
      %3495 = vrot.lane.b32.xlu0 %v1465, 48
      %v3496 = vpop.permute.xlu0 %3495
      %3497 = vrot.lane.b32.xlu0 %v1466, 48
      %v3498 = vpop.permute.xlu0 %3497
      %3499 = vrot.lane.b32.xlu0 %v1467, 48
      %v3500 = vpop.permute.xlu0 %3499
      %3501 = vrot.lane.b32.xlu0 %v1468, 48
      %v3502 = vpop.permute.xlu0 %3501
      %3503 = vrot.lane.b32.xlu0 %v1469, 48
      %v3504 = vpop.permute.xlu0 %3503
      %3505 = vrot.lane.b32.xlu0 %v1470, 48
      %v3506 = vpop.permute.xlu0 %3505
      %3507 = vrot.lane.b32.xlu0 %v1471, 48
      %v3508 = vpop.permute.xlu0 %3507
      %3509 = vrot.lane.b32.xlu0 %v1472, 48
      %v3510 = vpop.permute.xlu0 %3509
      %3511 = vrot.lane.b32.xlu0 %v1473, 48
      %v3512 = vpop.permute.xlu0 %3511
      %3513 = vrot.lane.b32.xlu0 %v1474, 48
      %v3514 = vpop.permute.xlu0 %3513
      %3515 = vrot.lane.b32.xlu0 %v1475, 48
      %v3516 = vpop.permute.xlu0 %3515
      %3517 = vrot.lane.b32.xlu0 %v1476, 48
      %v3518 = vpop.permute.xlu0 %3517
      %3519 = vrot.lane.b32.xlu0 %v1477, 48
      %v3520 = vpop.permute.xlu0 %3519
      %3521 = vrot.lane.b32.xlu0 %v1478, 48
      %v3522 = vpop.permute.xlu0 %3521
      %3523 = vrot.lane.b32.xlu0 %v1479, 48
      %v3524 = vpop.permute.xlu0 %3523
      %3525 = vrot.lane.b32.xlu0 %v1480, 48
      %v3526 = vpop.permute.xlu0 %3525
      %3527 = vrot.lane.b32.xlu0 %v1481, 48
      %v3528 = vpop.permute.xlu0 %3527
      %3529 = vrot.lane.b32.xlu0 %v1482, 48
      %v3530 = vpop.permute.xlu0 %3529
      %3531 = vrot.lane.b32.xlu0 %v1483, 48
      %v3532 = vpop.permute.xlu0 %3531
      %3789 = vrot.lane.b32.xlu0 %v1484, 64
      %v3790 = vpop.permute.xlu0 %3789
      %3791 = vrot.lane.b32.xlu0 %v1485, 64
      %v3792 = vpop.permute.xlu0 %3791
      %3793 = vrot.lane.b32.xlu0 %v1486, 64
      %v3794 = vpop.permute.xlu0 %3793
      %3795 = vrot.lane.b32.xlu0 %v1487, 64
      %v3796 = vpop.permute.xlu0 %3795
      %3797 = vrot.lane.b32.xlu0 %v1488, 64
      %v3798 = vpop.permute.xlu0 %3797
      %3799 = vrot.lane.b32.xlu0 %v1489, 64
      %v3800 = vpop.permute.xlu0 %3799
      %3801 = vrot.lane.b32.xlu0 %v1490, 64
      %v3802 = vpop.permute.xlu0 %3801
      %3803 = vrot.lane.b32.xlu0 %v1491, 64
      %v3804 = vpop.permute.xlu0 %3803
      %3805 = vrot.lane.b32.xlu0 %v1492, 64
      %v3806 = vpop.permute.xlu0 %3805
      %3807 = vrot.lane.b32.xlu0 %v1493, 64
      %v3808 = vpop.permute.xlu0 %3807
      %3809 = vrot.lane.b32.xlu0 %v1494, 64
      %v3810 = vpop.permute.xlu0 %3809
      %3811 = vrot.lane.b32.xlu0 %v1495, 64
      %v3812 = vpop.permute.xlu0 %3811
      %3813 = vrot.lane.b32.xlu0 %v1496, 64
      %v3814 = vpop.permute.xlu0 %3813
      %3815 = vrot.lane.b32.xlu0 %v1497, 64
      %v3816 = vpop.permute.xlu0 %3815
      %3817 = vrot.lane.b32.xlu0 %v1498, 64
      %v3818 = vpop.permute.xlu0 %3817
      %3819 = vrot.lane.b32.xlu0 %v1499, 64
      %v3820 = vpop.permute.xlu0 %3819
      %3821 = vrot.lane.b32.xlu0 %v1500, 64
      %v3822 = vpop.permute.xlu0 %3821
      %3823 = vrot.lane.b32.xlu0 %v1501, 64
      %v3824 = vpop.permute.xlu0 %3823
      %3825 = vrot.lane.b32.xlu0 %v1502, 64
      %v3826 = vpop.permute.xlu0 %3825
      %3827 = vrot.lane.b32.xlu0 %v1503, 64
      %v3828 = vpop.permute.xlu0 %3827
      %3829 = vrot.lane.b32.xlu0 %v1504, 64
      %v3830 = vpop.permute.xlu0 %3829
      %3831 = vrot.lane.b32.xlu0 %v1505, 64
      %v3832 = vpop.permute.xlu0 %3831
      %3833 = vrot.lane.b32.xlu0 %v1506, 64
      %v3834 = vpop.permute.xlu0 %3833
      %3835 = vrot.lane.b32.xlu0 %v1507, 64
      %v3836 = vpop.permute.xlu0 %3835
      %3837 = vrot.lane.b32.xlu0 %v1508, 64
      %v3838 = vpop.permute.xlu0 %3837
      %3839 = vrot.lane.b32.xlu0 %v1509, 64
      %v3840 = vpop.permute.xlu0 %3839
      %3841 = vrot.lane.b32.xlu0 %v1510, 64
      %v3842 = vpop.permute.xlu0 %3841
      %3843 = vrot.lane.b32.xlu0 %v1511, 64
      %v3844 = vpop.permute.xlu0 %3843
      %3845 = vrot.lane.b32.xlu0 %v1512, 64
      %v3846 = vpop.permute.xlu0 %3845
      %3847 = vrot.lane.b32.xlu0 %v1513, 64
      %v3848 = vpop.permute.xlu0 %3847
      %3849 = vrot.lane.b32.xlu0 %v1514, 64
      %v3850 = vpop.permute.xlu0 %3849
      %3851 = vrot.lane.b32.xlu0 %v1515, 64
      %v3852 = vpop.permute.xlu0 %3851
      %3853 = vrot.lane.b32.xlu0 %v1516, 64
      %v3854 = vpop.permute.xlu0 %3853
      %3855 = vrot.lane.b32.xlu0 %v1517, 64
      %v3856 = vpop.permute.xlu0 %3855
      %3857 = vrot.lane.b32.xlu0 %v1518, 64
      %v3858 = vpop.permute.xlu0 %3857
      %3859 = vrot.lane.b32.xlu0 %v1519, 64
      %v3860 = vpop.permute.xlu0 %3859
      %3861 = vrot.lane.b32.xlu0 %v1520, 64
      %v3862 = vpop.permute.xlu0 %3861
      %3863 = vrot.lane.b32.xlu0 %v1521, 64
      %v3864 = vpop.permute.xlu0 %3863
      %3865 = vrot.lane.b32.xlu0 %v1522, 64
      %v3866 = vpop.permute.xlu0 %3865
      %3867 = vrot.lane.b32.xlu0 %v1523, 64
      %v3868 = vpop.permute.xlu0 %3867
      %3869 = vrot.lane.b32.xlu0 %v1524, 64
      %v3870 = vpop.permute.xlu0 %3869
      %3871 = vrot.lane.b32.xlu0 %v1525, 64
      %v3872 = vpop.permute.xlu0 %3871
      %3873 = vrot.lane.b32.xlu0 %v1526, 64
      %v3874 = vpop.permute.xlu0 %3873
      %3875 = vrot.lane.b32.xlu0 %v1527, 64
      %v3876 = vpop.permute.xlu0 %3875
      %3877 = vrot.lane.b32.xlu0 %v1528, 64
      %v3878 = vpop.permute.xlu0 %3877
      %3879 = vrot.lane.b32.xlu0 %v1529, 64
      %v3880 = vpop.permute.xlu0 %3879
      %3881 = vrot.lane.b32.xlu0 %v1530, 64
      %v3882 = vpop.permute.xlu0 %3881
      %3883 = vrot.lane.b32.xlu0 %v1531, 64
      %v3884 = vpop.permute.xlu0 %3883
      %3885 = vrot.lane.b32.xlu0 %v1532, 64
      %v3886 = vpop.permute.xlu0 %3885
      %3887 = vrot.lane.b32.xlu0 %v1533, 64
      %v3888 = vpop.permute.xlu0 %3887
      %3889 = vrot.lane.b32.xlu0 %v1534, 64
      %v3890 = vpop.permute.xlu0 %3889
      %3891 = vrot.lane.b32.xlu0 %v1535, 64
      %v3892 = vpop.permute.xlu0 %3891
      %3893 = vrot.lane.b32.xlu0 %v1536, 64
      %v3894 = vpop.permute.xlu0 %3893
      %3895 = vrot.lane.b32.xlu0 %v1537, 64
      %v3896 = vpop.permute.xlu0 %3895
      %3897 = vrot.lane.b32.xlu0 %v1538, 64
      %v3898 = vpop.permute.xlu0 %3897
      %3899 = vrot.lane.b32.xlu0 %v1539, 64
      %v3900 = vpop.permute.xlu0 %3899
      %3901 = vrot.lane.b32.xlu0 %v1540, 64
      %v3902 = vpop.permute.xlu0 %3901
      %3903 = vrot.lane.b32.xlu0 %v1541, 64
      %v3904 = vpop.permute.xlu0 %3903
      %3905 = vrot.lane.b32.xlu0 %v1542, 64
      %v3906 = vpop.permute.xlu0 %3905
      %3907 = vrot.lane.b32.xlu0 %v1543, 64
      %v3908 = vpop.permute.xlu0 %3907
      %3909 = vrot.lane.b32.xlu0 %v1544, 64
      %v3910 = vpop.permute.xlu0 %3909
      %3911 = vrot.lane.b32.xlu0 %v1545, 64
      %v3912 = vpop.permute.xlu0 %3911
      %3913 = vrot.lane.b32.xlu0 %v1546, 64
      %v3914 = vpop.permute.xlu0 %3913
      %3915 = vrot.lane.b32.xlu0 %v1547, 64
      %v3916 = vpop.permute.xlu0 %3915
      %3917 = vrot.lane.b32.xlu0 %v1548, 64
      %v3918 = vpop.permute.xlu0 %3917
      %3919 = vrot.lane.b32.xlu0 %v1549, 64
      %v3920 = vpop.permute.xlu0 %3919
      %3921 = vrot.lane.b32.xlu0 %v1550, 64
      %v3922 = vpop.permute.xlu0 %3921
      %3923 = vrot.lane.b32.xlu0 %v1551, 64
      %v3924 = vpop.permute.xlu0 %3923
      %3925 = vrot.lane.b32.xlu0 %v1552, 64
      %v3926 = vpop.permute.xlu0 %3925
      %3927 = vrot.lane.b32.xlu0 %v1553, 64
      %v3928 = vpop.permute.xlu0 %3927
      %3929 = vrot.lane.b32.xlu0 %v1554, 64
      %v3930 = vpop.permute.xlu0 %3929
      %3931 = vrot.lane.b32.xlu0 %v1555, 64
      %v3932 = vpop.permute.xlu0 %3931
      %3933 = vrot.lane.b32.xlu0 %v1556, 64
      %v3934 = vpop.permute.xlu0 %3933
      %3935 = vrot.lane.b32.xlu0 %v1557, 64
      %v3936 = vpop.permute.xlu0 %3935
      %3937 = vrot.lane.b32.xlu0 %v1558, 64
      %v3938 = vpop.permute.xlu0 %3937
      %3939 = vrot.lane.b32.xlu0 %v1559, 64
      %v3940 = vpop.permute.xlu0 %3939
      %3941 = vrot.lane.b32.xlu0 %v1560, 64
      %v3942 = vpop.permute.xlu0 %3941
      %3943 = vrot.lane.b32.xlu0 %v1561, 64
      %v3944 = vpop.permute.xlu0 %3943
      %3945 = vrot.lane.b32.xlu0 %v1562, 64
      %v3946 = vpop.permute.xlu0 %3945
      %3947 = vrot.lane.b32.xlu0 %v1563, 64
      %v3948 = vpop.permute.xlu0 %3947
      %3949 = vrot.lane.b32.xlu0 %v1564, 64
      %v3950 = vpop.permute.xlu0 %3949
      %3951 = vrot.lane.b32.xlu0 %v1565, 64
      %v3952 = vpop.permute.xlu0 %3951
      %3953 = vrot.lane.b32.xlu0 %v1566, 64
      %v3954 = vpop.permute.xlu0 %3953
      %3955 = vrot.lane.b32.xlu0 %v1567, 64
      %v3956 = vpop.permute.xlu0 %3955
      %3957 = vrot.lane.b32.xlu0 %v1568, 64
      %v3958 = vpop.permute.xlu0 %3957
      %3959 = vrot.lane.b32.xlu0 %v1569, 64
      %v3960 = vpop.permute.xlu0 %3959
      %3961 = vrot.lane.b32.xlu0 %v1570, 64
      %v3962 = vpop.permute.xlu0 %3961
      %3963 = vrot.lane.b32.xlu0 %v1571, 64
      %v3964 = vpop.permute.xlu0 %3963
      %3965 = vrot.lane.b32.xlu0 %v1572, 64
      %v3966 = vpop.permute.xlu0 %3965
      %3967 = vrot.lane.b32.xlu0 %v1573, 64
      %v3968 = vpop.permute.xlu0 %3967
      %3969 = vrot.lane.b32.xlu0 %v1574, 64
      %v3970 = vpop.permute.xlu0 %3969
      %3971 = vrot.lane.b32.xlu0 %v1575, 64
      %v3972 = vpop.permute.xlu0 %3971
      %3973 = vrot.lane.b32.xlu0 %v1576, 64
      %v3974 = vpop.permute.xlu0 %3973
      %3975 = vrot.lane.b32.xlu0 %v1577, 64
      %v3976 = vpop.permute.xlu0 %3975
      %3977 = vrot.lane.b32.xlu0 %v1578, 64
      %v3978 = vpop.permute.xlu0 %3977
      %3979 = vrot.lane.b32.xlu0 %v1579, 64
      %v3980 = vpop.permute.xlu0 %3979
      %3981 = vrot.lane.b32.xlu0 %v1580, 64
      %v3982 = vpop.permute.xlu0 %3981
      %3983 = vrot.lane.b32.xlu0 %v1581, 64
      %v3984 = vpop.permute.xlu0 %3983
      %3985 = vrot.lane.b32.xlu0 %v1582, 64
      %v3986 = vpop.permute.xlu0 %3985
      %3987 = vrot.lane.b32.xlu0 %v1583, 64
      %v3988 = vpop.permute.xlu0 %3987
      %3989 = vrot.lane.b32.xlu0 %v1584, 64
      %v3990 = vpop.permute.xlu0 %3989
      %3991 = vrot.lane.b32.xlu0 %v1585, 64
      %v3992 = vpop.permute.xlu0 %3991
      %3993 = vrot.lane.b32.xlu0 %v1586, 64
      %v3994 = vpop.permute.xlu0 %3993
      %3995 = vrot.lane.b32.xlu0 %v1587, 64
      %v3996 = vpop.permute.xlu0 %3995
      %3997 = vrot.lane.b32.xlu0 %v1588, 64
      %v3998 = vpop.permute.xlu0 %3997
      %3999 = vrot.lane.b32.xlu0 %v1589, 64
      %v4000 = vpop.permute.xlu0 %3999
      %4001 = vrot.lane.b32.xlu0 %v1590, 64
      %v4002 = vpop.permute.xlu0 %4001
      %4003 = vrot.lane.b32.xlu0 %v1591, 64
      %v4004 = vpop.permute.xlu0 %4003
      %4005 = vrot.lane.b32.xlu0 %v1592, 64
      %v4006 = vpop.permute.xlu0 %4005
      %4007 = vrot.lane.b32.xlu0 %v1593, 64
      %v4008 = vpop.permute.xlu0 %4007
      %4009 = vrot.lane.b32.xlu0 %v1594, 64
      %v4010 = vpop.permute.xlu0 %4009
      %4011 = vrot.lane.b32.xlu0 %v1595, 64
      %v4012 = vpop.permute.xlu0 %4011
      %4013 = vrot.lane.b32.xlu0 %v1596, 64
      %v4014 = vpop.permute.xlu0 %4013
      %4015 = vrot.lane.b32.xlu0 %v1597, 64
      %v4016 = vpop.permute.xlu0 %4015
      %4017 = vrot.lane.b32.xlu0 %v1598, 64
      %v4018 = vpop.permute.xlu0 %4017
      %4019 = vrot.lane.b32.xlu0 %v1599, 64
      %v4020 = vpop.permute.xlu0 %4019
      %4021 = vrot.lane.b32.xlu0 %v1600, 64
      %v4022 = vpop.permute.xlu0 %4021
      %4023 = vrot.lane.b32.xlu0 %v1601, 64
      %v4024 = vpop.permute.xlu0 %4023
      %4025 = vrot.lane.b32.xlu0 %v1602, 64
      %v4026 = vpop.permute.xlu0 %4025
      %4027 = vrot.lane.b32.xlu0 %v1603, 64
      %v4028 = vpop.permute.xlu0 %4027
      %4029 = vrot.lane.b32.xlu0 %v1604, 64
      %v4030 = vpop.permute.xlu0 %4029
      %4031 = vrot.lane.b32.xlu0 %v1605, 64
      %v4032 = vpop.permute.xlu0 %4031
      %4033 = vrot.lane.b32.xlu0 %v1606, 64
      %v4034 = vpop.permute.xlu0 %4033
      %4035 = vrot.lane.b32.xlu0 %v1607, 64
      %v4036 = vpop.permute.xlu0 %4035
      %4037 = vrot.lane.b32.xlu0 %v1608, 64
      %v4038 = vpop.permute.xlu0 %4037
      %4039 = vrot.lane.b32.xlu0 %v1609, 64
      %v4040 = vpop.permute.xlu0 %4039
      %4041 = vrot.lane.b32.xlu0 %v1610, 64
      %v4042 = vpop.permute.xlu0 %4041
      %4043 = vrot.lane.b32.xlu0 %v1611, 64
      %v4044 = vpop.permute.xlu0 %4043
      %4301 = vrot.lane.b32.xlu0 %v1612, 80
      %v4302 = vpop.permute.xlu0 %4301
      %4303 = vrot.lane.b32.xlu0 %v1613, 80
      %v4304 = vpop.permute.xlu0 %4303
      %4305 = vrot.lane.b32.xlu0 %v1614, 80
      %v4306 = vpop.permute.xlu0 %4305
      %4307 = vrot.lane.b32.xlu0 %v1615, 80
      %v4308 = vpop.permute.xlu0 %4307
      %4309 = vrot.lane.b32.xlu0 %v1616, 80
      %v4310 = vpop.permute.xlu0 %4309
      %4311 = vrot.lane.b32.xlu0 %v1617, 80
      %v4312 = vpop.permute.xlu0 %4311
      %4313 = vrot.lane.b32.xlu0 %v1618, 80
      %v4314 = vpop.permute.xlu0 %4313
      %4315 = vrot.lane.b32.xlu0 %v1619, 80
      %v4316 = vpop.permute.xlu0 %4315
      %4317 = vrot.lane.b32.xlu0 %v1620, 80
      %v4318 = vpop.permute.xlu0 %4317
      %4319 = vrot.lane.b32.xlu0 %v1621, 80
      %v4320 = vpop.permute.xlu0 %4319
      %4321 = vrot.lane.b32.xlu0 %v1622, 80
      %v4322 = vpop.permute.xlu0 %4321
      %4323 = vrot.lane.b32.xlu0 %v1623, 80
      %v4324 = vpop.permute.xlu0 %4323
      %4325 = vrot.lane.b32.xlu0 %v1624, 80
      %v4326 = vpop.permute.xlu0 %4325
      %4327 = vrot.lane.b32.xlu0 %v1625, 80
      %v4328 = vpop.permute.xlu0 %4327
      %4329 = vrot.lane.b32.xlu0 %v1626, 80
      %v4330 = vpop.permute.xlu0 %4329
      %4331 = vrot.lane.b32.xlu0 %v1627, 80
      %v4332 = vpop.permute.xlu0 %4331
      %4333 = vrot.lane.b32.xlu0 %v1628, 80
      %v4334 = vpop.permute.xlu0 %4333
      %4335 = vrot.lane.b32.xlu0 %v1629, 80
      %v4336 = vpop.permute.xlu0 %4335
      %4337 = vrot.lane.b32.xlu0 %v1630, 80
      %v4338 = vpop.permute.xlu0 %4337
      %4339 = vrot.lane.b32.xlu0 %v1631, 80
      %v4340 = vpop.permute.xlu0 %4339
      %4341 = vrot.lane.b32.xlu0 %v1632, 80
      %v4342 = vpop.permute.xlu0 %4341
      %4343 = vrot.lane.b32.xlu0 %v1633, 80
      %v4344 = vpop.permute.xlu0 %4343
      %4345 = vrot.lane.b32.xlu0 %v1634, 80
      %v4346 = vpop.permute.xlu0 %4345
      %4347 = vrot.lane.b32.xlu0 %v1635, 80
      %v4348 = vpop.permute.xlu0 %4347
      %4349 = vrot.lane.b32.xlu0 %v1636, 80
      %v4350 = vpop.permute.xlu0 %4349
      %4351 = vrot.lane.b32.xlu0 %v1637, 80
      %v4352 = vpop.permute.xlu0 %4351
      %4353 = vrot.lane.b32.xlu0 %v1638, 80
      %v4354 = vpop.permute.xlu0 %4353
      %4355 = vrot.lane.b32.xlu0 %v1639, 80
      %v4356 = vpop.permute.xlu0 %4355
      %4357 = vrot.lane.b32.xlu0 %v1640, 80
      %v4358 = vpop.permute.xlu0 %4357
      %4359 = vrot.lane.b32.xlu0 %v1641, 80
      %v4360 = vpop.permute.xlu0 %4359
      %4361 = vrot.lane.b32.xlu0 %v1642, 80
      %v4362 = vpop.permute.xlu0 %4361
      %4363 = vrot.lane.b32.xlu0 %v1643, 80
      %v4364 = vpop.permute.xlu0 %4363
      %4365 = vrot.lane.b32.xlu0 %v1644, 80
      %v4366 = vpop.permute.xlu0 %4365
      %4367 = vrot.lane.b32.xlu0 %v1645, 80
      %v4368 = vpop.permute.xlu0 %4367
      %4369 = vrot.lane.b32.xlu0 %v1646, 80
      %v4370 = vpop.permute.xlu0 %4369
      %4371 = vrot.lane.b32.xlu0 %v1647, 80
      %v4372 = vpop.permute.xlu0 %4371
      %4373 = vrot.lane.b32.xlu0 %v1648, 80
      %v4374 = vpop.permute.xlu0 %4373
      %4375 = vrot.lane.b32.xlu0 %v1649, 80
      %v4376 = vpop.permute.xlu0 %4375
      %4377 = vrot.lane.b32.xlu0 %v1650, 80
      %v4378 = vpop.permute.xlu0 %4377
      %4379 = vrot.lane.b32.xlu0 %v1651, 80
      %v4380 = vpop.permute.xlu0 %4379
      %4381 = vrot.lane.b32.xlu0 %v1652, 80
      %v4382 = vpop.permute.xlu0 %4381
      %4383 = vrot.lane.b32.xlu0 %v1653, 80
      %v4384 = vpop.permute.xlu0 %4383
      %4385 = vrot.lane.b32.xlu0 %v1654, 80
      %v4386 = vpop.permute.xlu0 %4385
      %4387 = vrot.lane.b32.xlu0 %v1655, 80
      %v4388 = vpop.permute.xlu0 %4387
      %4389 = vrot.lane.b32.xlu0 %v1656, 80
      %v4390 = vpop.permute.xlu0 %4389
      %4391 = vrot.lane.b32.xlu0 %v1657, 80
      %v4392 = vpop.permute.xlu0 %4391
      %4393 = vrot.lane.b32.xlu0 %v1658, 80
      %v4394 = vpop.permute.xlu0 %4393
      %4395 = vrot.lane.b32.xlu0 %v1659, 80
      %v4396 = vpop.permute.xlu0 %4395
      %4397 = vrot.lane.b32.xlu0 %v1660, 80
      %v4398 = vpop.permute.xlu0 %4397
      %4399 = vrot.lane.b32.xlu0 %v1661, 80
      %v4400 = vpop.permute.xlu0 %4399
      %4401 = vrot.lane.b32.xlu0 %v1662, 80
      %v4402 = vpop.permute.xlu0 %4401
      %4403 = vrot.lane.b32.xlu0 %v1663, 80
      %v4404 = vpop.permute.xlu0 %4403
      %4405 = vrot.lane.b32.xlu0 %v1664, 80
      %v4406 = vpop.permute.xlu0 %4405
      %4407 = vrot.lane.b32.xlu0 %v1665, 80
      %v4408 = vpop.permute.xlu0 %4407
      %4409 = vrot.lane.b32.xlu0 %v1666, 80
      %v4410 = vpop.permute.xlu0 %4409
      %4411 = vrot.lane.b32.xlu0 %v1667, 80
      %v4412 = vpop.permute.xlu0 %4411
      %4413 = vrot.lane.b32.xlu0 %v1668, 80
      %v4414 = vpop.permute.xlu0 %4413
      %4415 = vrot.lane.b32.xlu0 %v1669, 80
      %v4416 = vpop.permute.xlu0 %4415
      %4417 = vrot.lane.b32.xlu0 %v1670, 80
      %v4418 = vpop.permute.xlu0 %4417
      %4419 = vrot.lane.b32.xlu0 %v1671, 80
      %v4420 = vpop.permute.xlu0 %4419
      %4421 = vrot.lane.b32.xlu0 %v1672, 80
      %v4422 = vpop.permute.xlu0 %4421
      %4423 = vrot.lane.b32.xlu0 %v1673, 80
      %v4424 = vpop.permute.xlu0 %4423
      %4425 = vrot.lane.b32.xlu0 %v1674, 80
      %v4426 = vpop.permute.xlu0 %4425
      %4427 = vrot.lane.b32.xlu0 %v1675, 80
      %v4428 = vpop.permute.xlu0 %4427
      %4429 = vrot.lane.b32.xlu0 %v1676, 80
      %v4430 = vpop.permute.xlu0 %4429
      %4431 = vrot.lane.b32.xlu0 %v1677, 80
      %v4432 = vpop.permute.xlu0 %4431
      %4433 = vrot.lane.b32.xlu0 %v1678, 80
      %v4434 = vpop.permute.xlu0 %4433
      %4435 = vrot.lane.b32.xlu0 %v1679, 80
      %v4436 = vpop.permute.xlu0 %4435
      %4437 = vrot.lane.b32.xlu0 %v1680, 80
      %v4438 = vpop.permute.xlu0 %4437
      %4439 = vrot.lane.b32.xlu0 %v1681, 80
      %v4440 = vpop.permute.xlu0 %4439
      %4441 = vrot.lane.b32.xlu0 %v1682, 80
      %v4442 = vpop.permute.xlu0 %4441
      %4443 = vrot.lane.b32.xlu0 %v1683, 80
      %v4444 = vpop.permute.xlu0 %4443
      %4445 = vrot.lane.b32.xlu0 %v1684, 80
      %v4446 = vpop.permute.xlu0 %4445
      %4447 = vrot.lane.b32.xlu0 %v1685, 80
      %v4448 = vpop.permute.xlu0 %4447
      %4449 = vrot.lane.b32.xlu0 %v1686, 80
      %v4450 = vpop.permute.xlu0 %4449
      %4451 = vrot.lane.b32.xlu0 %v1687, 80
      %v4452 = vpop.permute.xlu0 %4451
      %4453 = vrot.lane.b32.xlu0 %v1688, 80
      %v4454 = vpop.permute.xlu0 %4453
      %4455 = vrot.lane.b32.xlu0 %v1689, 80
      %v4456 = vpop.permute.xlu0 %4455
      %4457 = vrot.lane.b32.xlu0 %v1690, 80
      %v4458 = vpop.permute.xlu0 %4457
      %4459 = vrot.lane.b32.xlu0 %v1691, 80
      %v4460 = vpop.permute.xlu0 %4459
      %4461 = vrot.lane.b32.xlu0 %v1692, 80
      %v4462 = vpop.permute.xlu0 %4461
      %4463 = vrot.lane.b32.xlu0 %v1693, 80
      %v4464 = vpop.permute.xlu0 %4463
      %4465 = vrot.lane.b32.xlu0 %v1694, 80
      %v4466 = vpop.permute.xlu0 %4465
      %4467 = vrot.lane.b32.xlu0 %v1695, 80
      %v4468 = vpop.permute.xlu0 %4467
      %4469 = vrot.lane.b32.xlu0 %v1696, 80
      %v4470 = vpop.permute.xlu0 %4469
      %4471 = vrot.lane.b32.xlu0 %v1697, 80
      %v4472 = vpop.permute.xlu0 %4471
      %4473 = vrot.lane.b32.xlu0 %v1698, 80
      %v4474 = vpop.permute.xlu0 %4473
      %4475 = vrot.lane.b32.xlu0 %v1699, 80
      %v4476 = vpop.permute.xlu0 %4475
      %4477 = vrot.lane.b32.xlu0 %v1700, 80
      %v4478 = vpop.permute.xlu0 %4477
      %4479 = vrot.lane.b32.xlu0 %v1701, 80
      %v4480 = vpop.permute.xlu0 %4479
      %4481 = vrot.lane.b32.xlu0 %v1702, 80
      %v4482 = vpop.permute.xlu0 %4481
      %4483 = vrot.lane.b32.xlu0 %v1703, 80
      %v4484 = vpop.permute.xlu0 %4483
      %4485 = vrot.lane.b32.xlu0 %v1704, 80
      %v4486 = vpop.permute.xlu0 %4485
      %4487 = vrot.lane.b32.xlu0 %v1705, 80
      %v4488 = vpop.permute.xlu0 %4487
      %4489 = vrot.lane.b32.xlu0 %v1706, 80
      %v4490 = vpop.permute.xlu0 %4489
      %4491 = vrot.lane.b32.xlu0 %v1707, 80
      %v4492 = vpop.permute.xlu0 %4491
      %4493 = vrot.lane.b32.xlu0 %v1708, 80
      %v4494 = vpop.permute.xlu0 %4493
      %4495 = vrot.lane.b32.xlu0 %v1709, 80
      %v4496 = vpop.permute.xlu0 %4495
      %4497 = vrot.lane.b32.xlu0 %v1710, 80
      %v4498 = vpop.permute.xlu0 %4497
      %4499 = vrot.lane.b32.xlu0 %v1711, 80
      %v4500 = vpop.permute.xlu0 %4499
      %4501 = vrot.lane.b32.xlu0 %v1712, 80
      %v4502 = vpop.permute.xlu0 %4501
      %4503 = vrot.lane.b32.xlu0 %v1713, 80
      %v4504 = vpop.permute.xlu0 %4503
      %4505 = vrot.lane.b32.xlu0 %v1714, 80
      %v4506 = vpop.permute.xlu0 %4505
      %4507 = vrot.lane.b32.xlu0 %v1715, 80
      %v4508 = vpop.permute.xlu0 %4507
      %4509 = vrot.lane.b32.xlu0 %v1716, 80
      %v4510 = vpop.permute.xlu0 %4509
      %4511 = vrot.lane.b32.xlu0 %v1717, 80
      %v4512 = vpop.permute.xlu0 %4511
      %4513 = vrot.lane.b32.xlu0 %v1718, 80
      %v4514 = vpop.permute.xlu0 %4513
      %4515 = vrot.lane.b32.xlu0 %v1719, 80
      %v4516 = vpop.permute.xlu0 %4515
      %4517 = vrot.lane.b32.xlu0 %v1720, 80
      %v4518 = vpop.permute.xlu0 %4517
      %4519 = vrot.lane.b32.xlu0 %v1721, 80
      %v4520 = vpop.permute.xlu0 %4519
      %4521 = vrot.lane.b32.xlu0 %v1722, 80
      %v4522 = vpop.permute.xlu0 %4521
      %4523 = vrot.lane.b32.xlu0 %v1723, 80
      %v4524 = vpop.permute.xlu0 %4523
      %4525 = vrot.lane.b32.xlu0 %v1724, 80
      %v4526 = vpop.permute.xlu0 %4525
      %4527 = vrot.lane.b32.xlu0 %v1725, 80
      %v4528 = vpop.permute.xlu0 %4527
      %4529 = vrot.lane.b32.xlu0 %v1726, 80
      %v4530 = vpop.permute.xlu0 %4529
      %4531 = vrot.lane.b32.xlu0 %v1727, 80
      %v4532 = vpop.permute.xlu0 %4531
      %4533 = vrot.lane.b32.xlu0 %v1728, 80
      %v4534 = vpop.permute.xlu0 %4533
      %4535 = vrot.lane.b32.xlu0 %v1729, 80
      %v4536 = vpop.permute.xlu0 %4535
      %4537 = vrot.lane.b32.xlu0 %v1730, 80
      %v4538 = vpop.permute.xlu0 %4537
      %4539 = vrot.lane.b32.xlu0 %v1731, 80
      %v4540 = vpop.permute.xlu0 %4539
      %4541 = vrot.lane.b32.xlu0 %v1732, 80
      %v4542 = vpop.permute.xlu0 %4541
      %4543 = vrot.lane.b32.xlu0 %v1733, 80
      %v4544 = vpop.permute.xlu0 %4543
      %4545 = vrot.lane.b32.xlu0 %v1734, 80
      %v4546 = vpop.permute.xlu0 %4545
      %4547 = vrot.lane.b32.xlu0 %v1735, 80
      %v4548 = vpop.permute.xlu0 %4547
      %4549 = vrot.lane.b32.xlu0 %v1736, 80
      %v4550 = vpop.permute.xlu0 %4549
      %4551 = vrot.lane.b32.xlu0 %v1737, 80
      %v4552 = vpop.permute.xlu0 %4551
      %4553 = vrot.lane.b32.xlu0 %v1738, 80
      %v4554 = vpop.permute.xlu0 %4553
      %4555 = vrot.lane.b32.xlu0 %v1739, 80
      %v4556 = vpop.permute.xlu0 %4555
      %4813 = vrot.lane.b32.xlu0 %v1741, 96
      %v4814 = vpop.permute.xlu0 %4813
      %4815 = vrot.lane.b32.xlu0 %v1742, 96
      %v4816 = vpop.permute.xlu0 %4815
      %4817 = vrot.lane.b32.xlu0 %v1743, 96
      %v4818 = vpop.permute.xlu0 %4817
      %4819 = vrot.lane.b32.xlu0 %v1744, 96
      %v4820 = vpop.permute.xlu0 %4819
      %4821 = vrot.lane.b32.xlu0 %v1745, 96
      %v4822 = vpop.permute.xlu0 %4821
      %4823 = vrot.lane.b32.xlu0 %v1746, 96
      %v4824 = vpop.permute.xlu0 %4823
      %4825 = vrot.lane.b32.xlu0 %v1747, 96
      %v4826 = vpop.permute.xlu0 %4825
      %4827 = vrot.lane.b32.xlu0 %v1748, 96
      %v4828 = vpop.permute.xlu0 %4827
      %4829 = vrot.lane.b32.xlu0 %v1749, 96
      %v4830 = vpop.permute.xlu0 %4829
      %4831 = vrot.lane.b32.xlu0 %v1750, 96
      %v4832 = vpop.permute.xlu0 %4831
      %4833 = vrot.lane.b32.xlu0 %v1751, 96
      %v4834 = vpop.permute.xlu0 %4833
      %4835 = vrot.lane.b32.xlu0 %v1752, 96
      %v4836 = vpop.permute.xlu0 %4835
      %4837 = vrot.lane.b32.xlu0 %v1753, 96
      %v4838 = vpop.permute.xlu0 %4837
      %4839 = vrot.lane.b32.xlu0 %v1754, 96
      %v4840 = vpop.permute.xlu0 %4839
      %4841 = vrot.lane.b32.xlu0 %v1755, 96
      %v4842 = vpop.permute.xlu0 %4841
      %4843 = vrot.lane.b32.xlu0 %v1756, 96
      %v4844 = vpop.permute.xlu0 %4843
      %4845 = vrot.lane.b32.xlu0 %v1757, 96
      %v4846 = vpop.permute.xlu0 %4845
      %4847 = vrot.lane.b32.xlu0 %v1758, 96
      %v4848 = vpop.permute.xlu0 %4847
      %4849 = vrot.lane.b32.xlu0 %v1759, 96
      %v4850 = vpop.permute.xlu0 %4849
      %4851 = vrot.lane.b32.xlu0 %v1760, 96
      %v4852 = vpop.permute.xlu0 %4851
      %4853 = vrot.lane.b32.xlu0 %v1761, 96
      %v4854 = vpop.permute.xlu0 %4853
      %4855 = vrot.lane.b32.xlu0 %v1762, 96
      %v4856 = vpop.permute.xlu0 %4855
      %4857 = vrot.lane.b32.xlu0 %v1763, 96
      %v4858 = vpop.permute.xlu0 %4857
      %4859 = vrot.lane.b32.xlu0 %v1764, 96
      %v4860 = vpop.permute.xlu0 %4859
      %4861 = vrot.lane.b32.xlu0 %v1765, 96
      %v4862 = vpop.permute.xlu0 %4861
      %4863 = vrot.lane.b32.xlu0 %v1766, 96
      %v4864 = vpop.permute.xlu0 %4863
      %4865 = vrot.lane.b32.xlu0 %v1767, 96
      %v4866 = vpop.permute.xlu0 %4865
      %4867 = vrot.lane.b32.xlu0 %v1768, 96
      %v4868 = vpop.permute.xlu0 %4867
      %4869 = vrot.lane.b32.xlu0 %v1769, 96
      %v4870 = vpop.permute.xlu0 %4869
      %4871 = vrot.lane.b32.xlu0 %v1770, 96
      %v4872 = vpop.permute.xlu0 %4871
      %4873 = vrot.lane.b32.xlu0 %v1771, 96
      %v4874 = vpop.permute.xlu0 %4873
      %4875 = vrot.lane.b32.xlu0 %v1772, 96
      %v4876 = vpop.permute.xlu0 %4875
      %4877 = vrot.lane.b32.xlu0 %v1773, 96
      %v4878 = vpop.permute.xlu0 %4877
      %4879 = vrot.lane.b32.xlu0 %v1774, 96
      %v4880 = vpop.permute.xlu0 %4879
      %4881 = vrot.lane.b32.xlu0 %v1775, 96
      %v4882 = vpop.permute.xlu0 %4881
      %4883 = vrot.lane.b32.xlu0 %v1776, 96
      %v4884 = vpop.permute.xlu0 %4883
      %4885 = vrot.lane.b32.xlu0 %v1777, 96
      %v4886 = vpop.permute.xlu0 %4885
      %4887 = vrot.lane.b32.xlu0 %v1778, 96
      %v4888 = vpop.permute.xlu0 %4887
      %4889 = vrot.lane.b32.xlu0 %v1779, 96
      %v4890 = vpop.permute.xlu0 %4889
      %4891 = vrot.lane.b32.xlu0 %v1780, 96
      %v4892 = vpop.permute.xlu0 %4891
      %4893 = vrot.lane.b32.xlu0 %v1781, 96
      %v4894 = vpop.permute.xlu0 %4893
      %4895 = vrot.lane.b32.xlu0 %v1782, 96
      %v4896 = vpop.permute.xlu0 %4895
      %4897 = vrot.lane.b32.xlu0 %v1783, 96
      %v4898 = vpop.permute.xlu0 %4897
      %4899 = vrot.lane.b32.xlu0 %v1784, 96
      %v4900 = vpop.permute.xlu0 %4899
      %4901 = vrot.lane.b32.xlu0 %v1785, 96
      %v4902 = vpop.permute.xlu0 %4901
      %4903 = vrot.lane.b32.xlu0 %v1786, 96
      %v4904 = vpop.permute.xlu0 %4903
      %4905 = vrot.lane.b32.xlu0 %v1787, 96
      %v4906 = vpop.permute.xlu0 %4905
      %4907 = vrot.lane.b32.xlu0 %v1788, 96
      %v4908 = vpop.permute.xlu0 %4907
      %4909 = vrot.lane.b32.xlu0 %v1789, 96
      %v4910 = vpop.permute.xlu0 %4909
      %4911 = vrot.lane.b32.xlu0 %v1790, 96
      %v4912 = vpop.permute.xlu0 %4911
      %4913 = vrot.lane.b32.xlu0 %v1791, 96
      %v4914 = vpop.permute.xlu0 %4913
      %4915 = vrot.lane.b32.xlu0 %v1792, 96
      %v4916 = vpop.permute.xlu0 %4915
      %4917 = vrot.lane.b32.xlu0 %v1793, 96
      %v4918 = vpop.permute.xlu0 %4917
      %4919 = vrot.lane.b32.xlu0 %v1794, 96
      %v4920 = vpop.permute.xlu0 %4919
      %4921 = vrot.lane.b32.xlu0 %v1795, 96
      %v4922 = vpop.permute.xlu0 %4921
      %4923 = vrot.lane.b32.xlu0 %v1796, 96
      %v4924 = vpop.permute.xlu0 %4923
      %4925 = vrot.lane.b32.xlu0 %v1797, 96
      %v4926 = vpop.permute.xlu0 %4925
      %4927 = vrot.lane.b32.xlu0 %v1798, 96
      %v4928 = vpop.permute.xlu0 %4927
      %4929 = vrot.lane.b32.xlu0 %v1799, 96
      %v4930 = vpop.permute.xlu0 %4929
      %4931 = vrot.lane.b32.xlu0 %v1800, 96
      %v4932 = vpop.permute.xlu0 %4931
      %4933 = vrot.lane.b32.xlu0 %v1801, 96
      %v4934 = vpop.permute.xlu0 %4933
      %4935 = vrot.lane.b32.xlu0 %v1802, 96
      %v4936 = vpop.permute.xlu0 %4935
      %4937 = vrot.lane.b32.xlu0 %v1803, 96
      %v4938 = vpop.permute.xlu0 %4937
      %4939 = vrot.lane.b32.xlu0 %v1804, 96
      %v4940 = vpop.permute.xlu0 %4939
      %4941 = vrot.lane.b32.xlu0 %v1805, 96
      %v4942 = vpop.permute.xlu0 %4941
      %4943 = vrot.lane.b32.xlu0 %v1806, 96
      %v4944 = vpop.permute.xlu0 %4943
      %4945 = vrot.lane.b32.xlu0 %v1807, 96
      %v4946 = vpop.permute.xlu0 %4945
      %4947 = vrot.lane.b32.xlu0 %v1808, 96
      %v4948 = vpop.permute.xlu0 %4947
      %4949 = vrot.lane.b32.xlu0 %v1809, 96
      %v4950 = vpop.permute.xlu0 %4949
      %4951 = vrot.lane.b32.xlu0 %v1810, 96
      %v4952 = vpop.permute.xlu0 %4951
      %4953 = vrot.lane.b32.xlu0 %v1811, 96
      %v4954 = vpop.permute.xlu0 %4953
      %4955 = vrot.lane.b32.xlu0 %v1812, 96
      %v4956 = vpop.permute.xlu0 %4955
      %4957 = vrot.lane.b32.xlu0 %v1813, 96
      %v4958 = vpop.permute.xlu0 %4957
      %4959 = vrot.lane.b32.xlu0 %v1814, 96
      %v4960 = vpop.permute.xlu0 %4959
      %4961 = vrot.lane.b32.xlu0 %v1815, 96
      %v4962 = vpop.permute.xlu0 %4961
      %4963 = vrot.lane.b32.xlu0 %v1816, 96
      %v4964 = vpop.permute.xlu0 %4963
      %4965 = vrot.lane.b32.xlu0 %v1817, 96
      %v4966 = vpop.permute.xlu0 %4965
      %4967 = vrot.lane.b32.xlu0 %v1818, 96
      %v4968 = vpop.permute.xlu0 %4967
      %4969 = vrot.lane.b32.xlu0 %v1819, 96
      %v4970 = vpop.permute.xlu0 %4969
      %4971 = vrot.lane.b32.xlu0 %v1820, 96
      %v4972 = vpop.permute.xlu0 %4971
      %4973 = vrot.lane.b32.xlu0 %v1821, 96
      %v4974 = vpop.permute.xlu0 %4973
      %4975 = vrot.lane.b32.xlu0 %v1822, 96
      %v4976 = vpop.permute.xlu0 %4975
      %4977 = vrot.lane.b32.xlu0 %v1823, 96
      %v4978 = vpop.permute.xlu0 %4977
      %4979 = vrot.lane.b32.xlu0 %v1824, 96
      %v4980 = vpop.permute.xlu0 %4979
      %4981 = vrot.lane.b32.xlu0 %v1825, 96
      %v4982 = vpop.permute.xlu0 %4981
      %4983 = vrot.lane.b32.xlu0 %v1826, 96
      %v4984 = vpop.permute.xlu0 %4983
      %4985 = vrot.lane.b32.xlu0 %v1827, 96
      %v4986 = vpop.permute.xlu0 %4985
      %4987 = vrot.lane.b32.xlu0 %v1828, 96
      %v4988 = vpop.permute.xlu0 %4987
      %4989 = vrot.lane.b32.xlu0 %v1829, 96
      %v4990 = vpop.permute.xlu0 %4989
      %4991 = vrot.lane.b32.xlu0 %v1830, 96
      %v4992 = vpop.permute.xlu0 %4991
      %4993 = vrot.lane.b32.xlu0 %v1831, 96
      %v4994 = vpop.permute.xlu0 %4993
      %4995 = vrot.lane.b32.xlu0 %v1832, 96
      %v4996 = vpop.permute.xlu0 %4995
      %4997 = vrot.lane.b32.xlu0 %v1833, 96
      %v4998 = vpop.permute.xlu0 %4997
      %4999 = vrot.lane.b32.xlu0 %v1834, 96
      %v5000 = vpop.permute.xlu0 %4999
      %5001 = vrot.lane.b32.xlu0 %v1835, 96
      %v5002 = vpop.permute.xlu0 %5001
      %5003 = vrot.lane.b32.xlu0 %v1836, 96
      %v5004 = vpop.permute.xlu0 %5003
      %5005 = vrot.lane.b32.xlu0 %v1837, 96
      %v5006 = vpop.permute.xlu0 %5005
      %5007 = vrot.lane.b32.xlu0 %v1838, 96
      %v5008 = vpop.permute.xlu0 %5007
      %5009 = vrot.lane.b32.xlu0 %v1839, 96
      %v5010 = vpop.permute.xlu0 %5009
      %5011 = vrot.lane.b32.xlu0 %v1840, 96
      %v5012 = vpop.permute.xlu0 %5011
      %5013 = vrot.lane.b32.xlu0 %v1841, 96
      %v5014 = vpop.permute.xlu0 %5013
      %5015 = vrot.lane.b32.xlu0 %v1842, 96
      %v5016 = vpop.permute.xlu0 %5015
      %5017 = vrot.lane.b32.xlu0 %v1843, 96
      %v5018 = vpop.permute.xlu0 %5017
      %5019 = vrot.lane.b32.xlu0 %v1844, 96
      %v5020 = vpop.permute.xlu0 %5019
      %5021 = vrot.lane.b32.xlu0 %v1845, 96
      %v5022 = vpop.permute.xlu0 %5021
      %5023 = vrot.lane.b32.xlu0 %v1846, 96
      %v5024 = vpop.permute.xlu0 %5023
      %5025 = vrot.lane.b32.xlu0 %v1847, 96
      %v5026 = vpop.permute.xlu0 %5025
      %5027 = vrot.lane.b32.xlu0 %v1848, 96
      %v5028 = vpop.permute.xlu0 %5027
      %5029 = vrot.lane.b32.xlu0 %v1849, 96
      %v5030 = vpop.permute.xlu0 %5029
      %5031 = vrot.lane.b32.xlu0 %v1850, 96
      %v5032 = vpop.permute.xlu0 %5031
      %5033 = vrot.lane.b32.xlu0 %v1851, 96
      %v5034 = vpop.permute.xlu0 %5033
      %5035 = vrot.lane.b32.xlu0 %v1852, 96
      %v5036 = vpop.permute.xlu0 %5035
      %5037 = vrot.lane.b32.xlu0 %v1853, 96
      %v5038 = vpop.permute.xlu0 %5037
      %5039 = vrot.lane.b32.xlu0 %v1854, 96
      %v5040 = vpop.permute.xlu0 %5039
      %5041 = vrot.lane.b32.xlu0 %v1855, 96
      %v5042 = vpop.permute.xlu0 %5041
      %5043 = vrot.lane.b32.xlu0 %v1856, 96
      %v5044 = vpop.permute.xlu0 %5043
      %5045 = vrot.lane.b32.xlu0 %v1857, 96
      %v5046 = vpop.permute.xlu0 %5045
      %5047 = vrot.lane.b32.xlu0 %v1858, 96
      %v5048 = vpop.permute.xlu0 %5047
      %5049 = vrot.lane.b32.xlu0 %v1859, 96
      %v5050 = vpop.permute.xlu0 %5049
      %5051 = vrot.lane.b32.xlu0 %v1860, 96
      %v5052 = vpop.permute.xlu0 %5051
      %5053 = vrot.lane.b32.xlu0 %v1861, 96
      %v5054 = vpop.permute.xlu0 %5053
      %5055 = vrot.lane.b32.xlu0 %v1862, 96
      %v5056 = vpop.permute.xlu0 %5055
      %5057 = vrot.lane.b32.xlu0 %v1863, 96
      %v5058 = vpop.permute.xlu0 %5057
      %5059 = vrot.lane.b32.xlu0 %v1864, 96
      %v5060 = vpop.permute.xlu0 %5059
      %5061 = vrot.lane.b32.xlu0 %v1865, 96
      %v5062 = vpop.permute.xlu0 %5061
      %5063 = vrot.lane.b32.xlu0 %v1866, 96
      %v5064 = vpop.permute.xlu0 %5063
      %5065 = vrot.lane.b32.xlu0 %v1867, 96
      %v5066 = vpop.permute.xlu0 %5065
      %5067 = vrot.lane.b32.xlu0 %v1868, 96
      %v5068 = vpop.permute.xlu0 %5067
      %5325 = vrot.lane.b32.xlu0 %v1869, 112
      %v5326 = vpop.permute.xlu0 %5325
      %5327 = vrot.lane.b32.xlu0 %v1870, 112
      %v5328 = vpop.permute.xlu0 %5327
      %5329 = vrot.lane.b32.xlu0 %v1871, 112
      %v5330 = vpop.permute.xlu0 %5329
      %5331 = vrot.lane.b32.xlu0 %v1872, 112
      %v5332 = vpop.permute.xlu0 %5331
      %5333 = vrot.lane.b32.xlu0 %v1873, 112
      %v5334 = vpop.permute.xlu0 %5333
      %5335 = vrot.lane.b32.xlu0 %v1874, 112
      %v5336 = vpop.permute.xlu0 %5335
      %5337 = vrot.lane.b32.xlu0 %v1875, 112
      %v5338 = vpop.permute.xlu0 %5337
      %5339 = vrot.lane.b32.xlu0 %v1876, 112
      %v5340 = vpop.permute.xlu0 %5339
      %5341 = vrot.lane.b32.xlu0 %v1877, 112
      %v5342 = vpop.permute.xlu0 %5341
      %5343 = vrot.lane.b32.xlu0 %v1878, 112
      %v5344 = vpop.permute.xlu0 %5343
      %5345 = vrot.lane.b32.xlu0 %v1879, 112
      %v5346 = vpop.permute.xlu0 %5345
      %5347 = vrot.lane.b32.xlu0 %v1880, 112
      %v5348 = vpop.permute.xlu0 %5347
      %5349 = vrot.lane.b32.xlu0 %v1881, 112
      %v5350 = vpop.permute.xlu0 %5349
      %5351 = vrot.lane.b32.xlu0 %v1882, 112
      %v5352 = vpop.permute.xlu0 %5351
      %5353 = vrot.lane.b32.xlu0 %v1883, 112
      %v5354 = vpop.permute.xlu0 %5353
      %5355 = vrot.lane.b32.xlu0 %v1884, 112
      %v5356 = vpop.permute.xlu0 %5355
      %5357 = vrot.lane.b32.xlu0 %v1885, 112
      %v5358 = vpop.permute.xlu0 %5357
      %5359 = vrot.lane.b32.xlu0 %v1886, 112
      %v5360 = vpop.permute.xlu0 %5359
      %5361 = vrot.lane.b32.xlu0 %v1887, 112
      %v5362 = vpop.permute.xlu0 %5361
      %5363 = vrot.lane.b32.xlu0 %v1888, 112
      %v5364 = vpop.permute.xlu0 %5363
      %5365 = vrot.lane.b32.xlu0 %v1889, 112
      %v5366 = vpop.permute.xlu0 %5365
      %5367 = vrot.lane.b32.xlu0 %v1890, 112
      %v5368 = vpop.permute.xlu0 %5367
      %5369 = vrot.lane.b32.xlu0 %v1891, 112
      %v5370 = vpop.permute.xlu0 %5369
      %5371 = vrot.lane.b32.xlu0 %v1892, 112
      %v5372 = vpop.permute.xlu0 %5371
      %5373 = vrot.lane.b32.xlu0 %v1893, 112
      %v5374 = vpop.permute.xlu0 %5373
      %5375 = vrot.lane.b32.xlu0 %v1894, 112
      %v5376 = vpop.permute.xlu0 %5375
      %5377 = vrot.lane.b32.xlu0 %v1895, 112
      %v5378 = vpop.permute.xlu0 %5377
      %5379 = vrot.lane.b32.xlu0 %v1896, 112
      %v5380 = vpop.permute.xlu0 %5379
      %5381 = vrot.lane.b32.xlu0 %v1897, 112
      %v5382 = vpop.permute.xlu0 %5381
      %5383 = vrot.lane.b32.xlu0 %v1898, 112
      %v5384 = vpop.permute.xlu0 %5383
      %5385 = vrot.lane.b32.xlu0 %v1899, 112
      %v5386 = vpop.permute.xlu0 %5385
      %5387 = vrot.lane.b32.xlu0 %v1900, 112
      %v5388 = vpop.permute.xlu0 %5387
      %5389 = vrot.lane.b32.xlu0 %v1901, 112
      %v5390 = vpop.permute.xlu0 %5389
      %5391 = vrot.lane.b32.xlu0 %v1902, 112
      %v5392 = vpop.permute.xlu0 %5391
      %5393 = vrot.lane.b32.xlu0 %v1903, 112
      %v5394 = vpop.permute.xlu0 %5393
      %5395 = vrot.lane.b32.xlu0 %v1904, 112
      %v5396 = vpop.permute.xlu0 %5395
      %5397 = vrot.lane.b32.xlu0 %v1905, 112
      %v5398 = vpop.permute.xlu0 %5397
      %5399 = vrot.lane.b32.xlu0 %v1906, 112
      %v5400 = vpop.permute.xlu0 %5399
      %5401 = vrot.lane.b32.xlu0 %v1907, 112
      %v5402 = vpop.permute.xlu0 %5401
      %5403 = vrot.lane.b32.xlu0 %v1908, 112
      %v5404 = vpop.permute.xlu0 %5403
      %5405 = vrot.lane.b32.xlu0 %v1909, 112
      %v5406 = vpop.permute.xlu0 %5405
      %5407 = vrot.lane.b32.xlu0 %v1910, 112
      %v5408 = vpop.permute.xlu0 %5407
      %5409 = vrot.lane.b32.xlu0 %v1911, 112
      %v5410 = vpop.permute.xlu0 %5409
      %5411 = vrot.lane.b32.xlu0 %v1912, 112
      %v5412 = vpop.permute.xlu0 %5411
      %5413 = vrot.lane.b32.xlu0 %v1913, 112
      %v5414 = vpop.permute.xlu0 %5413
      %5415 = vrot.lane.b32.xlu0 %v1914, 112
      %v5416 = vpop.permute.xlu0 %5415
      %5417 = vrot.lane.b32.xlu0 %v1915, 112
      %v5418 = vpop.permute.xlu0 %5417
      %5419 = vrot.lane.b32.xlu0 %v1916, 112
      %v5420 = vpop.permute.xlu0 %5419
      %5421 = vrot.lane.b32.xlu0 %v1917, 112
      %v5422 = vpop.permute.xlu0 %5421
      %5423 = vrot.lane.b32.xlu0 %v1918, 112
      %v5424 = vpop.permute.xlu0 %5423
      %5425 = vrot.lane.b32.xlu0 %v1919, 112
      %v5426 = vpop.permute.xlu0 %5425
      %5427 = vrot.lane.b32.xlu0 %v1920, 112
      %v5428 = vpop.permute.xlu0 %5427
      %5429 = vrot.lane.b32.xlu0 %v1921, 112
      %v5430 = vpop.permute.xlu0 %5429
      %5431 = vrot.lane.b32.xlu0 %v1922, 112
      %v5432 = vpop.permute.xlu0 %5431
      %5433 = vrot.lane.b32.xlu0 %v1923, 112
      %v5434 = vpop.permute.xlu0 %5433
      %5435 = vrot.lane.b32.xlu0 %v1924, 112
      %v5436 = vpop.permute.xlu0 %5435
      %5437 = vrot.lane.b32.xlu0 %v1925, 112
      %v5438 = vpop.permute.xlu0 %5437
      %5439 = vrot.lane.b32.xlu0 %v1926, 112
      %v5440 = vpop.permute.xlu0 %5439
      %5441 = vrot.lane.b32.xlu0 %v1927, 112
      %v5442 = vpop.permute.xlu0 %5441
      %5443 = vrot.lane.b32.xlu0 %v1928, 112
      %v5444 = vpop.permute.xlu0 %5443
      %5445 = vrot.lane.b32.xlu0 %v1929, 112
      %v5446 = vpop.permute.xlu0 %5445
      %5447 = vrot.lane.b32.xlu0 %v1930, 112
      %v5448 = vpop.permute.xlu0 %5447
      %5449 = vrot.lane.b32.xlu0 %v1931, 112
      %v5450 = vpop.permute.xlu0 %5449
      %5451 = vrot.lane.b32.xlu0 %v1932, 112
      %v5452 = vpop.permute.xlu0 %5451
      %5453 = vrot.lane.b32.xlu0 %v1933, 112
      %v5454 = vpop.permute.xlu0 %5453
      %5455 = vrot.lane.b32.xlu0 %v1934, 112
      %v5456 = vpop.permute.xlu0 %5455
      %5457 = vrot.lane.b32.xlu0 %v1935, 112
      %v5458 = vpop.permute.xlu0 %5457
      %5459 = vrot.lane.b32.xlu0 %v1936, 112
      %v5460 = vpop.permute.xlu0 %5459
      %5461 = vrot.lane.b32.xlu0 %v1937, 112
      %v5462 = vpop.permute.xlu0 %5461
      %5463 = vrot.lane.b32.xlu0 %v1938, 112
      %v5464 = vpop.permute.xlu0 %5463
      %5465 = vrot.lane.b32.xlu0 %v1939, 112
      %v5466 = vpop.permute.xlu0 %5465
      %5467 = vrot.lane.b32.xlu0 %v1940, 112
      %v5468 = vpop.permute.xlu0 %5467
      %5469 = vrot.lane.b32.xlu0 %v1941, 112
      %v5470 = vpop.permute.xlu0 %5469
      %5471 = vrot.lane.b32.xlu0 %v1942, 112
      %v5472 = vpop.permute.xlu0 %5471
      %5473 = vrot.lane.b32.xlu0 %v1943, 112
      %v5474 = vpop.permute.xlu0 %5473
      %5475 = vrot.lane.b32.xlu0 %v1944, 112
      %v5476 = vpop.permute.xlu0 %5475
      %5477 = vrot.lane.b32.xlu0 %v1945, 112
      %v5478 = vpop.permute.xlu0 %5477
      %5479 = vrot.lane.b32.xlu0 %v1946, 112
      %v5480 = vpop.permute.xlu0 %5479
      %5481 = vrot.lane.b32.xlu0 %v1947, 112
      %v5482 = vpop.permute.xlu0 %5481
      %5483 = vrot.lane.b32.xlu0 %v1948, 112
      %v5484 = vpop.permute.xlu0 %5483
      %5485 = vrot.lane.b32.xlu0 %v1949, 112
      %v5486 = vpop.permute.xlu0 %5485
      %5487 = vrot.lane.b32.xlu0 %v1950, 112
      %v5488 = vpop.permute.xlu0 %5487
      %5489 = vrot.lane.b32.xlu0 %v1951, 112
      %v5490 = vpop.permute.xlu0 %5489
      %5491 = vrot.lane.b32.xlu0 %v1952, 112
      %v5492 = vpop.permute.xlu0 %5491
      %5493 = vrot.lane.b32.xlu0 %v1953, 112
      %v5494 = vpop.permute.xlu0 %5493
      %5495 = vrot.lane.b32.xlu0 %v1954, 112
      %v5496 = vpop.permute.xlu0 %5495
      %5497 = vrot.lane.b32.xlu0 %v1955, 112
      %v5498 = vpop.permute.xlu0 %5497
      %5499 = vrot.lane.b32.xlu0 %v1956, 112
      %v5500 = vpop.permute.xlu0 %5499
      %5501 = vrot.lane.b32.xlu0 %v1957, 112
      %v5502 = vpop.permute.xlu0 %5501
      %5503 = vrot.lane.b32.xlu0 %v1958, 112
      %v5504 = vpop.permute.xlu0 %5503
      %5505 = vrot.lane.b32.xlu0 %v1959, 112
      %v5506 = vpop.permute.xlu0 %5505
      %5507 = vrot.lane.b32.xlu0 %v1960, 112
      %v5508 = vpop.permute.xlu0 %5507
      %5509 = vrot.lane.b32.xlu0 %v1961, 112
      %v5510 = vpop.permute.xlu0 %5509
      %5511 = vrot.lane.b32.xlu0 %v1962, 112
      %v5512 = vpop.permute.xlu0 %5511
      %5513 = vrot.lane.b32.xlu0 %v1963, 112
      %v5514 = vpop.permute.xlu0 %5513
      %5515 = vrot.lane.b32.xlu0 %v1964, 112
      %v5516 = vpop.permute.xlu0 %5515
      %5517 = vrot.lane.b32.xlu0 %v1965, 112
      %v5518 = vpop.permute.xlu0 %5517
      %5519 = vrot.lane.b32.xlu0 %v1966, 112
      %v5520 = vpop.permute.xlu0 %5519
      %5521 = vrot.lane.b32.xlu0 %v1967, 112
      %v5522 = vpop.permute.xlu0 %5521
      %5523 = vrot.lane.b32.xlu0 %v1968, 112
      %v5524 = vpop.permute.xlu0 %5523
      %5525 = vrot.lane.b32.xlu0 %v1969, 112
      %v5526 = vpop.permute.xlu0 %5525
      %5527 = vrot.lane.b32.xlu0 %v1970, 112
      %v5528 = vpop.permute.xlu0 %5527
      %5529 = vrot.lane.b32.xlu0 %v1971, 112
      %v5530 = vpop.permute.xlu0 %5529
      %5531 = vrot.lane.b32.xlu0 %v1972, 112
      %v5532 = vpop.permute.xlu0 %5531
      %5533 = vrot.lane.b32.xlu0 %v1973, 112
      %v5534 = vpop.permute.xlu0 %5533
      %5535 = vrot.lane.b32.xlu0 %v1974, 112
      %v5536 = vpop.permute.xlu0 %5535
      %5537 = vrot.lane.b32.xlu0 %v1975, 112
      %v5538 = vpop.permute.xlu0 %5537
      %5539 = vrot.lane.b32.xlu0 %v1976, 112
      %v5540 = vpop.permute.xlu0 %5539
      %5541 = vrot.lane.b32.xlu0 %v1977, 112
      %v5542 = vpop.permute.xlu0 %5541
      %5543 = vrot.lane.b32.xlu0 %v1978, 112
      %v5544 = vpop.permute.xlu0 %5543
      %5545 = vrot.lane.b32.xlu0 %v1979, 112
      %v5546 = vpop.permute.xlu0 %5545
      %5547 = vrot.lane.b32.xlu0 %v1980, 112
      %v5548 = vpop.permute.xlu0 %5547
      %5549 = vrot.lane.b32.xlu0 %v1981, 112
      %v5550 = vpop.permute.xlu0 %5549
      %5551 = vrot.lane.b32.xlu0 %v1982, 112
      %v5552 = vpop.permute.xlu0 %5551
      %5553 = vrot.lane.b32.xlu0 %v1983, 112
      %v5554 = vpop.permute.xlu0 %5553
      %5555 = vrot.lane.b32.xlu0 %v1984, 112
      %v5556 = vpop.permute.xlu0 %5555
      %5557 = vrot.lane.b32.xlu0 %v1985, 112
      %v5558 = vpop.permute.xlu0 %5557
      %5559 = vrot.lane.b32.xlu0 %v1986, 112
      %v5560 = vpop.permute.xlu0 %5559
      %5561 = vrot.lane.b32.xlu0 %v1987, 112
      %v5562 = vpop.permute.xlu0 %5561
      %5563 = vrot.lane.b32.xlu0 %v1988, 112
      %v5564 = vpop.permute.xlu0 %5563
      %5565 = vrot.lane.b32.xlu0 %v1989, 112
      %v5566 = vpop.permute.xlu0 %5565
      %5567 = vrot.lane.b32.xlu0 %v1990, 112
      %v5568 = vpop.permute.xlu0 %5567
      %5569 = vrot.lane.b32.xlu0 %v1991, 112
      %v5570 = vpop.permute.xlu0 %5569
      %5571 = vrot.lane.b32.xlu0 %v1992, 112
      %v5572 = vpop.permute.xlu0 %5571
      %5573 = vrot.lane.b32.xlu0 %v1993, 112
      %v5574 = vpop.permute.xlu0 %5573
      %5575 = vrot.lane.b32.xlu0 %v1994, 112
      %v5576 = vpop.permute.xlu0 %5575
      %5577 = vrot.lane.b32.xlu0 %v1995, 112
      %v5578 = vpop.permute.xlu0 %5577
      %5579 = vrot.lane.b32.xlu0 %v1996, 112
      %v5580 = vpop.permute.xlu0 %5579
      %v5709 = vsel %vm273, %v972, %v2254
      %v5710 = vsel %vm273, %v973, %v2256
      %v5711 = vsel %vm273, %v974, %v2258
      %v5712 = vsel %vm273, %v975, %v2260
      %v5713 = vsel %vm273, %v976, %v2262
      %v5714 = vsel %vm273, %v977, %v2264
      %v5715 = vsel %vm273, %v978, %v2266
      %v5716 = vsel %vm273, %v979, %v2268
      %v5717 = vsel %vm273, %v980, %v2270
      %v5718 = vsel %vm273, %v981, %v2272
      %v5719 = vsel %vm273, %v982, %v2274
      %v5720 = vsel %vm273, %v983, %v2276
      %v5721 = vsel %vm273, %v984, %v2278
      %v5722 = vsel %vm273, %v985, %v2280
      %v5723 = vsel %vm273, %v986, %v2282
      %v5724 = vsel %vm273, %v987, %v2284
      %v5725 = vsel %vm273, %v988, %v2286
      %v5726 = vsel %vm273, %v989, %v2288
      %v5727 = vsel %vm273, %v990, %v2290
      %v5728 = vsel %vm273, %v991, %v2292
      %v5729 = vsel %vm273, %v992, %v2294
      %v5730 = vsel %vm273, %v993, %v2296
      %v5731 = vsel %vm273, %v994, %v2298
      %v5732 = vsel %vm273, %v995, %v2300
      %v5733 = vsel %vm273, %v996, %v2302
      %v5734 = vsel %vm273, %v997, %v2304
      %v5735 = vsel %vm273, %v998, %v2306
      %v5736 = vsel %vm273, %v999, %v2308
      %v5737 = vsel %vm273, %v1000, %v2310
      %v5738 = vsel %vm273, %v1001, %v2312
      %v5739 = vsel %vm273, %v1002, %v2314
      %v5740 = vsel %vm273, %v1003, %v2316
      %v5741 = vsel %vm273, %v1004, %v2318
      %v5742 = vsel %vm273, %v1005, %v2320
      %v5743 = vsel %vm273, %v1006, %v2322
      %v5744 = vsel %vm273, %v1007, %v2324
      %v5745 = vsel %vm273, %v1008, %v2326
      %v5746 = vsel %vm273, %v1009, %v2328
      %v5747 = vsel %vm273, %v1010, %v2330
      %v5748 = vsel %vm273, %v1011, %v2332
      %v5749 = vsel %vm273, %v1012, %v2334
      %v5750 = vsel %vm273, %v1013, %v2336
      %v5751 = vsel %vm273, %v1014, %v2338
      %v5752 = vsel %vm273, %v1015, %v2340
      %v5753 = vsel %vm273, %v1016, %v2342
      %v5754 = vsel %vm273, %v1017, %v2344
      %v5755 = vsel %vm273, %v1018, %v2346
      %v5756 = vsel %vm273, %v1019, %v2348
      %v5757 = vsel %vm273, %v1020, %v2350
      %v5758 = vsel %vm273, %v1021, %v2352
      %v5759 = vsel %vm273, %v1022, %v2354
      %v5760 = vsel %vm273, %v1023, %v2356
      %v5761 = vsel %vm273, %v1024, %v2358
      %v5762 = vsel %vm273, %v1025, %v2360
      %v5763 = vsel %vm273, %v1026, %v2362
      %v5764 = vsel %vm273, %v1027, %v2364
      %v5765 = vsel %vm273, %v1028, %v2366
      %v5766 = vsel %vm273, %v1029, %v2368
      %v5767 = vsel %vm273, %v1030, %v2370
      %v5768 = vsel %vm273, %v1031, %v2372
      %v5769 = vsel %vm273, %v1032, %v2374
      %v5770 = vsel %vm273, %v1033, %v2376
      %v5771 = vsel %vm273, %v1034, %v2378
      %v5772 = vsel %vm273, %v1035, %v2380
      %v5773 = vsel %vm273, %v1036, %v2382
      %v5774 = vsel %vm273, %v1037, %v2384
      %v5775 = vsel %vm273, %v1038, %v2386
      %v5776 = vsel %vm273, %v1039, %v2388
      %v5777 = vsel %vm273, %v1040, %v2390
      %v5778 = vsel %vm273, %v1041, %v2392
      %v5779 = vsel %vm273, %v1042, %v2394
      %v5780 = vsel %vm273, %v1043, %v2396
      %v5781 = vsel %vm273, %v1044, %v2398
      %v5782 = vsel %vm273, %v1045, %v2400
      %v5783 = vsel %vm273, %v1046, %v2402
      %v5784 = vsel %vm273, %v1047, %v2404
      %v5785 = vsel %vm273, %v1048, %v2406
      %v5786 = vsel %vm273, %v1049, %v2408
      %v5787 = vsel %vm273, %v1050, %v2410
      %v5788 = vsel %vm273, %v1051, %v2412
      %v5789 = vsel %vm273, %v1052, %v2414
      %v5790 = vsel %vm273, %v1053, %v2416
      %v5791 = vsel %vm273, %v1054, %v2418
      %v5792 = vsel %vm273, %v1055, %v2420
      %v5793 = vsel %vm273, %v1056, %v2422
      %v5794 = vsel %vm273, %v1057, %v2424
      %v5795 = vsel %vm273, %v1058, %v2426
      %v5796 = vsel %vm273, %v1059, %v2428
      %v5797 = vsel %vm273, %v1060, %v2430
      %v5798 = vsel %vm273, %v1061, %v2432
      %v5799 = vsel %vm273, %v1062, %v2434
      %v5800 = vsel %vm273, %v1063, %v2436
      %v5801 = vsel %vm273, %v1064, %v2438
      %v5802 = vsel %vm273, %v1065, %v2440
      %v5803 = vsel %vm273, %v1066, %v2442
      %v5804 = vsel %vm273, %v1067, %v2444
      %v5805 = vsel %vm273, %v1068, %v2446
      %v5806 = vsel %vm273, %v1069, %v2448
      %v5807 = vsel %vm273, %v1070, %v2450
      %v5808 = vsel %vm273, %v1071, %v2452
      %v5809 = vsel %vm273, %v1072, %v2454
      %v5810 = vsel %vm273, %v1073, %v2456
      %v5811 = vsel %vm273, %v1074, %v2458
      %v5812 = vsel %vm273, %v1075, %v2460
      %v5813 = vsel %vm273, %v1076, %v2462
      %v5814 = vsel %vm273, %v1077, %v2464
      %v5815 = vsel %vm273, %v1078, %v2466
      %v5816 = vsel %vm273, %v1079, %v2468
      %v5817 = vsel %vm273, %v1080, %v2470
      %v5818 = vsel %vm273, %v1081, %v2472
      %v5819 = vsel %vm273, %v1082, %v2474
      %v5820 = vsel %vm273, %v1083, %v2476
      %v5821 = vsel %vm273, %v1084, %v2478
      %v5822 = vsel %vm273, %v1085, %v2480
      %v5823 = vsel %vm273, %v1086, %v2482
      %v5824 = vsel %vm273, %v1087, %v2484
      %v5825 = vsel %vm273, %v1088, %v2486
      %v5826 = vsel %vm273, %v1089, %v2488
      %v5827 = vsel %vm273, %v1090, %v2490
      %v5828 = vsel %vm273, %v1091, %v2492
      %v5829 = vsel %vm273, %v1092, %v2494
      %v5830 = vsel %vm273, %v1093, %v2496
      %v5831 = vsel %vm273, %v1094, %v2498
      %v5832 = vsel %vm273, %v1095, %v2500
      %v5833 = vsel %vm273, %v1096, %v2502
      %v5834 = vsel %vm273, %v1097, %v2504
      %v5835 = vsel %vm273, %v1098, %v2506
      %v5836 = vsel %vm273, %v1099, %v2508
      %vm5837 = vcmask 261120
      %v5838 = vsel %vm5837, %v5709, %v2766
      %v5839 = vsel %vm5837, %v5710, %v2768
      %v5840 = vsel %vm5837, %v5711, %v2770
      %v5841 = vsel %vm5837, %v5712, %v2772
      %v5842 = vsel %vm5837, %v5713, %v2774
      %v5843 = vsel %vm5837, %v5714, %v2776
      %v5844 = vsel %vm5837, %v5715, %v2778
      %v5845 = vsel %vm5837, %v5716, %v2780
      %v5846 = vsel %vm5837, %v5717, %v2782
      %v5847 = vsel %vm5837, %v5718, %v2784
      %v5848 = vsel %vm5837, %v5719, %v2786
      %v5849 = vsel %vm5837, %v5720, %v2788
      %v5850 = vsel %vm5837, %v5721, %v2790
      %v5851 = vsel %vm5837, %v5722, %v2792
      %v5852 = vsel %vm5837, %v5723, %v2794
      %v5853 = vsel %vm5837, %v5724, %v2796
      %v5854 = vsel %vm5837, %v5725, %v2798
      %v5855 = vsel %vm5837, %v5726, %v2800
      %v5856 = vsel %vm5837, %v5727, %v2802
      %v5857 = vsel %vm5837, %v5728, %v2804
      %v5858 = vsel %vm5837, %v5729, %v2806
      %v5859 = vsel %vm5837, %v5730, %v2808
      %v5860 = vsel %vm5837, %v5731, %v2810
      %v5861 = vsel %vm5837, %v5732, %v2812
      %v5862 = vsel %vm5837, %v5733, %v2814
      %v5863 = vsel %vm5837, %v5734, %v2816
      %v5864 = vsel %vm5837, %v5735, %v2818
      %v5865 = vsel %vm5837, %v5736, %v2820
      %v5866 = vsel %vm5837, %v5737, %v2822
      %v5867 = vsel %vm5837, %v5738, %v2824
      %v5868 = vsel %vm5837, %v5739, %v2826
      %v5869 = vsel %vm5837, %v5740, %v2828
      %v5870 = vsel %vm5837, %v5741, %v2830
      %v5871 = vsel %vm5837, %v5742, %v2832
      %v5872 = vsel %vm5837, %v5743, %v2834
      %v5873 = vsel %vm5837, %v5744, %v2836
      %v5874 = vsel %vm5837, %v5745, %v2838
      %v5875 = vsel %vm5837, %v5746, %v2840
      %v5876 = vsel %vm5837, %v5747, %v2842
      %v5877 = vsel %vm5837, %v5748, %v2844
      %v5878 = vsel %vm5837, %v5749, %v2846
      %v5879 = vsel %vm5837, %v5750, %v2848
      %v5880 = vsel %vm5837, %v5751, %v2850
      %v5881 = vsel %vm5837, %v5752, %v2852
      %v5882 = vsel %vm5837, %v5753, %v2854
      %v5883 = vsel %vm5837, %v5754, %v2856
      %v5884 = vsel %vm5837, %v5755, %v2858
      %v5885 = vsel %vm5837, %v5756, %v2860
      %v5886 = vsel %vm5837, %v5757, %v2862
      %v5887 = vsel %vm5837, %v5758, %v2864
      %v5888 = vsel %vm5837, %v5759, %v2866
      %v5889 = vsel %vm5837, %v5760, %v2868
      %v5890 = vsel %vm5837, %v5761, %v2870
      %v5891 = vsel %vm5837, %v5762, %v2872
      %v5892 = vsel %vm5837, %v5763, %v2874
      %v5893 = vsel %vm5837, %v5764, %v2876
      %v5894 = vsel %vm5837, %v5765, %v2878
      %v5895 = vsel %vm5837, %v5766, %v2880
      %v5896 = vsel %vm5837, %v5767, %v2882
      %v5897 = vsel %vm5837, %v5768, %v2884
      %v5898 = vsel %vm5837, %v5769, %v2886
      %v5899 = vsel %vm5837, %v5770, %v2888
      %v5900 = vsel %vm5837, %v5771, %v2890
      %v5901 = vsel %vm5837, %v5772, %v2892
      %v5902 = vsel %vm5837, %v5773, %v2894
      %v5903 = vsel %vm5837, %v5774, %v2896
      %v5904 = vsel %vm5837, %v5775, %v2898
      %v5905 = vsel %vm5837, %v5776, %v2900
      %v5906 = vsel %vm5837, %v5777, %v2902
      %v5907 = vsel %vm5837, %v5778, %v2904
      %v5908 = vsel %vm5837, %v5779, %v2906
      %v5909 = vsel %vm5837, %v5780, %v2908
      %v5910 = vsel %vm5837, %v5781, %v2910
      %v5911 = vsel %vm5837, %v5782, %v2912
      %v5912 = vsel %vm5837, %v5783, %v2914
      %v5913 = vsel %vm5837, %v5784, %v2916
      %v5914 = vsel %vm5837, %v5785, %v2918
      %v5915 = vsel %vm5837, %v5786, %v2920
      %v5916 = vsel %vm5837, %v5787, %v2922
      %v5917 = vsel %vm5837, %v5788, %v2924
      %v5918 = vsel %vm5837, %v5789, %v2926
      %v5919 = vsel %vm5837, %v5790, %v2928
      %v5920 = vsel %vm5837, %v5791, %v2930
      %v5921 = vsel %vm5837, %v5792, %v2932
      %v5922 = vsel %vm5837, %v5793, %v2934
      %v5923 = vsel %vm5837, %v5794, %v2936
      %v5924 = vsel %vm5837, %v5795, %v2938
      %v5925 = vsel %vm5837, %v5796, %v2940
      %v5926 = vsel %vm5837, %v5797, %v2942
      %v5927 = vsel %vm5837, %v5798, %v2944
      %v5928 = vsel %vm5837, %v5799, %v2946
      %v5929 = vsel %vm5837, %v5800, %v2948
      %v5930 = vsel %vm5837, %v5801, %v2950
      %v5931 = vsel %vm5837, %v5802, %v2952
      %v5932 = vsel %vm5837, %v5803, %v2954
      %v5933 = vsel %vm5837, %v5804, %v2956
      %v5934 = vsel %vm5837, %v5805, %v2958
      %v5935 = vsel %vm5837, %v5806, %v2960
      %v5936 = vsel %vm5837, %v5807, %v2962
      %v5937 = vsel %vm5837, %v5808, %v2964
      %v5938 = vsel %vm5837, %v5809, %v2966
      %v5939 = vsel %vm5837, %v5810, %v2968
      %v5940 = vsel %vm5837, %v5811, %v2970
      %v5941 = vsel %vm5837, %v5812, %v2972
      %v5942 = vsel %vm5837, %v5813, %v2974
      %v5943 = vsel %vm5837, %v5814, %v2976
      %v5944 = vsel %vm5837, %v5815, %v2978
      %v5945 = vsel %vm5837, %v5816, %v2980
      %v5946 = vsel %vm5837, %v5817, %v2982
      %v5947 = vsel %vm5837, %v5818, %v2984
      %v5948 = vsel %vm5837, %v5819, %v2986
      %v5949 = vsel %vm5837, %v5820, %v2988
      %v5950 = vsel %vm5837, %v5821, %v2990
      %v5951 = vsel %vm5837, %v5822, %v2992
      %v5952 = vsel %vm5837, %v5823, %v2994
      %v5953 = vsel %vm5837, %v5824, %v2996
      %v5954 = vsel %vm5837, %v5825, %v2998
      %v5955 = vsel %vm5837, %v5826, %v3000
      %v5956 = vsel %vm5837, %v5827, %v3002
      %v5957 = vsel %vm5837, %v5828, %v3004
      %v5958 = vsel %vm5837, %v5829, %v3006
      %v5959 = vsel %vm5837, %v5830, %v3008
      %v5960 = vsel %vm5837, %v5831, %v3010
      %v5961 = vsel %vm5837, %v5832, %v3012
      %v5962 = vsel %vm5837, %v5833, %v3014
      %v5963 = vsel %vm5837, %v5834, %v3016
      %v5964 = vsel %vm5837, %v5835, %v3018
      %v5965 = vsel %vm5837, %v5836, %v3020
      %vm5966 = vcmask 392192
      %v5967 = vsel %vm5966, %v5838, %v3278
      %v5968 = vsel %vm5966, %v5839, %v3280
      %v5969 = vsel %vm5966, %v5840, %v3282
      %v5970 = vsel %vm5966, %v5841, %v3284
      %v5971 = vsel %vm5966, %v5842, %v3286
      %v5972 = vsel %vm5966, %v5843, %v3288
      %v5973 = vsel %vm5966, %v5844, %v3290
      %v5974 = vsel %vm5966, %v5845, %v3292
      %v5975 = vsel %vm5966, %v5846, %v3294
      %v5976 = vsel %vm5966, %v5847, %v3296
      %v5977 = vsel %vm5966, %v5848, %v3298
      %v5978 = vsel %vm5966, %v5849, %v3300
      %v5979 = vsel %vm5966, %v5850, %v3302
      %v5980 = vsel %vm5966, %v5851, %v3304
      %v5981 = vsel %vm5966, %v5852, %v3306
      %v5982 = vsel %vm5966, %v5853, %v3308
      %v5983 = vsel %vm5966, %v5854, %v3310
      %v5984 = vsel %vm5966, %v5855, %v3312
      %v5985 = vsel %vm5966, %v5856, %v3314
      %v5986 = vsel %vm5966, %v5857, %v3316
      %v5987 = vsel %vm5966, %v5858, %v3318
      %v5988 = vsel %vm5966, %v5859, %v3320
      %v5989 = vsel %vm5966, %v5860, %v3322
      %v5990 = vsel %vm5966, %v5861, %v3324
      %v5991 = vsel %vm5966, %v5862, %v3326
      %v5992 = vsel %vm5966, %v5863, %v3328
      %v5993 = vsel %vm5966, %v5864, %v3330
      %v5994 = vsel %vm5966, %v5865, %v3332
      %v5995 = vsel %vm5966, %v5866, %v3334
      %v5996 = vsel %vm5966, %v5867, %v3336
      %v5997 = vsel %vm5966, %v5868, %v3338
      %v5998 = vsel %vm5966, %v5869, %v3340
      %v5999 = vsel %vm5966, %v5870, %v3342
      %v6000 = vsel %vm5966, %v5871, %v3344
      %v6001 = vsel %vm5966, %v5872, %v3346
      %v6002 = vsel %vm5966, %v5873, %v3348
      %v6003 = vsel %vm5966, %v5874, %v3350
      %v6004 = vsel %vm5966, %v5875, %v3352
      %v6005 = vsel %vm5966, %v5876, %v3354
      %v6006 = vsel %vm5966, %v5877, %v3356
      %v6007 = vsel %vm5966, %v5878, %v3358
      %v6008 = vsel %vm5966, %v5879, %v3360
      %v6009 = vsel %vm5966, %v5880, %v3362
      %v6010 = vsel %vm5966, %v5881, %v3364
      %v6011 = vsel %vm5966, %v5882, %v3366
      %v6012 = vsel %vm5966, %v5883, %v3368
      %v6013 = vsel %vm5966, %v5884, %v3370
      %v6014 = vsel %vm5966, %v5885, %v3372
      %v6015 = vsel %vm5966, %v5886, %v3374
      %v6016 = vsel %vm5966, %v5887, %v3376
      %v6017 = vsel %vm5966, %v5888, %v3378
      %v6018 = vsel %vm5966, %v5889, %v3380
      %v6019 = vsel %vm5966, %v5890, %v3382
      %v6020 = vsel %vm5966, %v5891, %v3384
      %v6021 = vsel %vm5966, %v5892, %v3386
      %v6022 = vsel %vm5966, %v5893, %v3388
      %v6023 = vsel %vm5966, %v5894, %v3390
      %v6024 = vsel %vm5966, %v5895, %v3392
      %v6025 = vsel %vm5966, %v5896, %v3394
      %v6026 = vsel %vm5966, %v5897, %v3396
      %v6027 = vsel %vm5966, %v5898, %v3398
      %v6028 = vsel %vm5966, %v5899, %v3400
      %v6029 = vsel %vm5966, %v5900, %v3402
      %v6030 = vsel %vm5966, %v5901, %v3404
      %v6031 = vsel %vm5966, %v5902, %v3406
      %v6032 = vsel %vm5966, %v5903, %v3408
      %v6033 = vsel %vm5966, %v5904, %v3410
      %v6034 = vsel %vm5966, %v5905, %v3412
      %v6035 = vsel %vm5966, %v5906, %v3414
      %v6036 = vsel %vm5966, %v5907, %v3416
      %v6037 = vsel %vm5966, %v5908, %v3418
      %v6038 = vsel %vm5966, %v5909, %v3420
      %v6039 = vsel %vm5966, %v5910, %v3422
      %v6040 = vsel %vm5966, %v5911, %v3424
      %v6041 = vsel %vm5966, %v5912, %v3426
      %v6042 = vsel %vm5966, %v5913, %v3428
      %v6043 = vsel %vm5966, %v5914, %v3430
      %v6044 = vsel %vm5966, %v5915, %v3432
      %v6045 = vsel %vm5966, %v5916, %v3434
      %v6046 = vsel %vm5966, %v5917, %v3436
      %v6047 = vsel %vm5966, %v5918, %v3438
      %v6048 = vsel %vm5966, %v5919, %v3440
      %v6049 = vsel %vm5966, %v5920, %v3442
      %v6050 = vsel %vm5966, %v5921, %v3444
      %v6051 = vsel %vm5966, %v5922, %v3446
      %v6052 = vsel %vm5966, %v5923, %v3448
      %v6053 = vsel %vm5966, %v5924, %v3450
      %v6054 = vsel %vm5966, %v5925, %v3452
      %v6055 = vsel %vm5966, %v5926, %v3454
      %v6056 = vsel %vm5966, %v5927, %v3456
      %v6057 = vsel %vm5966, %v5928, %v3458
      %v6058 = vsel %vm5966, %v5929, %v3460
      %v6059 = vsel %vm5966, %v5930, %v3462
      %v6060 = vsel %vm5966, %v5931, %v3464
      %v6061 = vsel %vm5966, %v5932, %v3466
      %v6062 = vsel %vm5966, %v5933, %v3468
      %v6063 = vsel %vm5966, %v5934, %v3470
      %v6064 = vsel %vm5966, %v5935, %v3472
      %v6065 = vsel %vm5966, %v5936, %v3474
      %v6066 = vsel %vm5966, %v5937, %v3476
      %v6067 = vsel %vm5966, %v5938, %v3478
      %v6068 = vsel %vm5966, %v5939, %v3480
      %v6069 = vsel %vm5966, %v5940, %v3482
      %v6070 = vsel %vm5966, %v5941, %v3484
      %v6071 = vsel %vm5966, %v5942, %v3486
      %v6072 = vsel %vm5966, %v5943, %v3488
      %v6073 = vsel %vm5966, %v5944, %v3490
      %v6074 = vsel %vm5966, %v5945, %v3492
      %v6075 = vsel %vm5966, %v5946, %v3494
      %v6076 = vsel %vm5966, %v5947, %v3496
      %v6077 = vsel %vm5966, %v5948, %v3498
      %v6078 = vsel %vm5966, %v5949, %v3500
      %v6079 = vsel %vm5966, %v5950, %v3502
      %v6080 = vsel %vm5966, %v5951, %v3504
      %v6081 = vsel %vm5966, %v5952, %v3506
      %v6082 = vsel %vm5966, %v5953, %v3508
      %v6083 = vsel %vm5966, %v5954, %v3510
      %v6084 = vsel %vm5966, %v5955, %v3512
      %v6085 = vsel %vm5966, %v5956, %v3514
      %v6086 = vsel %vm5966, %v5957, %v3516
      %v6087 = vsel %vm5966, %v5958, %v3518
      %v6088 = vsel %vm5966, %v5959, %v3520
      %v6089 = vsel %vm5966, %v5960, %v3522
      %v6090 = vsel %vm5966, %v5961, %v3524
      %v6091 = vsel %vm5966, %v5962, %v3526
      %v6092 = vsel %vm5966, %v5963, %v3528
      %v6093 = vsel %vm5966, %v5964, %v3530
      %v6094 = vsel %vm5966, %v5965, %v3532
      %vm6095 = vcmask 523264
      %v6096 = vsel %vm6095, %v5967, %v3790
      %v6097 = vsel %vm6095, %v5968, %v3792
      %v6098 = vsel %vm6095, %v5969, %v3794
      %v6099 = vsel %vm6095, %v5970, %v3796
      %v6100 = vsel %vm6095, %v5971, %v3798
      %v6101 = vsel %vm6095, %v5972, %v3800
      %v6102 = vsel %vm6095, %v5973, %v3802
      %v6103 = vsel %vm6095, %v5974, %v3804
      %v6104 = vsel %vm6095, %v5975, %v3806
      %v6105 = vsel %vm6095, %v5976, %v3808
      %v6106 = vsel %vm6095, %v5977, %v3810
      %v6107 = vsel %vm6095, %v5978, %v3812
      %v6108 = vsel %vm6095, %v5979, %v3814
      %v6109 = vsel %vm6095, %v5980, %v3816
      %v6110 = vsel %vm6095, %v5981, %v3818
      %v6111 = vsel %vm6095, %v5982, %v3820
      %v6112 = vsel %vm6095, %v5983, %v3822
      %v6113 = vsel %vm6095, %v5984, %v3824
      %v6114 = vsel %vm6095, %v5985, %v3826
      %v6115 = vsel %vm6095, %v5986, %v3828
      %v6116 = vsel %vm6095, %v5987, %v3830
      %v6117 = vsel %vm6095, %v5988, %v3832
      %v6118 = vsel %vm6095, %v5989, %v3834
      %v6119 = vsel %vm6095, %v5990, %v3836
      %v6120 = vsel %vm6095, %v5991, %v3838
      %v6121 = vsel %vm6095, %v5992, %v3840
      %v6122 = vsel %vm6095, %v5993, %v3842
      %v6123 = vsel %vm6095, %v5994, %v3844
      %v6124 = vsel %vm6095, %v5995, %v3846
      %v6125 = vsel %vm6095, %v5996, %v3848
      %v6126 = vsel %vm6095, %v5997, %v3850
      %v6127 = vsel %vm6095, %v5998, %v3852
      %v6128 = vsel %vm6095, %v5999, %v3854
      %v6129 = vsel %vm6095, %v6000, %v3856
      %v6130 = vsel %vm6095, %v6001, %v3858
      %v6131 = vsel %vm6095, %v6002, %v3860
      %v6132 = vsel %vm6095, %v6003, %v3862
      %v6133 = vsel %vm6095, %v6004, %v3864
      %v6134 = vsel %vm6095, %v6005, %v3866
      %v6135 = vsel %vm6095, %v6006, %v3868
      %v6136 = vsel %vm6095, %v6007, %v3870
      %v6137 = vsel %vm6095, %v6008, %v3872
      %v6138 = vsel %vm6095, %v6009, %v3874
      %v6139 = vsel %vm6095, %v6010, %v3876
      %v6140 = vsel %vm6095, %v6011, %v3878
      %v6141 = vsel %vm6095, %v6012, %v3880
      %v6142 = vsel %vm6095, %v6013, %v3882
      %v6143 = vsel %vm6095, %v6014, %v3884
      %v6144 = vsel %vm6095, %v6015, %v3886
      %v6145 = vsel %vm6095, %v6016, %v3888
      %v6146 = vsel %vm6095, %v6017, %v3890
      %v6147 = vsel %vm6095, %v6018, %v3892
      %v6148 = vsel %vm6095, %v6019, %v3894
      %v6149 = vsel %vm6095, %v6020, %v3896
      %v6150 = vsel %vm6095, %v6021, %v3898
      %v6151 = vsel %vm6095, %v6022, %v3900
      %v6152 = vsel %vm6095, %v6023, %v3902
      %v6153 = vsel %vm6095, %v6024, %v3904
      %v6154 = vsel %vm6095, %v6025, %v3906
      %v6155 = vsel %vm6095, %v6026, %v3908
      %v6156 = vsel %vm6095, %v6027, %v3910
      %v6157 = vsel %vm6095, %v6028, %v3912
      %v6158 = vsel %vm6095, %v6029, %v3914
      %v6159 = vsel %vm6095, %v6030, %v3916
      %v6160 = vsel %vm6095, %v6031, %v3918
      %v6161 = vsel %vm6095, %v6032, %v3920
      %v6162 = vsel %vm6095, %v6033, %v3922
      %v6163 = vsel %vm6095, %v6034, %v3924
      %v6164 = vsel %vm6095, %v6035, %v3926
      %v6165 = vsel %vm6095, %v6036, %v3928
      %v6166 = vsel %vm6095, %v6037, %v3930
      %v6167 = vsel %vm6095, %v6038, %v3932
      %v6168 = vsel %vm6095, %v6039, %v3934
      %v6169 = vsel %vm6095, %v6040, %v3936
      %v6170 = vsel %vm6095, %v6041, %v3938
      %v6171 = vsel %vm6095, %v6042, %v3940
      %v6172 = vsel %vm6095, %v6043, %v3942
      %v6173 = vsel %vm6095, %v6044, %v3944
      %v6174 = vsel %vm6095, %v6045, %v3946
      %v6175 = vsel %vm6095, %v6046, %v3948
      %v6176 = vsel %vm6095, %v6047, %v3950
      %v6177 = vsel %vm6095, %v6048, %v3952
      %v6178 = vsel %vm6095, %v6049, %v3954
      %v6179 = vsel %vm6095, %v6050, %v3956
      %v6180 = vsel %vm6095, %v6051, %v3958
      %v6181 = vsel %vm6095, %v6052, %v3960
      %v6182 = vsel %vm6095, %v6053, %v3962
      %v6183 = vsel %vm6095, %v6054, %v3964
      %v6184 = vsel %vm6095, %v6055, %v3966
      %v6185 = vsel %vm6095, %v6056, %v3968
      %v6186 = vsel %vm6095, %v6057, %v3970
      %v6187 = vsel %vm6095, %v6058, %v3972
      %v6188 = vsel %vm6095, %v6059, %v3974
      %v6189 = vsel %vm6095, %v6060, %v3976
      %v6190 = vsel %vm6095, %v6061, %v3978
      %v6191 = vsel %vm6095, %v6062, %v3980
      %v6192 = vsel %vm6095, %v6063, %v3982
      %v6193 = vsel %vm6095, %v6064, %v3984
      %v6194 = vsel %vm6095, %v6065, %v3986
      %v6195 = vsel %vm6095, %v6066, %v3988
      %v6196 = vsel %vm6095, %v6067, %v3990
      %v6197 = vsel %vm6095, %v6068, %v3992
      %v6198 = vsel %vm6095, %v6069, %v3994
      %v6199 = vsel %vm6095, %v6070, %v3996
      %v6200 = vsel %vm6095, %v6071, %v3998
      %v6201 = vsel %vm6095, %v6072, %v4000
      %v6202 = vsel %vm6095, %v6073, %v4002
      %v6203 = vsel %vm6095, %v6074, %v4004
      %v6204 = vsel %vm6095, %v6075, %v4006
      %v6205 = vsel %vm6095, %v6076, %v4008
      %v6206 = vsel %vm6095, %v6077, %v4010
      %v6207 = vsel %vm6095, %v6078, %v4012
      %v6208 = vsel %vm6095, %v6079, %v4014
      %v6209 = vsel %vm6095, %v6080, %v4016
      %v6210 = vsel %vm6095, %v6081, %v4018
      %v6211 = vsel %vm6095, %v6082, %v4020
      %v6212 = vsel %vm6095, %v6083, %v4022
      %v6213 = vsel %vm6095, %v6084, %v4024
      %v6214 = vsel %vm6095, %v6085, %v4026
      %v6215 = vsel %vm6095, %v6086, %v4028
      %v6216 = vsel %vm6095, %v6087, %v4030
      %v6217 = vsel %vm6095, %v6088, %v4032
      %v6218 = vsel %vm6095, %v6089, %v4034
      %v6219 = vsel %vm6095, %v6090, %v4036
      %v6220 = vsel %vm6095, %v6091, %v4038
      %v6221 = vsel %vm6095, %v6092, %v4040
      %v6222 = vsel %vm6095, %v6093, %v4042
      %v6223 = vsel %vm6095, %v6094, %v4044
      %vm6224 = vcmask 654336
      %v6225 = vsel %vm6224, %v6096, %v4302
      %v6226 = vsel %vm6224, %v6097, %v4304
      %v6227 = vsel %vm6224, %v6098, %v4306
      %v6228 = vsel %vm6224, %v6099, %v4308
      %v6229 = vsel %vm6224, %v6100, %v4310
      %v6230 = vsel %vm6224, %v6101, %v4312
      %v6231 = vsel %vm6224, %v6102, %v4314
      %v6232 = vsel %vm6224, %v6103, %v4316
      %v6233 = vsel %vm6224, %v6104, %v4318
      %v6234 = vsel %vm6224, %v6105, %v4320
      %v6235 = vsel %vm6224, %v6106, %v4322
      %v6236 = vsel %vm6224, %v6107, %v4324
      %v6237 = vsel %vm6224, %v6108, %v4326
      %v6238 = vsel %vm6224, %v6109, %v4328
      %v6239 = vsel %vm6224, %v6110, %v4330
      %v6240 = vsel %vm6224, %v6111, %v4332
      %v6241 = vsel %vm6224, %v6112, %v4334
      %v6242 = vsel %vm6224, %v6113, %v4336
      %v6243 = vsel %vm6224, %v6114, %v4338
      %v6244 = vsel %vm6224, %v6115, %v4340
      %v6245 = vsel %vm6224, %v6116, %v4342
      %v6246 = vsel %vm6224, %v6117, %v4344
      %v6247 = vsel %vm6224, %v6118, %v4346
      %v6248 = vsel %vm6224, %v6119, %v4348
      %v6249 = vsel %vm6224, %v6120, %v4350
      %v6250 = vsel %vm6224, %v6121, %v4352
      %v6251 = vsel %vm6224, %v6122, %v4354
      %v6252 = vsel %vm6224, %v6123, %v4356
      %v6253 = vsel %vm6224, %v6124, %v4358
      %v6254 = vsel %vm6224, %v6125, %v4360
      %v6255 = vsel %vm6224, %v6126, %v4362
      %v6256 = vsel %vm6224, %v6127, %v4364
      %v6257 = vsel %vm6224, %v6128, %v4366
      %v6258 = vsel %vm6224, %v6129, %v4368
      %v6259 = vsel %vm6224, %v6130, %v4370
      %v6260 = vsel %vm6224, %v6131, %v4372
      %v6261 = vsel %vm6224, %v6132, %v4374
      %v6262 = vsel %vm6224, %v6133, %v4376
      %v6263 = vsel %vm6224, %v6134, %v4378
      %v6264 = vsel %vm6224, %v6135, %v4380
      %v6265 = vsel %vm6224, %v6136, %v4382
      %v6266 = vsel %vm6224, %v6137, %v4384
      %v6267 = vsel %vm6224, %v6138, %v4386
      %v6268 = vsel %vm6224, %v6139, %v4388
      %v6269 = vsel %vm6224, %v6140, %v4390
      %v6270 = vsel %vm6224, %v6141, %v4392
      %v6271 = vsel %vm6224, %v6142, %v4394
      %v6272 = vsel %vm6224, %v6143, %v4396
      %v6273 = vsel %vm6224, %v6144, %v4398
      %v6274 = vsel %vm6224, %v6145, %v4400
      %v6275 = vsel %vm6224, %v6146, %v4402
      %v6276 = vsel %vm6224, %v6147, %v4404
      %v6277 = vsel %vm6224, %v6148, %v4406
      %v6278 = vsel %vm6224, %v6149, %v4408
      %v6279 = vsel %vm6224, %v6150, %v4410
      %v6280 = vsel %vm6224, %v6151, %v4412
      %v6281 = vsel %vm6224, %v6152, %v4414
      %v6282 = vsel %vm6224, %v6153, %v4416
      %v6283 = vsel %vm6224, %v6154, %v4418
      %v6284 = vsel %vm6224, %v6155, %v4420
      %v6285 = vsel %vm6224, %v6156, %v4422
      %v6286 = vsel %vm6224, %v6157, %v4424
      %v6287 = vsel %vm6224, %v6158, %v4426
      %v6288 = vsel %vm6224, %v6159, %v4428
      %v6289 = vsel %vm6224, %v6160, %v4430
      %v6290 = vsel %vm6224, %v6161, %v4432
      %v6291 = vsel %vm6224, %v6162, %v4434
      %v6292 = vsel %vm6224, %v6163, %v4436
      %v6293 = vsel %vm6224, %v6164, %v4438
      %v6294 = vsel %vm6224, %v6165, %v4440
      %v6295 = vsel %vm6224, %v6166, %v4442
      %v6296 = vsel %vm6224, %v6167, %v4444
      %v6297 = vsel %vm6224, %v6168, %v4446
      %v6298 = vsel %vm6224, %v6169, %v4448
      %v6299 = vsel %vm6224, %v6170, %v4450
      %v6300 = vsel %vm6224, %v6171, %v4452
      %v6301 = vsel %vm6224, %v6172, %v4454
      %v6302 = vsel %vm6224, %v6173, %v4456
      %v6303 = vsel %vm6224, %v6174, %v4458
      %v6304 = vsel %vm6224, %v6175, %v4460
      %v6305 = vsel %vm6224, %v6176, %v4462
      %v6306 = vsel %vm6224, %v6177, %v4464
      %v6307 = vsel %vm6224, %v6178, %v4466
      %v6308 = vsel %vm6224, %v6179, %v4468
      %v6309 = vsel %vm6224, %v6180, %v4470
      %v6310 = vsel %vm6224, %v6181, %v4472
      %v6311 = vsel %vm6224, %v6182, %v4474
      %v6312 = vsel %vm6224, %v6183, %v4476
      %v6313 = vsel %vm6224, %v6184, %v4478
      %v6314 = vsel %vm6224, %v6185, %v4480
      %v6315 = vsel %vm6224, %v6186, %v4482
      %v6316 = vsel %vm6224, %v6187, %v4484
      %v6317 = vsel %vm6224, %v6188, %v4486
      %v6318 = vsel %vm6224, %v6189, %v4488
      %v6319 = vsel %vm6224, %v6190, %v4490
      %v6320 = vsel %vm6224, %v6191, %v4492
      %v6321 = vsel %vm6224, %v6192, %v4494
      %v6322 = vsel %vm6224, %v6193, %v4496
      %v6323 = vsel %vm6224, %v6194, %v4498
      %v6324 = vsel %vm6224, %v6195, %v4500
      %v6325 = vsel %vm6224, %v6196, %v4502
      %v6326 = vsel %vm6224, %v6197, %v4504
      %v6327 = vsel %vm6224, %v6198, %v4506
      %v6328 = vsel %vm6224, %v6199, %v4508
      %v6329 = vsel %vm6224, %v6200, %v4510
      %v6330 = vsel %vm6224, %v6201, %v4512
      %v6331 = vsel %vm6224, %v6202, %v4514
      %v6332 = vsel %vm6224, %v6203, %v4516
      %v6333 = vsel %vm6224, %v6204, %v4518
      %v6334 = vsel %vm6224, %v6205, %v4520
      %v6335 = vsel %vm6224, %v6206, %v4522
      %v6336 = vsel %vm6224, %v6207, %v4524
      %v6337 = vsel %vm6224, %v6208, %v4526
      %v6338 = vsel %vm6224, %v6209, %v4528
      %v6339 = vsel %vm6224, %v6210, %v4530
      %v6340 = vsel %vm6224, %v6211, %v4532
      %v6341 = vsel %vm6224, %v6212, %v4534
      %v6342 = vsel %vm6224, %v6213, %v4536
      %v6343 = vsel %vm6224, %v6214, %v4538
      %v6344 = vsel %vm6224, %v6215, %v4540
      %v6345 = vsel %vm6224, %v6216, %v4542
      %v6346 = vsel %vm6224, %v6217, %v4544
      %v6347 = vsel %vm6224, %v6218, %v4546
      %v6348 = vsel %vm6224, %v6219, %v4548
      %v6349 = vsel %vm6224, %v6220, %v4550
      %v6350 = vsel %vm6224, %v6221, %v4552
      %v6351 = vsel %vm6224, %v6222, %v4554
      %v6352 = vsel %vm6224, %v6223, %v4556
      %vm6353 = vcmask 785408
      %v6354 = vsel %vm6353, %v6225, %v4814
      %v6355 = vsel %vm6353, %v6226, %v4816
      %v6356 = vsel %vm6353, %v6227, %v4818
      %v6357 = vsel %vm6353, %v6228, %v4820
      %v6358 = vsel %vm6353, %v6229, %v4822
      %v6359 = vsel %vm6353, %v6230, %v4824
      %v6360 = vsel %vm6353, %v6231, %v4826
      %v6361 = vsel %vm6353, %v6232, %v4828
      %v6362 = vsel %vm6353, %v6233, %v4830
      %v6363 = vsel %vm6353, %v6234, %v4832
      %v6364 = vsel %vm6353, %v6235, %v4834
      %v6365 = vsel %vm6353, %v6236, %v4836
      %v6366 = vsel %vm6353, %v6237, %v4838
      %v6367 = vsel %vm6353, %v6238, %v4840
      %v6368 = vsel %vm6353, %v6239, %v4842
      %v6369 = vsel %vm6353, %v6240, %v4844
      %v6370 = vsel %vm6353, %v6241, %v4846
      %v6371 = vsel %vm6353, %v6242, %v4848
      %v6372 = vsel %vm6353, %v6243, %v4850
      %v6373 = vsel %vm6353, %v6244, %v4852
      %v6374 = vsel %vm6353, %v6245, %v4854
      %v6375 = vsel %vm6353, %v6246, %v4856
      %v6376 = vsel %vm6353, %v6247, %v4858
      %v6377 = vsel %vm6353, %v6248, %v4860
      %v6378 = vsel %vm6353, %v6249, %v4862
      %v6379 = vsel %vm6353, %v6250, %v4864
      %v6380 = vsel %vm6353, %v6251, %v4866
      %v6381 = vsel %vm6353, %v6252, %v4868
      %v6382 = vsel %vm6353, %v6253, %v4870
      %v6383 = vsel %vm6353, %v6254, %v4872
      %v6384 = vsel %vm6353, %v6255, %v4874
      %v6385 = vsel %vm6353, %v6256, %v4876
      %v6386 = vsel %vm6353, %v6257, %v4878
      %v6387 = vsel %vm6353, %v6258, %v4880
      %v6388 = vsel %vm6353, %v6259, %v4882
      %v6389 = vsel %vm6353, %v6260, %v4884
      %v6390 = vsel %vm6353, %v6261, %v4886
      %v6391 = vsel %vm6353, %v6262, %v4888
      %v6392 = vsel %vm6353, %v6263, %v4890
      %v6393 = vsel %vm6353, %v6264, %v4892
      %v6394 = vsel %vm6353, %v6265, %v4894
      %v6395 = vsel %vm6353, %v6266, %v4896
      %v6396 = vsel %vm6353, %v6267, %v4898
      %v6397 = vsel %vm6353, %v6268, %v4900
      %v6398 = vsel %vm6353, %v6269, %v4902
      %v6399 = vsel %vm6353, %v6270, %v4904
      %v6400 = vsel %vm6353, %v6271, %v4906
      %v6401 = vsel %vm6353, %v6272, %v4908
      %v6402 = vsel %vm6353, %v6273, %v4910
      %v6403 = vsel %vm6353, %v6274, %v4912
      %v6404 = vsel %vm6353, %v6275, %v4914
      %v6405 = vsel %vm6353, %v6276, %v4916
      %v6406 = vsel %vm6353, %v6277, %v4918
      %v6407 = vsel %vm6353, %v6278, %v4920
      %v6408 = vsel %vm6353, %v6279, %v4922
      %v6409 = vsel %vm6353, %v6280, %v4924
      %v6410 = vsel %vm6353, %v6281, %v4926
      %v6411 = vsel %vm6353, %v6282, %v4928
      %v6412 = vsel %vm6353, %v6283, %v4930
      %v6413 = vsel %vm6353, %v6284, %v4932
      %v6414 = vsel %vm6353, %v6285, %v4934
      %v6415 = vsel %vm6353, %v6286, %v4936
      %v6416 = vsel %vm6353, %v6287, %v4938
      %v6417 = vsel %vm6353, %v6288, %v4940
      %v6418 = vsel %vm6353, %v6289, %v4942
      %v6419 = vsel %vm6353, %v6290, %v4944
      %v6420 = vsel %vm6353, %v6291, %v4946
      %v6421 = vsel %vm6353, %v6292, %v4948
      %v6422 = vsel %vm6353, %v6293, %v4950
      %v6423 = vsel %vm6353, %v6294, %v4952
      %v6424 = vsel %vm6353, %v6295, %v4954
      %v6425 = vsel %vm6353, %v6296, %v4956
      %v6426 = vsel %vm6353, %v6297, %v4958
      %v6427 = vsel %vm6353, %v6298, %v4960
      %v6428 = vsel %vm6353, %v6299, %v4962
      %v6429 = vsel %vm6353, %v6300, %v4964
      %v6430 = vsel %vm6353, %v6301, %v4966
      %v6431 = vsel %vm6353, %v6302, %v4968
      %v6432 = vsel %vm6353, %v6303, %v4970
      %v6433 = vsel %vm6353, %v6304, %v4972
      %v6434 = vsel %vm6353, %v6305, %v4974
      %v6435 = vsel %vm6353, %v6306, %v4976
      %v6436 = vsel %vm6353, %v6307, %v4978
      %v6437 = vsel %vm6353, %v6308, %v4980
      %v6438 = vsel %vm6353, %v6309, %v4982
      %v6439 = vsel %vm6353, %v6310, %v4984
      %v6440 = vsel %vm6353, %v6311, %v4986
      %v6441 = vsel %vm6353, %v6312, %v4988
      %v6442 = vsel %vm6353, %v6313, %v4990
      %v6443 = vsel %vm6353, %v6314, %v4992
      %v6444 = vsel %vm6353, %v6315, %v4994
      %v6445 = vsel %vm6353, %v6316, %v4996
      %v6446 = vsel %vm6353, %v6317, %v4998
      %v6447 = vsel %vm6353, %v6318, %v5000
      %v6448 = vsel %vm6353, %v6319, %v5002
      %v6449 = vsel %vm6353, %v6320, %v5004
      %v6450 = vsel %vm6353, %v6321, %v5006
      %v6451 = vsel %vm6353, %v6322, %v5008
      %v6452 = vsel %vm6353, %v6323, %v5010
      %v6453 = vsel %vm6353, %v6324, %v5012
      %v6454 = vsel %vm6353, %v6325, %v5014
      %v6455 = vsel %vm6353, %v6326, %v5016
      %v6456 = vsel %vm6353, %v6327, %v5018
      %v6457 = vsel %vm6353, %v6328, %v5020
      %v6458 = vsel %vm6353, %v6329, %v5022
      %v6459 = vsel %vm6353, %v6330, %v5024
      %v6460 = vsel %vm6353, %v6331, %v5026
      %v6461 = vsel %vm6353, %v6332, %v5028
      %v6462 = vsel %vm6353, %v6333, %v5030
      %v6463 = vsel %vm6353, %v6334, %v5032
      %v6464 = vsel %vm6353, %v6335, %v5034
      %v6465 = vsel %vm6353, %v6336, %v5036
      %v6466 = vsel %vm6353, %v6337, %v5038
      %v6467 = vsel %vm6353, %v6338, %v5040
      %v6468 = vsel %vm6353, %v6339, %v5042
      %v6469 = vsel %vm6353, %v6340, %v5044
      %v6470 = vsel %vm6353, %v6341, %v5046
      %v6471 = vsel %vm6353, %v6342, %v5048
      %v6472 = vsel %vm6353, %v6343, %v5050
      %v6473 = vsel %vm6353, %v6344, %v5052
      %v6474 = vsel %vm6353, %v6345, %v5054
      %v6475 = vsel %vm6353, %v6346, %v5056
      %v6476 = vsel %vm6353, %v6347, %v5058
      %v6477 = vsel %vm6353, %v6348, %v5060
      %v6478 = vsel %vm6353, %v6349, %v5062
      %v6479 = vsel %vm6353, %v6350, %v5064
      %v6480 = vsel %vm6353, %v6351, %v5066
      %v6481 = vsel %vm6353, %v6352, %v5068
      %vm6482 = vcmask 916480
      %v6483 = vsel %vm6482, %v6354, %v5326
      %v6484 = vsel %vm6482, %v6355, %v5328
      %v6485 = vsel %vm6482, %v6356, %v5330
      %v6486 = vsel %vm6482, %v6357, %v5332
      %v6487 = vsel %vm6482, %v6358, %v5334
      %v6488 = vsel %vm6482, %v6359, %v5336
      %v6489 = vsel %vm6482, %v6360, %v5338
      %v6490 = vsel %vm6482, %v6361, %v5340
      %v6491 = vsel %vm6482, %v6362, %v5342
      %v6492 = vsel %vm6482, %v6363, %v5344
      %v6493 = vsel %vm6482, %v6364, %v5346
      %v6494 = vsel %vm6482, %v6365, %v5348
      %v6495 = vsel %vm6482, %v6366, %v5350
      %v6496 = vsel %vm6482, %v6367, %v5352
      %v6497 = vsel %vm6482, %v6368, %v5354
      %v6498 = vsel %vm6482, %v6369, %v5356
      %v6499 = vsel %vm6482, %v6370, %v5358
      %v6500 = vsel %vm6482, %v6371, %v5360
      %v6501 = vsel %vm6482, %v6372, %v5362
      %v6502 = vsel %vm6482, %v6373, %v5364
      %v6503 = vsel %vm6482, %v6374, %v5366
      %v6504 = vsel %vm6482, %v6375, %v5368
      %v6505 = vsel %vm6482, %v6376, %v5370
      %v6506 = vsel %vm6482, %v6377, %v5372
      %v6507 = vsel %vm6482, %v6378, %v5374
      %v6508 = vsel %vm6482, %v6379, %v5376
      %v6509 = vsel %vm6482, %v6380, %v5378
      %v6510 = vsel %vm6482, %v6381, %v5380
      %v6511 = vsel %vm6482, %v6382, %v5382
      %v6512 = vsel %vm6482, %v6383, %v5384
      %v6513 = vsel %vm6482, %v6384, %v5386
      %v6514 = vsel %vm6482, %v6385, %v5388
      %v6515 = vsel %vm6482, %v6386, %v5390
      %v6516 = vsel %vm6482, %v6387, %v5392
      %v6517 = vsel %vm6482, %v6388, %v5394
      %v6518 = vsel %vm6482, %v6389, %v5396
      %v6519 = vsel %vm6482, %v6390, %v5398
      %v6520 = vsel %vm6482, %v6391, %v5400
      %v6521 = vsel %vm6482, %v6392, %v5402
      %v6522 = vsel %vm6482, %v6393, %v5404
      %v6523 = vsel %vm6482, %v6394, %v5406
      %v6524 = vsel %vm6482, %v6395, %v5408
      %v6525 = vsel %vm6482, %v6396, %v5410
      %v6526 = vsel %vm6482, %v6397, %v5412
      %v6527 = vsel %vm6482, %v6398, %v5414
      %v6528 = vsel %vm6482, %v6399, %v5416
      %v6529 = vsel %vm6482, %v6400, %v5418
      %v6530 = vsel %vm6482, %v6401, %v5420
      %v6531 = vsel %vm6482, %v6402, %v5422
      %v6532 = vsel %vm6482, %v6403, %v5424
      %v6533 = vsel %vm6482, %v6404, %v5426
      %v6534 = vsel %vm6482, %v6405, %v5428
      %v6535 = vsel %vm6482, %v6406, %v5430
      %v6536 = vsel %vm6482, %v6407, %v5432
      %v6537 = vsel %vm6482, %v6408, %v5434
      %v6538 = vsel %vm6482, %v6409, %v5436
      %v6539 = vsel %vm6482, %v6410, %v5438
      %v6540 = vsel %vm6482, %v6411, %v5440
      %v6541 = vsel %vm6482, %v6412, %v5442
      %v6542 = vsel %vm6482, %v6413, %v5444
      %v6543 = vsel %vm6482, %v6414, %v5446
      %v6544 = vsel %vm6482, %v6415, %v5448
      %v6545 = vsel %vm6482, %v6416, %v5450
      %v6546 = vsel %vm6482, %v6417, %v5452
      %v6547 = vsel %vm6482, %v6418, %v5454
      %v6548 = vsel %vm6482, %v6419, %v5456
      %v6549 = vsel %vm6482, %v6420, %v5458
      %v6550 = vsel %vm6482, %v6421, %v5460
      %v6551 = vsel %vm6482, %v6422, %v5462
      %v6552 = vsel %vm6482, %v6423, %v5464
      %v6553 = vsel %vm6482, %v6424, %v5466
      %v6554 = vsel %vm6482, %v6425, %v5468
      %v6555 = vsel %vm6482, %v6426, %v5470
      %v6556 = vsel %vm6482, %v6427, %v5472
      %v6557 = vsel %vm6482, %v6428, %v5474
      %v6558 = vsel %vm6482, %v6429, %v5476
      %v6559 = vsel %vm6482, %v6430, %v5478
      %v6560 = vsel %vm6482, %v6431, %v5480
      %v6561 = vsel %vm6482, %v6432, %v5482
      %v6562 = vsel %vm6482, %v6433, %v5484
      %v6563 = vsel %vm6482, %v6434, %v5486
      %v6564 = vsel %vm6482, %v6435, %v5488
      %v6565 = vsel %vm6482, %v6436, %v5490
      %v6566 = vsel %vm6482, %v6437, %v5492
      %v6567 = vsel %vm6482, %v6438, %v5494
      %v6568 = vsel %vm6482, %v6439, %v5496
      %v6569 = vsel %vm6482, %v6440, %v5498
      %v6570 = vsel %vm6482, %v6441, %v5500
      %v6571 = vsel %vm6482, %v6442, %v5502
      %v6572 = vsel %vm6482, %v6443, %v5504
      %v6573 = vsel %vm6482, %v6444, %v5506
      %v6574 = vsel %vm6482, %v6445, %v5508
      %v6575 = vsel %vm6482, %v6446, %v5510
      %v6576 = vsel %vm6482, %v6447, %v5512
      %v6577 = vsel %vm6482, %v6448, %v5514
      %v6578 = vsel %vm6482, %v6449, %v5516
      %v6579 = vsel %vm6482, %v6450, %v5518
      %v6580 = vsel %vm6482, %v6451, %v5520
      %v6581 = vsel %vm6482, %v6452, %v5522
      %v6582 = vsel %vm6482, %v6453, %v5524
      %v6583 = vsel %vm6482, %v6454, %v5526
      %v6584 = vsel %vm6482, %v6455, %v5528
      %v6585 = vsel %vm6482, %v6456, %v5530
      %v6586 = vsel %vm6482, %v6457, %v5532
      %v6587 = vsel %vm6482, %v6458, %v5534
      %v6588 = vsel %vm6482, %v6459, %v5536
      %v6589 = vsel %vm6482, %v6460, %v5538
      %v6590 = vsel %vm6482, %v6461, %v5540
      %v6591 = vsel %vm6482, %v6462, %v5542
      %v6592 = vsel %vm6482, %v6463, %v5544
      %v6593 = vsel %vm6482, %v6464, %v5546
      %v6594 = vsel %vm6482, %v6465, %v5548
      %v6595 = vsel %vm6482, %v6466, %v5550
      %v6596 = vsel %vm6482, %v6467, %v5552
      %v6597 = vsel %vm6482, %v6468, %v5554
      %v6598 = vsel %vm6482, %v6469, %v5556
      %v6599 = vsel %vm6482, %v6470, %v5558
      %v6600 = vsel %vm6482, %v6471, %v5560
      %v6601 = vsel %vm6482, %v6472, %v5562
      %v6602 = vsel %vm6482, %v6473, %v5564
      %v6603 = vsel %vm6482, %v6474, %v5566
      %v6604 = vsel %vm6482, %v6475, %v5568
      %v6605 = vsel %vm6482, %v6476, %v5570
      %v6606 = vsel %vm6482, %v6477, %v5572
      %v6607 = vsel %vm6482, %v6478, %v5574
      %v6608 = vsel %vm6482, %v6479, %v5576
      %v6609 = vsel %vm6482, %v6480, %v5578
      %v6610 = vsel %vm6482, %v6481, %v5580
      %v6611 = vld [vmem:[%s3] sm:$0xff]
      %v6612 = vld [vmem:[%s3 + $0x8] sm:$0xff]
      %v6613 = vld [vmem:[%s3 + $0x10] sm:$0xff]
      %v6614 = vld [vmem:[%s3 + $0x18] sm:$0xff]
      %v6615 = vld [vmem:[%s3 + $0x20] sm:$0xff]
      %v6616 = vld [vmem:[%s3 + $0x28] sm:$0xff]
      %v6617 = vld [vmem:[%s3 + $0x30] sm:$0xff]
      %v6618 = vld [vmem:[%s3 + $0x38] sm:$0xff]
      %v6619 = vld [vmem:[%s3 + $0x40] sm:$0xff]
      %v6620 = vld [vmem:[%s3 + $0x48] sm:$0xff]
      %v6621 = vld [vmem:[%s3 + $0x50] sm:$0xff]
      %v6622 = vld [vmem:[%s3 + $0x58] sm:$0xff]
      %v6623 = vld [vmem:[%s3 + $0x60] sm:$0xff]
      %v6624 = vld [vmem:[%s3 + $0x68] sm:$0xff]
      %v6625 = vld [vmem:[%s3 + $0x70] sm:$0xff]
      %v6626 = vld [vmem:[%s3 + $0x78] sm:$0xff]
      %v6627 = vld [vmem:[%s3 + $0x80] sm:$0xff]
      %v6628 = vld [vmem:[%s3 + $0x88] sm:$0xff]
      %v6630 = vsel %vm273, %v1997, 0
      %v6633 = vsel %vm273, %v1998, 0
      %v6636 = vsel %vm273, %v1999, 0
      %v6639 = vsel %vm273, %v2000, 0
      %v6642 = vsel %vm273, %v2001, 0
      %v6645 = vsel %vm273, %v2002, 0
      %v6648 = vsel %vm273, %v2003, 0
      %v6651 = vsel %vm273, %v2004, 0
      %v6654 = vsel %vm273, %v2005, 0
      %v6657 = vsel %vm273, %v2006, 0
      %v6660 = vsel %vm273, %v2007, 0
      %v6663 = vsel %vm273, %v2008, 0
      %v6666 = vsel %vm273, %v2009, 0
      %v6669 = vsel %vm273, %v2010, 0
      %v6672 = vsel %vm273, %v2011, 0
      %v6675 = vsel %vm273, %v2012, 0
      %v6678 = vsel %vm273, %v2013, 0
      %v6681 = vsel %vm273, %v2014, 0
      %v6684 = vsel %vm273, %v2015, 0
      %v6687 = vsel %vm273, %v2016, 0
      %v6690 = vsel %vm273, %v2017, 0
      %v6693 = vsel %vm273, %v2018, 0
      %v6696 = vsel %vm273, %v2019, 0
      %v6699 = vsel %vm273, %v2020, 0
      %v6702 = vsel %vm273, %v2021, 0
      %v6705 = vsel %vm273, %v2022, 0
      %v6708 = vsel %vm273, %v2023, 0
      %v6711 = vsel %vm273, %v2024, 0
      %v6714 = vsel %vm273, %v2025, 0
      %v6717 = vsel %vm273, %v2026, 0
      %v6720 = vsel %vm273, %v2027, 0
      %v6723 = vsel %vm273, %v2028, 0
      %v6726 = vsel %vm273, %v2029, 0
      %v6729 = vsel %vm273, %v2030, 0
      %v6732 = vsel %vm273, %v2031, 0
      %v6735 = vsel %vm273, %v2032, 0
      %v6738 = vsel %vm273, %v2033, 0
      %v6741 = vsel %vm273, %v2034, 0
      %v6744 = vsel %vm273, %v2035, 0
      %v6747 = vsel %vm273, %v2036, 0
      %v6750 = vsel %vm273, %v2037, 0
      %v6753 = vsel %vm273, %v2038, 0
      %v6756 = vsel %vm273, %v2039, 0
      %v6759 = vsel %vm273, %v2040, 0
      %v6762 = vsel %vm273, %v2041, 0
      %v6765 = vsel %vm273, %v2042, 0
      %v6768 = vsel %vm273, %v2043, 0
      %v6771 = vsel %vm273, %v2044, 0
      %v6774 = vsel %vm273, %v2045, 0
      %v6777 = vsel %vm273, %v2046, 0
      %v6780 = vsel %vm273, %v2047, 0
      %v6783 = vsel %vm273, %v2048, 0
      %v6786 = vsel %vm273, %v2049, 0
      %v6789 = vsel %vm273, %v2050, 0
      %v6792 = vsel %vm273, %v2051, 0
      %v6795 = vsel %vm273, %v2052, 0
      %v6798 = vsel %vm273, %v2053, 0
      %v6801 = vsel %vm273, %v2054, 0
      %v6804 = vsel %vm273, %v2055, 0
      %v6807 = vsel %vm273, %v2056, 0
      %v6810 = vsel %vm273, %v2057, 0
      %v6813 = vsel %vm273, %v2058, 0
      %v6816 = vsel %vm273, %v2059, 0
      %v6819 = vsel %vm273, %v2060, 0
      %v6822 = vsel %vm273, %v2061, 0
      %v6825 = vsel %vm273, %v2062, 0
      %v6828 = vsel %vm273, %v2063, 0
      %v6831 = vsel %vm273, %v2064, 0
      %v6834 = vsel %vm273, %v2065, 0
      %v6837 = vsel %vm273, %v2066, 0
      %v6840 = vsel %vm273, %v2067, 0
      %v6843 = vsel %vm273, %v2068, 0
      %v6846 = vsel %vm273, %v2069, 0
      %v6849 = vsel %vm273, %v2070, 0
      %v6852 = vsel %vm273, %v2071, 0
      %v6855 = vsel %vm273, %v2072, 0
      %v6858 = vsel %vm273, %v2073, 0
      %v6861 = vsel %vm273, %v2074, 0
      %v6864 = vsel %vm273, %v2075, 0
      %v6867 = vsel %vm273, %v2076, 0
      %v6870 = vsel %vm273, %v2077, 0
      %v6873 = vsel %vm273, %v2078, 0
      %v6876 = vsel %vm273, %v2079, 0
      %v6879 = vsel %vm273, %v2080, 0
      %v6882 = vsel %vm273, %v2081, 0
      %v6885 = vsel %vm273, %v2082, 0
      %v6888 = vsel %vm273, %v2083, 0
      %v6891 = vsel %vm273, %v2084, 0
      %v6894 = vsel %vm273, %v2085, 0
      %v6897 = vsel %vm273, %v2086, 0
      %v6900 = vsel %vm273, %v2087, 0
      %v6903 = vsel %vm273, %v2088, 0
      %v6906 = vsel %vm273, %v2089, 0
      %v6909 = vsel %vm273, %v2090, 0
      %v6912 = vsel %vm273, %v2091, 0
      %v6915 = vsel %vm273, %v2092, 0
      %v6918 = vsel %vm273, %v2093, 0
      %v6921 = vsel %vm273, %v2094, 0
      %v6924 = vsel %vm273, %v2095, 0
      %v6927 = vsel %vm273, %v2096, 0
      %v6930 = vsel %vm273, %v2097, 0
      %v6933 = vsel %vm273, %v2098, 0
      %v6936 = vsel %vm273, %v2099, 0
      %v6939 = vsel %vm273, %v2100, 0
      %v6942 = vsel %vm273, %v2101, 0
      %v6945 = vsel %vm273, %v2102, 0
      %v6948 = vsel %vm273, %v2103, 0
      %v6951 = vsel %vm273, %v2104, 0
      %v6954 = vsel %vm273, %v2105, 0
      %v6957 = vsel %vm273, %v2106, 0
      %v6960 = vsel %vm273, %v2107, 0
      %v6963 = vsel %vm273, %v2108, 0
      %v6966 = vsel %vm273, %v2109, 0
      %v6969 = vsel %vm273, %v2110, 0
      %v6972 = vsel %vm273, %v2111, 0
      %v6975 = vsel %vm273, %v2112, 0
      %v6978 = vsel %vm273, %v2113, 0
      %v6981 = vsel %vm273, %v2114, 0
      %v6984 = vsel %vm273, %v2115, 0
      %v6987 = vsel %vm273, %v2116, 0
      %v6990 = vsel %vm273, %v2117, 0
      %v6993 = vsel %vm273, %v2118, 0
      %v6996 = vsel %vm273, %v2119, 0
      %v6999 = vsel %vm273, %v2120, 0
      %v7002 = vsel %vm273, %v2121, 0
      %v7005 = vsel %vm273, %v2122, 0
      %v7008 = vsel %vm273, %v2123, 0
      %v7011 = vsel %vm273, %v2124, 0
      %7013 = vmatprep.subr.mxu0 0.0
      %7014 = vmatpush1.msra.mxu0 %v6626
      %7015 = vmatprep.subr.mxu0 0.0
      %7016 = vmatpush1.msra.mxu0 %v6625
      %7017 = vmatprep.subr.mxu0 0.0
      %7018 = vmatpush1.msra.mxu0 %v6624
      %7019 = vmatprep.subr.mxu0 0.0
      %7020 = vmatpush1.msra.mxu0 %v6623
      %7021 = vmatprep.subr.mxu0 0.0
      %7022 = vmatpush1.msra.mxu0 %v6622
      %7023 = vmatprep.subr.mxu0 0.0
      %7024 = vmatpush1.msra.mxu0 %v6621
      %7025 = vmatprep.subr.mxu0 0.0
      %7026 = vmatpush1.msra.mxu0 %v6620
      %7027 = vmatprep.subr.mxu0 0.0
      %7028 = vmatpush1.msra.mxu0 %v6619
      %7029 = vmatprep.subr.mxu0 0.0
      %7030 = vmatpush1.msra.mxu0 %v6618
      %7031 = vmatprep.subr.mxu0 0.0
      %7032 = vmatpush1.msra.mxu0 %v6617
      %7033 = vmatprep.subr.mxu0 0.0
      %7034 = vmatpush1.msra.mxu0 %v6616
      %7035 = vmatprep.subr.mxu0 0.0
      %7036 = vmatpush1.msra.mxu0 %v6615
      %7037 = vmatprep.subr.mxu0 0.0
      %7038 = vmatpush1.msra.mxu0 %v6614
      %7039 = vmatprep.subr.mxu0 0.0
      %7040 = vmatpush1.msra.mxu0 %v6613
      %7041 = vmatprep.subr.mxu0 0.0
      %7042 = vmatpush1.msra.mxu0 %v6612
      %7043 = vmatprep.subr.mxu0 0.0
      %7044 = vmatpush1.msra.mxu0 %v6611
      %7045 = vmatprep.subr.mxu0 0.0
      %7046 = vmatpush2.msra.mxu0 0.0
      %7047 = vmatprep.subr.mxu0 0.0
      %7048 = vmatpush2.msra.mxu0 0.0
      %7049 = vmatprep.subr.mxu0 0.0
      %7050 = vmatpush2.msra.mxu0 0.0
      %7051 = vmatprep.subr.mxu0 0.0
      %7052 = vmatpush2.msra.mxu0 0.0
      %7053 = vmatprep.subr.mxu0 0.0
      %7054 = vmatpush2.msra.mxu0 0.0
      %7055 = vmatprep.subr.mxu0 0.0
      %7056 = vmatpush2.msra.mxu0 0.0
      %7057 = vmatprep.subr.mxu0 0.0
      %7058 = vmatpush2.msra.mxu0 0.0
      %7059 = vmatprep.subr.mxu0 0.0
      %7060 = vmatpush2.msra.mxu0 0.0
      %7061 = vmatprep.subr.mxu0 0.0
      %7062 = vmatpush2.msra.mxu0 0.0
      %7063 = vmatprep.subr.mxu0 0.0
      %7064 = vmatpush2.msra.mxu0 0.0
      %7065 = vmatprep.subr.mxu0 0.0
      %7066 = vmatpush2.msra.mxu0 0.0
      %7067 = vmatprep.subr.mxu0 0.0
      %7068 = vmatpush2.msra.mxu0 0.0
      %7069 = vmatprep.subr.mxu0 0.0
      %7070 = vmatpush2.msra.mxu0 0.0
      %7071 = vmatprep.subr.mxu0 0.0
      %7072 = vmatpush2.msra.mxu0 0.0
      %7073 = vmatprep.subr.mxu0 0.0
      %7074 = vmatpush2.msra.mxu0 %v6628
      %7075 = vmatprep.subr.mxu0 0.0
      %7076 = vmatpush2.msra.mxu0 %v6627
      %7077 = vmatprep.mubr.f32.mxu0 %v6630
      %7078 = vmatmul.mubr.f32.gmra.mxu0 %v6483
      %v7079 = vpop.f32.mrf.mxu0
      %v7080 = vadd.f32 0.0, %v7079
      %v7081 = vpop.f32.mrf.mxu0
      %7082 = vmatprep.mubr.f32.mxu0 %v6633
      %7083 = vmatmul.mubr.f32.gmra.mxu0 %v6484
      %v7084 = vpop.f32.mrf.mxu0
      %v7085 = vadd.f32 0.0, %v7084
      %v7086 = vpop.f32.mrf.mxu0
      %7087 = vmatprep.mubr.f32.mxu0 %v6636
      %7088 = vmatmul.mubr.f32.gmra.mxu0 %v6485
      %v7089 = vpop.f32.mrf.mxu0
      %v7090 = vadd.f32 0.0, %v7089
      %v7091 = vpop.f32.mrf.mxu0
      %7092 = vmatprep.mubr.f32.mxu0 %v6639
      %7093 = vmatmul.mubr.f32.gmra.mxu0 %v6486
      %v7094 = vpop.f32.mrf.mxu0
      %v7095 = vadd.f32 0.0, %v7094
      %v7096 = vpop.f32.mrf.mxu0
      %7097 = vmatprep.mubr.f32.mxu0 %v6642
      %7098 = vmatmul.mubr.f32.gmra.mxu0 %v6487
      %v7099 = vpop.f32.mrf.mxu0
      %v7100 = vadd.f32 0.0, %v7099
      %v7101 = vpop.f32.mrf.mxu0
      %7102 = vmatprep.mubr.f32.mxu0 %v6645
      %7103 = vmatmul.mubr.f32.gmra.mxu0 %v6488
      %v7104 = vpop.f32.mrf.mxu0
      %v7105 = vadd.f32 0.0, %v7104
      %v7106 = vpop.f32.mrf.mxu0
      %7107 = vmatprep.mubr.f32.mxu0 %v6648
      %7108 = vmatmul.mubr.f32.gmra.mxu0 %v6489
      %v7109 = vpop.f32.mrf.mxu0
      %v7110 = vadd.f32 0.0, %v7109
      %v7111 = vpop.f32.mrf.mxu0
      %7112 = vmatprep.mubr.f32.mxu0 %v6651
      %7113 = vmatmul.mubr.f32.gmra.mxu0 %v6490
      %v7114 = vpop.f32.mrf.mxu0
      %v7115 = vadd.f32 0.0, %v7114
      %v7116 = vpop.f32.mrf.mxu0
      %7117 = vmatprep.mubr.f32.mxu0 %v6654
      %7118 = vmatmul.mubr.f32.gmra.mxu0 %v6491
      %v7119 = vpop.f32.mrf.mxu0
      %v7120 = vadd.f32 0.0, %v7119
      %v7121 = vpop.f32.mrf.mxu0
      %7122 = vmatprep.mubr.f32.mxu0 %v6657
      %7123 = vmatmul.mubr.f32.gmra.mxu0 %v6492
      %v7124 = vpop.f32.mrf.mxu0
      %v7125 = vadd.f32 0.0, %v7124
      %v7126 = vpop.f32.mrf.mxu0
      %7127 = vmatprep.mubr.f32.mxu0 %v6660
      %7128 = vmatmul.mubr.f32.gmra.mxu0 %v6493
      %v7129 = vpop.f32.mrf.mxu0
      %v7130 = vadd.f32 0.0, %v7129
      %v7131 = vpop.f32.mrf.mxu0
      %7132 = vmatprep.mubr.f32.mxu0 %v6663
      %7133 = vmatmul.mubr.f32.gmra.mxu0 %v6494
      %v7134 = vpop.f32.mrf.mxu0
      %v7135 = vadd.f32 0.0, %v7134
      %v7136 = vpop.f32.mrf.mxu0
      %7137 = vmatprep.mubr.f32.mxu0 %v6666
      %7138 = vmatmul.mubr.f32.gmra.mxu0 %v6495
      %v7139 = vpop.f32.mrf.mxu0
      %v7140 = vadd.f32 0.0, %v7139
      %v7141 = vpop.f32.mrf.mxu0
      %7142 = vmatprep.mubr.f32.mxu0 %v6669
      %7143 = vmatmul.mubr.f32.gmra.mxu0 %v6496
      %v7144 = vpop.f32.mrf.mxu0
      %v7145 = vadd.f32 0.0, %v7144
      %v7146 = vpop.f32.mrf.mxu0
      %7147 = vmatprep.mubr.f32.mxu0 %v6672
      %7148 = vmatmul.mubr.f32.gmra.mxu0 %v6497
      %v7149 = vpop.f32.mrf.mxu0
      %v7150 = vadd.f32 0.0, %v7149
      %v7151 = vpop.f32.mrf.mxu0
      %7152 = vmatprep.mubr.f32.mxu0 %v6675
      %7153 = vmatmul.mubr.f32.gmra.mxu0 %v6498
      %v7154 = vpop.f32.mrf.mxu0
      %v7155 = vadd.f32 0.0, %v7154
      %v7156 = vpop.f32.mrf.mxu0
      %7157 = vmatprep.mubr.f32.mxu0 %v6678
      %7158 = vmatmul.mubr.f32.gmra.mxu0 %v6499
      %v7159 = vpop.f32.mrf.mxu0
      %v7160 = vadd.f32 0.0, %v7159
      %v7161 = vpop.f32.mrf.mxu0
      %7162 = vmatprep.mubr.f32.mxu0 %v6681
      %7163 = vmatmul.mubr.f32.gmra.mxu0 %v6500
      %v7164 = vpop.f32.mrf.mxu0
      %v7165 = vadd.f32 0.0, %v7164
      %v7166 = vpop.f32.mrf.mxu0
      %7167 = vmatprep.mubr.f32.mxu0 %v6684
      %7168 = vmatmul.mubr.f32.gmra.mxu0 %v6501
      %v7169 = vpop.f32.mrf.mxu0
      %v7170 = vadd.f32 0.0, %v7169
      %v7171 = vpop.f32.mrf.mxu0
      %7172 = vmatprep.mubr.f32.mxu0 %v6687
      %7173 = vmatmul.mubr.f32.gmra.mxu0 %v6502
      %v7174 = vpop.f32.mrf.mxu0
      %v7175 = vadd.f32 0.0, %v7174
      %v7176 = vpop.f32.mrf.mxu0
      %7177 = vmatprep.mubr.f32.mxu0 %v6690
      %7178 = vmatmul.mubr.f32.gmra.mxu0 %v6503
      %v7179 = vpop.f32.mrf.mxu0
      %v7180 = vadd.f32 0.0, %v7179
      %v7181 = vpop.f32.mrf.mxu0
      %7182 = vmatprep.mubr.f32.mxu0 %v6693
      %7183 = vmatmul.mubr.f32.gmra.mxu0 %v6504
      %v7184 = vpop.f32.mrf.mxu0
      %v7185 = vadd.f32 0.0, %v7184
      %v7186 = vpop.f32.mrf.mxu0
      %7187 = vmatprep.mubr.f32.mxu0 %v6696
      %7188 = vmatmul.mubr.f32.gmra.mxu0 %v6505
      %v7189 = vpop.f32.mrf.mxu0
      %v7190 = vadd.f32 0.0, %v7189
      %v7191 = vpop.f32.mrf.mxu0
      %7192 = vmatprep.mubr.f32.mxu0 %v6699
      %7193 = vmatmul.mubr.f32.gmra.mxu0 %v6506
      %v7194 = vpop.f32.mrf.mxu0
      %v7195 = vadd.f32 0.0, %v7194
      %v7196 = vpop.f32.mrf.mxu0
      %7197 = vmatprep.mubr.f32.mxu0 %v6702
      %7198 = vmatmul.mubr.f32.gmra.mxu0 %v6507
      %v7199 = vpop.f32.mrf.mxu0
      %v7200 = vadd.f32 0.0, %v7199
      %v7201 = vpop.f32.mrf.mxu0
      %7202 = vmatprep.mubr.f32.mxu0 %v6705
      %7203 = vmatmul.mubr.f32.gmra.mxu0 %v6508
      %v7204 = vpop.f32.mrf.mxu0
      %v7205 = vadd.f32 0.0, %v7204
      %v7206 = vpop.f32.mrf.mxu0
      %7207 = vmatprep.mubr.f32.mxu0 %v6708
      %7208 = vmatmul.mubr.f32.gmra.mxu0 %v6509
      %v7209 = vpop.f32.mrf.mxu0
      %v7210 = vadd.f32 0.0, %v7209
      %v7211 = vpop.f32.mrf.mxu0
      %7212 = vmatprep.mubr.f32.mxu0 %v6711
      %7213 = vmatmul.mubr.f32.gmra.mxu0 %v6510
      %v7214 = vpop.f32.mrf.mxu0
      %v7215 = vadd.f32 0.0, %v7214
      %v7216 = vpop.f32.mrf.mxu0
      %7217 = vmatprep.mubr.f32.mxu0 %v6714
      %7218 = vmatmul.mubr.f32.gmra.mxu0 %v6511
      %v7219 = vpop.f32.mrf.mxu0
      %v7220 = vadd.f32 0.0, %v7219
      %v7221 = vpop.f32.mrf.mxu0
      %7222 = vmatprep.mubr.f32.mxu0 %v6717
      %7223 = vmatmul.mubr.f32.gmra.mxu0 %v6512
      %v7224 = vpop.f32.mrf.mxu0
      %v7225 = vadd.f32 0.0, %v7224
      %v7226 = vpop.f32.mrf.mxu0
      %7227 = vmatprep.mubr.f32.mxu0 %v6720
      %7228 = vmatmul.mubr.f32.gmra.mxu0 %v6513
      %v7229 = vpop.f32.mrf.mxu0
      %v7230 = vadd.f32 0.0, %v7229
      %v7231 = vpop.f32.mrf.mxu0
      %7232 = vmatprep.mubr.f32.mxu0 %v6723
      %7233 = vmatmul.mubr.f32.gmra.mxu0 %v6514
      %v7234 = vpop.f32.mrf.mxu0
      %v7235 = vadd.f32 0.0, %v7234
      %v7236 = vpop.f32.mrf.mxu0
      %7237 = vmatprep.mubr.f32.mxu0 %v6726
      %7238 = vmatmul.mubr.f32.gmra.mxu0 %v6515
      %v7239 = vpop.f32.mrf.mxu0
      %v7240 = vadd.f32 0.0, %v7239
      %v7241 = vpop.f32.mrf.mxu0
      %7242 = vmatprep.mubr.f32.mxu0 %v6729
      %7243 = vmatmul.mubr.f32.gmra.mxu0 %v6516
      %v7244 = vpop.f32.mrf.mxu0
      %v7245 = vadd.f32 0.0, %v7244
      %v7246 = vpop.f32.mrf.mxu0
      %7247 = vmatprep.mubr.f32.mxu0 %v6732
      %7248 = vmatmul.mubr.f32.gmra.mxu0 %v6517
      %v7249 = vpop.f32.mrf.mxu0
      %v7250 = vadd.f32 0.0, %v7249
      %v7251 = vpop.f32.mrf.mxu0
      %7252 = vmatprep.mubr.f32.mxu0 %v6735
      %7253 = vmatmul.mubr.f32.gmra.mxu0 %v6518
      %v7254 = vpop.f32.mrf.mxu0
      %v7255 = vadd.f32 0.0, %v7254
      %v7256 = vpop.f32.mrf.mxu0
      %7257 = vmatprep.mubr.f32.mxu0 %v6738
      %7258 = vmatmul.mubr.f32.gmra.mxu0 %v6519
      %v7259 = vpop.f32.mrf.mxu0
      %v7260 = vadd.f32 0.0, %v7259
      %v7261 = vpop.f32.mrf.mxu0
      %7262 = vmatprep.mubr.f32.mxu0 %v6741
      %7263 = vmatmul.mubr.f32.gmra.mxu0 %v6520
      %v7264 = vpop.f32.mrf.mxu0
      %v7265 = vadd.f32 0.0, %v7264
      %v7266 = vpop.f32.mrf.mxu0
      %7267 = vmatprep.mubr.f32.mxu0 %v6744
      %7268 = vmatmul.mubr.f32.gmra.mxu0 %v6521
      %v7269 = vpop.f32.mrf.mxu0
      %v7270 = vadd.f32 0.0, %v7269
      %v7271 = vpop.f32.mrf.mxu0
      %7272 = vmatprep.mubr.f32.mxu0 %v6747
      %7273 = vmatmul.mubr.f32.gmra.mxu0 %v6522
      %v7274 = vpop.f32.mrf.mxu0
      %v7275 = vadd.f32 0.0, %v7274
      %v7276 = vpop.f32.mrf.mxu0
      %7277 = vmatprep.mubr.f32.mxu0 %v6750
      %7278 = vmatmul.mubr.f32.gmra.mxu0 %v6523
      %v7279 = vpop.f32.mrf.mxu0
      %v7280 = vadd.f32 0.0, %v7279
      %v7281 = vpop.f32.mrf.mxu0
      %7282 = vmatprep.mubr.f32.mxu0 %v6753
      %7283 = vmatmul.mubr.f32.gmra.mxu0 %v6524
      %v7284 = vpop.f32.mrf.mxu0
      %v7285 = vadd.f32 0.0, %v7284
      %v7286 = vpop.f32.mrf.mxu0
      %7287 = vmatprep.mubr.f32.mxu0 %v6756
      %7288 = vmatmul.mubr.f32.gmra.mxu0 %v6525
      %v7289 = vpop.f32.mrf.mxu0
      %v7290 = vadd.f32 0.0, %v7289
      %v7291 = vpop.f32.mrf.mxu0
      %7292 = vmatprep.mubr.f32.mxu0 %v6759
      %7293 = vmatmul.mubr.f32.gmra.mxu0 %v6526
      %v7294 = vpop.f32.mrf.mxu0
      %v7295 = vadd.f32 0.0, %v7294
      %v7296 = vpop.f32.mrf.mxu0
      %7297 = vmatprep.mubr.f32.mxu0 %v6762
      %7298 = vmatmul.mubr.f32.gmra.mxu0 %v6527
      %v7299 = vpop.f32.mrf.mxu0
      %v7300 = vadd.f32 0.0, %v7299
      %v7301 = vpop.f32.mrf.mxu0
      %7302 = vmatprep.mubr.f32.mxu0 %v6765
      %7303 = vmatmul.mubr.f32.gmra.mxu0 %v6528
      %v7304 = vpop.f32.mrf.mxu0
      %v7305 = vadd.f32 0.0, %v7304
      %v7306 = vpop.f32.mrf.mxu0
      %7307 = vmatprep.mubr.f32.mxu0 %v6768
      %7308 = vmatmul.mubr.f32.gmra.mxu0 %v6529
      %v7309 = vpop.f32.mrf.mxu0
      %v7310 = vadd.f32 0.0, %v7309
      %v7311 = vpop.f32.mrf.mxu0
      %7312 = vmatprep.mubr.f32.mxu0 %v6771
      %7313 = vmatmul.mubr.f32.gmra.mxu0 %v6530
      %v7314 = vpop.f32.mrf.mxu0
      %v7315 = vadd.f32 0.0, %v7314
      %v7316 = vpop.f32.mrf.mxu0
      %7317 = vmatprep.mubr.f32.mxu0 %v6774
      %7318 = vmatmul.mubr.f32.gmra.mxu0 %v6531
      %v7319 = vpop.f32.mrf.mxu0
      %v7320 = vadd.f32 0.0, %v7319
      %v7321 = vpop.f32.mrf.mxu0
      %7322 = vmatprep.mubr.f32.mxu0 %v6777
      %7323 = vmatmul.mubr.f32.gmra.mxu0 %v6532
      %v7324 = vpop.f32.mrf.mxu0
      %v7325 = vadd.f32 0.0, %v7324
      %v7326 = vpop.f32.mrf.mxu0
      %7327 = vmatprep.mubr.f32.mxu0 %v6780
      %7328 = vmatmul.mubr.f32.gmra.mxu0 %v6533
      %v7329 = vpop.f32.mrf.mxu0
      %v7330 = vadd.f32 0.0, %v7329
      %v7331 = vpop.f32.mrf.mxu0
      %7332 = vmatprep.mubr.f32.mxu0 %v6783
      %7333 = vmatmul.mubr.f32.gmra.mxu0 %v6534
      %v7334 = vpop.f32.mrf.mxu0
      %v7335 = vadd.f32 0.0, %v7334
      %v7336 = vpop.f32.mrf.mxu0
      %7337 = vmatprep.mubr.f32.mxu0 %v6786
      %7338 = vmatmul.mubr.f32.gmra.mxu0 %v6535
      %v7339 = vpop.f32.mrf.mxu0
      %v7340 = vadd.f32 0.0, %v7339
      %v7341 = vpop.f32.mrf.mxu0
      %7342 = vmatprep.mubr.f32.mxu0 %v6789
      %7343 = vmatmul.mubr.f32.gmra.mxu0 %v6536
      %v7344 = vpop.f32.mrf.mxu0
      %v7345 = vadd.f32 0.0, %v7344
      %v7346 = vpop.f32.mrf.mxu0
      %7347 = vmatprep.mubr.f32.mxu0 %v6792
      %7348 = vmatmul.mubr.f32.gmra.mxu0 %v6537
      %v7349 = vpop.f32.mrf.mxu0
      %v7350 = vadd.f32 0.0, %v7349
      %v7351 = vpop.f32.mrf.mxu0
      %7352 = vmatprep.mubr.f32.mxu0 %v6795
      %7353 = vmatmul.mubr.f32.gmra.mxu0 %v6538
      %v7354 = vpop.f32.mrf.mxu0
      %v7355 = vadd.f32 0.0, %v7354
      %v7356 = vpop.f32.mrf.mxu0
      %7357 = vmatprep.mubr.f32.mxu0 %v6798
      %7358 = vmatmul.mubr.f32.gmra.mxu0 %v6539
      %v7359 = vpop.f32.mrf.mxu0
      %v7360 = vadd.f32 0.0, %v7359
      %v7361 = vpop.f32.mrf.mxu0
      %7362 = vmatprep.mubr.f32.mxu0 %v6801
      %7363 = vmatmul.mubr.f32.gmra.mxu0 %v6540
      %v7364 = vpop.f32.mrf.mxu0
      %v7365 = vadd.f32 0.0, %v7364
      %v7366 = vpop.f32.mrf.mxu0
      %7367 = vmatprep.mubr.f32.mxu0 %v6804
      %7368 = vmatmul.mubr.f32.gmra.mxu0 %v6541
      %v7369 = vpop.f32.mrf.mxu0
      %v7370 = vadd.f32 0.0, %v7369
      %v7371 = vpop.f32.mrf.mxu0
      %7372 = vmatprep.mubr.f32.mxu0 %v6807
      %7373 = vmatmul.mubr.f32.gmra.mxu0 %v6542
      %v7374 = vpop.f32.mrf.mxu0
      %v7375 = vadd.f32 0.0, %v7374
      %v7376 = vpop.f32.mrf.mxu0
      %7377 = vmatprep.mubr.f32.mxu0 %v6810
      %7378 = vmatmul.mubr.f32.gmra.mxu0 %v6543
      %v7379 = vpop.f32.mrf.mxu0
      %v7380 = vadd.f32 0.0, %v7379
      %v7381 = vpop.f32.mrf.mxu0
      %7382 = vmatprep.mubr.f32.mxu0 %v6813
      %7383 = vmatmul.mubr.f32.gmra.mxu0 %v6544
      %v7384 = vpop.f32.mrf.mxu0
      %v7385 = vadd.f32 0.0, %v7384
      %v7386 = vpop.f32.mrf.mxu0
      %7387 = vmatprep.mubr.f32.mxu0 %v6816
      %7388 = vmatmul.mubr.f32.gmra.mxu0 %v6545
      %v7389 = vpop.f32.mrf.mxu0
      %v7390 = vadd.f32 0.0, %v7389
      %v7391 = vpop.f32.mrf.mxu0
      %7392 = vmatprep.mubr.f32.mxu0 %v6819
      %7393 = vmatmul.mubr.f32.gmra.mxu0 %v6546
      %v7394 = vpop.f32.mrf.mxu0
      %v7395 = vadd.f32 0.0, %v7394
      %v7396 = vpop.f32.mrf.mxu0
      %7397 = vmatprep.mubr.f32.mxu0 %v6822
      %7398 = vmatmul.mubr.f32.gmra.mxu0 %v6547
      %v7399 = vpop.f32.mrf.mxu0
      %v7400 = vadd.f32 0.0, %v7399
      %v7401 = vpop.f32.mrf.mxu0
      %7402 = vmatprep.mubr.f32.mxu0 %v6825
      %7403 = vmatmul.mubr.f32.gmra.mxu0 %v6548
      %v7404 = vpop.f32.mrf.mxu0
      %v7405 = vadd.f32 0.0, %v7404
      %v7406 = vpop.f32.mrf.mxu0
      %7407 = vmatprep.mubr.f32.mxu0 %v6828
      %7408 = vmatmul.mubr.f32.gmra.mxu0 %v6549
      %v7409 = vpop.f32.mrf.mxu0
      %v7410 = vadd.f32 0.0, %v7409
      %v7411 = vpop.f32.mrf.mxu0
      %7412 = vmatprep.mubr.f32.mxu0 %v6831
      %7413 = vmatmul.mubr.f32.gmra.mxu0 %v6550
      %v7414 = vpop.f32.mrf.mxu0
      %v7415 = vadd.f32 0.0, %v7414
      %v7416 = vpop.f32.mrf.mxu0
      %7417 = vmatprep.mubr.f32.mxu0 %v6834
      %7418 = vmatmul.mubr.f32.gmra.mxu0 %v6551
      %v7419 = vpop.f32.mrf.mxu0
      %v7420 = vadd.f32 0.0, %v7419
      %v7421 = vpop.f32.mrf.mxu0
      %7422 = vmatprep.mubr.f32.mxu0 %v6837
      %7423 = vmatmul.mubr.f32.gmra.mxu0 %v6552
      %v7424 = vpop.f32.mrf.mxu0
      %v7425 = vadd.f32 0.0, %v7424
      %v7426 = vpop.f32.mrf.mxu0
      %7427 = vmatprep.mubr.f32.mxu0 %v6840
      %7428 = vmatmul.mubr.f32.gmra.mxu0 %v6553
      %v7429 = vpop.f32.mrf.mxu0
      %v7430 = vadd.f32 0.0, %v7429
      %v7431 = vpop.f32.mrf.mxu0
      %7432 = vmatprep.mubr.f32.mxu0 %v6843
      %7433 = vmatmul.mubr.f32.gmra.mxu0 %v6554
      %v7434 = vpop.f32.mrf.mxu0
      %v7435 = vadd.f32 0.0, %v7434
      %v7436 = vpop.f32.mrf.mxu0
      %7437 = vmatprep.mubr.f32.mxu0 %v6846
      %7438 = vmatmul.mubr.f32.gmra.mxu0 %v6555
      %v7439 = vpop.f32.mrf.mxu0
      %v7440 = vadd.f32 0.0, %v7439
      %v7441 = vpop.f32.mrf.mxu0
      %7442 = vmatprep.mubr.f32.mxu0 %v6849
      %7443 = vmatmul.mubr.f32.gmra.mxu0 %v6556
      %v7444 = vpop.f32.mrf.mxu0
      %v7445 = vadd.f32 0.0, %v7444
      %v7446 = vpop.f32.mrf.mxu0
      %7447 = vmatprep.mubr.f32.mxu0 %v6852
      %7448 = vmatmul.mubr.f32.gmra.mxu0 %v6557
      %v7449 = vpop.f32.mrf.mxu0
      %v7450 = vadd.f32 0.0, %v7449
      %v7451 = vpop.f32.mrf.mxu0
      %7452 = vmatprep.mubr.f32.mxu0 %v6855
      %7453 = vmatmul.mubr.f32.gmra.mxu0 %v6558
      %v7454 = vpop.f32.mrf.mxu0
      %v7455 = vadd.f32 0.0, %v7454
      %v7456 = vpop.f32.mrf.mxu0
      %7457 = vmatprep.mubr.f32.mxu0 %v6858
      %7458 = vmatmul.mubr.f32.gmra.mxu0 %v6559
      %v7459 = vpop.f32.mrf.mxu0
      %v7460 = vadd.f32 0.0, %v7459
      %v7461 = vpop.f32.mrf.mxu0
      %7462 = vmatprep.mubr.f32.mxu0 %v6861
      %7463 = vmatmul.mubr.f32.gmra.mxu0 %v6560
      %v7464 = vpop.f32.mrf.mxu0
      %v7465 = vadd.f32 0.0, %v7464
      %v7466 = vpop.f32.mrf.mxu0
      %7467 = vmatprep.mubr.f32.mxu0 %v6864
      %7468 = vmatmul.mubr.f32.gmra.mxu0 %v6561
      %v7469 = vpop.f32.mrf.mxu0
      %v7470 = vadd.f32 0.0, %v7469
      %v7471 = vpop.f32.mrf.mxu0
      %7472 = vmatprep.mubr.f32.mxu0 %v6867
      %7473 = vmatmul.mubr.f32.gmra.mxu0 %v6562
      %v7474 = vpop.f32.mrf.mxu0
      %v7475 = vadd.f32 0.0, %v7474
      %v7476 = vpop.f32.mrf.mxu0
      %7477 = vmatprep.mubr.f32.mxu0 %v6870
      %7478 = vmatmul.mubr.f32.gmra.mxu0 %v6563
      %v7479 = vpop.f32.mrf.mxu0
      %v7480 = vadd.f32 0.0, %v7479
      %v7481 = vpop.f32.mrf.mxu0
      %7482 = vmatprep.mubr.f32.mxu0 %v6873
      %7483 = vmatmul.mubr.f32.gmra.mxu0 %v6564
      %v7484 = vpop.f32.mrf.mxu0
      %v7485 = vadd.f32 0.0, %v7484
      %v7486 = vpop.f32.mrf.mxu0
      %7487 = vmatprep.mubr.f32.mxu0 %v6876
      %7488 = vmatmul.mubr.f32.gmra.mxu0 %v6565
      %v7489 = vpop.f32.mrf.mxu0
      %v7490 = vadd.f32 0.0, %v7489
      %v7491 = vpop.f32.mrf.mxu0
      %7492 = vmatprep.mubr.f32.mxu0 %v6879
      %7493 = vmatmul.mubr.f32.gmra.mxu0 %v6566
      %v7494 = vpop.f32.mrf.mxu0
      %v7495 = vadd.f32 0.0, %v7494
      %v7496 = vpop.f32.mrf.mxu0
      %7497 = vmatprep.mubr.f32.mxu0 %v6882
      %7498 = vmatmul.mubr.f32.gmra.mxu0 %v6567
      %v7499 = vpop.f32.mrf.mxu0
      %v7500 = vadd.f32 0.0, %v7499
      %v7501 = vpop.f32.mrf.mxu0
      %7502 = vmatprep.mubr.f32.mxu0 %v6885
      %7503 = vmatmul.mubr.f32.gmra.mxu0 %v6568
      %v7504 = vpop.f32.mrf.mxu0
      %v7505 = vadd.f32 0.0, %v7504
      %v7506 = vpop.f32.mrf.mxu0
      %7507 = vmatprep.mubr.f32.mxu0 %v6888
      %7508 = vmatmul.mubr.f32.gmra.mxu0 %v6569
      %v7509 = vpop.f32.mrf.mxu0
      %v7510 = vadd.f32 0.0, %v7509
      %v7511 = vpop.f32.mrf.mxu0
      %7512 = vmatprep.mubr.f32.mxu0 %v6891
      %7513 = vmatmul.mubr.f32.gmra.mxu0 %v6570
      %v7514 = vpop.f32.mrf.mxu0
      %v7515 = vadd.f32 0.0, %v7514
      %v7516 = vpop.f32.mrf.mxu0
      %7517 = vmatprep.mubr.f32.mxu0 %v6894
      %7518 = vmatmul.mubr.f32.gmra.mxu0 %v6571
      %v7519 = vpop.f32.mrf.mxu0
      %v7520 = vadd.f32 0.0, %v7519
      %v7521 = vpop.f32.mrf.mxu0
      %7522 = vmatprep.mubr.f32.mxu0 %v6897
      %7523 = vmatmul.mubr.f32.gmra.mxu0 %v6572
      %v7524 = vpop.f32.mrf.mxu0
      %v7525 = vadd.f32 0.0, %v7524
      %v7526 = vpop.f32.mrf.mxu0
      %7527 = vmatprep.mubr.f32.mxu0 %v6900
      %7528 = vmatmul.mubr.f32.gmra.mxu0 %v6573
      %v7529 = vpop.f32.mrf.mxu0
      %v7530 = vadd.f32 0.0, %v7529
      %v7531 = vpop.f32.mrf.mxu0
      %7532 = vmatprep.mubr.f32.mxu0 %v6903
      %7533 = vmatmul.mubr.f32.gmra.mxu0 %v6574
      %v7534 = vpop.f32.mrf.mxu0
      %v7535 = vadd.f32 0.0, %v7534
      %v7536 = vpop.f32.mrf.mxu0
      %7537 = vmatprep.mubr.f32.mxu0 %v6906
      %7538 = vmatmul.mubr.f32.gmra.mxu0 %v6575
      %v7539 = vpop.f32.mrf.mxu0
      %v7540 = vadd.f32 0.0, %v7539
      %v7541 = vpop.f32.mrf.mxu0
      %7542 = vmatprep.mubr.f32.mxu0 %v6909
      %7543 = vmatmul.mubr.f32.gmra.mxu0 %v6576
      %v7544 = vpop.f32.mrf.mxu0
      %v7545 = vadd.f32 0.0, %v7544
      %v7546 = vpop.f32.mrf.mxu0
      %7547 = vmatprep.mubr.f32.mxu0 %v6912
      %7548 = vmatmul.mubr.f32.gmra.mxu0 %v6577
      %v7549 = vpop.f32.mrf.mxu0
      %v7550 = vadd.f32 0.0, %v7549
      %v7551 = vpop.f32.mrf.mxu0
      %7552 = vmatprep.mubr.f32.mxu0 %v6915
      %7553 = vmatmul.mubr.f32.gmra.mxu0 %v6578
      %v7554 = vpop.f32.mrf.mxu0
      %v7555 = vadd.f32 0.0, %v7554
      %v7556 = vpop.f32.mrf.mxu0
      %7557 = vmatprep.mubr.f32.mxu0 %v6918
      %7558 = vmatmul.mubr.f32.gmra.mxu0 %v6579
      %v7559 = vpop.f32.mrf.mxu0
      %v7560 = vadd.f32 0.0, %v7559
      %v7561 = vpop.f32.mrf.mxu0
      %7562 = vmatprep.mubr.f32.mxu0 %v6921
      %7563 = vmatmul.mubr.f32.gmra.mxu0 %v6580
      %v7564 = vpop.f32.mrf.mxu0
      %v7565 = vadd.f32 0.0, %v7564
      %v7566 = vpop.f32.mrf.mxu0
      %7567 = vmatprep.mubr.f32.mxu0 %v6924
      %7568 = vmatmul.mubr.f32.gmra.mxu0 %v6581
      %v7569 = vpop.f32.mrf.mxu0
      %v7570 = vadd.f32 0.0, %v7569
      %v7571 = vpop.f32.mrf.mxu0
      %7572 = vmatprep.mubr.f32.mxu0 %v6927
      %7573 = vmatmul.mubr.f32.gmra.mxu0 %v6582
      %v7574 = vpop.f32.mrf.mxu0
      %v7575 = vadd.f32 0.0, %v7574
      %v7576 = vpop.f32.mrf.mxu0
      %7577 = vmatprep.mubr.f32.mxu0 %v6930
      %7578 = vmatmul.mubr.f32.gmra.mxu0 %v6583
      %v7579 = vpop.f32.mrf.mxu0
      %v7580 = vadd.f32 0.0, %v7579
      %v7581 = vpop.f32.mrf.mxu0
      %7582 = vmatprep.mubr.f32.mxu0 %v6933
      %7583 = vmatmul.mubr.f32.gmra.mxu0 %v6584
      %v7584 = vpop.f32.mrf.mxu0
      %v7585 = vadd.f32 0.0, %v7584
      %v7586 = vpop.f32.mrf.mxu0
      %7587 = vmatprep.mubr.f32.mxu0 %v6936
      %7588 = vmatmul.mubr.f32.gmra.mxu0 %v6585
      %v7589 = vpop.f32.mrf.mxu0
      %v7590 = vadd.f32 0.0, %v7589
      %v7591 = vpop.f32.mrf.mxu0
      %7592 = vmatprep.mubr.f32.mxu0 %v6939
      %7593 = vmatmul.mubr.f32.gmra.mxu0 %v6586
      %v7594 = vpop.f32.mrf.mxu0
      %v7595 = vadd.f32 0.0, %v7594
      %v7596 = vpop.f32.mrf.mxu0
      %7597 = vmatprep.mubr.f32.mxu0 %v6942
      %7598 = vmatmul.mubr.f32.gmra.mxu0 %v6587
      %v7599 = vpop.f32.mrf.mxu0
      %v7600 = vadd.f32 0.0, %v7599
      %v7601 = vpop.f32.mrf.mxu0
      %7602 = vmatprep.mubr.f32.mxu0 %v6945
      %7603 = vmatmul.mubr.f32.gmra.mxu0 %v6588
      %v7604 = vpop.f32.mrf.mxu0
      %v7605 = vadd.f32 0.0, %v7604
      %v7606 = vpop.f32.mrf.mxu0
      %7607 = vmatprep.mubr.f32.mxu0 %v6948
      %7608 = vmatmul.mubr.f32.gmra.mxu0 %v6589
      %v7609 = vpop.f32.mrf.mxu0
      %v7610 = vadd.f32 0.0, %v7609
      %v7611 = vpop.f32.mrf.mxu0
      %7612 = vmatprep.mubr.f32.mxu0 %v6951
      %7613 = vmatmul.mubr.f32.gmra.mxu0 %v6590
      %v7614 = vpop.f32.mrf.mxu0
      %v7615 = vadd.f32 0.0, %v7614
      %v7616 = vpop.f32.mrf.mxu0
      %7617 = vmatprep.mubr.f32.mxu0 %v6954
      %7618 = vmatmul.mubr.f32.gmra.mxu0 %v6591
      %v7619 = vpop.f32.mrf.mxu0
      %v7620 = vadd.f32 0.0, %v7619
      %v7621 = vpop.f32.mrf.mxu0
      %7622 = vmatprep.mubr.f32.mxu0 %v6957
      %7623 = vmatmul.mubr.f32.gmra.mxu0 %v6592
      %v7624 = vpop.f32.mrf.mxu0
      %v7625 = vadd.f32 0.0, %v7624
      %v7626 = vpop.f32.mrf.mxu0
      %7627 = vmatprep.mubr.f32.mxu0 %v6960
      %7628 = vmatmul.mubr.f32.gmra.mxu0 %v6593
      %v7629 = vpop.f32.mrf.mxu0
      %v7630 = vadd.f32 0.0, %v7629
      %v7631 = vpop.f32.mrf.mxu0
      %7632 = vmatprep.mubr.f32.mxu0 %v6963
      %7633 = vmatmul.mubr.f32.gmra.mxu0 %v6594
      %v7634 = vpop.f32.mrf.mxu0
      %v7635 = vadd.f32 0.0, %v7634
      %v7636 = vpop.f32.mrf.mxu0
      %7637 = vmatprep.mubr.f32.mxu0 %v6966
      %7638 = vmatmul.mubr.f32.gmra.mxu0 %v6595
      %v7639 = vpop.f32.mrf.mxu0
      %v7640 = vadd.f32 0.0, %v7639
      %v7641 = vpop.f32.mrf.mxu0
      %7642 = vmatprep.mubr.f32.mxu0 %v6969
      %7643 = vmatmul.mubr.f32.gmra.mxu0 %v6596
      %v7644 = vpop.f32.mrf.mxu0
      %v7645 = vadd.f32 0.0, %v7644
      %v7646 = vpop.f32.mrf.mxu0
      %7647 = vmatprep.mubr.f32.mxu0 %v6972
      %7648 = vmatmul.mubr.f32.gmra.mxu0 %v6597
      %v7649 = vpop.f32.mrf.mxu0
      %v7650 = vadd.f32 0.0, %v7649
      %v7651 = vpop.f32.mrf.mxu0
      %7652 = vmatprep.mubr.f32.mxu0 %v6975
      %7653 = vmatmul.mubr.f32.gmra.mxu0 %v6598
      %v7654 = vpop.f32.mrf.mxu0
      %v7655 = vadd.f32 0.0, %v7654
      %v7656 = vpop.f32.mrf.mxu0
      %7657 = vmatprep.mubr.f32.mxu0 %v6978
      %7658 = vmatmul.mubr.f32.gmra.mxu0 %v6599
      %v7659 = vpop.f32.mrf.mxu0
      %v7660 = vadd.f32 0.0, %v7659
      %v7661 = vpop.f32.mrf.mxu0
      %7662 = vmatprep.mubr.f32.mxu0 %v6981
      %7663 = vmatmul.mubr.f32.gmra.mxu0 %v6600
      %v7664 = vpop.f32.mrf.mxu0
      %v7665 = vadd.f32 0.0, %v7664
      %v7666 = vpop.f32.mrf.mxu0
      %7667 = vmatprep.mubr.f32.mxu0 %v6984
      %7668 = vmatmul.mubr.f32.gmra.mxu0 %v6601
      %v7669 = vpop.f32.mrf.mxu0
      %v7670 = vadd.f32 0.0, %v7669
      %v7671 = vpop.f32.mrf.mxu0
      %7672 = vmatprep.mubr.f32.mxu0 %v6987
      %7673 = vmatmul.mubr.f32.gmra.mxu0 %v6602
      %v7674 = vpop.f32.mrf.mxu0
      %v7675 = vadd.f32 0.0, %v7674
      %v7676 = vpop.f32.mrf.mxu0
      %7677 = vmatprep.mubr.f32.mxu0 %v6990
      %7678 = vmatmul.mubr.f32.gmra.mxu0 %v6603
      %v7679 = vpop.f32.mrf.mxu0
      %v7680 = vadd.f32 0.0, %v7679
      %v7681 = vpop.f32.mrf.mxu0
      %7682 = vmatprep.mubr.f32.mxu0 %v6993
      %7683 = vmatmul.mubr.f32.gmra.mxu0 %v6604
      %v7684 = vpop.f32.mrf.mxu0
      %v7685 = vadd.f32 0.0, %v7684
      %v7686 = vpop.f32.mrf.mxu0
      %7687 = vmatprep.mubr.f32.mxu0 %v6996
      %7688 = vmatmul.mubr.f32.gmra.mxu0 %v6605
      %v7689 = vpop.f32.mrf.mxu0
      %v7690 = vadd.f32 0.0, %v7689
      %v7691 = vpop.f32.mrf.mxu0
      %7692 = vmatprep.mubr.f32.mxu0 %v6999
      %7693 = vmatmul.mubr.f32.gmra.mxu0 %v6606
      %v7694 = vpop.f32.mrf.mxu0
      %v7695 = vadd.f32 0.0, %v7694
      %v7696 = vpop.f32.mrf.mxu0
      %7697 = vmatprep.mubr.f32.mxu0 %v7002
      %7698 = vmatmul.mubr.f32.gmra.mxu0 %v6607
      %v7699 = vpop.f32.mrf.mxu0
      %v7700 = vadd.f32 0.0, %v7699
      %v7701 = vpop.f32.mrf.mxu0
      %7702 = vmatprep.mubr.f32.mxu0 %v7005
      %7703 = vmatmul.mubr.f32.gmra.mxu0 %v6608
      %v7704 = vpop.f32.mrf.mxu0
      %v7705 = vadd.f32 0.0, %v7704
      %v7706 = vpop.f32.mrf.mxu0
      %7707 = vmatprep.mubr.f32.mxu0 %v7008
      %7708 = vmatmul.mubr.f32.gmra.mxu0 %v6609
      %v7709 = vpop.f32.mrf.mxu0
      %v7710 = vadd.f32 0.0, %v7709
      %v7711 = vpop.f32.mrf.mxu0
      %7712 = vmatprep.mubr.f32.mxu0 %v7011
      %7713 = vmatmul.mubr.f32.gmra.mxu0 %v6610
      %v7714 = vpop.f32.mrf.mxu0
      %v7715 = vadd.f32 0.0, %v7714
      %v7716 = vpop.f32.mrf.mxu0
      %7717 = vdwg.mxu0
      %7718 = vst.msk [vmem:[%s264] sm:$0xff] %vm273, %v7080
      %7719 = vst.msk [vmem:[%s264 + $0x8] sm:$0xff] %vm273, %v7085
      %7720 = vst.msk [vmem:[%s264 + $0x10] sm:$0xff] %vm273, %v7090
      %7721 = vst.msk [vmem:[%s264 + $0x18] sm:$0xff] %vm273, %v7095
      %7722 = vst.msk [vmem:[%s264 + $0x20] sm:$0xff] %vm273, %v7100
      %7723 = vst.msk [vmem:[%s264 + $0x28] sm:$0xff] %vm273, %v7105
      %7724 = vst.msk [vmem:[%s264 + $0x30] sm:$0xff] %vm273, %v7110
      %7725 = vst.msk [vmem:[%s264 + $0x38] sm:$0xff] %vm273, %v7115
      %7726 = vst.msk [vmem:[%s264 + $0x40] sm:$0xff] %vm273, %v7120
      %7727 = vst.msk [vmem:[%s264 + $0x48] sm:$0xff] %vm273, %v7125
      %7728 = vst.msk [vmem:[%s264 + $0x50] sm:$0xff] %vm273, %v7130
      %7729 = vst.msk [vmem:[%s264 + $0x58] sm:$0xff] %vm273, %v7135
      %7730 = vst.msk [vmem:[%s264 + $0x60] sm:$0xff] %vm273, %v7140
      %7731 = vst.msk [vmem:[%s264 + $0x68] sm:$0xff] %vm273, %v7145
      %7732 = vst.msk [vmem:[%s264 + $0x70] sm:$0xff] %vm273, %v7150
      %7733 = vst.msk [vmem:[%s264 + $0x78] sm:$0xff] %vm273, %v7155
      %7734 = vst.msk [vmem:[%s264 + $0x80] sm:$0xff] %vm273, %v7160
      %7735 = vst.msk [vmem:[%s264 + $0x88] sm:$0xff] %vm273, %v7165
      %7736 = vst.msk [vmem:[%s264 + $0x90] sm:$0xff] %vm273, %v7170
      %7737 = vst.msk [vmem:[%s264 + $0x98] sm:$0xff] %vm273, %v7175
      %7738 = vst.msk [vmem:[%s264 + $0xa0] sm:$0xff] %vm273, %v7180
      %7739 = vst.msk [vmem:[%s264 + $0xa8] sm:$0xff] %vm273, %v7185
      %7740 = vst.msk [vmem:[%s264 + $0xb0] sm:$0xff] %vm273, %v7190
      %7741 = vst.msk [vmem:[%s264 + $0xb8] sm:$0xff] %vm273, %v7195
      %7742 = vst.msk [vmem:[%s264 + $0xc0] sm:$0xff] %vm273, %v7200
      %7743 = vst.msk [vmem:[%s264 + $0xc8] sm:$0xff] %vm273, %v7205
      %7744 = vst.msk [vmem:[%s264 + $0xd0] sm:$0xff] %vm273, %v7210
      %7745 = vst.msk [vmem:[%s264 + $0xd8] sm:$0xff] %vm273, %v7215
      %7746 = vst.msk [vmem:[%s264 + $0xe0] sm:$0xff] %vm273, %v7220
      %7747 = vst.msk [vmem:[%s264 + $0xe8] sm:$0xff] %vm273, %v7225
      %7748 = vst.msk [vmem:[%s264 + $0xf0] sm:$0xff] %vm273, %v7230
      %7749 = vst.msk [vmem:[%s264 + $0xf8] sm:$0xff] %vm273, %v7235
      %7750 = vst.msk [vmem:[%s264 + $0x100] sm:$0xff] %vm273, %v7240
      %7751 = vst.msk [vmem:[%s264 + $0x108] sm:$0xff] %vm273, %v7245
      %7752 = vst.msk [vmem:[%s264 + $0x110] sm:$0xff] %vm273, %v7250
      %7753 = vst.msk [vmem:[%s264 + $0x118] sm:$0xff] %vm273, %v7255
      %7754 = vst.msk [vmem:[%s264 + $0x120] sm:$0xff] %vm273, %v7260
      %7755 = vst.msk [vmem:[%s264 + $0x128] sm:$0xff] %vm273, %v7265
      %7756 = vst.msk [vmem:[%s264 + $0x130] sm:$0xff] %vm273, %v7270
      %7757 = vst.msk [vmem:[%s264 + $0x138] sm:$0xff] %vm273, %v7275
      %7758 = vst.msk [vmem:[%s264 + $0x140] sm:$0xff] %vm273, %v7280
      %7759 = vst.msk [vmem:[%s264 + $0x148] sm:$0xff] %vm273, %v7285
      %7760 = vst.msk [vmem:[%s264 + $0x150] sm:$0xff] %vm273, %v7290
      %7761 = vst.msk [vmem:[%s264 + $0x158] sm:$0xff] %vm273, %v7295
      %7762 = vst.msk [vmem:[%s264 + $0x160] sm:$0xff] %vm273, %v7300
      %7763 = vst.msk [vmem:[%s264 + $0x168] sm:$0xff] %vm273, %v7305
      %7764 = vst.msk [vmem:[%s264 + $0x170] sm:$0xff] %vm273, %v7310
      %7765 = vst.msk [vmem:[%s264 + $0x178] sm:$0xff] %vm273, %v7315
      %7766 = vst.msk [vmem:[%s264 + $0x180] sm:$0xff] %vm273, %v7320
      %7767 = vst.msk [vmem:[%s264 + $0x188] sm:$0xff] %vm273, %v7325
      %7768 = vst.msk [vmem:[%s264 + $0x190] sm:$0xff] %vm273, %v7330
      %7769 = vst.msk [vmem:[%s264 + $0x198] sm:$0xff] %vm273, %v7335
      %7770 = vst.msk [vmem:[%s264 + $0x1a0] sm:$0xff] %vm273, %v7340
      %7771 = vst.msk [vmem:[%s264 + $0x1a8] sm:$0xff] %vm273, %v7345
      %7772 = vst.msk [vmem:[%s264 + $0x1b0] sm:$0xff] %vm273, %v7350
      %7773 = vst.msk [vmem:[%s264 + $0x1b8] sm:$0xff] %vm273, %v7355
      %7774 = vst.msk [vmem:[%s264 + $0x1c0] sm:$0xff] %vm273, %v7360
      %7775 = vst.msk [vmem:[%s264 + $0x1c8] sm:$0xff] %vm273, %v7365
      %7776 = vst.msk [vmem:[%s264 + $0x1d0] sm:$0xff] %vm273, %v7370
      %7777 = vst.msk [vmem:[%s264 + $0x1d8] sm:$0xff] %vm273, %v7375
      %7778 = vst.msk [vmem:[%s264 + $0x1e0] sm:$0xff] %vm273, %v7380
      %7779 = vst.msk [vmem:[%s264 + $0x1e8] sm:$0xff] %vm273, %v7385
      %7780 = vst.msk [vmem:[%s264 + $0x1f0] sm:$0xff] %vm273, %v7390
      %7781 = vst.msk [vmem:[%s264 + $0x1f8] sm:$0xff] %vm273, %v7395
      %7782 = vst.msk [vmem:[%s264 + $0x200] sm:$0xff] %vm273, %v7400
      %7783 = vst.msk [vmem:[%s264 + $0x208] sm:$0xff] %vm273, %v7405
      %7784 = vst.msk [vmem:[%s264 + $0x210] sm:$0xff] %vm273, %v7410
      %7785 = vst.msk [vmem:[%s264 + $0x218] sm:$0xff] %vm273, %v7415
      %7786 = vst.msk [vmem:[%s264 + $0x220] sm:$0xff] %vm273, %v7420
      %7787 = vst.msk [vmem:[%s264 + $0x228] sm:$0xff] %vm273, %v7425
      %7788 = vst.msk [vmem:[%s264 + $0x230] sm:$0xff] %vm273, %v7430
      %7789 = vst.msk [vmem:[%s264 + $0x238] sm:$0xff] %vm273, %v7435
      %7790 = vst.msk [vmem:[%s264 + $0x240] sm:$0xff] %vm273, %v7440
      %7791 = vst.msk [vmem:[%s264 + $0x248] sm:$0xff] %vm273, %v7445
      %7792 = vst.msk [vmem:[%s264 + $0x250] sm:$0xff] %vm273, %v7450
      %7793 = vst.msk [vmem:[%s264 + $0x258] sm:$0xff] %vm273, %v7455
      %7794 = vst.msk [vmem:[%s264 + $0x260] sm:$0xff] %vm273, %v7460
      %7795 = vst.msk [vmem:[%s264 + $0x268] sm:$0xff] %vm273, %v7465
      %7796 = vst.msk [vmem:[%s264 + $0x270] sm:$0xff] %vm273, %v7470
      %7797 = vst.msk [vmem:[%s264 + $0x278] sm:$0xff] %vm273, %v7475
      %7798 = vst.msk [vmem:[%s264 + $0x280] sm:$0xff] %vm273, %v7480
      %7799 = vst.msk [vmem:[%s264 + $0x288] sm:$0xff] %vm273, %v7485
      %7800 = vst.msk [vmem:[%s264 + $0x290] sm:$0xff] %vm273, %v7490
      %7801 = vst.msk [vmem:[%s264 + $0x298] sm:$0xff] %vm273, %v7495
      %7802 = vst.msk [vmem:[%s264 + $0x2a0] sm:$0xff] %vm273, %v7500
      %7803 = vst.msk [vmem:[%s264 + $0x2a8] sm:$0xff] %vm273, %v7505
      %7804 = vst.msk [vmem:[%s264 + $0x2b0] sm:$0xff] %vm273, %v7510
      %7805 = vst.msk [vmem:[%s264 + $0x2b8] sm:$0xff] %vm273, %v7515
      %7806 = vst.msk [vmem:[%s264 + $0x2c0] sm:$0xff] %vm273, %v7520
      %7807 = vst.msk [vmem:[%s264 + $0x2c8] sm:$0xff] %vm273, %v7525
      %7808 = vst.msk [vmem:[%s264 + $0x2d0] sm:$0xff] %vm273, %v7530
      %7809 = vst.msk [vmem:[%s264 + $0x2d8] sm:$0xff] %vm273, %v7535
      %7810 = vst.msk [vmem:[%s264 + $0x2e0] sm:$0xff] %vm273, %v7540
      %7811 = vst.msk [vmem:[%s264 + $0x2e8] sm:$0xff] %vm273, %v7545
      %7812 = vst.msk [vmem:[%s264 + $0x2f0] sm:$0xff] %vm273, %v7550
      %7813 = vst.msk [vmem:[%s264 + $0x2f8] sm:$0xff] %vm273, %v7555
      %7814 = vst.msk [vmem:[%s264 + $0x300] sm:$0xff] %vm273, %v7560
      %7815 = vst.msk [vmem:[%s264 + $0x308] sm:$0xff] %vm273, %v7565
      %7816 = vst.msk [vmem:[%s264 + $0x310] sm:$0xff] %vm273, %v7570
      %7817 = vst.msk [vmem:[%s264 + $0x318] sm:$0xff] %vm273, %v7575
      %7818 = vst.msk [vmem:[%s264 + $0x320] sm:$0xff] %vm273, %v7580
      %7819 = vst.msk [vmem:[%s264 + $0x328] sm:$0xff] %vm273, %v7585
      %7820 = vst.msk [vmem:[%s264 + $0x330] sm:$0xff] %vm273, %v7590
      %7821 = vst.msk [vmem:[%s264 + $0x338] sm:$0xff] %vm273, %v7595
      %7822 = vst.msk [vmem:[%s264 + $0x340] sm:$0xff] %vm273, %v7600
      %7823 = vst.msk [vmem:[%s264 + $0x348] sm:$0xff] %vm273, %v7605
      %7824 = vst.msk [vmem:[%s264 + $0x350] sm:$0xff] %vm273, %v7610
      %7825 = vst.msk [vmem:[%s264 + $0x358] sm:$0xff] %vm273, %v7615
      %7826 = vst.msk [vmem:[%s264 + $0x360] sm:$0xff] %vm273, %v7620
      %7827 = vst.msk [vmem:[%s264 + $0x368] sm:$0xff] %vm273, %v7625
      %7828 = vst.msk [vmem:[%s264 + $0x370] sm:$0xff] %vm273, %v7630
      %7829 = vst.msk [vmem:[%s264 + $0x378] sm:$0xff] %vm273, %v7635
      %7830 = vst.msk [vmem:[%s264 + $0x380] sm:$0xff] %vm273, %v7640
      %7831 = vst.msk [vmem:[%s264 + $0x388] sm:$0xff] %vm273, %v7645
      %7832 = vst.msk [vmem:[%s264 + $0x390] sm:$0xff] %vm273, %v7650
      %7833 = vst.msk [vmem:[%s264 + $0x398] sm:$0xff] %vm273, %v7655
      %7834 = vst.msk [vmem:[%s264 + $0x3a0] sm:$0xff] %vm273, %v7660
      %7835 = vst.msk [vmem:[%s264 + $0x3a8] sm:$0xff] %vm273, %v7665
      %7836 = vst.msk [vmem:[%s264 + $0x3b0] sm:$0xff] %vm273, %v7670
      %7837 = vst.msk [vmem:[%s264 + $0x3b8] sm:$0xff] %vm273, %v7675
      %7838 = vst.msk [vmem:[%s264 + $0x3c0] sm:$0xff] %vm273, %v7680
      %7839 = vst.msk [vmem:[%s264 + $0x3c8] sm:$0xff] %vm273, %v7685
      %7840 = vst.msk [vmem:[%s264 + $0x3d0] sm:$0xff] %vm273, %v7690
      %7841 = vst.msk [vmem:[%s264 + $0x3d8] sm:$0xff] %vm273, %v7695
      %7842 = vst.msk [vmem:[%s264 + $0x3e0] sm:$0xff] %vm273, %v7700
      %7843 = vst.msk [vmem:[%s264 + $0x3e8] sm:$0xff] %vm273, %v7705
      %7844 = vst.msk [vmem:[%s264 + $0x3f0] sm:$0xff] %vm273, %v7710
      %7845 = vst.msk [vmem:[%s264 + $0x3f8] sm:$0xff] %vm273, %v7715
      %v7846 = vsel %vm273, %v7080, 0.0
      %v7847 = vsel %vm273, %v7085, 0.0
      %v7848 = vadd.f32 %v7846, %v7847
      %v7849 = vsel %vm273, %v7090, 0.0
      %v7850 = vadd.f32 %v7848, %v7849
      %v7851 = vsel %vm273, %v7095, 0.0
      %v7852 = vadd.f32 %v7850, %v7851
      %v7853 = vsel %vm273, %v7100, 0.0
      %v7854 = vadd.f32 %v7852, %v7853
      %v7855 = vsel %vm273, %v7105, 0.0
      %v7856 = vadd.f32 %v7854, %v7855
      %v7857 = vsel %vm273, %v7110, 0.0
      %v7858 = vadd.f32 %v7856, %v7857
      %v7859 = vsel %vm273, %v7115, 0.0
      %v7860 = vadd.f32 %v7858, %v7859
      %v7861 = vsel %vm273, %v7120, 0.0
      %v7862 = vadd.f32 %v7860, %v7861
      %v7863 = vsel %vm273, %v7125, 0.0
      %v7864 = vadd.f32 %v7862, %v7863
      %v7865 = vsel %vm273, %v7130, 0.0
      %v7866 = vadd.f32 %v7864, %v7865
      %v7867 = vsel %vm273, %v7135, 0.0
      %v7868 = vadd.f32 %v7866, %v7867
      %v7869 = vsel %vm273, %v7140, 0.0
      %v7870 = vadd.f32 %v7868, %v7869
      %v7871 = vsel %vm273, %v7145, 0.0
      %v7872 = vadd.f32 %v7870, %v7871
      %v7873 = vsel %vm273, %v7150, 0.0
      %v7874 = vadd.f32 %v7872, %v7873
      %v7875 = vsel %vm273, %v7155, 0.0
      %v7876 = vadd.f32 %v7874, %v7875
      %v7877 = vsel %vm273, %v7160, 0.0
      %v7878 = vadd.f32 %v7876, %v7877
      %v7879 = vsel %vm273, %v7165, 0.0
      %v7880 = vadd.f32 %v7878, %v7879
      %v7881 = vsel %vm273, %v7170, 0.0
      %v7882 = vadd.f32 %v7880, %v7881
      %v7883 = vsel %vm273, %v7175, 0.0
      %v7884 = vadd.f32 %v7882, %v7883
      %v7885 = vsel %vm273, %v7180, 0.0
      %v7886 = vadd.f32 %v7884, %v7885
      %v7887 = vsel %vm273, %v7185, 0.0
      %v7888 = vadd.f32 %v7886, %v7887
      %v7889 = vsel %vm273, %v7190, 0.0
      %v7890 = vadd.f32 %v7888, %v7889
      %v7891 = vsel %vm273, %v7195, 0.0
      %v7892 = vadd.f32 %v7890, %v7891
      %v7893 = vsel %vm273, %v7200, 0.0
      %v7894 = vadd.f32 %v7892, %v7893
      %v7895 = vsel %vm273, %v7205, 0.0
      %v7896 = vadd.f32 %v7894, %v7895
      %v7897 = vsel %vm273, %v7210, 0.0
      %v7898 = vadd.f32 %v7896, %v7897
      %v7899 = vsel %vm273, %v7215, 0.0
      %v7900 = vadd.f32 %v7898, %v7899
      %v7901 = vsel %vm273, %v7220, 0.0
      %v7902 = vadd.f32 %v7900, %v7901
      %v7903 = vsel %vm273, %v7225, 0.0
      %v7904 = vadd.f32 %v7902, %v7903
      %v7905 = vsel %vm273, %v7230, 0.0
      %v7906 = vadd.f32 %v7904, %v7905
      %v7907 = vsel %vm273, %v7235, 0.0
      %v7908 = vadd.f32 %v7906, %v7907
      %v7909 = vsel %vm273, %v7240, 0.0
      %v7910 = vadd.f32 %v7908, %v7909
      %v7911 = vsel %vm273, %v7245, 0.0
      %v7912 = vadd.f32 %v7910, %v7911
      %v7913 = vsel %vm273, %v7250, 0.0
      %v7914 = vadd.f32 %v7912, %v7913
      %v7915 = vsel %vm273, %v7255, 0.0
      %v7916 = vadd.f32 %v7914, %v7915
      %v7917 = vsel %vm273, %v7260, 0.0
      %v7918 = vadd.f32 %v7916, %v7917
      %v7919 = vsel %vm273, %v7265, 0.0
      %v7920 = vadd.f32 %v7918, %v7919
      %v7921 = vsel %vm273, %v7270, 0.0
      %v7922 = vadd.f32 %v7920, %v7921
      %v7923 = vsel %vm273, %v7275, 0.0
      %v7924 = vadd.f32 %v7922, %v7923
      %v7925 = vsel %vm273, %v7280, 0.0
      %v7926 = vadd.f32 %v7924, %v7925
      %v7927 = vsel %vm273, %v7285, 0.0
      %v7928 = vadd.f32 %v7926, %v7927
      %v7929 = vsel %vm273, %v7290, 0.0
      %v7930 = vadd.f32 %v7928, %v7929
      %v7931 = vsel %vm273, %v7295, 0.0
      %v7932 = vadd.f32 %v7930, %v7931
      %v7933 = vsel %vm273, %v7300, 0.0
      %v7934 = vadd.f32 %v7932, %v7933
      %v7935 = vsel %vm273, %v7305, 0.0
      %v7936 = vadd.f32 %v7934, %v7935
      %v7937 = vsel %vm273, %v7310, 0.0
      %v7938 = vadd.f32 %v7936, %v7937
      %v7939 = vsel %vm273, %v7315, 0.0
      %v7940 = vadd.f32 %v7938, %v7939
      %v7941 = vsel %vm273, %v7320, 0.0
      %v7942 = vadd.f32 %v7940, %v7941
      %v7943 = vsel %vm273, %v7325, 0.0
      %v7944 = vadd.f32 %v7942, %v7943
      %v7945 = vsel %vm273, %v7330, 0.0
      %v7946 = vadd.f32 %v7944, %v7945
      %v7947 = vsel %vm273, %v7335, 0.0
      %v7948 = vadd.f32 %v7946, %v7947
      %v7949 = vsel %vm273, %v7340, 0.0
      %v7950 = vadd.f32 %v7948, %v7949
      %v7951 = vsel %vm273, %v7345, 0.0
      %v7952 = vadd.f32 %v7950, %v7951
      %v7953 = vsel %vm273, %v7350, 0.0
      %v7954 = vadd.f32 %v7952, %v7953
      %v7955 = vsel %vm273, %v7355, 0.0
      %v7956 = vadd.f32 %v7954, %v7955
      %v7957 = vsel %vm273, %v7360, 0.0
      %v7958 = vadd.f32 %v7956, %v7957
      %v7959 = vsel %vm273, %v7365, 0.0
      %v7960 = vadd.f32 %v7958, %v7959
      %v7961 = vsel %vm273, %v7370, 0.0
      %v7962 = vadd.f32 %v7960, %v7961
      %v7963 = vsel %vm273, %v7375, 0.0
      %v7964 = vadd.f32 %v7962, %v7963
      %v7965 = vsel %vm273, %v7380, 0.0
      %v7966 = vadd.f32 %v7964, %v7965
      %v7967 = vsel %vm273, %v7385, 0.0
      %v7968 = vadd.f32 %v7966, %v7967
      %v7969 = vsel %vm273, %v7390, 0.0
      %v7970 = vadd.f32 %v7968, %v7969
      %v7971 = vsel %vm273, %v7395, 0.0
      %v7972 = vadd.f32 %v7970, %v7971
      %v7973 = vsel %vm273, %v7400, 0.0
      %v7974 = vadd.f32 %v7972, %v7973
      %v7975 = vsel %vm273, %v7405, 0.0
      %v7976 = vadd.f32 %v7974, %v7975
      %v7977 = vsel %vm273, %v7410, 0.0
      %v7978 = vadd.f32 %v7976, %v7977
      %v7979 = vsel %vm273, %v7415, 0.0
      %v7980 = vadd.f32 %v7978, %v7979
      %v7981 = vsel %vm273, %v7420, 0.0
      %v7982 = vadd.f32 %v7980, %v7981
      %v7983 = vsel %vm273, %v7425, 0.0
      %v7984 = vadd.f32 %v7982, %v7983
      %v7985 = vsel %vm273, %v7430, 0.0
      %v7986 = vadd.f32 %v7984, %v7985
      %v7987 = vsel %vm273, %v7435, 0.0
      %v7988 = vadd.f32 %v7986, %v7987
      %v7989 = vsel %vm273, %v7440, 0.0
      %v7990 = vadd.f32 %v7988, %v7989
      %v7991 = vsel %vm273, %v7445, 0.0
      %v7992 = vadd.f32 %v7990, %v7991
      %v7993 = vsel %vm273, %v7450, 0.0
      %v7994 = vadd.f32 %v7992, %v7993
      %v7995 = vsel %vm273, %v7455, 0.0
      %v7996 = vadd.f32 %v7994, %v7995
      %v7997 = vsel %vm273, %v7460, 0.0
      %v7998 = vadd.f32 %v7996, %v7997
      %v7999 = vsel %vm273, %v7465, 0.0
      %v8000 = vadd.f32 %v7998, %v7999
      %v8001 = vsel %vm273, %v7470, 0.0
      %v8002 = vadd.f32 %v8000, %v8001
      %v8003 = vsel %vm273, %v7475, 0.0
      %v8004 = vadd.f32 %v8002, %v8003
      %v8005 = vsel %vm273, %v7480, 0.0
      %v8006 = vadd.f32 %v8004, %v8005
      %v8007 = vsel %vm273, %v7485, 0.0
      %v8008 = vadd.f32 %v8006, %v8007
      %v8009 = vsel %vm273, %v7490, 0.0
      %v8010 = vadd.f32 %v8008, %v8009
      %v8011 = vsel %vm273, %v7495, 0.0
      %v8012 = vadd.f32 %v8010, %v8011
      %v8013 = vsel %vm273, %v7500, 0.0
      %v8014 = vadd.f32 %v8012, %v8013
      %v8015 = vsel %vm273, %v7505, 0.0
      %v8016 = vadd.f32 %v8014, %v8015
      %v8017 = vsel %vm273, %v7510, 0.0
      %v8018 = vadd.f32 %v8016, %v8017
      %v8019 = vsel %vm273, %v7515, 0.0
      %v8020 = vadd.f32 %v8018, %v8019
      %v8021 = vsel %vm273, %v7520, 0.0
      %v8022 = vadd.f32 %v8020, %v8021
      %v8023 = vsel %vm273, %v7525, 0.0
      %v8024 = vadd.f32 %v8022, %v8023
      %v8025 = vsel %vm273, %v7530, 0.0
      %v8026 = vadd.f32 %v8024, %v8025
      %v8027 = vsel %vm273, %v7535, 0.0
      %v8028 = vadd.f32 %v8026, %v8027
      %v8029 = vsel %vm273, %v7540, 0.0
      %v8030 = vadd.f32 %v8028, %v8029
      %v8031 = vsel %vm273, %v7545, 0.0
      %v8032 = vadd.f32 %v8030, %v8031
      %v8033 = vsel %vm273, %v7550, 0.0
      %v8034 = vadd.f32 %v8032, %v8033
      %v8035 = vsel %vm273, %v7555, 0.0
      %v8036 = vadd.f32 %v8034, %v8035
      %v8037 = vsel %vm273, %v7560, 0.0
      %v8038 = vadd.f32 %v8036, %v8037
      %v8039 = vsel %vm273, %v7565, 0.0
      %v8040 = vadd.f32 %v8038, %v8039
      %v8041 = vsel %vm273, %v7570, 0.0
      %v8042 = vadd.f32 %v8040, %v8041
      %v8043 = vsel %vm273, %v7575, 0.0
      %v8044 = vadd.f32 %v8042, %v8043
      %v8045 = vsel %vm273, %v7580, 0.0
      %v8046 = vadd.f32 %v8044, %v8045
      %v8047 = vsel %vm273, %v7585, 0.0
      %v8048 = vadd.f32 %v8046, %v8047
      %v8049 = vsel %vm273, %v7590, 0.0
      %v8050 = vadd.f32 %v8048, %v8049
      %v8051 = vsel %vm273, %v7595, 0.0
      %v8052 = vadd.f32 %v8050, %v8051
      %v8053 = vsel %vm273, %v7600, 0.0
      %v8054 = vadd.f32 %v8052, %v8053
      %v8055 = vsel %vm273, %v7605, 0.0
      %v8056 = vadd.f32 %v8054, %v8055
      %v8057 = vsel %vm273, %v7610, 0.0
      %v8058 = vadd.f32 %v8056, %v8057
      %v8059 = vsel %vm273, %v7615, 0.0
      %v8060 = vadd.f32 %v8058, %v8059
      %v8061 = vsel %vm273, %v7620, 0.0
      %v8062 = vadd.f32 %v8060, %v8061
      %v8063 = vsel %vm273, %v7625, 0.0
      %v8064 = vadd.f32 %v8062, %v8063
      %v8065 = vsel %vm273, %v7630, 0.0
      %v8066 = vadd.f32 %v8064, %v8065
      %v8067 = vsel %vm273, %v7635, 0.0
      %v8068 = vadd.f32 %v8066, %v8067
      %v8069 = vsel %vm273, %v7640, 0.0
      %v8070 = vadd.f32 %v8068, %v8069
      %v8071 = vsel %vm273, %v7645, 0.0
      %v8072 = vadd.f32 %v8070, %v8071
      %v8073 = vsel %vm273, %v7650, 0.0
      %v8074 = vadd.f32 %v8072, %v8073
      %v8075 = vsel %vm273, %v7655, 0.0
      %v8076 = vadd.f32 %v8074, %v8075
      %v8077 = vsel %vm273, %v7660, 0.0
      %v8078 = vadd.f32 %v8076, %v8077
      %v8079 = vsel %vm273, %v7665, 0.0
      %v8080 = vadd.f32 %v8078, %v8079
      %v8081 = vsel %vm273, %v7670, 0.0
      %v8082 = vadd.f32 %v8080, %v8081
      %v8083 = vsel %vm273, %v7675, 0.0
      %v8084 = vadd.f32 %v8082, %v8083
      %v8085 = vsel %vm273, %v7680, 0.0
      %v8086 = vadd.f32 %v8084, %v8085
      %v8087 = vsel %vm273, %v7685, 0.0
      %v8088 = vadd.f32 %v8086, %v8087
      %v8089 = vsel %vm273, %v7690, 0.0
      %v8090 = vadd.f32 %v8088, %v8089
      %v8091 = vsel %vm273, %v7695, 0.0
      %v8092 = vadd.f32 %v8090, %v8091
      %v8093 = vsel %vm273, %v7700, 0.0
      %v8094 = vadd.f32 %v8092, %v8093
      %v8095 = vsel %vm273, %v7705, 0.0
      %v8096 = vadd.f32 %v8094, %v8095
      %v8097 = vsel %vm273, %v7710, 0.0
      %v8098 = vadd.f32 %v8096, %v8097
      %v8099 = vsel %vm273, %v7715, 0.0
      %v8100 = vadd.f32 %v8098, %v8099
      %8101 = vst.msk [vmem:[%s268] sm:$0xff] %vm273, %v8100
      %v8102 = vmul.f32 %v7080, %v7080
      %v8103 = vmul.f32 %v7085, %v7085
      %v8104 = vmul.f32 %v7090, %v7090
      %v8105 = vmul.f32 %v7095, %v7095
      %v8106 = vmul.f32 %v7100, %v7100
      %v8107 = vmul.f32 %v7105, %v7105
      %v8108 = vmul.f32 %v7110, %v7110
      %v8109 = vmul.f32 %v7115, %v7115
      %v8110 = vmul.f32 %v7120, %v7120
      %v8111 = vmul.f32 %v7125, %v7125
      %v8112 = vmul.f32 %v7130, %v7130
      %v8113 = vmul.f32 %v7135, %v7135
      %v8114 = vmul.f32 %v7140, %v7140
      %v8115 = vmul.f32 %v7145, %v7145
      %v8116 = vmul.f32 %v7150, %v7150
      %v8117 = vmul.f32 %v7155, %v7155
      %v8118 = vmul.f32 %v7160, %v7160
      %v8119 = vmul.f32 %v7165, %v7165
      %v8120 = vmul.f32 %v7170, %v7170
      %v8121 = vmul.f32 %v7175, %v7175
      %v8122 = vmul.f32 %v7180, %v7180
      %v8123 = vmul.f32 %v7185, %v7185
      %v8124 = vmul.f32 %v7190, %v7190
      %v8125 = vmul.f32 %v7195, %v7195
      %v8126 = vmul.f32 %v7200, %v7200
      %v8127 = vmul.f32 %v7205, %v7205
      %v8128 = vmul.f32 %v7210, %v7210
      %v8129 = vmul.f32 %v7215, %v7215
      %v8130 = vmul.f32 %v7220, %v7220
      %v8131 = vmul.f32 %v7225, %v7225
      %v8132 = vmul.f32 %v7230, %v7230
      %v8133 = vmul.f32 %v7235, %v7235
      %v8134 = vmul.f32 %v7240, %v7240
      %v8135 = vmul.f32 %v7245, %v7245
      %v8136 = vmul.f32 %v7250, %v7250
      %v8137 = vmul.f32 %v7255, %v7255
      %v8138 = vmul.f32 %v7260, %v7260
      %v8139 = vmul.f32 %v7265, %v7265
      %v8140 = vmul.f32 %v7270, %v7270
      %v8141 = vmul.f32 %v7275, %v7275
      %v8142 = vmul.f32 %v7280, %v7280
      %v8143 = vmul.f32 %v7285, %v7285
      %v8144 = vmul.f32 %v7290, %v7290
      %v8145 = vmul.f32 %v7295, %v7295
      %v8146 = vmul.f32 %v7300, %v7300
      %v8147 = vmul.f32 %v7305, %v7305
      %v8148 = vmul.f32 %v7310, %v7310
      %v8149 = vmul.f32 %v7315, %v7315
      %v8150 = vmul.f32 %v7320, %v7320
      %v8151 = vmul.f32 %v7325, %v7325
      %v8152 = vmul.f32 %v7330, %v7330
      %v8153 = vmul.f32 %v7335, %v7335
      %v8154 = vmul.f32 %v7340, %v7340
      %v8155 = vmul.f32 %v7345, %v7345
      %v8156 = vmul.f32 %v7350, %v7350
      %v8157 = vmul.f32 %v7355, %v7355
      %v8158 = vmul.f32 %v7360, %v7360
      %v8159 = vmul.f32 %v7365, %v7365
      %v8160 = vmul.f32 %v7370, %v7370
      %v8161 = vmul.f32 %v7375, %v7375
      %v8162 = vmul.f32 %v7380, %v7380
      %v8163 = vmul.f32 %v7385, %v7385
      %v8164 = vmul.f32 %v7390, %v7390
      %v8165 = vmul.f32 %v7395, %v7395
      %v8166 = vmul.f32 %v7400, %v7400
      %v8167 = vmul.f32 %v7405, %v7405
      %v8168 = vmul.f32 %v7410, %v7410
      %v8169 = vmul.f32 %v7415, %v7415
      %v8170 = vmul.f32 %v7420, %v7420
      %v8171 = vmul.f32 %v7425, %v7425
      %v8172 = vmul.f32 %v7430, %v7430
      %v8173 = vmul.f32 %v7435, %v7435
      %v8174 = vmul.f32 %v7440, %v7440
      %v8175 = vmul.f32 %v7445, %v7445
      %v8176 = vmul.f32 %v7450, %v7450
      %v8177 = vmul.f32 %v7455, %v7455
      %v8178 = vmul.f32 %v7460, %v7460
      %v8179 = vmul.f32 %v7465, %v7465
      %v8180 = vmul.f32 %v7470, %v7470
      %v8181 = vmul.f32 %v7475, %v7475
      %v8182 = vmul.f32 %v7480, %v7480
      %v8183 = vmul.f32 %v7485, %v7485
      %v8184 = vmul.f32 %v7490, %v7490
      %v8185 = vmul.f32 %v7495, %v7495
      %v8186 = vmul.f32 %v7500, %v7500
      %v8187 = vmul.f32 %v7505, %v7505
      %v8188 = vmul.f32 %v7510, %v7510
      %v8189 = vmul.f32 %v7515, %v7515
      %v8190 = vmul.f32 %v7520, %v7520
      %v8191 = vmul.f32 %v7525, %v7525
      %v8192 = vmul.f32 %v7530, %v7530
      %v8193 = vmul.f32 %v7535, %v7535
      %v8194 = vmul.f32 %v7540, %v7540
      %v8195 = vmul.f32 %v7545, %v7545
      %v8196 = vmul.f32 %v7550, %v7550
      %v8197 = vmul.f32 %v7555, %v7555
      %v8198 = vmul.f32 %v7560, %v7560
      %v8199 = vmul.f32 %v7565, %v7565
      %v8200 = vmul.f32 %v7570, %v7570
      %v8201 = vmul.f32 %v7575, %v7575
      %v8202 = vmul.f32 %v7580, %v7580
      %v8203 = vmul.f32 %v7585, %v7585
      %v8204 = vmul.f32 %v7590, %v7590
      %v8205 = vmul.f32 %v7595, %v7595
      %v8206 = vmul.f32 %v7600, %v7600
      %v8207 = vmul.f32 %v7605, %v7605
      %v8208 = vmul.f32 %v7610, %v7610
      %v8209 = vmul.f32 %v7615, %v7615
      %v8210 = vmul.f32 %v7620, %v7620
      %v8211 = vmul.f32 %v7625, %v7625
      %v8212 = vmul.f32 %v7630, %v7630
      %v8213 = vmul.f32 %v7635, %v7635
      %v8214 = vmul.f32 %v7640, %v7640
      %v8215 = vmul.f32 %v7645, %v7645
      %v8216 = vmul.f32 %v7650, %v7650
      %v8217 = vmul.f32 %v7655, %v7655
      %v8218 = vmul.f32 %v7660, %v7660
      %v8219 = vmul.f32 %v7665, %v7665
      %v8220 = vmul.f32 %v7670, %v7670
      %v8221 = vmul.f32 %v7675, %v7675
      %v8222 = vmul.f32 %v7680, %v7680
      %v8223 = vmul.f32 %v7685, %v7685
      %v8224 = vmul.f32 %v7690, %v7690
      %v8225 = vmul.f32 %v7695, %v7695
      %v8226 = vmul.f32 %v7700, %v7700
      %v8227 = vmul.f32 %v7705, %v7705
      %v8228 = vmul.f32 %v7710, %v7710
      %v8229 = vmul.f32 %v7715, %v7715
      %v8230 = vsel %vm273, %v8102, 0.0
      %v8231 = vsel %vm273, %v8103, 0.0
      %v8232 = vadd.f32 %v8230, %v8231
      %v8233 = vsel %vm273, %v8104, 0.0
      %v8234 = vadd.f32 %v8232, %v8233
      %v8235 = vsel %vm273, %v8105, 0.0
      %v8236 = vadd.f32 %v8234, %v8235
      %v8237 = vsel %vm273, %v8106, 0.0
      %v8238 = vadd.f32 %v8236, %v8237
      %v8239 = vsel %vm273, %v8107, 0.0
      %v8240 = vadd.f32 %v8238, %v8239
      %v8241 = vsel %vm273, %v8108, 0.0
      %v8242 = vadd.f32 %v8240, %v8241
      %v8243 = vsel %vm273, %v8109, 0.0
      %v8244 = vadd.f32 %v8242, %v8243
      %v8245 = vsel %vm273, %v8110, 0.0
      %v8246 = vadd.f32 %v8244, %v8245
      %v8247 = vsel %vm273, %v8111, 0.0
      %v8248 = vadd.f32 %v8246, %v8247
      %v8249 = vsel %vm273, %v8112, 0.0
      %v8250 = vadd.f32 %v8248, %v8249
      %v8251 = vsel %vm273, %v8113, 0.0
      %v8252 = vadd.f32 %v8250, %v8251
      %v8253 = vsel %vm273, %v8114, 0.0
      %v8254 = vadd.f32 %v8252, %v8253
      %v8255 = vsel %vm273, %v8115, 0.0
      %v8256 = vadd.f32 %v8254, %v8255
      %v8257 = vsel %vm273, %v8116, 0.0
      %v8258 = vadd.f32 %v8256, %v8257
      %v8259 = vsel %vm273, %v8117, 0.0
      %v8260 = vadd.f32 %v8258, %v8259
      %v8261 = vsel %vm273, %v8118, 0.0
      %v8262 = vadd.f32 %v8260, %v8261
      %v8263 = vsel %vm273, %v8119, 0.0
      %v8264 = vadd.f32 %v8262, %v8263
      %v8265 = vsel %vm273, %v8120, 0.0
      %v8266 = vadd.f32 %v8264, %v8265
      %v8267 = vsel %vm273, %v8121, 0.0
      %v8268 = vadd.f32 %v8266, %v8267
      %v8269 = vsel %vm273, %v8122, 0.0
      %v8270 = vadd.f32 %v8268, %v8269
      %v8271 = vsel %vm273, %v8123, 0.0
      %v8272 = vadd.f32 %v8270, %v8271
      %v8273 = vsel %vm273, %v8124, 0.0
      %v8274 = vadd.f32 %v8272, %v8273
      %v8275 = vsel %vm273, %v8125, 0.0
      %v8276 = vadd.f32 %v8274, %v8275
      %v8277 = vsel %vm273, %v8126, 0.0
      %v8278 = vadd.f32 %v8276, %v8277
      %v8279 = vsel %vm273, %v8127, 0.0
      %v8280 = vadd.f32 %v8278, %v8279
      %v8281 = vsel %vm273, %v8128, 0.0
      %v8282 = vadd.f32 %v8280, %v8281
      %v8283 = vsel %vm273, %v8129, 0.0
      %v8284 = vadd.f32 %v8282, %v8283
      %v8285 = vsel %vm273, %v8130, 0.0
      %v8286 = vadd.f32 %v8284, %v8285
      %v8287 = vsel %vm273, %v8131, 0.0
      %v8288 = vadd.f32 %v8286, %v8287
      %v8289 = vsel %vm273, %v8132, 0.0
      %v8290 = vadd.f32 %v8288, %v8289
      %v8291 = vsel %vm273, %v8133, 0.0
      %v8292 = vadd.f32 %v8290, %v8291
      %v8293 = vsel %vm273, %v8134, 0.0
      %v8294 = vadd.f32 %v8292, %v8293
      %v8295 = vsel %vm273, %v8135, 0.0
      %v8296 = vadd.f32 %v8294, %v8295
      %v8297 = vsel %vm273, %v8136, 0.0
      %v8298 = vadd.f32 %v8296, %v8297
      %v8299 = vsel %vm273, %v8137, 0.0
      %v8300 = vadd.f32 %v8298, %v8299
      %v8301 = vsel %vm273, %v8138, 0.0
      %v8302 = vadd.f32 %v8300, %v8301
      %v8303 = vsel %vm273, %v8139, 0.0
      %v8304 = vadd.f32 %v8302, %v8303
      %v8305 = vsel %vm273, %v8140, 0.0
      %v8306 = vadd.f32 %v8304, %v8305
      %v8307 = vsel %vm273, %v8141, 0.0
      %v8308 = vadd.f32 %v8306, %v8307
      %v8309 = vsel %vm273, %v8142, 0.0
      %v8310 = vadd.f32 %v8308, %v8309
      %v8311 = vsel %vm273, %v8143, 0.0
      %v8312 = vadd.f32 %v8310, %v8311
      %v8313 = vsel %vm273, %v8144, 0.0
      %v8314 = vadd.f32 %v8312, %v8313
      %v8315 = vsel %vm273, %v8145, 0.0
      %v8316 = vadd.f32 %v8314, %v8315
      %v8317 = vsel %vm273, %v8146, 0.0
      %v8318 = vadd.f32 %v8316, %v8317
      %v8319 = vsel %vm273, %v8147, 0.0
      %v8320 = vadd.f32 %v8318, %v8319
      %v8321 = vsel %vm273, %v8148, 0.0
      %v8322 = vadd.f32 %v8320, %v8321
      %v8323 = vsel %vm273, %v8149, 0.0
      %v8324 = vadd.f32 %v8322, %v8323
      %v8325 = vsel %vm273, %v8150, 0.0
      %v8326 = vadd.f32 %v8324, %v8325
      %v8327 = vsel %vm273, %v8151, 0.0
      %v8328 = vadd.f32 %v8326, %v8327
      %v8329 = vsel %vm273, %v8152, 0.0
      %v8330 = vadd.f32 %v8328, %v8329
      %v8331 = vsel %vm273, %v8153, 0.0
      %v8332 = vadd.f32 %v8330, %v8331
      %v8333 = vsel %vm273, %v8154, 0.0
      %v8334 = vadd.f32 %v8332, %v8333
      %v8335 = vsel %vm273, %v8155, 0.0
      %v8336 = vadd.f32 %v8334, %v8335
      %v8337 = vsel %vm273, %v8156, 0.0
      %v8338 = vadd.f32 %v8336, %v8337
      %v8339 = vsel %vm273, %v8157, 0.0
      %v8340 = vadd.f32 %v8338, %v8339
      %v8341 = vsel %vm273, %v8158, 0.0
      %v8342 = vadd.f32 %v8340, %v8341
      %v8343 = vsel %vm273, %v8159, 0.0
      %v8344 = vadd.f32 %v8342, %v8343
      %v8345 = vsel %vm273, %v8160, 0.0
      %v8346 = vadd.f32 %v8344, %v8345
      %v8347 = vsel %vm273, %v8161, 0.0
      %v8348 = vadd.f32 %v8346, %v8347
      %v8349 = vsel %vm273, %v8162, 0.0
      %v8350 = vadd.f32 %v8348, %v8349
      %v8351 = vsel %vm273, %v8163, 0.0
      %v8352 = vadd.f32 %v8350, %v8351
      %v8353 = vsel %vm273, %v8164, 0.0
      %v8354 = vadd.f32 %v8352, %v8353
      %v8355 = vsel %vm273, %v8165, 0.0
      %v8356 = vadd.f32 %v8354, %v8355
      %v8357 = vsel %vm273, %v8166, 0.0
      %v8358 = vadd.f32 %v8356, %v8357
      %v8359 = vsel %vm273, %v8167, 0.0
      %v8360 = vadd.f32 %v8358, %v8359
      %v8361 = vsel %vm273, %v8168, 0.0
      %v8362 = vadd.f32 %v8360, %v8361
      %v8363 = vsel %vm273, %v8169, 0.0
      %v8364 = vadd.f32 %v8362, %v8363
      %v8365 = vsel %vm273, %v8170, 0.0
      %v8366 = vadd.f32 %v8364, %v8365
      %v8367 = vsel %vm273, %v8171, 0.0
      %v8368 = vadd.f32 %v8366, %v8367
      %v8369 = vsel %vm273, %v8172, 0.0
      %v8370 = vadd.f32 %v8368, %v8369
      %v8371 = vsel %vm273, %v8173, 0.0
      %v8372 = vadd.f32 %v8370, %v8371
      %v8373 = vsel %vm273, %v8174, 0.0
      %v8374 = vadd.f32 %v8372, %v8373
      %v8375 = vsel %vm273, %v8175, 0.0
      %v8376 = vadd.f32 %v8374, %v8375
      %v8377 = vsel %vm273, %v8176, 0.0
      %v8378 = vadd.f32 %v8376, %v8377
      %v8379 = vsel %vm273, %v8177, 0.0
      %v8380 = vadd.f32 %v8378, %v8379
      %v8381 = vsel %vm273, %v8178, 0.0
      %v8382 = vadd.f32 %v8380, %v8381
      %v8383 = vsel %vm273, %v8179, 0.0
      %v8384 = vadd.f32 %v8382, %v8383
      %v8385 = vsel %vm273, %v8180, 0.0
      %v8386 = vadd.f32 %v8384, %v8385
      %v8387 = vsel %vm273, %v8181, 0.0
      %v8388 = vadd.f32 %v8386, %v8387
      %v8389 = vsel %vm273, %v8182, 0.0
      %v8390 = vadd.f32 %v8388, %v8389
      %v8391 = vsel %vm273, %v8183, 0.0
      %v8392 = vadd.f32 %v8390, %v8391
      %v8393 = vsel %vm273, %v8184, 0.0
      %v8394 = vadd.f32 %v8392, %v8393
      %v8395 = vsel %vm273, %v8185, 0.0
      %v8396 = vadd.f32 %v8394, %v8395
      %v8397 = vsel %vm273, %v8186, 0.0
      %v8398 = vadd.f32 %v8396, %v8397
      %v8399 = vsel %vm273, %v8187, 0.0
      %v8400 = vadd.f32 %v8398, %v8399
      %v8401 = vsel %vm273, %v8188, 0.0
      %v8402 = vadd.f32 %v8400, %v8401
      %v8403 = vsel %vm273, %v8189, 0.0
      %v8404 = vadd.f32 %v8402, %v8403
      %v8405 = vsel %vm273, %v8190, 0.0
      %v8406 = vadd.f32 %v8404, %v8405
      %v8407 = vsel %vm273, %v8191, 0.0
      %v8408 = vadd.f32 %v8406, %v8407
      %v8409 = vsel %vm273, %v8192, 0.0
      %v8410 = vadd.f32 %v8408, %v8409
      %v8411 = vsel %vm273, %v8193, 0.0
      %v8412 = vadd.f32 %v8410, %v8411
      %v8413 = vsel %vm273, %v8194, 0.0
      %v8414 = vadd.f32 %v8412, %v8413
      %v8415 = vsel %vm273, %v8195, 0.0
      %v8416 = vadd.f32 %v8414, %v8415
      %v8417 = vsel %vm273, %v8196, 0.0
      %v8418 = vadd.f32 %v8416, %v8417
      %v8419 = vsel %vm273, %v8197, 0.0
      %v8420 = vadd.f32 %v8418, %v8419
      %v8421 = vsel %vm273, %v8198, 0.0
      %v8422 = vadd.f32 %v8420, %v8421
      %v8423 = vsel %vm273, %v8199, 0.0
      %v8424 = vadd.f32 %v8422, %v8423
      %v8425 = vsel %vm273, %v8200, 0.0
      %v8426 = vadd.f32 %v8424, %v8425
      %v8427 = vsel %vm273, %v8201, 0.0
      %v8428 = vadd.f32 %v8426, %v8427
      %v8429 = vsel %vm273, %v8202, 0.0
      %v8430 = vadd.f32 %v8428, %v8429
      %v8431 = vsel %vm273, %v8203, 0.0
      %v8432 = vadd.f32 %v8430, %v8431
      %v8433 = vsel %vm273, %v8204, 0.0
      %v8434 = vadd.f32 %v8432, %v8433
      %v8435 = vsel %vm273, %v8205, 0.0
      %v8436 = vadd.f32 %v8434, %v8435
      %v8437 = vsel %vm273, %v8206, 0.0
      %v8438 = vadd.f32 %v8436, %v8437
      %v8439 = vsel %vm273, %v8207, 0.0
      %v8440 = vadd.f32 %v8438, %v8439
      %v8441 = vsel %vm273, %v8208, 0.0
      %v8442 = vadd.f32 %v8440, %v8441
      %v8443 = vsel %vm273, %v8209, 0.0
      %v8444 = vadd.f32 %v8442, %v8443
      %v8445 = vsel %vm273, %v8210, 0.0
      %v8446 = vadd.f32 %v8444, %v8445
      %v8447 = vsel %vm273, %v8211, 0.0
      %v8448 = vadd.f32 %v8446, %v8447
      %v8449 = vsel %vm273, %v8212, 0.0
      %v8450 = vadd.f32 %v8448, %v8449
      %v8451 = vsel %vm273, %v8213, 0.0
      %v8452 = vadd.f32 %v8450, %v8451
      %v8453 = vsel %vm273, %v8214, 0.0
      %v8454 = vadd.f32 %v8452, %v8453
      %v8455 = vsel %vm273, %v8215, 0.0
      %v8456 = vadd.f32 %v8454, %v8455
      %v8457 = vsel %vm273, %v8216, 0.0
      %v8458 = vadd.f32 %v8456, %v8457
      %v8459 = vsel %vm273, %v8217, 0.0
      %v8460 = vadd.f32 %v8458, %v8459
      %v8461 = vsel %vm273, %v8218, 0.0
      %v8462 = vadd.f32 %v8460, %v8461
      %v8463 = vsel %vm273, %v8219, 0.0
      %v8464 = vadd.f32 %v8462, %v8463
      %v8465 = vsel %vm273, %v8220, 0.0
      %v8466 = vadd.f32 %v8464, %v8465
      %v8467 = vsel %vm273, %v8221, 0.0
      %v8468 = vadd.f32 %v8466, %v8467
      %v8469 = vsel %vm273, %v8222, 0.0
      %v8470 = vadd.f32 %v8468, %v8469
      %v8471 = vsel %vm273, %v8223, 0.0
      %v8472 = vadd.f32 %v8470, %v8471
      %v8473 = vsel %vm273, %v8224, 0.0
      %v8474 = vadd.f32 %v8472, %v8473
      %v8475 = vsel %vm273, %v8225, 0.0
      %v8476 = vadd.f32 %v8474, %v8475
      %v8477 = vsel %vm273, %v8226, 0.0
      %v8478 = vadd.f32 %v8476, %v8477
      %v8479 = vsel %vm273, %v8227, 0.0
      %v8480 = vadd.f32 %v8478, %v8479
      %v8481 = vsel %vm273, %v8228, 0.0
      %v8482 = vadd.f32 %v8480, %v8481
      %v8483 = vsel %vm273, %v8229, 0.0
      %v8484 = vadd.f32 %v8482, %v8483
      %8485 = vst.msk [vmem:[%s272] sm:$0xff] %vm273, %v8484
      %p8486 = scmp.lt.s32.totalorder %s18, 1
      %s8487 = scalar_select %p8486, %s18, 1
      %s8488 = smul.addr %s8487, 128
      %s8489 = smul.addr %s8488, 8
      %s8490 = scalar_lea.vmem %s4, %s8489
      %p8491 = scmp.lt.s32.totalorder %s18, 1
      %s8492 = scalar_select %p8491, %s18, 1
      %s8493 = smul.addr %s8492, 8
      %s8494 = scalar_lea.vmem %s5, %s8493
      %p8495 = scmp.lt.s32.totalorder %s18, 1
      %s8496 = scalar_select %p8495, %s18, 1
      %s8497 = smul.addr %s8496, 8
      %s8498 = scalar_lea.vmem %s6, %s8497
      // Predicated region
      $region37: #{upsample_forward.4} parent=35 // pred_check
        %p8499 = pneg %p125
      $region38: #{upsample_forward.4} parent=35 // pred_check_branch
        %8501 = sbr.rel (%p8499) target = $region40
      $region39: #{upsample_forward.4} parent=35 // pred_region
        _
      $region40: #{upsample_forward.4} parent=35 // pred_fallthru
        _
      // Predicated region
      $region41: #{upsample_forward.4} parent=35 // pred_check
        %p8502 = pneg %p151
      $region42: #{upsample_forward.4} parent=35 // pred_check_branch
        %8504 = sbr.rel (%p8502) target = $region44
      $region43: #{upsample_forward.4} parent=35 // pred_region
        _
      $region44: #{upsample_forward.4} parent=35 // pred_fallthru
        _
      // Predicated region
      $region45: #{upsample_forward.4} parent=35 // pred_check
        %p8505 = pneg %p177
      $region46: #{upsample_forward.4} parent=35 // pred_check_branch
        %8507 = sbr.rel (%p8505) target = $region48
      $region47: #{upsample_forward.4} parent=35 // pred_region
        _
      $region48: #{upsample_forward.4} parent=35 // pred_fallthru
        _
    $region36: #{upsample_forward.4} parent=5 // pred_fallthru
      _
    %p8508 = scmp.le.s32.totalorder 2, %s13
    // Predicated region
    $region49: #{upsample_forward.4} parent=5 // pred_check
      %p8509 = pneg %p8508
    $region50: #{upsample_forward.4} parent=5 // pred_check_branch
      %8511 = sbr.rel (%p8509) target = $region52
    $region51: #{upsample_forward.4} parent=5 // pred_region
      %s8512 = ssub.s32 %s13, 2
      // Predicated region
      $region53: #{upsample_forward.4} parent=51 // pred_check
        %p8513 = pneg %p131
      $region54: #{upsample_forward.4} parent=51 // pred_check_branch
        %8515 = sbr.rel (%p8513) target = $region56
      $region55: #{upsample_forward.4} parent=51 // pred_region
        %p8516 = scmp.lt.s32.totalorder %s19, 1
        %s8517 = scalar_select %p8516, %s19, 1
        %s8518 = smul.addr %s8517, 128
        %s8519 = smul.addr %s8518, 8
        %s8520 = scalar_lea.vmem %s4, %s8519
      $region56: #{upsample_forward.4} parent=51 // pred_fallthru
        _
      // Predicated region
      $region57: #{upsample_forward.4} parent=51 // pred_check
        %p8521 = pneg %p157
      $region58: #{upsample_forward.4} parent=51 // pred_check_branch
        %8523 = sbr.rel (%p8521) target = $region60
      $region59: #{upsample_forward.4} parent=51 // pred_region
        %p8524 = scmp.lt.s32.totalorder %s19, 1
        %s8525 = scalar_select %p8524, %s19, 1
        %s8526 = smul.addr %s8525, 8
        %s8527 = scalar_lea.vmem %s5, %s8526
      $region60: #{upsample_forward.4} parent=51 // pred_fallthru
        _
      // Predicated region
      $region61: #{upsample_forward.4} parent=51 // pred_check
        %p8528 = pneg %p183
      $region62: #{upsample_forward.4} parent=51 // pred_check_branch
        %8530 = sbr.rel (%p8528) target = $region64
      $region63: #{upsample_forward.4} parent=51 // pred_region
        %p8531 = scmp.lt.s32.totalorder %s19, 1
        %s8532 = scalar_select %p8531, %s19, 1
        %s8533 = smul.addr %s8532, 8
        %s8534 = scalar_lea.vmem %s6, %s8533
      $region64: #{upsample_forward.4} parent=51 // pred_fallthru
        _
    $region52: #{upsample_forward.4} parent=5 // pred_fallthru
      _
  $region6: #{upsample_forward.4} parent=0 // loop_footer
    %s17 = sadd.s32 1, %s13
  $region7: #{upsample_forward.4} parent=0 // loop_footer_branch
    %12 = sbr.rel target = $region3
  $region8: #{upsample_forward.4} parent=0 // loop_exit
    _

</llo_original>
